<compile_context>
chip_gen: v7x
topology: tpu7x:2x2x1
jax: 0.10.0
libtpu: 0.0.40
codegen_flags: <defaults>
</compile_context>

<pallas_src>
import jax
import jax.numpy as jnp
from jax.experimental import pallas as pl
from jax.experimental.pallas import tpu as pltpu

NUM_VIEWS = 2
FEAT_DIM = 64            # GNR: feat_dim = 64 when use_feat_sr=True
HIDDEN = 128
DIN_PAD = 128            # packed MLP input: [target(3) | xyz(3) | feat(64) | zeros]
ROW_TILE = 32            # conv rows per grid step (clamped to H); amortizes step overhead
TILE_N = 2048            # MLP points per grid step
VMEM_LIMIT = 48 * 1024 * 1024   # > 16/32 MiB scoped defaults, < v7x's 64 MiB physical


# ----------------------------------------------------------------------------
# Kernel A: 3x3 conv features via a single fused im2col matmul per row-block
# ----------------------------------------------------------------------------
def _conv_feat_kernel(img_ref, w_ref, b_ref, feat_ref):
    """One (view, row-block) grid cell.

    img_ref  : (H+2, W+2, C)   zero-padded image, resident across row blocks
    w_ref    : (32, FEAT_DIM)  bf16 im2col weights (row = tap*C + channel, zero pad rows)
    b_ref    : (1, FEAT_DIM)   f32 bias
    feat_ref : (RT, W, FEAT_DIM) bf16 output block
    """
    hb = pl.program_id(1)
    rt, w, fdim = feat_ref.shape
    kpad = w_ref.shape[0]
    base = pl.multiple_of(hb * rt, rt)
    rows = img_ref[pl.ds(base, rt + 2)].astype(jnp.bfloat16)     # (rt+2, W+2, C)
    c = rows.shape[-1]

    # im2col fused in-kernel: 9 shifted windows concatenated along channels,
    # zero-padded to 32 lanes -> ONE MXU matmul (M = rt*W, K = 32, N = 64).
    wins = [rows[dy:dy + rt, dx:dx + w, :] for dy in range(3) for dx in range(3)]
    if kpad > 9 * c:
        wins.append(jnp.zeros((rt, w, kpad - 9 * c), jnp.bfloat16))
    lhs = jnp.concatenate(wins, axis=-1).reshape(rt * w, kpad)    # (rt*W, 32) bf16

    out = jnp.dot(lhs, w_ref[...], preferred_element_type=jnp.float32) + b_ref[...]
    feat_ref[...] = out.reshape(rt, w, fdim).astype(feat_ref.dtype)


def conv_features(img_pad, w_conv, b_conv, *, row_tile=ROW_TILE):
    """img_pad: [V, H+2, W+2, C] f32; w_conv: [9, C, FEAT_DIM] bf16; b_conv: [1, FEAT_DIM]."""
    nv, hp2, wp2, c = img_pad.shape
    h, w = hp2 - 2, wp2 - 2
    k9, cc, fdim = w_conv.shape
    assert (k9, cc) == (9, c)

    rt = min(row_tile, h)
    assert h % rt == 0
    grid = (nv, h // rt)

    kreal = 9 * c
    kpad = ((kreal + 31) // 32) * 32                         # 27 -> 32 lanes
    w_im2col = jnp.pad(w_conv.reshape(kreal, fdim), ((0, kpad - kreal), (0, 0)))

    feat = pl.pallas_call(
        _conv_feat_kernel,
        out_shape=jax.ShapeDtypeStruct((nv, h, w, fdim), jnp.bfloat16),
        grid_spec=pltpu.PrefetchScalarGridSpec(
            num_scalar_prefetch=0,
            grid=grid,
            in_specs=[
                # full padded image per view; block index independent of hb -> resident
                pl.BlockSpec((None, hp2, wp2, c), lambda v, hb: (v, 0, 0, 0)),
                pl.BlockSpec((kpad, fdim), lambda v, hb: (0, 0)),
                pl.BlockSpec((1, fdim), lambda v, hb: (0, 0)),
            ],
            out_specs=pl.BlockSpec((None, rt, w, fdim), lambda v, hb: (v, hb, 0, 0)),
        ),
        compiler_params=pltpu.CompilerParams(
            # views parallel (maps to the 2 TensorCores on v7x), row blocks sequential
            # so the resident image is not re-DMA'd per core.
            dimension_semantics=("parallel", "arbitrary"),
            vmem_limit_bytes=VMEM_LIMIT,
        ),
    )(img_pad, w_im2col, b_conv)
    return feat


# ----------------------------------------------------------------------------
# Kernel B: fused NeRF point-MLP + MSE (lane-parallel accumulation)
# ----------------------------------------------------------------------------
def _nerf_mse_kernel(x_ref, w1_ref, b1_ref, w2_ref, b2_ref, w3_ref, b3_ref,
                     out_ref, acc_ref):
    """x lanes: [0:3]=target rgb (zero rows in w1), [3:6]=xyz, [6:70]=feat, rest 0."""
    i = pl.program_id(1)

    @pl.when(i == 0)
    def _():
        acc_ref[...] = jnp.zeros_like(acc_ref)

    x = x_ref[...]                                        # (tile_n, 128) bf16
    h = jnp.dot(x, w1_ref[...], preferred_element_type=jnp.float32) + b1_ref[...]
    h = jnp.maximum(h, 0.0)
    h = jnp.dot(h.astype(jnp.bfloat16), w2_ref[...],
                preferred_element_type=jnp.float32) + b2_ref[...]
    h = jnp.maximum(h, 0.0)
    out = jnp.dot(h.astype(jnp.bfloat16), w3_ref[...],
                  preferred_element_type=jnp.float32) + b3_ref[...]

    # cols 0..2 = rgb logits, col 3 = sigma (unused — no volume rendering here).
    lane = jax.lax.broadcasted_iota(jnp.int32, out.shape, 1)
    diff = jnp.where(lane < 3, jax.nn.sigmoid(out) - x.astype(jnp.float32), 0.0)
    acc_ref[...] += diff * diff                           # pure VPU, lane-parallel

    @pl.when(i == pl.num_programs(1) - 1)
    def _():
        out_ref[...] = jnp.sum(acc_ref[...], axis=0, keepdims=True)[None]


def nerf_mse(x_in, params, *, n_chunks=2, tile_n=TILE_N):
    """x_in: [N, DIN_PAD] packed bf16 points -> scalar MSE (mean over N*3 rgb values)."""
    n, din = x_in.shape
    w1, b1, w2, b2, w3, b3 = params
    tile_n = min(tile_n, n // n_chunks)
    assert n % (n_chunks * tile_n) == 0
    assert w3.shape[1] == din
    steps = n // (n_chunks * tile_n)
    hid = w1.shape[1]

    rep = lambda shp: pl.BlockSpec(shp, lambda c, i: (0, 0))
    partials = pl.pallas_call(
        _nerf_mse_kernel,
        out_shape=jax.ShapeDtypeStruct((n_chunks, 1, din), jnp.float32),
        grid_spec=pltpu.PrefetchScalarGridSpec(
            num_scalar_prefetch=0,
            grid=(n_chunks, steps),
            in_specs=[
                pl.BlockSpec((tile_n, din), lambda c, i: (c * steps + i, 0)),
                rep((din, hid)), rep((1, hid)),
                rep((hid, hid)), rep((1, hid)),
                rep((hid, din)), rep((1, din)),
            ],
            out_specs=pl.BlockSpec((1, 1, din), lambda c, i: (c, 0, 0)),
            scratch_shapes=[pltpu.VMEM((tile_n, din), jnp.float32)],
        ),
        compiler_params=pltpu.CompilerParams(
            # chunk axis parallel (one partial per TensorCore on v7x), step axis
            # sequential (accumulator).
            dimension_semantics=("parallel", "arbitrary"),
            vmem_limit_bytes=VMEM_LIMIT,
        ),
    )(x_in, w1, b1, w2, b2, w3, b3)
    return jnp.sum(partials) / (n * 3.0)   # nn.MSELoss default: mean reduction


# ----------------------------------------------------------------------------
# Parameters + GNR forward wrapper (plain-JAX glue only)
# ----------------------------------------------------------------------------
def init_params(key, in_ch=3):
    ks = jax.random.split(key, 4)
    s = 0.05
    w_conv = (s * jax.random.normal(ks[0], (9, in_ch, FEAT_DIM), jnp.float32)
              ).astype(jnp.bfloat16)
    b_conv = jnp.zeros((1, FEAT_DIM), jnp.float32)

    din_real = 3 + FEAT_DIM                       # xyz + point feature
    w1r = s * jax.random.normal(ks[1], (din_real, HIDDEN), jnp.float32)
    # rows 0..2 (target-rgb lanes) and the trailing pad lanes get zero weights.
    w1 = jnp.pad(w1r, ((3, DIN_PAD - 3 - din_real), (0, 0))).astype(jnp.bfloat16)
    b1 = jnp.zeros((1, HIDDEN), jnp.float32)
    w2 = (s * jax.random.normal(ks[2], (HIDDEN, HIDDEN), jnp.float32)).astype(jnp.bfloat16)
    b2 = jnp.zeros((1, HIDDEN), jnp.float32)
    w3r = s * jax.random.normal(ks[3], (HIDDEN, 4), jnp.float32)   # rgb + sigma
    w3 = jnp.pad(w3r, ((0, 0), (0, DIN_PAD - 4))).astype(jnp.bfloat16)
    b3 = jnp.zeros((1, DIN_PAD), jnp.float32)
    return (w_conv, b_conv), (w1, b1, w2, b2, w3, b3)


@jax.jit
def gnr_forward(images, masks, xyz, target_rgb, conv_params, nerf_params):
    """images: [V_total, 3, H, W], masks: [V_total, 1, H, W] (NCHW, like PyTorch)."""
    _, _, h, w = images.shape
    src = images[:NUM_VIEWS]
    src_masks = masks[:NUM_VIEWS]

    # image_rescale(): flag-gated elementwise op, done by XLA in native (lane-dense)
    # NCHW layout — avoids a 3-lane masked Pallas store and a transpose round trip.
    flag = jnp.min(src) < -0.2
    resc = jnp.where(flag, (src + 1.0) * 0.5 * (src_masks > 0.0).astype(src.dtype), src)
    images_out = jnp.concatenate([resc, images[NUM_VIEWS:]], axis=0)

    # Layout glue for the conv kernel: NCHW -> NHWC + 1px zero halo (single cheap
    # pass; the 9x im2col patch tensor is never materialised in HBM).
    src_pad = jnp.pad(jnp.transpose(src, (0, 2, 3, 1)),
                      ((0, 0), (1, 1), (1, 1), (0, 0)))

    w_conv, b_conv = conv_params
    feat = conv_features(src_pad, w_conv, b_conv)          # [nv, H, W, 64] bf16

    # Per-point nearest-pixel feature gather (plain JAX glue).
    n = xyz.shape[0]
    idx = jnp.arange(n, dtype=jnp.int32)
    pt_feat = feat[idx % NUM_VIEWS, (idx * 13) % h, (idx * 7) % w]   # [N, 64] bf16

    # Packed bf16 MLP input: lanes [0:3]=target rgb, [3:6]=xyz, [6:70]=feat, rest zero.
    x_in = jnp.concatenate([target_rgb.astype(jnp.bfloat16),
                            xyz.astype(jnp.bfloat16), pt_feat], axis=1)
    x_in = jnp.pad(x_in, ((0, 0), (0, DIN_PAD - x_in.shape[1])))

    error = nerf_mse(x_in, nerf_params)
    return error, images_out


# ----------------------------------------------------------------------------
# Pure-JAX reference (for correctness checking of the fused kernels)
# ----------------------------------------------------------------------------
def _mm(a, w):
    return jnp.dot(a.astype(jnp.bfloat16).astype(jnp.float32), w.astype(jnp.float32),
                   precision=jax.lax.Precision.HIGHEST)


def _reference(images, masks, xyz, target_rgb, conv_params, nerf_params):
    _, _, h, w = images.shape
    src = images[:NUM_VIEWS]
    flag = jnp.min(src) < -0.2
    resc = jnp.where(flag,
                     (src + 1.0) * 0.5 * (masks[:NUM_VIEWS] > 0.0).astype(jnp.float32),
                     src)
    images_out = jnp.concatenate([resc, images[NUM_VIEWS:]], axis=0)

    w_conv, b_conv = conv_params
    xp = jnp.pad(jnp.transpose(src, (0, 2, 3, 1)), ((0, 0), (1, 1), (1, 1), (0, 0)))
    wf = w_conv.astype(jnp.float32)                       # (9, C, FEAT_DIM)
    feat = jnp.zeros((NUM_VIEWS, h, w, wf.shape[-1]), jnp.float32) + b_conv
    for k in range(9):
        dy, dx = divmod(k, 3)
        win = xp[:, dy:dy + h, dx:dx + w, :].astype(jnp.bfloat16).astype(jnp.float32)
        feat = feat + jnp.einsum('vhwc,cf->vhwf', win, wf[k],
                                 precision=jax.lax.Precision.HIGHEST)

    n = xyz.shape[0]
    idx = jnp.arange(n, dtype=jnp.int32)
    pt_feat = feat[idx % NUM_VIEWS, (idx * 13) % h, (idx * 7) % w]

    x_in = jnp.concatenate([target_rgb, xyz, pt_feat], axis=1)
    x_in = jnp.pad(x_in, ((0, 0), (0, DIN_PAD - x_in.shape[1])))
    w1, b1, w2, b2, w3, b3 = nerf_params
    hid = jnp.maximum(_mm(x_in, w1) + b1, 0.0)
    hid = jnp.maximum(_mm(hid, w2) + b2, 0.0)
    out = _mm(hid, w3) + b3
    rgb = jax.nn.sigmoid(out[:, :3])
    return jnp.mean((rgb - target_rgb) ** 2), images_out


if __name__ == "__main__":
    key = jax.random.PRNGKey(0)
    k_img, k_msk, k_xyz, k_tgt, k_par = jax.random.split(key, 5)

    V_TOTAL, C, H, W = NUM_VIEWS + 1, 3, 16, 16
    N_POINTS = 8192   # 2 parallel chunks x 2 steps x 2048-point tiles

    images = jax.random.uniform(k_img, (V_TOTAL, C, H, W), jnp.float32,
                                minval=-1.0, maxval=1.0)   # min < -0.2 -> rescale path
    masks = (jax.random.uniform(k_msk, (V_TOTAL, 1, H, W), jnp.float32) > 0.3
             ).astype(jnp.float32)
    xyz = jax.random.normal(k_xyz, (N_POINTS, 3), jnp.float32)
    target_rgb = jax.random.uniform(k_tgt, (N_POINTS, 3), jnp.float32)

    conv_params, nerf_params = init_params(k_par)

    error, images_out = gnr_forward(images, masks, xyz, target_rgb,
                                    conv_params, nerf_params)
    jax.block_until_ready((error, images_out))

    err_ref, images_ref = _reference(images, masks, xyz, target_rgb,
                                     conv_params, nerf_params)

    assert error.shape == () and bool(jnp.isfinite(error))
    assert images_out.shape == images.shape
    assert bool(jnp.allclose(images_out, images_ref, atol=1e-6))
    assert bool(jnp.allclose(error, err_ref, rtol=2e-2, atol=1e-3))
    print("KERNEL_OK")
</pallas_src>

<mosaic_0001>
module attributes {stable_mosaic.version = 11 : i64} {
  func.func @_conv_feat_kernel(%arg0: i32, %arg1: i32, %arg2: memref<1x18x18x3xf32, #tpu.memory_space<vmem>>, %arg3: memref<32x64xbf16, #tpu.memory_space<vmem>>, %arg4: memref<1x64xf32, #tpu.memory_space<vmem>>, %arg5: memref<1x16x16x64xbf16, #tpu.memory_space<vmem>>) attributes {dimension_semantics = [#tpu.dimension_semantics<parallel>, #tpu.dimension_semantics<arbitrary>], iteration_bounds = array<i64: 2, 1>, scalar_prefetch = 0 : i64, scratch_operands = 0 : i64, tpu.core_type = #tpu.core_type<tc>, window_params = [{transform_indices = @transform_0, window_bounds = array<i64: 1, 18, 18, 3>}, {pipeline_mode = #tpu.pipeline_mode<synchronous>, transform_indices = @transform_1, window_bounds = array<i64: 32, 64>}, {pipeline_mode = #tpu.pipeline_mode<synchronous>, transform_indices = @transform_2, window_bounds = array<i64: 1, 64>}, {transform_indices = @transform_3, window_bounds = array<i64: 1, 16, 16, 64>}]} {
    %c16_i32 = arith.constant 16 : i32
    %0 = arith.muli %arg1, %c16_i32 : i32
    %1 = tpu.assume_multiple %0, 16 : i32
    %c0 = arith.constant 0 : index
    %2 = arith.index_cast %1 : i32 to index
    %c0_0 = arith.constant 0 : index
    %c0_1 = arith.constant 0 : index
    %3 = vector.load %arg2[%c0, %2, %c0_0, %c0_1] : memref<1x18x18x3xf32, #tpu.memory_space<vmem>>, vector<1x18x18x3xf32>
    %4 = vector.shape_cast %3 : vector<1x18x18x3xf32> to vector<18x18x3xf32>
    %5 = arith.truncf %4 : vector<18x18x3xf32> to vector<18x18x3xbf16>
    %6 = vector.extract_strided_slice %5 {offsets = [0, 0, 0], sizes = [16, 16, 3], strides = [1, 1, 1]} : vector<18x18x3xbf16> to vector<16x16x3xbf16>
    %7 = vector.extract_strided_slice %5 {offsets = [0, 1, 0], sizes = [16, 16, 3], strides = [1, 1, 1]} : vector<18x18x3xbf16> to vector<16x16x3xbf16>
    %8 = vector.extract_strided_slice %5 {offsets = [0, 2, 0], sizes = [16, 16, 3], strides = [1, 1, 1]} : vector<18x18x3xbf16> to vector<16x16x3xbf16>
    %9 = vector.extract_strided_slice %5 {offsets = [1, 0, 0], sizes = [16, 16, 3], strides = [1, 1, 1]} : vector<18x18x3xbf16> to vector<16x16x3xbf16>
    %10 = vector.extract_strided_slice %5 {offsets = [1, 1, 0], sizes = [16, 16, 3], strides = [1, 1, 1]} : vector<18x18x3xbf16> to vector<16x16x3xbf16>
    %11 = vector.extract_strided_slice %5 {offsets = [1, 2, 0], sizes = [16, 16, 3], strides = [1, 1, 1]} : vector<18x18x3xbf16> to vector<16x16x3xbf16>
    %12 = vector.extract_strided_slice %5 {offsets = [2, 0, 0], sizes = [16, 16, 3], strides = [1, 1, 1]} : vector<18x18x3xbf16> to vector<16x16x3xbf16>
    %13 = vector.extract_strided_slice %5 {offsets = [2, 1, 0], sizes = [16, 16, 3], strides = [1, 1, 1]} : vector<18x18x3xbf16> to vector<16x16x3xbf16>
    %14 = vector.extract_strided_slice %5 {offsets = [2, 2, 0], sizes = [16, 16, 3], strides = [1, 1, 1]} : vector<18x18x3xbf16> to vector<16x16x3xbf16>
    %cst = arith.constant 0.000000e+00 : bf16
    %15 = vector.broadcast %cst : bf16 to vector<16x16x5xbf16>
    %16 = tpu.concatenate %6, %7, %8, %9, %10, %11, %12, %13, %14, %15 in 2 : vector<16x16x3xbf16>, vector<16x16x3xbf16>, vector<16x16x3xbf16>, vector<16x16x3xbf16>, vector<16x16x3xbf16>, vector<16x16x3xbf16>, vector<16x16x3xbf16>, vector<16x16x3xbf16>, vector<16x16x3xbf16>, vector<16x16x5xbf16> -> vector<16x16x32xbf16>
    %17 = vector.shape_cast %16 : vector<16x16x32xbf16> to vector<256x32xbf16>
    %c0_2 = arith.constant 0 : index
    %c0_3 = arith.constant 0 : index
    %18 = vector.load %arg3[%c0_2, %c0_3] : memref<32x64xbf16, #tpu.memory_space<vmem>>, vector<32x64xbf16>
    %cst_4 = arith.constant dense<0.000000e+00> : vector<256x64xf32>
    %19 = tpu.matmul %17, %18, %cst_4 {dimension_numbers = #tpu.dot_dimension_numbers<[1], [0], [0], [1], [0, 0, 1, 1], [], []>} : vector<256x32xbf16>, vector<32x64xbf16>, vector<256x64xf32> -> vector<256x64xf32>
    %c0_5 = arith.constant 0 : index
    %c0_6 = arith.constant 0 : index
    %20 = vector.load %arg4[%c0_5, %c0_6] : memref<1x64xf32, #tpu.memory_space<vmem>>, vector<1x64xf32>
    %21 = vector.broadcast %20 : vector<1x64xf32> to vector<256x64xf32>
    %22 = arith.addf %19, %21 : vector<256x64xf32>
    %23 = vector.shape_cast %22 : vector<256x64xf32> to vector<16x16x64xf32>
    %24 = arith.truncf %23 : vector<16x16x64xf32> to vector<16x16x64xbf16>
    %c0_7 = arith.constant 0 : index
    %c0_8 = arith.constant 0 : index
    %c0_9 = arith.constant 0 : index
    %c0_10 = arith.constant 0 : index
    %25 = vector.load %arg5[%c0_7, %c0_8, %c0_9, %c0_10] : memref<1x16x16x64xbf16, #tpu.memory_space<vmem>>, vector<1x16x16x64xbf16>
    %26 = vector.shape_cast %25 : vector<1x16x16x64xbf16> to vector<16x16x64xbf16>
    %27 = vector.shape_cast %24 : vector<16x16x64xbf16> to vector<1x16x16x64xbf16>
    tpu.vector_store %arg5[%c0_7, %c0_8, %c0_9, %c0_10], %27 {strides = array<i32>} : memref<1x16x16x64xbf16, #tpu.memory_space<vmem>>, vector<1x16x16x64xbf16>,
    return
  }
  func.func @transform_0(%arg0: i32, %arg1: i32) -> (i32, i32, i32, i32) {
    %c0_i32 = arith.constant 0 : i32
    %c0_i32_0 = arith.constant 0 : i32
    %c0_i32_1 = arith.constant 0 : i32
    %c0_i32_2 = arith.constant 0 : i32
    return %arg0, %c0_i32, %c0_i32_0, %c0_i32_1 : i32, i32, i32, i32
  }
  func.func @transform_1(%arg0: i32, %arg1: i32) -> (i32, i32) {
    %c0_i32 = arith.constant 0 : i32
    %c0_i32_0 = arith.constant 0 : i32
    %c0_i32_1 = arith.constant 0 : i32
    return %c0_i32, %c0_i32_0 : i32, i32
  }
  func.func @transform_2(%arg0: i32, %arg1: i32) -> (i32, i32) {
    %c0_i32 = arith.constant 0 : i32
    %c0_i32_0 = arith.constant 0 : i32
    %c0_i32_1 = arith.constant 0 : i32
    return %c0_i32, %c0_i32_0 : i32, i32
  }
  func.func @transform_3(%arg0: i32, %arg1: i32) -> (i32, i32, i32, i32) {
    %c0_i32 = arith.constant 0 : i32
    %c0_i32_0 = arith.constant 0 : i32
    %c0_i32_1 = arith.constant 0 : i32
    return %arg0, %arg1, %c0_i32, %c0_i32_0 : i32, i32, i32, i32
  }
}

module attributes {stable_mosaic.version = 11 : i64} {
  func.func @_nerf_mse_kernel(%arg0: i32, %arg1: i32, %arg2: memref<2048x128xbf16, #tpu.memory_space<vmem>>, %arg3: memref<128x128xbf16, #tpu.memory_space<vmem>>, %arg4: memref<1x128xf32, #tpu.memory_space<vmem>>, %arg5: memref<128x128xbf16, #tpu.memory_space<vmem>>, %arg6: memref<1x128xf32, #tpu.memory_space<vmem>>, %arg7: memref<128x128xbf16, #tpu.memory_space<vmem>>, %arg8: memref<1x128xf32, #tpu.memory_space<vmem>>, %arg9: memref<1x1x128xf32, #tpu.memory_space<vmem>>, %arg10: memref<2048x128xf32, #tpu.memory_space<vmem>>) attributes {dimension_semantics = [#tpu.dimension_semantics<parallel>, #tpu.dimension_semantics<arbitrary>], iteration_bounds = array<i64: 2, 2>, scalar_prefetch = 0 : i64, scratch_operands = 1 : i64, tpu.core_type = #tpu.core_type<tc>, window_params = [{transform_indices = @transform_0, window_bounds = array<i64: 2048, 128>}, {pipeline_mode = #tpu.pipeline_mode<synchronous>, transform_indices = @transform_1, window_bounds = array<i64: 128, 128>}, {pipeline_mode = #tpu.pipeline_mode<synchronous>, transform_indices = @transform_2, window_bounds = array<i64: 1, 128>}, {pipeline_mode = #tpu.pipeline_mode<synchronous>, transform_indices = @transform_3, window_bounds = array<i64: 128, 128>}, {pipeline_mode = #tpu.pipeline_mode<synchronous>, transform_indices = @transform_4, window_bounds = array<i64: 1, 128>}, {pipeline_mode = #tpu.pipeline_mode<synchronous>, transform_indices = @transform_5, window_bounds = array<i64: 128, 128>}, {pipeline_mode = #tpu.pipeline_mode<synchronous>, transform_indices = @transform_6, window_bounds = array<i64: 1, 128>}, {transform_indices = @transform_7, window_bounds = array<i64: 1, 1, 128>}]} {
    %c0_i32 = arith.constant 0 : i32
    %0 = arith.cmpi eq, %arg1, %c0_i32 : i32
    %1 = arith.extui %0 : i1 to i32
    %c0_i32_0 = arith.constant 0 : i32
    %2 = arith.cmpi ne, %1, %c0_i32_0 : i32
    scf.if %2 {
      %cst_25 = arith.constant 0.000000e+00 : f32
      %44 = vector.broadcast %cst_25 : f32 to vector<2048x128xf32>
      %c0_26 = arith.constant 0 : index
      %c0_27 = arith.constant 0 : index
      %45 = vector.load %arg10[%c0_26, %c0_27] : memref<2048x128xf32, #tpu.memory_space<vmem>>, vector<2048x128xf32>
      tpu.vector_store %arg10[%c0_26, %c0_27], %44 {strides = array<i32>} : memref<2048x128xf32, #tpu.memory_space<vmem>>, vector<2048x128xf32>,
    } else {
    }
    %c0 = arith.constant 0 : index
    %c0_1 = arith.constant 0 : index
    %3 = vector.load %arg2[%c0, %c0_1] : memref<2048x128xbf16, #tpu.memory_space<vmem>>, vector<2048x128xbf16>
    %c0_2 = arith.constant 0 : index
    %c0_3 = arith.constant 0 : index
    %4 = vector.load %arg3[%c0_2, %c0_3] : memref<128x128xbf16, #tpu.memory_space<vmem>>, vector<128x128xbf16>
    %cst = arith.constant dense<0.000000e+00> : vector<2048x128xf32>
    %5 = tpu.matmul %3, %4, %cst {dimension_numbers = #tpu.dot_dimension_numbers<[1], [0], [0], [1], [0, 0, 1, 1], [], []>} : vector<2048x128xbf16>, vector<128x128xbf16>, vector<2048x128xf32> -> vector<2048x128xf32>
    %c0_4 = arith.constant 0 : index
    %c0_5 = arith.constant 0 : index
    %6 = vector.load %arg4[%c0_4, %c0_5] : memref<1x128xf32, #tpu.memory_space<vmem>>, vector<1x128xf32>
    %7 = vector.broadcast %6 : vector<1x128xf32> to vector<2048x128xf32>
    %8 = arith.addf %5, %7 : vector<2048x128xf32>
    %cst_6 = arith.constant 0.000000e+00 : f32
    %9 = vector.broadcast %cst_6 : f32 to vector<2048x128xf32>
    %10 = arith.maximumf %8, %9 : vector<2048x128xf32>
    %11 = arith.truncf %10 : vector<2048x128xf32> to vector<2048x128xbf16>
    %c0_7 = arith.constant 0 : index
    %c0_8 = arith.constant 0 : index
    %12 = vector.load %arg5[%c0_7, %c0_8] : memref<128x128xbf16, #tpu.memory_space<vmem>>, vector<128x128xbf16>
    %cst_9 = arith.constant dense<0.000000e+00> : vector<2048x128xf32>
    %13 = tpu.matmul %11, %12, %cst_9 {dimension_numbers = #tpu.dot_dimension_numbers<[1], [0], [0], [1], [0, 0, 1, 1], [], []>} : vector<2048x128xbf16>, vector<128x128xbf16>, vector<2048x128xf32> -> vector<2048x128xf32>
    %c0_10 = arith.constant 0 : index
    %c0_11 = arith.constant 0 : index
    %14 = vector.load %arg6[%c0_10, %c0_11] : memref<1x128xf32, #tpu.memory_space<vmem>>, vector<1x128xf32>
    %15 = vector.broadcast %14 : vector<1x128xf32> to vector<2048x128xf32>
    %16 = arith.addf %13, %15 : vector<2048x128xf32>
    %cst_12 = arith.constant 0.000000e+00 : f32
    %17 = vector.broadcast %cst_12 : f32 to vector<2048x128xf32>
    %18 = arith.maximumf %16, %17 : vector<2048x128xf32>
    %19 = arith.truncf %18 : vector<2048x128xf32> to vector<2048x128xbf16>
    %c0_13 = arith.constant 0 : index
    %c0_14 = arith.constant 0 : index
    %20 = vector.load %arg7[%c0_13, %c0_14] : memref<128x128xbf16, #tpu.memory_space<vmem>>, vector<128x128xbf16>
    %cst_15 = arith.constant dense<0.000000e+00> : vector<2048x128xf32>
    %21 = tpu.matmul %19, %20, %cst_15 {dimension_numbers = #tpu.dot_dimension_numbers<[1], [0], [0], [1], [0, 0, 1, 1], [], []>} : vector<2048x128xbf16>, vector<128x128xbf16>, vector<2048x128xf32> -> vector<2048x128xf32>
    %c0_16 = arith.constant 0 : index
    %c0_17 = arith.constant 0 : index
    %22 = vector.load %arg8[%c0_16, %c0_17] : memref<1x128xf32, #tpu.memory_space<vmem>>, vector<1x128xf32>
    %23 = vector.broadcast %22 : vector<1x128xf32> to vector<2048x128xf32>
    %24 = arith.addf %21, %23 : vector<2048x128xf32>
    %25 = tpu.iota {dimensions = array<i32: 1>} : vector<2048x128xi32>
    %c3_i32 = arith.constant 3 : i32
    %26 = vector.broadcast %c3_i32 : i32 to vector<2048x128xi32>
    %27 = arith.cmpi slt, %25, %26 : vector<2048x128xi32>
    %28 = arith.negf %24 : vector<2048x128xf32>
    %29 = math.exp %28 : vector<2048x128xf32>
    %cst_18 = arith.constant 1.000000e+00 : f32
    %30 = vector.broadcast %cst_18 : f32 to vector<2048x128xf32>
    %31 = arith.addf %30, %29 : vector<2048x128xf32>
    %32 = arith.divf %30, %31 : vector<2048x128xf32>
    %33 = arith.extf %3 : vector<2048x128xbf16> to vector<2048x128xf32>
    %34 = arith.subf %32, %33 : vector<2048x128xf32>
    %cst_19 = arith.constant 0.000000e+00 : f32
    %35 = vector.broadcast %cst_19 : f32 to vector<2048x128xf32>
    %36 = arith.select %27, %34, %35 : vector<2048x128xi1>, vector<2048x128xf32>
    %c0_20 = arith.constant 0 : index
    %c0_21 = arith.constant 0 : index
    %37 = vector.load %arg10[%c0_20, %c0_21] : memref<2048x128xf32, #tpu.memory_space<vmem>>, vector<2048x128xf32>
    %38 = arith.mulf %36, %36 : vector<2048x128xf32>
    %39 = arith.addf %37, %38 : vector<2048x128xf32>
    %c0_22 = arith.constant 0 : index
    %c0_23 = arith.constant 0 : index
    %40 = vector.load %arg10[%c0_22, %c0_23] : memref<2048x128xf32, #tpu.memory_space<vmem>>, vector<2048x128xf32>
    tpu.vector_store %arg10[%c0_22, %c0_23], %39 {strides = array<i32>} : memref<2048x128xf32, #tpu.memory_space<vmem>>, vector<2048x128xf32>,
    %c1_i32 = arith.constant 1 : i32
    %41 = arith.cmpi eq, %arg1, %c1_i32 : i32
    %42 = arith.extui %41 : i1 to i32
    %c0_i32_24 = arith.constant 0 : i32
    %43 = arith.cmpi ne, %42, %c0_i32_24 : i32
    scf.if %43 {
      %c0_25 = arith.constant 0 : index
      %c0_26 = arith.constant 0 : index
      %44 = vector.load %arg10[%c0_25, %c0_26] : memref<2048x128xf32, #tpu.memory_space<vmem>>, vector<2048x128xf32>
      %cst_27 = arith.constant dense<0.000000e+00> : vector<128xf32>
      %45 = vector.multi_reduction <add>, %44, %cst_27 [0] : vector<2048x128xf32> to vector<128xf32>
      %46 = vector.shape_cast %45 : vector<128xf32> to vector<1x128xf32>
      %47 = vector.shape_cast %46 : vector<1x128xf32> to vector<1x1x128xf32>
      %c0_28 = arith.constant 0 : index
      %c0_29 = arith.constant 0 : index
      %c0_30 = arith.constant 0 : index
      %48 = vector.load %arg9[%c0_28, %c0_29, %c0_30] : memref<1x1x128xf32, #tpu.memory_space<vmem>>, vector<1x1x128xf32>
      tpu.vector_store %arg9[%c0_28, %c0_29, %c0_30], %47 {strides = array<i32>} : memref<1x1x128xf32, #tpu.memory_space<vmem>>, vector<1x1x128xf32>,
    } else {
    }
    return
  }
  func.func @transform_0(%arg0: i32, %arg1: i32) -> (i32, i32) {
    %c2_i32 = arith.constant 2 : i32
    %0 = arith.muli %arg0, %c2_i32 : i32
    %1 = arith.addi %0, %arg1 : i32
    %c0_i32 = arith.constant 0 : i32
    %c0_i32_0 = arith.constant 0 : i32
    return %1, %c0_i32 : i32, i32
  }
  func.func @transform_1(%arg0: i32, %arg1: i32) -> (i32, i32) {
    %c0_i32 = arith.constant 0 : i32
    %c0_i32_0 = arith.constant 0 : i32
    %c0_i32_1 = arith.constant 0 : i32
    return %c0_i32, %c0_i32_0 : i32, i32
  }
  func.func @transform_2(%arg0: i32, %arg1: i32) -> (i32, i32) {
    %c0_i32 = arith.constant 0 : i32
    %c0_i32_0 = arith.constant 0 : i32
    %c0_i32_1 = arith.constant 0 : i32
    return %c0_i32, %c0_i32_0 : i32, i32
  }
  func.func @transform_3(%arg0: i32, %arg1: i32) -> (i32, i32) {
    %c0_i32 = arith.constant 0 : i32
    %c0_i32_0 = arith.constant 0 : i32
    %c0_i32_1 = arith.constant 0 : i32
    return %c0_i32, %c0_i32_0 : i32, i32
  }
  func.func @transform_4(%arg0: i32, %arg1: i32) -> (i32, i32) {
    %c0_i32 = arith.constant 0 : i32
    %c0_i32_0 = arith.constant 0 : i32
    %c0_i32_1 = arith.constant 0 : i32
    return %c0_i32, %c0_i32_0 : i32, i32
  }
  func.func @transform_5(%arg0: i32, %arg1: i32) -> (i32, i32) {
    %c0_i32 = arith.constant 0 : i32
    %c0_i32_0 = arith.constant 0 : i32
    %c0_i32_1 = arith.constant 0 : i32
    return %c0_i32, %c0_i32_0 : i32, i32
  }
  func.func @transform_6(%arg0: i32, %arg1: i32) -> (i32, i32) {
    %c0_i32 = arith.constant 0 : i32
    %c0_i32_0 = arith.constant 0 : i32
    %c0_i32_1 = arith.constant 0 : i32
    return %c0_i32, %c0_i32_0 : i32, i32
  }
  func.func @transform_7(%arg0: i32, %arg1: i32) -> (i32, i32, i32) {
    %c0_i32 = arith.constant 0 : i32
    %c0_i32_0 = arith.constant 0 : i32
    %c0_i32_1 = arith.constant 0 : i32
    return %arg0, %c0_i32, %c0_i32_0 : i32, i32, i32
  }
}

</mosaic_0001>

<llo_original>
// kernel: gnr_forward.2
$region0: #{gnr_forward.2}
  #allocation0 [shape = 'u32[]', space=smem, size = 0x4, offset = 0x4, fixed_abs, tag = 'smem constant byte address 0x4 - core index']
  #allocation1 [shape = 'u32[144,128]{1,0:T(1,128)}', space=vmem, size = 0x12000, scoped, tag = 'internal scratch']
  %s0 = inlined_call_operand.vmem [shape: f32[2,18,18,3], index: 0, kind: input, shape index: {}]
  %s1 = inlined_call_operand.vmem [shape: bf16[32,64], index: 1, kind: input, shape index: {}]
  %s2 = inlined_call_operand.vmem [shape: f32[1,64], index: 2, kind: input, shape index: {}]
  %s3 = inlined_call_operand.vmem [shape: bf16[2,16,16,64], index: 3, kind: output, shape index: {}]
  %s4 = sld [smem:[#allocation0]]
  $region45: #{gnr_forward.2} parent=0
    _
  %s6 = ssub.s32 1, %s4
  %s7 = scalar_select 0, %s6, %s4
  loop: start=0, step=1, limit=4
  $region2: #{gnr_forward.2} parent=0 // loop_pre_header
    _
  $region3: #{gnr_forward.2} parent=0 // loop_header
    %s9 = sphi 0, %s13
    %p10 = scmp.ge.s32.totalorder %s9, 4
    %s16 = sphi 0, %s28
    %s17 = sphi 0, %s24
    %s18 = sphi 0, %s16
    %s19 = sphi 0, %s17
    %s20 = sphi 0, %s18
    %s21 = sphi 0, %s19
    %s31 = sphi 0, %s33
    %s34 = sphi 0, %s31
    %s35 = sphi 0, %s34
    %s51 = sphi 0, %s35
    %s55 = sphi 0, %s55
    %s57 = sphi 0, %s55
    %s58 = sphi 0, %s57
    %s72 = sphi 0, %s58
    %s76 = sphi 0, %s76
    %s78 = sphi 0, %s76
    %s79 = sphi 0, %s78
    %s93 = sphi 0, %s79
    %s101 = sphi 0, %s103
    %s104 = sphi 0, %s101
    %s105 = sphi 0, %s104
    %s121 = sphi 0, %s105
  $region4: #{gnr_forward.2} parent=0 // loop_header_branch
    %12 = sbr.rel (%p10) target = $region8
  $region5: #{gnr_forward.2} parent=0 // loop_body
    %s14 = ssub.s32 %s9, 1
    %s15 = ssub.s32 %s9, 2
    %s22 = sadd.s32 1, %s17
    %p23 = scmp.ge.s32.totalorder %s22, 1
    %s24 = scalar_select %p23, 0, %s22
    %s25 = sadd.s32 1, %s16
    %s26 = scalar_select %p23, %s25, %s16
    %p27 = scmp.ge.s32.totalorder %s26, 2
    %s28 = scalar_select %p27, 0, %s26
    %s29 = ssub.s32 %s16, %s28
    %p30 = scmp.eq.s32.totalorder %s29, 0
    %s32 = sadd.s32 %s31, 1
    %s33 = scalar_select %p30, %s31, %s32
    %p36 = pneg %p30
    %p37 = scmp.eq.s32.totalorder %s9, 1
    %p38 = por %p36, %p37
    %p39 = scmp.ne.s32.totalorder %s31, %s34
    %p40 = scmp.eq.s32.totalorder %s9, 0
    %p41 = por %p39, %p40
    %p42 = scmp.ne.s32.totalorder %s31, %s34
    %p43 = scmp.eq.s32.totalorder %s14, 1
    %p44 = por %p42, %p43
    %p45 = scmp.ne.s32.totalorder %s34, %s35
    %p46 = scmp.eq.s32.totalorder %s14, 0
    %p47 = por %p45, %p46
    %p48 = scmp.ne.s32.totalorder %s34, %s35
    %p49 = scmp.eq.s32.totalorder %s15, 1
    %p50 = por %p48, %p49
    %p52 = scmp.ne.s32.totalorder %s35, %s51
    %p53 = scmp.eq.s32.totalorder %s15, 0
    %p54 = por %p52, %p53
    %s56 = sadd.s32 %s55, 1
    %p59 = scmp.eq.s32.totalorder %s9, 1
    %p60 = scmp.ne.s32.totalorder %s55, %s57
    %p61 = scmp.eq.s32.totalorder %s9, 0
    %p62 = por %p60, %p61
    %p63 = scmp.ne.s32.totalorder %s55, %s57
    %p64 = scmp.eq.s32.totalorder %s14, 1
    %p65 = por %p63, %p64
    %p66 = scmp.ne.s32.totalorder %s57, %s58
    %p67 = scmp.eq.s32.totalorder %s14, 0
    %p68 = por %p66, %p67
    %p69 = scmp.ne.s32.totalorder %s57, %s58
    %p70 = scmp.eq.s32.totalorder %s15, 1
    %p71 = por %p69, %p70
    %p73 = scmp.ne.s32.totalorder %s58, %s72
    %p74 = scmp.eq.s32.totalorder %s15, 0
    %p75 = por %p73, %p74
    %s77 = sadd.s32 %s76, 1
    %p80 = scmp.eq.s32.totalorder %s9, 1
    %p81 = scmp.ne.s32.totalorder %s76, %s78
    %p82 = scmp.eq.s32.totalorder %s9, 0
    %p83 = por %p81, %p82
    %p84 = scmp.ne.s32.totalorder %s76, %s78
    %p85 = scmp.eq.s32.totalorder %s14, 1
    %p86 = por %p84, %p85
    %p87 = scmp.ne.s32.totalorder %s78, %s79
    %p88 = scmp.eq.s32.totalorder %s14, 0
    %p89 = por %p87, %p88
    %p90 = scmp.ne.s32.totalorder %s78, %s79
    %p91 = scmp.eq.s32.totalorder %s15, 1
    %p92 = por %p90, %p91
    %p94 = scmp.ne.s32.totalorder %s79, %s93
    %p95 = scmp.eq.s32.totalorder %s15, 0
    %p96 = por %p94, %p95
    %s97 = ssub.s32 %s16, %s28
    %s98 = ssub.s32 %s17, %s24
    %s99 = sor.u32 %s97, %s98
    %p100 = scmp.eq.s32.totalorder %s99, 0
    %s102 = sadd.s32 %s101, 1
    %s103 = scalar_select %p100, %s101, %s102
    %p106 = pneg %p100
    %p107 = scmp.eq.s32.totalorder %s9, 1
    %p108 = por %p106, %p107
    %p109 = scmp.ne.s32.totalorder %s101, %s104
    %p110 = scmp.eq.s32.totalorder %s9, 0
    %p111 = por %p109, %p110
    %p112 = scmp.ne.s32.totalorder %s101, %s104
    %p113 = scmp.eq.s32.totalorder %s14, 1
    %p114 = por %p112, %p113
    %p115 = scmp.ne.s32.totalorder %s104, %s105
    %p116 = scmp.eq.s32.totalorder %s14, 0
    %p117 = por %p115, %p116
    %p118 = scmp.ne.s32.totalorder %s104, %s105
    %p119 = scmp.eq.s32.totalorder %s15, 1
    %p120 = por %p118, %p119
    %p122 = scmp.ne.s32.totalorder %s105, %s121
    %p123 = scmp.eq.s32.totalorder %s15, 0
    %p124 = por %p122, %p123
    %p125 = scmp.le.s32.totalorder 1, %s9
    %p126 = scmp.lt.s32.totalorder %s9, 3
    %p127 = pnand %p125, %p126
    %p128 = pneg %p127
    // Predicated region
    $region9: #{gnr_forward.2} parent=5 // pred_check
      _
    $region10: #{gnr_forward.2} parent=5 // pred_check_branch
      %130 = sbr.rel (%p127) target = $region12
    $region11: #{gnr_forward.2} parent=5 // pred_region
      %s131 = ssub.s32 %s9, 1
      // Predicated region
      $region13: #{gnr_forward.2} parent=11 // pred_check
        %p132 = pneg %p68
      $region14: #{gnr_forward.2} parent=11 // pred_check_branch
        %134 = sbr.rel (%p132) target = $region16
      $region15: #{gnr_forward.2} parent=11 // pred_region
        _
      $region16: #{gnr_forward.2} parent=11 // pred_fallthru
        _
      // Predicated region
      $region17: #{gnr_forward.2} parent=11 // pred_check
        %p135 = pneg %p89
      $region18: #{gnr_forward.2} parent=11 // pred_check_branch
        %137 = sbr.rel (%p135) target = $region20
      $region19: #{gnr_forward.2} parent=11 // pred_region
        _
      $region20: #{gnr_forward.2} parent=11 // pred_fallthru
        _
    $region12: #{gnr_forward.2} parent=5 // pred_fallthru
      _
    %p138 = scmp.lt.s32.totalorder %s9, 2
    // Predicated region
    $region21: #{gnr_forward.2} parent=5 // pred_check
      %p139 = pneg %p138
    $region22: #{gnr_forward.2} parent=5 // pred_check_branch
      %141 = sbr.rel (%p139) target = $region24
    $region23: #{gnr_forward.2} parent=5 // pred_region
      // Predicated region
      $region25: #{gnr_forward.2} parent=23 // pred_check
        %p142 = pneg %p41
      $region26: #{gnr_forward.2} parent=23 // pred_check_branch
        %144 = sbr.rel (%p142) target = $region28
      $region27: #{gnr_forward.2} parent=23 // pred_region
        %p145 = scmp.lt.s32.totalorder %s16, 1
        %s146 = scalar_select %p145, %s16, 1
        %s147 = smul.addr %s146, 54
        %s148 = smul.addr %s147, 8
        %s149 = scalar_lea.vmem %s0, %s148
      $region28: #{gnr_forward.2} parent=23 // pred_fallthru
        _
    $region24: #{gnr_forward.2} parent=5 // pred_fallthru
      _
    %p150 = scmp.le.s32.totalorder 1, %s9
    %p151 = scmp.lt.s32.totalorder %s9, 3
    %p152 = pnand %p150, %p151
    %p153 = pneg %p152
    // Predicated region
    $region29: #{gnr_forward.2} parent=5 // pred_check
      _
    $region30: #{gnr_forward.2} parent=5 // pred_check_branch
      %155 = sbr.rel (%p152) target = $region32
    $region31: #{gnr_forward.2} parent=5 // pred_region
      %s156 = ssub.s32 %s9, 1
      %p157 = scmp.lt.s32.totalorder %s18, 1
      %s158 = scalar_select %p157, %s18, 1
      %s159 = smul.addr %s158, 54
      %s160 = smul.addr %s159, 8
      %s161 = scalar_lea.vmem %s0, %s160
      %p162 = pneg %p47
      %p163 = pneg %p44
      %p164 = pneg %p68
      %p165 = pneg %p65
      %p166 = pneg %p89
      %p167 = pneg %p86
      %p168 = pneg %p117
      %p169 = pneg %p114
      %s170 = smul.u32 16, %s19
      %p171 = scmp.lt.s32.totalorder %s18, 1
      %s172 = scalar_select %p171, %s18, 1
      %p173 = scmp.lt.s32.totalorder %s170, 15
      %s174 = scalar_select %p173, %s170, 15
      %s175 = smul.addr %s174, 2
      %s176 = smul.addr %s172, 32
      %s177 = sadd.s32 %s175, %s176
      %s178 = smul.addr %s177, 4
      %s179 = scalar_lea.vmem %s3, %s178
      %p180 = scmp.lt.s32.totalorder %s18, 1
      %s181 = scalar_select %p180, %s18, 1
      %s182 = smul.addr %s181, 54
      %s183 = smul.addr %s182, 8
      %s184 = scalar_lea.vmem %s0, %s183
      %s185 = smul.u32 16, %s19
      %p186 = scmp.lt.s32.totalorder %s18, 1
      %s187 = scalar_select %p186, %s18, 1
      %p188 = scmp.lt.s32.totalorder %s185, 15
      %s189 = scalar_select %p188, %s185, 15
      %s190 = smul.addr %s189, 2
      %s191 = smul.addr %s187, 32
      %s192 = sadd.s32 %s190, %s191
      %s193 = smul.addr %s192, 4
      %s194 = scalar_lea.vmem %s3, %s193
      %s195 = smul.u32 16, %s19
      %s197 = smul.u32 %s19, 16
      %s198 = smul.u32 %s197, 24
      %s199 = scalar_lea.vmem %s184, %s198
      %v200 = vld [vmem:[%s199] sm:$0xff]
      %v201 = vld [vmem:[%s199 + $0x8] sm:$0xff]
      %v202 = vld [vmem:[%s199 + $0x10] sm:$0x3]
      %v203 = vld [vmem:[%s199 + $0x18] sm:$0xff]
      %v204 = vld [vmem:[%s199 + $0x20] sm:$0xff]
      %v205 = vld [vmem:[%s199 + $0x28] sm:$0x3]
      %v206 = vld [vmem:[%s199 + $0x30] sm:$0xff]
      %v207 = vld [vmem:[%s199 + $0x38] sm:$0xff]
      %v208 = vld [vmem:[%s199 + $0x40] sm:$0x3]
      %v209 = vld [vmem:[%s199 + $0x48] sm:$0xff]
      %v210 = vld [vmem:[%s199 + $0x50] sm:$0xff]
      %v211 = vld [vmem:[%s199 + $0x58] sm:$0x3]
      %v212 = vld [vmem:[%s199 + $0x60] sm:$0xff]
      %v213 = vld [vmem:[%s199 + $0x68] sm:$0xff]
      %v214 = vld [vmem:[%s199 + $0x70] sm:$0x3]
      %v215 = vld [vmem:[%s199 + $0x78] sm:$0xff]
      %v216 = vld [vmem:[%s199 + $0x80] sm:$0xff]
      %v217 = vld [vmem:[%s199 + $0x88] sm:$0x3]
      %v218 = vld [vmem:[%s199 + $0x90] sm:$0xff]
      %v219 = vld [vmem:[%s199 + $0x98] sm:$0xff]
      %v220 = vld [vmem:[%s199 + $0xa0] sm:$0x3]
      %v221 = vld [vmem:[%s199 + $0xa8] sm:$0xff]
      %v222 = vld [vmem:[%s199 + $0xb0] sm:$0xff]
      %v223 = vld [vmem:[%s199 + $0xb8] sm:$0x3]
      %v224 = vld [vmem:[%s199 + $0xc0] sm:$0xff]
      %v225 = vld [vmem:[%s199 + $0xc8] sm:$0xff]
      %v226 = vld [vmem:[%s199 + $0xd0] sm:$0x3]
      %v227 = vld [vmem:[%s199 + $0xd8] sm:$0xff]
      %v228 = vld [vmem:[%s199 + $0xe0] sm:$0xff]
      %v229 = vld [vmem:[%s199 + $0xe8] sm:$0x3]
      %v230 = vld [vmem:[%s199 + $0xf0] sm:$0xff]
      %v231 = vld [vmem:[%s199 + $0xf8] sm:$0xff]
      %v232 = vld [vmem:[%s199 + $0x100] sm:$0x3]
      %v233 = vld [vmem:[%s199 + $0x108] sm:$0xff]
      %v234 = vld [vmem:[%s199 + $0x110] sm:$0xff]
      %v235 = vld [vmem:[%s199 + $0x118] sm:$0x3]
      %v236 = vld [vmem:[%s199 + $0x120] sm:$0xff]
      %v237 = vld [vmem:[%s199 + $0x128] sm:$0xff]
      %v238 = vld [vmem:[%s199 + $0x130] sm:$0x3]
      %v239 = vld [vmem:[%s199 + $0x138] sm:$0xff]
      %v240 = vld [vmem:[%s199 + $0x140] sm:$0xff]
      %v241 = vld [vmem:[%s199 + $0x148] sm:$0x3]
      %v242 = vld [vmem:[%s199 + $0x150] sm:$0xff]
      %v243 = vld [vmem:[%s199 + $0x158] sm:$0xff]
      %v244 = vld [vmem:[%s199 + $0x160] sm:$0x3]
      %v245 = vld [vmem:[%s199 + $0x168] sm:$0xff]
      %v246 = vld [vmem:[%s199 + $0x170] sm:$0xff]
      %v247 = vld [vmem:[%s199 + $0x178] sm:$0x3]
      %v248 = vld [vmem:[%s199 + $0x180] sm:$0xff]
      %v249 = vld [vmem:[%s199 + $0x188] sm:$0xff]
      %v250 = vld [vmem:[%s199 + $0x190] sm:$0x3]
      %v251 = vld [vmem:[%s199 + $0x198] sm:$0xff]
      %v252 = vld [vmem:[%s199 + $0x1a0] sm:$0xff]
      %v253 = vld [vmem:[%s199 + $0x1a8] sm:$0x3]
      %v254 = vpack.c.bf16 %v201, %v200
      %v255 = vpack.c.bf16 %v202, %v202
      %v256 = vpack.c.bf16 %v204, %v203
      %v257 = vpack.c.bf16 %v205, %v205
      %v258 = vpack.c.bf16 %v207, %v206
      %v259 = vpack.c.bf16 %v208, %v208
      %v260 = vpack.c.bf16 %v210, %v209
      %v261 = vpack.c.bf16 %v211, %v211
      %v262 = vpack.c.bf16 %v213, %v212
      %v263 = vpack.c.bf16 %v214, %v214
      %v264 = vpack.c.bf16 %v216, %v215
      %v265 = vpack.c.bf16 %v217, %v217
      %v266 = vpack.c.bf16 %v219, %v218
      %v267 = vpack.c.bf16 %v220, %v220
      %v268 = vpack.c.bf16 %v222, %v221
      %v269 = vpack.c.bf16 %v223, %v223
      %v270 = vpack.c.bf16 %v225, %v224
      %v271 = vpack.c.bf16 %v226, %v226
      %v272 = vpack.c.bf16 %v228, %v227
      %v273 = vpack.c.bf16 %v229, %v229
      %v274 = vpack.c.bf16 %v231, %v230
      %v275 = vpack.c.bf16 %v232, %v232
      %v276 = vpack.c.bf16 %v234, %v233
      %v277 = vpack.c.bf16 %v235, %v235
      %v278 = vpack.c.bf16 %v237, %v236
      %v279 = vpack.c.bf16 %v238, %v238
      %v280 = vpack.c.bf16 %v240, %v239
      %v281 = vpack.c.bf16 %v241, %v241
      %v282 = vpack.c.bf16 %v243, %v242
      %v283 = vpack.c.bf16 %v244, %v244
      %v284 = vpack.c.bf16 %v246, %v245
      %v285 = vpack.c.bf16 %v247, %v247
      %v286 = vpack.c.bf16 %v249, %v248
      %v287 = vpack.c.bf16 %v250, %v250
      %v288 = vpack.c.bf16 %v252, %v251
      %v289 = vpack.c.bf16 %v253, %v253
      %vm290 = vsmask.f32 7424
      %v292 = vshrl.u32 %v254, 16
      %v294 = vshll.u32 %v254, 16
      %v296 = vrot.slane %v294, 1
      %v297 = vor.u32 %v292, %v296
      %v299 = vshll.u32 %v255, 16
      %v301 = vrot.slane %v299, 1
      %v302 = vsel %vm290, %v297, %v301
      %v304 = vshrl.u32 %v256, 16
      %v306 = vshll.u32 %v256, 16
      %v308 = vrot.slane %v306, 1
      %v309 = vor.u32 %v304, %v308
      %v311 = vshll.u32 %v257, 16
      %v313 = vrot.slane %v311, 1
      %v314 = vsel %vm290, %v309, %v313
      %v316 = vshrl.u32 %v258, 16
      %v318 = vshll.u32 %v258, 16
      %v320 = vrot.slane %v318, 1
      %v321 = vor.u32 %v316, %v320
      %v323 = vshll.u32 %v259, 16
      %v325 = vrot.slane %v323, 1
      %v326 = vsel %vm290, %v321, %v325
      %v328 = vshrl.u32 %v260, 16
      %v330 = vshll.u32 %v260, 16
      %v332 = vrot.slane %v330, 1
      %v333 = vor.u32 %v328, %v332
      %v335 = vshll.u32 %v261, 16
      %v337 = vrot.slane %v335, 1
      %v338 = vsel %vm290, %v333, %v337
      %v340 = vshrl.u32 %v262, 16
      %v342 = vshll.u32 %v262, 16
      %v344 = vrot.slane %v342, 1
      %v345 = vor.u32 %v340, %v344
      %v347 = vshll.u32 %v263, 16
      %v349 = vrot.slane %v347, 1
      %v350 = vsel %vm290, %v345, %v349
      %v352 = vshrl.u32 %v264, 16
      %v354 = vshll.u32 %v264, 16
      %v356 = vrot.slane %v354, 1
      %v357 = vor.u32 %v352, %v356
      %v359 = vshll.u32 %v265, 16
      %v361 = vrot.slane %v359, 1
      %v362 = vsel %vm290, %v357, %v361
      %v364 = vshrl.u32 %v266, 16
      %v366 = vshll.u32 %v266, 16
      %v368 = vrot.slane %v366, 1
      %v369 = vor.u32 %v364, %v368
      %v371 = vshll.u32 %v267, 16
      %v373 = vrot.slane %v371, 1
      %v374 = vsel %vm290, %v369, %v373
      %v376 = vshrl.u32 %v268, 16
      %v378 = vshll.u32 %v268, 16
      %v380 = vrot.slane %v378, 1
      %v381 = vor.u32 %v376, %v380
      %v383 = vshll.u32 %v269, 16
      %v385 = vrot.slane %v383, 1
      %v386 = vsel %vm290, %v381, %v385
      %v388 = vshrl.u32 %v270, 16
      %v390 = vshll.u32 %v270, 16
      %v392 = vrot.slane %v390, 1
      %v393 = vor.u32 %v388, %v392
      %v395 = vshll.u32 %v271, 16
      %v397 = vrot.slane %v395, 1
      %v398 = vsel %vm290, %v393, %v397
      %v400 = vshrl.u32 %v272, 16
      %v402 = vshll.u32 %v272, 16
      %v404 = vrot.slane %v402, 1
      %v405 = vor.u32 %v400, %v404
      %v407 = vshll.u32 %v273, 16
      %v409 = vrot.slane %v407, 1
      %v410 = vsel %vm290, %v405, %v409
      %v412 = vshrl.u32 %v274, 16
      %v414 = vshll.u32 %v274, 16
      %v416 = vrot.slane %v414, 1
      %v417 = vor.u32 %v412, %v416
      %v419 = vshll.u32 %v275, 16
      %v421 = vrot.slane %v419, 1
      %v422 = vsel %vm290, %v417, %v421
      %v424 = vshrl.u32 %v276, 16
      %v426 = vshll.u32 %v276, 16
      %v428 = vrot.slane %v426, 1
      %v429 = vor.u32 %v424, %v428
      %v431 = vshll.u32 %v277, 16
      %v433 = vrot.slane %v431, 1
      %v434 = vsel %vm290, %v429, %v433
      %v436 = vshrl.u32 %v278, 16
      %v438 = vshll.u32 %v278, 16
      %v440 = vrot.slane %v438, 1
      %v441 = vor.u32 %v436, %v440
      %v443 = vshll.u32 %v279, 16
      %v445 = vrot.slane %v443, 1
      %v446 = vsel %vm290, %v441, %v445
      %v448 = vshrl.u32 %v280, 16
      %v450 = vshll.u32 %v280, 16
      %v452 = vrot.slane %v450, 1
      %v453 = vor.u32 %v448, %v452
      %v455 = vshll.u32 %v281, 16
      %v457 = vrot.slane %v455, 1
      %v458 = vsel %vm290, %v453, %v457
      %v460 = vshrl.u32 %v282, 16
      %v462 = vshll.u32 %v282, 16
      %v464 = vrot.slane %v462, 1
      %v465 = vor.u32 %v460, %v464
      %v467 = vshll.u32 %v283, 16
      %v469 = vrot.slane %v467, 1
      %v470 = vsel %vm290, %v465, %v469
      %v472 = vshrl.u32 %v284, 16
      %v474 = vshll.u32 %v284, 16
      %v476 = vrot.slane %v474, 1
      %v477 = vor.u32 %v472, %v476
      %v479 = vshll.u32 %v285, 16
      %v481 = vrot.slane %v479, 1
      %v482 = vsel %vm290, %v477, %v481
      %483 = vrot.lane.b32.xlu0 %v302, 3
      %v484 = vpop.permute.xlu0 %483
      %485 = vrot.lane.b32.xlu0 %v314, 3
      %v486 = vpop.permute.xlu0 %485
      %487 = vrot.lane.b32.xlu0 %v326, 3
      %v488 = vpop.permute.xlu0 %487
      %489 = vrot.lane.b32.xlu0 %v338, 3
      %v490 = vpop.permute.xlu0 %489
      %491 = vrot.lane.b32.xlu0 %v350, 3
      %v492 = vpop.permute.xlu0 %491
      %493 = vrot.lane.b32.xlu0 %v362, 3
      %v494 = vpop.permute.xlu0 %493
      %495 = vrot.lane.b32.xlu0 %v374, 3
      %v496 = vpop.permute.xlu0 %495
      %497 = vrot.lane.b32.xlu0 %v386, 3
      %v498 = vpop.permute.xlu0 %497
      %499 = vrot.lane.b32.xlu0 %v398, 3
      %v500 = vpop.permute.xlu0 %499
      %501 = vrot.lane.b32.xlu0 %v410, 3
      %v502 = vpop.permute.xlu0 %501
      %503 = vrot.lane.b32.xlu0 %v422, 3
      %v504 = vpop.permute.xlu0 %503
      %505 = vrot.lane.b32.xlu0 %v434, 3
      %v506 = vpop.permute.xlu0 %505
      %507 = vrot.lane.b32.xlu0 %v446, 3
      %v508 = vpop.permute.xlu0 %507
      %509 = vrot.lane.b32.xlu0 %v458, 3
      %v510 = vpop.permute.xlu0 %509
      %511 = vrot.lane.b32.xlu0 %v470, 3
      %v512 = vpop.permute.xlu0 %511
      %513 = vrot.lane.b32.xlu0 %v482, 3
      %v514 = vpop.permute.xlu0 %513
      %vm547 = vcmask 1046528
      %v548 = vrot.slane %v254, 1
      %v549 = vrot.slane %v255, 1
      %v550 = vsel %vm547, %v548, %v549
      %v551 = vrot.slane %v256, 1
      %v552 = vrot.slane %v257, 1
      %v553 = vsel %vm547, %v551, %v552
      %v554 = vrot.slane %v258, 1
      %v555 = vrot.slane %v259, 1
      %v556 = vsel %vm547, %v554, %v555
      %v557 = vrot.slane %v260, 1
      %v558 = vrot.slane %v261, 1
      %v559 = vsel %vm547, %v557, %v558
      %v560 = vrot.slane %v262, 1
      %v561 = vrot.slane %v263, 1
      %v562 = vsel %vm547, %v560, %v561
      %v563 = vrot.slane %v264, 1
      %v564 = vrot.slane %v265, 1
      %v565 = vsel %vm547, %v563, %v564
      %v566 = vrot.slane %v266, 1
      %v567 = vrot.slane %v267, 1
      %v568 = vsel %vm547, %v566, %v567
      %v569 = vrot.slane %v268, 1
      %v570 = vrot.slane %v269, 1
      %v571 = vsel %vm547, %v569, %v570
      %v572 = vrot.slane %v270, 1
      %v573 = vrot.slane %v271, 1
      %v574 = vsel %vm547, %v572, %v573
      %v575 = vrot.slane %v272, 1
      %v576 = vrot.slane %v273, 1
      %v577 = vsel %vm547, %v575, %v576
      %v578 = vrot.slane %v274, 1
      %v579 = vrot.slane %v275, 1
      %v580 = vsel %vm547, %v578, %v579
      %v581 = vrot.slane %v276, 1
      %v582 = vrot.slane %v277, 1
      %v583 = vsel %vm547, %v581, %v582
      %v584 = vrot.slane %v278, 1
      %v585 = vrot.slane %v279, 1
      %v586 = vsel %vm547, %v584, %v585
      %v587 = vrot.slane %v280, 1
      %v588 = vrot.slane %v281, 1
      %v589 = vsel %vm547, %v587, %v588
      %v590 = vrot.slane %v282, 1
      %v591 = vrot.slane %v283, 1
      %v592 = vsel %vm547, %v590, %v591
      %v593 = vrot.slane %v284, 1
      %v594 = vrot.slane %v285, 1
      %v595 = vsel %vm547, %v593, %v594
      %596 = vrot.lane.b32.xlu0 %v550, 6
      %v597 = vpop.permute.xlu0 %596
      %598 = vrot.lane.b32.xlu0 %v553, 6
      %v599 = vpop.permute.xlu0 %598
      %600 = vrot.lane.b32.xlu0 %v556, 6
      %v601 = vpop.permute.xlu0 %600
      %602 = vrot.lane.b32.xlu0 %v559, 6
      %v603 = vpop.permute.xlu0 %602
      %604 = vrot.lane.b32.xlu0 %v562, 6
      %v605 = vpop.permute.xlu0 %604
      %606 = vrot.lane.b32.xlu0 %v565, 6
      %v607 = vpop.permute.xlu0 %606
      %608 = vrot.lane.b32.xlu0 %v568, 6
      %v609 = vpop.permute.xlu0 %608
      %610 = vrot.lane.b32.xlu0 %v571, 6
      %v611 = vpop.permute.xlu0 %610
      %612 = vrot.lane.b32.xlu0 %v574, 6
      %v613 = vpop.permute.xlu0 %612
      %614 = vrot.lane.b32.xlu0 %v577, 6
      %v615 = vpop.permute.xlu0 %614
      %616 = vrot.lane.b32.xlu0 %v580, 6
      %v617 = vpop.permute.xlu0 %616
      %618 = vrot.lane.b32.xlu0 %v583, 6
      %v619 = vpop.permute.xlu0 %618
      %620 = vrot.lane.b32.xlu0 %v586, 6
      %v621 = vpop.permute.xlu0 %620
      %622 = vrot.lane.b32.xlu0 %v589, 6
      %v623 = vpop.permute.xlu0 %622
      %624 = vrot.lane.b32.xlu0 %v592, 6
      %v625 = vpop.permute.xlu0 %624
      %626 = vrot.lane.b32.xlu0 %v595, 6
      %v627 = vpop.permute.xlu0 %626
      %629 = vrot.lane.b32.xlu0 %v256, 9
      %v630 = vpop.permute.xlu0 %629
      %631 = vrot.lane.b32.xlu0 %v258, 9
      %v632 = vpop.permute.xlu0 %631
      %633 = vrot.lane.b32.xlu0 %v260, 9
      %v634 = vpop.permute.xlu0 %633
      %635 = vrot.lane.b32.xlu0 %v262, 9
      %v636 = vpop.permute.xlu0 %635
      %637 = vrot.lane.b32.xlu0 %v264, 9
      %v638 = vpop.permute.xlu0 %637
      %639 = vrot.lane.b32.xlu0 %v266, 9
      %v640 = vpop.permute.xlu0 %639
      %641 = vrot.lane.b32.xlu0 %v268, 9
      %v642 = vpop.permute.xlu0 %641
      %643 = vrot.lane.b32.xlu0 %v270, 9
      %v644 = vpop.permute.xlu0 %643
      %645 = vrot.lane.b32.xlu0 %v272, 9
      %v646 = vpop.permute.xlu0 %645
      %647 = vrot.lane.b32.xlu0 %v274, 9
      %v648 = vpop.permute.xlu0 %647
      %649 = vrot.lane.b32.xlu0 %v276, 9
      %v650 = vpop.permute.xlu0 %649
      %651 = vrot.lane.b32.xlu0 %v278, 9
      %v652 = vpop.permute.xlu0 %651
      %653 = vrot.lane.b32.xlu0 %v280, 9
      %v654 = vpop.permute.xlu0 %653
      %655 = vrot.lane.b32.xlu0 %v282, 9
      %v656 = vpop.permute.xlu0 %655
      %657 = vrot.lane.b32.xlu0 %v284, 9
      %v658 = vpop.permute.xlu0 %657
      %659 = vrot.lane.b32.xlu0 %v286, 9
      %v660 = vpop.permute.xlu0 %659
      %v662 = vshrl.u32 %v286, 16
      %v664 = vshll.u32 %v286, 16
      %v666 = vrot.slane %v664, 1
      %v667 = vor.u32 %v662, %v666
      %v669 = vshll.u32 %v287, 16
      %v671 = vrot.slane %v669, 1
      %v672 = vsel %vm290, %v667, %v671
      %673 = vrot.lane.b32.xlu0 %v314, 12
      %v674 = vpop.permute.xlu0 %673
      %675 = vrot.lane.b32.xlu0 %v326, 12
      %v676 = vpop.permute.xlu0 %675
      %677 = vrot.lane.b32.xlu0 %v338, 12
      %v678 = vpop.permute.xlu0 %677
      %679 = vrot.lane.b32.xlu0 %v350, 12
      %v680 = vpop.permute.xlu0 %679
      %681 = vrot.lane.b32.xlu0 %v362, 12
      %v682 = vpop.permute.xlu0 %681
      %683 = vrot.lane.b32.xlu0 %v374, 12
      %v684 = vpop.permute.xlu0 %683
      %685 = vrot.lane.b32.xlu0 %v386, 12
      %v686 = vpop.permute.xlu0 %685
      %687 = vrot.lane.b32.xlu0 %v398, 12
      %v688 = vpop.permute.xlu0 %687
      %689 = vrot.lane.b32.xlu0 %v410, 12
      %v690 = vpop.permute.xlu0 %689
      %691 = vrot.lane.b32.xlu0 %v422, 12
      %v692 = vpop.permute.xlu0 %691
      %693 = vrot.lane.b32.xlu0 %v434, 12
      %v694 = vpop.permute.xlu0 %693
      %695 = vrot.lane.b32.xlu0 %v446, 12
      %v696 = vpop.permute.xlu0 %695
      %697 = vrot.lane.b32.xlu0 %v458, 12
      %v698 = vpop.permute.xlu0 %697
      %699 = vrot.lane.b32.xlu0 %v470, 12
      %v700 = vpop.permute.xlu0 %699
      %701 = vrot.lane.b32.xlu0 %v482, 12
      %v702 = vpop.permute.xlu0 %701
      %703 = vrot.lane.b32.xlu0 %v672, 12
      %v704 = vpop.permute.xlu0 %703
      %v706 = vrot.slane %v286, 1
      %v707 = vrot.slane %v287, 1
      %v708 = vsel %vm547, %v706, %v707
      %709 = vrot.lane.b32.xlu0 %v553, 15
      %v710 = vpop.permute.xlu0 %709
      %711 = vrot.lane.b32.xlu0 %v556, 15
      %v712 = vpop.permute.xlu0 %711
      %713 = vrot.lane.b32.xlu0 %v559, 15
      %v714 = vpop.permute.xlu0 %713
      %715 = vrot.lane.b32.xlu0 %v562, 15
      %v716 = vpop.permute.xlu0 %715
      %717 = vrot.lane.b32.xlu0 %v565, 15
      %v718 = vpop.permute.xlu0 %717
      %719 = vrot.lane.b32.xlu0 %v568, 15
      %v720 = vpop.permute.xlu0 %719
      %721 = vrot.lane.b32.xlu0 %v571, 15
      %v722 = vpop.permute.xlu0 %721
      %723 = vrot.lane.b32.xlu0 %v574, 15
      %v724 = vpop.permute.xlu0 %723
      %725 = vrot.lane.b32.xlu0 %v577, 15
      %v726 = vpop.permute.xlu0 %725
      %727 = vrot.lane.b32.xlu0 %v580, 15
      %v728 = vpop.permute.xlu0 %727
      %729 = vrot.lane.b32.xlu0 %v583, 15
      %v730 = vpop.permute.xlu0 %729
      %731 = vrot.lane.b32.xlu0 %v586, 15
      %v732 = vpop.permute.xlu0 %731
      %733 = vrot.lane.b32.xlu0 %v589, 15
      %v734 = vpop.permute.xlu0 %733
      %735 = vrot.lane.b32.xlu0 %v592, 15
      %v736 = vpop.permute.xlu0 %735
      %737 = vrot.lane.b32.xlu0 %v595, 15
      %v738 = vpop.permute.xlu0 %737
      %739 = vrot.lane.b32.xlu0 %v708, 15
      %v740 = vpop.permute.xlu0 %739
      %742 = vrot.lane.b32.xlu0 %v258, 18
      %v743 = vpop.permute.xlu0 %742
      %744 = vrot.lane.b32.xlu0 %v260, 18
      %v745 = vpop.permute.xlu0 %744
      %746 = vrot.lane.b32.xlu0 %v262, 18
      %v747 = vpop.permute.xlu0 %746
      %748 = vrot.lane.b32.xlu0 %v264, 18
      %v749 = vpop.permute.xlu0 %748
      %750 = vrot.lane.b32.xlu0 %v266, 18
      %v751 = vpop.permute.xlu0 %750
      %752 = vrot.lane.b32.xlu0 %v268, 18
      %v753 = vpop.permute.xlu0 %752
      %754 = vrot.lane.b32.xlu0 %v270, 18
      %v755 = vpop.permute.xlu0 %754
      %756 = vrot.lane.b32.xlu0 %v272, 18
      %v757 = vpop.permute.xlu0 %756
      %758 = vrot.lane.b32.xlu0 %v274, 18
      %v759 = vpop.permute.xlu0 %758
      %760 = vrot.lane.b32.xlu0 %v276, 18
      %v761 = vpop.permute.xlu0 %760
      %762 = vrot.lane.b32.xlu0 %v278, 18
      %v763 = vpop.permute.xlu0 %762
      %764 = vrot.lane.b32.xlu0 %v280, 18
      %v765 = vpop.permute.xlu0 %764
      %766 = vrot.lane.b32.xlu0 %v282, 18
      %v767 = vpop.permute.xlu0 %766
      %768 = vrot.lane.b32.xlu0 %v284, 18
      %v769 = vpop.permute.xlu0 %768
      %770 = vrot.lane.b32.xlu0 %v286, 18
      %v771 = vpop.permute.xlu0 %770
      %772 = vrot.lane.b32.xlu0 %v288, 18
      %v773 = vpop.permute.xlu0 %772
      %v775 = vshrl.u32 %v288, 16
      %v777 = vshll.u32 %v288, 16
      %v779 = vrot.slane %v777, 1
      %v780 = vor.u32 %v775, %v779
      %v782 = vshll.u32 %v289, 16
      %v784 = vrot.slane %v782, 1
      %v785 = vsel %vm290, %v780, %v784
      %786 = vrot.lane.b32.xlu0 %v326, 21
      %v787 = vpop.permute.xlu0 %786
      %788 = vrot.lane.b32.xlu0 %v338, 21
      %v789 = vpop.permute.xlu0 %788
      %790 = vrot.lane.b32.xlu0 %v350, 21
      %v791 = vpop.permute.xlu0 %790
      %792 = vrot.lane.b32.xlu0 %v362, 21
      %v793 = vpop.permute.xlu0 %792
      %794 = vrot.lane.b32.xlu0 %v374, 21
      %v795 = vpop.permute.xlu0 %794
      %796 = vrot.lane.b32.xlu0 %v386, 21
      %v797 = vpop.permute.xlu0 %796
      %798 = vrot.lane.b32.xlu0 %v398, 21
      %v799 = vpop.permute.xlu0 %798
      %800 = vrot.lane.b32.xlu0 %v410, 21
      %v801 = vpop.permute.xlu0 %800
      %802 = vrot.lane.b32.xlu0 %v422, 21
      %v803 = vpop.permute.xlu0 %802
      %804 = vrot.lane.b32.xlu0 %v434, 21
      %v805 = vpop.permute.xlu0 %804
      %806 = vrot.lane.b32.xlu0 %v446, 21
      %v807 = vpop.permute.xlu0 %806
      %808 = vrot.lane.b32.xlu0 %v458, 21
      %v809 = vpop.permute.xlu0 %808
      %810 = vrot.lane.b32.xlu0 %v470, 21
      %v811 = vpop.permute.xlu0 %810
      %812 = vrot.lane.b32.xlu0 %v482, 21
      %v813 = vpop.permute.xlu0 %812
      %814 = vrot.lane.b32.xlu0 %v672, 21
      %v815 = vpop.permute.xlu0 %814
      %816 = vrot.lane.b32.xlu0 %v785, 21
      %v817 = vpop.permute.xlu0 %816
      %v819 = vrot.slane %v288, 1
      %v820 = vrot.slane %v289, 1
      %v821 = vsel %vm547, %v819, %v820
      %822 = vrot.lane.b32.xlu0 %v556, 24
      %v823 = vpop.permute.xlu0 %822
      %824 = vrot.lane.b32.xlu0 %v559, 24
      %v825 = vpop.permute.xlu0 %824
      %826 = vrot.lane.b32.xlu0 %v562, 24
      %v827 = vpop.permute.xlu0 %826
      %828 = vrot.lane.b32.xlu0 %v565, 24
      %v829 = vpop.permute.xlu0 %828
      %830 = vrot.lane.b32.xlu0 %v568, 24
      %v831 = vpop.permute.xlu0 %830
      %832 = vrot.lane.b32.xlu0 %v571, 24
      %v833 = vpop.permute.xlu0 %832
      %834 = vrot.lane.b32.xlu0 %v574, 24
      %v835 = vpop.permute.xlu0 %834
      %836 = vrot.lane.b32.xlu0 %v577, 24
      %v837 = vpop.permute.xlu0 %836
      %838 = vrot.lane.b32.xlu0 %v580, 24
      %v839 = vpop.permute.xlu0 %838
      %840 = vrot.lane.b32.xlu0 %v583, 24
      %v841 = vpop.permute.xlu0 %840
      %842 = vrot.lane.b32.xlu0 %v586, 24
      %v843 = vpop.permute.xlu0 %842
      %844 = vrot.lane.b32.xlu0 %v589, 24
      %v845 = vpop.permute.xlu0 %844
      %846 = vrot.lane.b32.xlu0 %v592, 24
      %v847 = vpop.permute.xlu0 %846
      %848 = vrot.lane.b32.xlu0 %v595, 24
      %v849 = vpop.permute.xlu0 %848
      %850 = vrot.lane.b32.xlu0 %v708, 24
      %v851 = vpop.permute.xlu0 %850
      %852 = vrot.lane.b32.xlu0 %v821, 24
      %v853 = vpop.permute.xlu0 %852
      %vm854 = vcmask 23552
      %v856 = vsel %vm854, %v254, %v484
      %v858 = vsel %vm854, %v256, %v486
      %v860 = vsel %vm854, %v258, %v488
      %v862 = vsel %vm854, %v260, %v490
      %v864 = vsel %vm854, %v262, %v492
      %v866 = vsel %vm854, %v264, %v494
      %v868 = vsel %vm854, %v266, %v496
      %v870 = vsel %vm854, %v268, %v498
      %v872 = vsel %vm854, %v270, %v500
      %v874 = vsel %vm854, %v272, %v502
      %v876 = vsel %vm854, %v274, %v504
      %v878 = vsel %vm854, %v276, %v506
      %v880 = vsel %vm854, %v278, %v508
      %v882 = vsel %vm854, %v280, %v510
      %v884 = vsel %vm854, %v282, %v512
      %v886 = vsel %vm854, %v284, %v514
      %vm887 = vcmask 48128
      %v889 = vsel %vm887, %v856, %v597
      %v891 = vsel %vm887, %v858, %v599
      %v893 = vsel %vm887, %v860, %v601
      %v895 = vsel %vm887, %v862, %v603
      %v897 = vsel %vm887, %v864, %v605
      %v899 = vsel %vm887, %v866, %v607
      %v901 = vsel %vm887, %v868, %v609
      %v903 = vsel %vm887, %v870, %v611
      %v905 = vsel %vm887, %v872, %v613
      %v907 = vsel %vm887, %v874, %v615
      %v909 = vsel %vm887, %v876, %v617
      %v911 = vsel %vm887, %v878, %v619
      %v913 = vsel %vm887, %v880, %v621
      %v915 = vsel %vm887, %v882, %v623
      %v917 = vsel %vm887, %v884, %v625
      %v919 = vsel %vm887, %v886, %v627
      %vm920 = vcmask 72704
      %v922 = vsel %vm920, %v889, %v630
      %v924 = vsel %vm920, %v891, %v632
      %v926 = vsel %vm920, %v893, %v634
      %v928 = vsel %vm920, %v895, %v636
      %v930 = vsel %vm920, %v897, %v638
      %v932 = vsel %vm920, %v899, %v640
      %v934 = vsel %vm920, %v901, %v642
      %v936 = vsel %vm920, %v903, %v644
      %v938 = vsel %vm920, %v905, %v646
      %v940 = vsel %vm920, %v907, %v648
      %v942 = vsel %vm920, %v909, %v650
      %v944 = vsel %vm920, %v911, %v652
      %v946 = vsel %vm920, %v913, %v654
      %v948 = vsel %vm920, %v915, %v656
      %v950 = vsel %vm920, %v917, %v658
      %v952 = vsel %vm920, %v919, %v660
      %vm953 = vcmask 97280
      %v955 = vsel %vm953, %v922, %v674
      %v957 = vsel %vm953, %v924, %v676
      %v959 = vsel %vm953, %v926, %v678
      %v961 = vsel %vm953, %v928, %v680
      %v963 = vsel %vm953, %v930, %v682
      %v965 = vsel %vm953, %v932, %v684
      %v967 = vsel %vm953, %v934, %v686
      %v969 = vsel %vm953, %v936, %v688
      %v971 = vsel %vm953, %v938, %v690
      %v973 = vsel %vm953, %v940, %v692
      %v975 = vsel %vm953, %v942, %v694
      %v977 = vsel %vm953, %v944, %v696
      %v979 = vsel %vm953, %v946, %v698
      %v981 = vsel %vm953, %v948, %v700
      %v983 = vsel %vm953, %v950, %v702
      %v985 = vsel %vm953, %v952, %v704
      %vm986 = vcmask 121856
      %v988 = vsel %vm986, %v955, %v710
      %v990 = vsel %vm986, %v957, %v712
      %v992 = vsel %vm986, %v959, %v714
      %v994 = vsel %vm986, %v961, %v716
      %v996 = vsel %vm986, %v963, %v718
      %v998 = vsel %vm986, %v965, %v720
      %v1000 = vsel %vm986, %v967, %v722
      %v1002 = vsel %vm986, %v969, %v724
      %v1004 = vsel %vm986, %v971, %v726
      %v1006 = vsel %vm986, %v973, %v728
      %v1008 = vsel %vm986, %v975, %v730
      %v1010 = vsel %vm986, %v977, %v732
      %v1012 = vsel %vm986, %v979, %v734
      %v1014 = vsel %vm986, %v981, %v736
      %v1016 = vsel %vm986, %v983, %v738
      %v1018 = vsel %vm986, %v985, %v740
      %vm1019 = vcmask 146432
      %v1021 = vsel %vm1019, %v988, %v743
      %v1023 = vsel %vm1019, %v990, %v745
      %v1025 = vsel %vm1019, %v992, %v747
      %v1027 = vsel %vm1019, %v994, %v749
      %v1029 = vsel %vm1019, %v996, %v751
      %v1031 = vsel %vm1019, %v998, %v753
      %v1033 = vsel %vm1019, %v1000, %v755
      %v1035 = vsel %vm1019, %v1002, %v757
      %v1037 = vsel %vm1019, %v1004, %v759
      %v1039 = vsel %vm1019, %v1006, %v761
      %v1041 = vsel %vm1019, %v1008, %v763
      %v1043 = vsel %vm1019, %v1010, %v765
      %v1045 = vsel %vm1019, %v1012, %v767
      %v1047 = vsel %vm1019, %v1014, %v769
      %v1049 = vsel %vm1019, %v1016, %v771
      %v1051 = vsel %vm1019, %v1018, %v773
      %vm1052 = vcmask 171008
      %v1054 = vsel %vm1052, %v1021, %v787
      %v1056 = vsel %vm1052, %v1023, %v789
      %v1058 = vsel %vm1052, %v1025, %v791
      %v1060 = vsel %vm1052, %v1027, %v793
      %v1062 = vsel %vm1052, %v1029, %v795
      %v1064 = vsel %vm1052, %v1031, %v797
      %v1066 = vsel %vm1052, %v1033, %v799
      %v1068 = vsel %vm1052, %v1035, %v801
      %v1070 = vsel %vm1052, %v1037, %v803
      %v1072 = vsel %vm1052, %v1039, %v805
      %v1074 = vsel %vm1052, %v1041, %v807
      %v1076 = vsel %vm1052, %v1043, %v809
      %v1078 = vsel %vm1052, %v1045, %v811
      %v1080 = vsel %vm1052, %v1047, %v813
      %v1082 = vsel %vm1052, %v1049, %v815
      %v1084 = vsel %vm1052, %v1051, %v817
      %vm1085 = vcmask 195584
      %v1087 = vsel %vm1085, %v1054, %v823
      %v1089 = vsel %vm1085, %v1056, %v825
      %v1091 = vsel %vm1085, %v1058, %v827
      %v1093 = vsel %vm1085, %v1060, %v829
      %v1095 = vsel %vm1085, %v1062, %v831
      %v1097 = vsel %vm1085, %v1064, %v833
      %v1099 = vsel %vm1085, %v1066, %v835
      %v1101 = vsel %vm1085, %v1068, %v837
      %v1103 = vsel %vm1085, %v1070, %v839
      %v1105 = vsel %vm1085, %v1072, %v841
      %v1107 = vsel %vm1085, %v1074, %v843
      %v1109 = vsel %vm1085, %v1076, %v845
      %v1111 = vsel %vm1085, %v1078, %v847
      %v1113 = vsel %vm1085, %v1080, %v849
      %v1115 = vsel %vm1085, %v1082, %v851
      %v1117 = vsel %vm1085, %v1084, %v853
      %vm1118 = vcmask 220160
      %v1120 = vsel %vm1118, %v1087, 0
      %v1121 = vsel %vm1118, %v1089, 0
      %v1122 = vsel %vm1118, %v1091, 0
      %v1123 = vsel %vm1118, %v1093, 0
      %v1124 = vsel %vm1118, %v1095, 0
      %v1125 = vsel %vm1118, %v1097, 0
      %v1126 = vsel %vm1118, %v1099, 0
      %v1127 = vsel %vm1118, %v1101, 0
      %v1128 = vsel %vm1118, %v1103, 0
      %v1129 = vsel %vm1118, %v1105, 0
      %v1130 = vsel %vm1118, %v1107, 0
      %v1131 = vsel %vm1118, %v1109, 0
      %v1132 = vsel %vm1118, %v1111, 0
      %v1133 = vsel %vm1118, %v1113, 0
      %v1134 = vsel %vm1118, %v1115, 0
      %v1135 = vsel %vm1118, %v1117, 0
      %v1136 = vld [vmem:[%s1] sm:$0xf]
      %v1137 = vld [vmem:[%s1 + $0x4] sm:$0xf]
      %v1138 = vld [vmem:[%s1 + $0x8] sm:$0xf]
      %v1139 = vld [vmem:[%s1 + $0xc] sm:$0xf]
      %v1140 = vld [vmem:[%s2] sm:$0x1]
      %v1142 = vlaneseq
      %v1143 = vshrl.u32 %v1142, 7
      %v1144 = vsub.s32 0, %v1143
      %v1145 = vrot.slane %v1140, %v1144
      %v1151 = vunpack.c.l.b16 %v1136
      %v1152 = vunpack.c.l.b16 %v1137
      %v1153 = vunpack.c.l.b16 %v1138
      %v1154 = vunpack.c.l.b16 %v1139
      %v1155 = vpack.c.b16 %v1152, %v1151
      %v1156 = vpack.c.b16 %v1154, %v1153
      %vm1159 = vcmask 261120
      %v1160 = vsel %vm1159, %v1120, 0
      %v1162 = vsel %vm1159, %v1121, 0
      %v1164 = vsel %vm1159, %v1122, 0
      %v1166 = vsel %vm1159, %v1123, 0
      %v1168 = vsel %vm1159, %v1124, 0
      %v1170 = vsel %vm1159, %v1125, 0
      %v1172 = vsel %vm1159, %v1126, 0
      %v1174 = vsel %vm1159, %v1127, 0
      %v1176 = vsel %vm1159, %v1128, 0
      %v1178 = vsel %vm1159, %v1129, 0
      %v1180 = vsel %vm1159, %v1130, 0
      %v1182 = vsel %vm1159, %v1131, 0
      %v1184 = vsel %vm1159, %v1132, 0
      %v1186 = vsel %vm1159, %v1133, 0
      %v1188 = vsel %vm1159, %v1134, 0
      %v1190 = vsel %vm1159, %v1135, 0
      %1192 = vmatprep.subr.bf16.mxu0 0
      %1193 = vmatpush1.bf16.msra.mxu0 %v1155
      %1194 = vmatprep.subr.bf16.mxu0 0
      %1195 = vmatpush1.bf16.msra.mxu0 %v1156
      %1196 = vmatprep.subr.bf16.mxu0 0
      %1197 = vmatpush1.bf16.msra.mxu0 0
      %1198 = vmatprep.subr.bf16.mxu0 0
      %1199 = vmatpush1.bf16.msra.mxu0 0
      %1200 = vmatprep.subr.bf16.mxu0 0
      %1201 = vmatpush1.bf16.msra.mxu0 0
      %1202 = vmatprep.subr.bf16.mxu0 0
      %1203 = vmatpush1.bf16.msra.mxu0 0
      %1204 = vmatprep.subr.bf16.mxu0 0
      %1205 = vmatpush1.bf16.msra.mxu0 0
      %1206 = vmatprep.subr.bf16.mxu0 0
      %1207 = vmatpush1.bf16.msra.mxu0 0
      %1208 = vmatprep.subr.bf16.mxu0 0
      %1209 = vmatpush1.bf16.msra.mxu0 0
      %1210 = vmatprep.subr.bf16.mxu0 0
      %1211 = vmatpush1.bf16.msra.mxu0 0
      %1212 = vmatprep.subr.bf16.mxu0 0
      %1213 = vmatpush1.bf16.msra.mxu0 0
      %1214 = vmatprep.subr.bf16.mxu0 0
      %1215 = vmatpush1.bf16.msra.mxu0 0
      %1216 = vmatprep.subr.bf16.mxu0 0
      %1217 = vmatpush1.bf16.msra.mxu0 0
      %1218 = vmatprep.subr.bf16.mxu0 0
      %1219 = vmatpush1.bf16.msra.mxu0 0
      %1220 = vmatprep.subr.bf16.mxu0 0
      %1221 = vmatpush1.bf16.msra.mxu0 0
      %1222 = vmatprep.subr.bf16.mxu0 0
      %1223 = vmatpush1.bf16.msra.mxu0 0
      %1224 = vmatprep.mubr.bf16.mxu0 0
      %1225 = vmatmul.mubr.bf16.gmra.mrb[0].mxu0 %v1160
      %v1226 = vpop.f32.mrb[0].mxu0
      %v1227 = vadd.f32 %v1145, %v1226
      %v1228 = vpop.f32.mrb[0].mxu0
      %v1229 = vpop.f32.mrb[0].mxu0
      %v1230 = vadd.f32 %v1145, %v1229
      %v1231 = vpop.f32.mrb[0].mxu0
      %1232 = vmatprep.mubr.bf16.mxu0 0
      %1233 = vmatmul.mubr.bf16.gmra.mrb[0].mxu0 %v1162
      %v1234 = vpop.f32.mrb[0].mxu0
      %v1235 = vadd.f32 %v1145, %v1234
      %v1236 = vpop.f32.mrb[0].mxu0
      %v1237 = vpop.f32.mrb[0].mxu0
      %v1238 = vadd.f32 %v1145, %v1237
      %v1239 = vpop.f32.mrb[0].mxu0
      %1240 = vmatprep.mubr.bf16.mxu0 0
      %1241 = vmatmul.mubr.bf16.gmra.mrb[0].mxu0 %v1164
      %v1242 = vpop.f32.mrb[0].mxu0
      %v1243 = vadd.f32 %v1145, %v1242
      %v1244 = vpop.f32.mrb[0].mxu0
      %v1245 = vpop.f32.mrb[0].mxu0
      %v1246 = vadd.f32 %v1145, %v1245
      %v1247 = vpop.f32.mrb[0].mxu0
      %1248 = vmatprep.mubr.bf16.mxu0 0
      %1249 = vmatmul.mubr.bf16.gmra.mrb[0].mxu0 %v1166
      %v1250 = vpop.f32.mrb[0].mxu0
      %v1251 = vadd.f32 %v1145, %v1250
      %v1252 = vpop.f32.mrb[0].mxu0
      %v1253 = vpop.f32.mrb[0].mxu0
      %v1254 = vadd.f32 %v1145, %v1253
      %v1255 = vpop.f32.mrb[0].mxu0
      %1256 = vmatprep.mubr.bf16.mxu0 0
      %1257 = vmatmul.mubr.bf16.gmra.mrb[0].mxu0 %v1168
      %v1258 = vpop.f32.mrb[0].mxu0
      %v1259 = vadd.f32 %v1145, %v1258
      %v1260 = vpop.f32.mrb[0].mxu0
      %v1261 = vpop.f32.mrb[0].mxu0
      %v1262 = vadd.f32 %v1145, %v1261
      %v1263 = vpop.f32.mrb[0].mxu0
      %1264 = vmatprep.mubr.bf16.mxu0 0
      %1265 = vmatmul.mubr.bf16.gmra.mrb[0].mxu0 %v1170
      %v1266 = vpop.f32.mrb[0].mxu0
      %v1267 = vadd.f32 %v1145, %v1266
      %v1268 = vpop.f32.mrb[0].mxu0
      %v1269 = vpop.f32.mrb[0].mxu0
      %v1270 = vadd.f32 %v1145, %v1269
      %v1271 = vpop.f32.mrb[0].mxu0
      %1272 = vmatprep.mubr.bf16.mxu0 0
      %1273 = vmatmul.mubr.bf16.gmra.mrb[0].mxu0 %v1172
      %v1274 = vpop.f32.mrb[0].mxu0
      %v1275 = vadd.f32 %v1145, %v1274
      %v1276 = vpop.f32.mrb[0].mxu0
      %v1277 = vpop.f32.mrb[0].mxu0
      %v1278 = vadd.f32 %v1145, %v1277
      %v1279 = vpop.f32.mrb[0].mxu0
      %1280 = vmatprep.mubr.bf16.mxu0 0
      %1281 = vmatmul.mubr.bf16.gmra.mrb[0].mxu0 %v1174
      %v1282 = vpop.f32.mrb[0].mxu0
      %v1283 = vadd.f32 %v1145, %v1282
      %v1284 = vpop.f32.mrb[0].mxu0
      %v1285 = vpop.f32.mrb[0].mxu0
      %v1286 = vadd.f32 %v1145, %v1285
      %v1287 = vpop.f32.mrb[0].mxu0
      %1288 = vmatprep.mubr.bf16.mxu0 0
      %1289 = vmatmul.mubr.bf16.gmra.mrb[0].mxu0 %v1176
      %v1290 = vpop.f32.mrb[0].mxu0
      %v1291 = vadd.f32 %v1145, %v1290
      %v1292 = vpop.f32.mrb[0].mxu0
      %v1293 = vpop.f32.mrb[0].mxu0
      %v1294 = vadd.f32 %v1145, %v1293
      %v1295 = vpop.f32.mrb[0].mxu0
      %1296 = vmatprep.mubr.bf16.mxu0 0
      %1297 = vmatmul.mubr.bf16.gmra.mrb[0].mxu0 %v1178
      %v1298 = vpop.f32.mrb[0].mxu0
      %v1299 = vadd.f32 %v1145, %v1298
      %v1300 = vpop.f32.mrb[0].mxu0
      %v1301 = vpop.f32.mrb[0].mxu0
      %v1302 = vadd.f32 %v1145, %v1301
      %v1303 = vpop.f32.mrb[0].mxu0
      %1304 = vmatprep.mubr.bf16.mxu0 0
      %1305 = vmatmul.mubr.bf16.gmra.mrb[0].mxu0 %v1180
      %v1306 = vpop.f32.mrb[0].mxu0
      %v1307 = vadd.f32 %v1145, %v1306
      %v1308 = vpop.f32.mrb[0].mxu0
      %v1309 = vpop.f32.mrb[0].mxu0
      %v1310 = vadd.f32 %v1145, %v1309
      %v1311 = vpop.f32.mrb[0].mxu0
      %1312 = vmatprep.mubr.bf16.mxu0 0
      %1313 = vmatmul.mubr.bf16.gmra.mrb[0].mxu0 %v1182
      %v1314 = vpop.f32.mrb[0].mxu0
      %v1315 = vadd.f32 %v1145, %v1314
      %v1316 = vpop.f32.mrb[0].mxu0
      %v1317 = vpop.f32.mrb[0].mxu0
      %v1318 = vadd.f32 %v1145, %v1317
      %v1319 = vpop.f32.mrb[0].mxu0
      %1320 = vmatprep.mubr.bf16.mxu0 0
      %1321 = vmatmul.mubr.bf16.gmra.mrb[0].mxu0 %v1184
      %v1322 = vpop.f32.mrb[0].mxu0
      %v1323 = vadd.f32 %v1145, %v1322
      %v1324 = vpop.f32.mrb[0].mxu0
      %v1325 = vpop.f32.mrb[0].mxu0
      %v1326 = vadd.f32 %v1145, %v1325
      %v1327 = vpop.f32.mrb[0].mxu0
      %1328 = vmatprep.mubr.bf16.mxu0 0
      %1329 = vmatmul.mubr.bf16.gmra.mrb[0].mxu0 %v1186
      %v1330 = vpop.f32.mrb[0].mxu0
      %v1331 = vadd.f32 %v1145, %v1330
      %v1332 = vpop.f32.mrb[0].mxu0
      %v1333 = vpop.f32.mrb[0].mxu0
      %v1334 = vadd.f32 %v1145, %v1333
      %v1335 = vpop.f32.mrb[0].mxu0
      %1336 = vmatprep.mubr.bf16.mxu0 0
      %1337 = vmatmul.mubr.bf16.gmra.mrb[0].mxu0 %v1188
      %v1338 = vpop.f32.mrb[0].mxu0
      %v1339 = vadd.f32 %v1145, %v1338
      %v1340 = vpop.f32.mrb[0].mxu0
      %v1341 = vpop.f32.mrb[0].mxu0
      %v1342 = vadd.f32 %v1145, %v1341
      %v1343 = vpop.f32.mrb[0].mxu0
      %1344 = vmatprep.mubr.bf16.mxu0 0
      %1345 = vmatmul.mubr.bf16.gmra.mrb[0].mxu0 %v1190
      %v1346 = vpop.f32.mrb[0].mxu0
      %v1347 = vadd.f32 %v1145, %v1346
      %v1348 = vpop.f32.mrb[0].mxu0
      %v1349 = vpop.f32.mrb[0].mxu0
      %v1350 = vadd.f32 %v1145, %v1349
      %v1351 = vpop.f32.mrb[0].mxu0
      %1352 = vdwg.mxu0
      %v1353 = vpack.c.bf16 %v1230, %v1227
      %v1354 = vpack.c.bf16 %v1238, %v1235
      %v1355 = vpack.c.bf16 %v1246, %v1243
      %v1356 = vpack.c.bf16 %v1254, %v1251
      %v1357 = vpack.c.bf16 %v1262, %v1259
      %v1358 = vpack.c.bf16 %v1270, %v1267
      %v1359 = vpack.c.bf16 %v1278, %v1275
      %v1360 = vpack.c.bf16 %v1286, %v1283
      %v1361 = vpack.c.bf16 %v1294, %v1291
      %v1362 = vpack.c.bf16 %v1302, %v1299
      %v1363 = vpack.c.bf16 %v1310, %v1307
      %v1364 = vpack.c.bf16 %v1318, %v1315
      %v1365 = vpack.c.bf16 %v1326, %v1323
      %v1366 = vpack.c.bf16 %v1334, %v1331
      %v1367 = vpack.c.bf16 %v1342, %v1339
      %v1368 = vpack.c.bf16 %v1350, %v1347
      %v1385 = vunpack.c.l.b16 %v1353
      %v1386 = vunpack.c.h.b16 %v1353
      %v1387 = vunpack.c.l.b16 %v1354
      %v1388 = vunpack.c.h.b16 %v1354
      %v1389 = vunpack.c.l.b16 %v1355
      %v1390 = vunpack.c.h.b16 %v1355
      %v1391 = vunpack.c.l.b16 %v1356
      %v1392 = vunpack.c.h.b16 %v1356
      %v1393 = vunpack.c.l.b16 %v1357
      %v1394 = vunpack.c.h.b16 %v1357
      %v1395 = vunpack.c.l.b16 %v1358
      %v1396 = vunpack.c.h.b16 %v1358
      %v1397 = vunpack.c.l.b16 %v1359
      %v1398 = vunpack.c.h.b16 %v1359
      %v1399 = vunpack.c.l.b16 %v1360
      %v1400 = vunpack.c.h.b16 %v1360
      %v1401 = vunpack.c.l.b16 %v1361
      %v1402 = vunpack.c.h.b16 %v1361
      %v1403 = vunpack.c.l.b16 %v1362
      %v1404 = vunpack.c.h.b16 %v1362
      %v1405 = vunpack.c.l.b16 %v1363
      %v1406 = vunpack.c.h.b16 %v1363
      %v1407 = vunpack.c.l.b16 %v1364
      %v1408 = vunpack.c.h.b16 %v1364
      %v1409 = vunpack.c.l.b16 %v1365
      %v1410 = vunpack.c.h.b16 %v1365
      %v1411 = vunpack.c.l.b16 %v1366
      %v1412 = vunpack.c.h.b16 %v1366
      %v1413 = vunpack.c.l.b16 %v1367
      %v1414 = vunpack.c.h.b16 %v1367
      %v1415 = vunpack.c.l.b16 %v1368
      %v1416 = vunpack.c.h.b16 %v1368
      %v1417 = vpack.c.b16 %v1385, %v1385
      %v1418 = vpack.c.b16 %v1386, %v1386
      %v1419 = vpack.c.b16 %v1387, %v1387
      %v1420 = vpack.c.b16 %v1388, %v1388
      %v1421 = vpack.c.b16 %v1389, %v1389
      %v1422 = vpack.c.b16 %v1390, %v1390
      %v1423 = vpack.c.b16 %v1391, %v1391
      %v1424 = vpack.c.b16 %v1392, %v1392
      %v1425 = vpack.c.b16 %v1393, %v1393
      %v1426 = vpack.c.b16 %v1394, %v1394
      %v1427 = vpack.c.b16 %v1395, %v1395
      %v1428 = vpack.c.b16 %v1396, %v1396
      %v1429 = vpack.c.b16 %v1397, %v1397
      %v1430 = vpack.c.b16 %v1398, %v1398
      %v1431 = vpack.c.b16 %v1399, %v1399
      %v1432 = vpack.c.b16 %v1400, %v1400
      %v1433 = vpack.c.b16 %v1401, %v1401
      %v1434 = vpack.c.b16 %v1402, %v1402
      %v1435 = vpack.c.b16 %v1403, %v1403
      %v1436 = vpack.c.b16 %v1404, %v1404
      %v1437 = vpack.c.b16 %v1405, %v1405
      %v1438 = vpack.c.b16 %v1406, %v1406
      %v1439 = vpack.c.b16 %v1407, %v1407
      %v1440 = vpack.c.b16 %v1408, %v1408
      %v1441 = vpack.c.b16 %v1409, %v1409
      %v1442 = vpack.c.b16 %v1410, %v1410
      %v1443 = vpack.c.b16 %v1411, %v1411
      %v1444 = vpack.c.b16 %v1412, %v1412
      %v1445 = vpack.c.b16 %v1413, %v1413
      %v1446 = vpack.c.b16 %v1414, %v1414
      %v1447 = vpack.c.b16 %v1415, %v1415
      %v1448 = vpack.c.b16 %v1416, %v1416
      %vm1481 = vcmask 519168
      %1482 = vst.msk [vmem:[%s194] sm:$0xf] %vm1481, %v1417
      %1483 = vst.msk [vmem:[%s194 + $0x4] sm:$0xf] %vm1481, %v1418
      %1484 = vst.msk [vmem:[%s194 + $0x8] sm:$0xf] %vm1481, %v1419
      %1485 = vst.msk [vmem:[%s194 + $0xc] sm:$0xf] %vm1481, %v1420
      %1486 = vst.msk [vmem:[%s194 + $0x10] sm:$0xf] %vm1481, %v1421
      %1487 = vst.msk [vmem:[%s194 + $0x14] sm:$0xf] %vm1481, %v1422
      %1488 = vst.msk [vmem:[%s194 + $0x18] sm:$0xf] %vm1481, %v1423
      %1489 = vst.msk [vmem:[%s194 + $0x1c] sm:$0xf] %vm1481, %v1424
      %1490 = vst.msk [vmem:[%s194 + $0x20] sm:$0xf] %vm1481, %v1425
      %1491 = vst.msk [vmem:[%s194 + $0x24] sm:$0xf] %vm1481, %v1426
      %1492 = vst.msk [vmem:[%s194 + $0x28] sm:$0xf] %vm1481, %v1427
      %1493 = vst.msk [vmem:[%s194 + $0x2c] sm:$0xf] %vm1481, %v1428
      %1494 = vst.msk [vmem:[%s194 + $0x30] sm:$0xf] %vm1481, %v1429
      %1495 = vst.msk [vmem:[%s194 + $0x34] sm:$0xf] %vm1481, %v1430
      %1496 = vst.msk [vmem:[%s194 + $0x38] sm:$0xf] %vm1481, %v1431
      %1497 = vst.msk [vmem:[%s194 + $0x3c] sm:$0xf] %vm1481, %v1432
      %1498 = vst.msk [vmem:[%s194 + $0x40] sm:$0xf] %vm1481, %v1433
      %1499 = vst.msk [vmem:[%s194 + $0x44] sm:$0xf] %vm1481, %v1434
      %1500 = vst.msk [vmem:[%s194 + $0x48] sm:$0xf] %vm1481, %v1435
      %1501 = vst.msk [vmem:[%s194 + $0x4c] sm:$0xf] %vm1481, %v1436
      %1502 = vst.msk [vmem:[%s194 + $0x50] sm:$0xf] %vm1481, %v1437
      %1503 = vst.msk [vmem:[%s194 + $0x54] sm:$0xf] %vm1481, %v1438
      %1504 = vst.msk [vmem:[%s194 + $0x58] sm:$0xf] %vm1481, %v1439
      %1505 = vst.msk [vmem:[%s194 + $0x5c] sm:$0xf] %vm1481, %v1440
      %1506 = vst.msk [vmem:[%s194 + $0x60] sm:$0xf] %vm1481, %v1441
      %1507 = vst.msk [vmem:[%s194 + $0x64] sm:$0xf] %vm1481, %v1442
      %1508 = vst.msk [vmem:[%s194 + $0x68] sm:$0xf] %vm1481, %v1443
      %1509 = vst.msk [vmem:[%s194 + $0x6c] sm:$0xf] %vm1481, %v1444
      %1510 = vst.msk [vmem:[%s194 + $0x70] sm:$0xf] %vm1481, %v1445
      %1511 = vst.msk [vmem:[%s194 + $0x74] sm:$0xf] %vm1481, %v1446
      %1512 = vst.msk [vmem:[%s194 + $0x78] sm:$0xf] %vm1481, %v1447
      %1513 = vst.msk [vmem:[%s194 + $0x7c] sm:$0xf] %vm1481, %v1448
      %s1514 = smul.u32 16, %s19
      %p1515 = scmp.lt.s32.totalorder %s18, 1
      %s1516 = scalar_select %p1515, %s18, 1
      %p1517 = scmp.lt.s32.totalorder %s1514, 15
      %s1518 = scalar_select %p1517, %s1514, 15
      %s1519 = smul.addr %s1518, 2
      %s1520 = smul.addr %s1516, 32
      %s1521 = sadd.s32 %s1519, %s1520
      %s1522 = smul.addr %s1521, 4
      %s1523 = scalar_lea.vmem %s3, %s1522
      // Predicated region
      $region33: #{gnr_forward.2} parent=31 // pred_check
        %p1524 = pneg %p114
      $region34: #{gnr_forward.2} parent=31 // pred_check_branch
        %1526 = sbr.rel (%p1524) target = $region36
      $region35: #{gnr_forward.2} parent=31 // pred_region
        %s1527 = smul.u32 16, %s19
      $region36: #{gnr_forward.2} parent=31 // pred_fallthru
        _
    $region32: #{gnr_forward.2} parent=5 // pred_fallthru
      _
    %p1528 = scmp.le.s32.totalorder 2, %s9
    // Predicated region
    $region37: #{gnr_forward.2} parent=5 // pred_check
      %p1529 = pneg %p1528
    $region38: #{gnr_forward.2} parent=5 // pred_check_branch
      %1531 = sbr.rel (%p1529) target = $region40
    $region39: #{gnr_forward.2} parent=5 // pred_region
      %s1532 = ssub.s32 %s9, 2
      // Predicated region
      $region41: #{gnr_forward.2} parent=39 // pred_check
        %p1533 = pneg %p120
      $region42: #{gnr_forward.2} parent=39 // pred_check_branch
        %1535 = sbr.rel (%p1533) target = $region44
      $region43: #{gnr_forward.2} parent=39 // pred_region
        %s1536 = smul.u32 16, %s21
        %p1537 = scmp.lt.s32.totalorder %s20, 1
        %s1538 = scalar_select %p1537, %s20, 1
        %p1539 = scmp.lt.s32.totalorder %s1536, 15
        %s1540 = scalar_select %p1539, %s1536, 15
        %s1541 = smul.addr %s1540, 2
        %s1542 = smul.addr %s1538, 32
        %s1543 = sadd.s32 %s1541, %s1542
        %s1544 = smul.addr %s1543, 4
        %s1545 = scalar_lea.vmem %s3, %s1544
      $region44: #{gnr_forward.2} parent=39 // pred_fallthru
        _
    $region40: #{gnr_forward.2} parent=5 // pred_fallthru
      _
  $region6: #{gnr_forward.2} parent=0 // loop_footer
    %s13 = sadd.s32 1, %s9
  $region7: #{gnr_forward.2} parent=0 // loop_footer_branch
    %8 = sbr.rel target = $region3
  $region8: #{gnr_forward.2} parent=0 // loop_exit
    _

// kernel: gnr_forward.3
$region0: #{gnr_forward.3}
  #allocation0 [shape = 'u32[]', space=smem, size = 0x4, offset = 0x4, fixed_abs, tag = 'smem constant byte address 0x4 - core index']
  #allocation1 [shape = 'u32[144,128]{1,0:T(1,128)}', space=vmem, size = 0x12000, scoped, tag = 'internal scratch']
  #allocation2 [shape = 'f32[2048,128]{1,0:T(8,128)}', space=vmem, size = 0x100000, scoped, tag = 'scratch operand']
  %s0 = inlined_call_operand.vmem [shape: bf16[8192,128], index: 0, kind: input, shape index: {}]
  %s1 = inlined_call_operand.vmem [shape: bf16[128,128], index: 1, kind: input, shape index: {}]
  %s2 = inlined_call_operand.vmem [shape: f32[1,128], index: 2, kind: input, shape index: {}]
  %s3 = inlined_call_operand.vmem [shape: bf16[128,128], index: 3, kind: input, shape index: {}]
  %s4 = inlined_call_operand.vmem [shape: f32[1,128], index: 4, kind: input, shape index: {}]
  %s5 = inlined_call_operand.vmem [shape: bf16[128,128], index: 5, kind: input, shape index: {}]
  %s6 = inlined_call_operand.vmem [shape: f32[1,128], index: 6, kind: input, shape index: {}]
  %s7 = inlined_call_operand.vmem [shape: f32[2,1,128], index: 7, kind: output, shape index: {}]
  %s8 = sld [smem:[#allocation0]]
  $region69: #{gnr_forward.3} parent=0
    _
  %s10 = ssub.s32 1, %s8
  %s11 = scalar_select 0, %s10, %s8
  loop: start=0, step=1, limit=6
  $region2: #{gnr_forward.3} parent=0 // loop_pre_header
    _
  $region3: #{gnr_forward.3} parent=0 // loop_header
    %s13 = sphi 0, %s17
    %p14 = scmp.ge.s32.totalorder %s13, 6
    %s20 = sphi 0, %s32
    %s21 = sphi 0, %s28
    %s22 = sphi 0, %s20
    %s23 = sphi 0, %s21
    %s24 = sphi 0, %s22
    %s25 = sphi 0, %s23
    %s39 = sphi 0, %s41
    %s42 = sphi 0, %s39
    %s43 = sphi 0, %s42
    %s59 = sphi 0, %s43
    %s63 = sphi 0, %s63
    %s65 = sphi 0, %s63
    %s66 = sphi 0, %s65
    %s80 = sphi 0, %s66
    %s84 = sphi 0, %s84
    %s86 = sphi 0, %s84
    %s87 = sphi 0, %s86
    %s101 = sphi 0, %s87
    %s105 = sphi 0, %s105
    %s107 = sphi 0, %s105
    %s108 = sphi 0, %s107
    %s122 = sphi 0, %s108
    %s126 = sphi 0, %s126
    %s128 = sphi 0, %s126
    %s129 = sphi 0, %s128
    %s143 = sphi 0, %s129
    %s147 = sphi 0, %s147
    %s149 = sphi 0, %s147
    %s150 = sphi 0, %s149
    %s164 = sphi 0, %s150
    %s168 = sphi 0, %s168
    %s170 = sphi 0, %s168
    %s171 = sphi 0, %s170
    %s185 = sphi 0, %s171
    %s191 = sphi 0, %s193
    %s194 = sphi 0, %s191
    %s195 = sphi 0, %s194
    %s211 = sphi 0, %s195
  $region4: #{gnr_forward.3} parent=0 // loop_header_branch
    %16 = sbr.rel (%p14) target = $region8
  $region5: #{gnr_forward.3} parent=0 // loop_body
    %s18 = ssub.s32 %s13, 1
    %s19 = ssub.s32 %s13, 2
    %s26 = sadd.s32 1, %s21
    %p27 = scmp.ge.s32.totalorder %s26, 2
    %s28 = scalar_select %p27, 0, %s26
    %s29 = sadd.s32 1, %s20
    %s30 = scalar_select %p27, %s29, %s20
    %p31 = scmp.ge.s32.totalorder %s30, 2
    %s32 = scalar_select %p31, 0, %s30
    %s33 = smul.u32 %s20, 2
    %s34 = sadd.s32 %s33, %s21
    %s35 = smul.u32 %s32, 2
    %s36 = sadd.s32 %s35, %s28
    %s37 = ssub.s32 %s34, %s36
    %p38 = scmp.eq.s32.totalorder %s37, 0
    %s40 = sadd.s32 %s39, 1
    %s41 = scalar_select %p38, %s39, %s40
    %p44 = pneg %p38
    %p45 = scmp.eq.s32.totalorder %s13, 3
    %p46 = por %p44, %p45
    %p47 = scmp.ne.s32.totalorder %s39, %s42
    %p48 = scmp.eq.s32.totalorder %s13, 0
    %p49 = por %p47, %p48
    %p50 = scmp.ne.s32.totalorder %s39, %s42
    %p51 = scmp.eq.s32.totalorder %s18, 3
    %p52 = por %p50, %p51
    %p53 = scmp.ne.s32.totalorder %s42, %s43
    %p54 = scmp.eq.s32.totalorder %s18, 0
    %p55 = por %p53, %p54
    %p56 = scmp.ne.s32.totalorder %s42, %s43
    %p57 = scmp.eq.s32.totalorder %s19, 3
    %p58 = por %p56, %p57
    %p60 = scmp.ne.s32.totalorder %s43, %s59
    %p61 = scmp.eq.s32.totalorder %s19, 0
    %p62 = por %p60, %p61
    %s64 = sadd.s32 %s63, 1
    %p67 = scmp.eq.s32.totalorder %s13, 3
    %p68 = scmp.ne.s32.totalorder %s63, %s65
    %p69 = scmp.eq.s32.totalorder %s13, 0
    %p70 = por %p68, %p69
    %p71 = scmp.ne.s32.totalorder %s63, %s65
    %p72 = scmp.eq.s32.totalorder %s18, 3
    %p73 = por %p71, %p72
    %p74 = scmp.ne.s32.totalorder %s65, %s66
    %p75 = scmp.eq.s32.totalorder %s18, 0
    %p76 = por %p74, %p75
    %p77 = scmp.ne.s32.totalorder %s65, %s66
    %p78 = scmp.eq.s32.totalorder %s19, 3
    %p79 = por %p77, %p78
    %p81 = scmp.ne.s32.totalorder %s66, %s80
    %p82 = scmp.eq.s32.totalorder %s19, 0
    %p83 = por %p81, %p82
    %s85 = sadd.s32 %s84, 1
    %p88 = scmp.eq.s32.totalorder %s13, 3
    %p89 = scmp.ne.s32.totalorder %s84, %s86
    %p90 = scmp.eq.s32.totalorder %s13, 0
    %p91 = por %p89, %p90
    %p92 = scmp.ne.s32.totalorder %s84, %s86
    %p93 = scmp.eq.s32.totalorder %s18, 3
    %p94 = por %p92, %p93
    %p95 = scmp.ne.s32.totalorder %s86, %s87
    %p96 = scmp.eq.s32.totalorder %s18, 0
    %p97 = por %p95, %p96
    %p98 = scmp.ne.s32.totalorder %s86, %s87
    %p99 = scmp.eq.s32.totalorder %s19, 3
    %p100 = por %p98, %p99
    %p102 = scmp.ne.s32.totalorder %s87, %s101
    %p103 = scmp.eq.s32.totalorder %s19, 0
    %p104 = por %p102, %p103
    %s106 = sadd.s32 %s105, 1
    %p109 = scmp.eq.s32.totalorder %s13, 3
    %p110 = scmp.ne.s32.totalorder %s105, %s107
    %p111 = scmp.eq.s32.totalorder %s13, 0
    %p112 = por %p110, %p111
    %p113 = scmp.ne.s32.totalorder %s105, %s107
    %p114 = scmp.eq.s32.totalorder %s18, 3
    %p115 = por %p113, %p114
    %p116 = scmp.ne.s32.totalorder %s107, %s108
    %p117 = scmp.eq.s32.totalorder %s18, 0
    %p118 = por %p116, %p117
    %p119 = scmp.ne.s32.totalorder %s107, %s108
    %p120 = scmp.eq.s32.totalorder %s19, 3
    %p121 = por %p119, %p120
    %p123 = scmp.ne.s32.totalorder %s108, %s122
    %p124 = scmp.eq.s32.totalorder %s19, 0
    %p125 = por %p123, %p124
    %s127 = sadd.s32 %s126, 1
    %p130 = scmp.eq.s32.totalorder %s13, 3
    %p131 = scmp.ne.s32.totalorder %s126, %s128
    %p132 = scmp.eq.s32.totalorder %s13, 0
    %p133 = por %p131, %p132
    %p134 = scmp.ne.s32.totalorder %s126, %s128
    %p135 = scmp.eq.s32.totalorder %s18, 3
    %p136 = por %p134, %p135
    %p137 = scmp.ne.s32.totalorder %s128, %s129
    %p138 = scmp.eq.s32.totalorder %s18, 0
    %p139 = por %p137, %p138
    %p140 = scmp.ne.s32.totalorder %s128, %s129
    %p141 = scmp.eq.s32.totalorder %s19, 3
    %p142 = por %p140, %p141
    %p144 = scmp.ne.s32.totalorder %s129, %s143
    %p145 = scmp.eq.s32.totalorder %s19, 0
    %p146 = por %p144, %p145
    %s148 = sadd.s32 %s147, 1
    %p151 = scmp.eq.s32.totalorder %s13, 3
    %p152 = scmp.ne.s32.totalorder %s147, %s149
    %p153 = scmp.eq.s32.totalorder %s13, 0
    %p154 = por %p152, %p153
    %p155 = scmp.ne.s32.totalorder %s147, %s149
    %p156 = scmp.eq.s32.totalorder %s18, 3
    %p157 = por %p155, %p156
    %p158 = scmp.ne.s32.totalorder %s149, %s150
    %p159 = scmp.eq.s32.totalorder %s18, 0
    %p160 = por %p158, %p159
    %p161 = scmp.ne.s32.totalorder %s149, %s150
    %p162 = scmp.eq.s32.totalorder %s19, 3
    %p163 = por %p161, %p162
    %p165 = scmp.ne.s32.totalorder %s150, %s164
    %p166 = scmp.eq.s32.totalorder %s19, 0
    %p167 = por %p165, %p166
    %s169 = sadd.s32 %s168, 1
    %p172 = scmp.eq.s32.totalorder %s13, 3
    %p173 = scmp.ne.s32.totalorder %s168, %s170
    %p174 = scmp.eq.s32.totalorder %s13, 0
    %p175 = por %p173, %p174
    %p176 = scmp.ne.s32.totalorder %s168, %s170
    %p177 = scmp.eq.s32.totalorder %s18, 3
    %p178 = por %p176, %p177
    %p179 = scmp.ne.s32.totalorder %s170, %s171
    %p180 = scmp.eq.s32.totalorder %s18, 0
    %p181 = por %p179, %p180
    %p182 = scmp.ne.s32.totalorder %s170, %s171
    %p183 = scmp.eq.s32.totalorder %s19, 3
    %p184 = por %p182, %p183
    %p186 = scmp.ne.s32.totalorder %s171, %s185
    %p187 = scmp.eq.s32.totalorder %s19, 0
    %p188 = por %p186, %p187
    %s189 = ssub.s32 %s20, %s32
    %p190 = scmp.eq.s32.totalorder %s189, 0
    %s192 = sadd.s32 %s191, 1
    %s193 = scalar_select %p190, %s191, %s192
    %p196 = pneg %p190
    %p197 = scmp.eq.s32.totalorder %s13, 3
    %p198 = por %p196, %p197
    %p199 = scmp.ne.s32.totalorder %s191, %s194
    %p200 = scmp.eq.s32.totalorder %s13, 0
    %p201 = por %p199, %p200
    %p202 = scmp.ne.s32.totalorder %s191, %s194
    %p203 = scmp.eq.s32.totalorder %s18, 3
    %p204 = por %p202, %p203
    %p205 = scmp.ne.s32.totalorder %s194, %s195
    %p206 = scmp.eq.s32.totalorder %s18, 0
    %p207 = por %p205, %p206
    %p208 = scmp.ne.s32.totalorder %s194, %s195
    %p209 = scmp.eq.s32.totalorder %s19, 3
    %p210 = por %p208, %p209
    %p212 = scmp.ne.s32.totalorder %s195, %s211
    %p213 = scmp.eq.s32.totalorder %s19, 0
    %p214 = por %p212, %p213
    %p215 = scmp.le.s32.totalorder 1, %s13
    %p216 = scmp.lt.s32.totalorder %s13, 5
    %p217 = pnand %p215, %p216
    %p218 = pneg %p217
    // Predicated region
    $region9: #{gnr_forward.3} parent=5 // pred_check
      _
    $region10: #{gnr_forward.3} parent=5 // pred_check_branch
      %220 = sbr.rel (%p217) target = $region12
    $region11: #{gnr_forward.3} parent=5 // pred_region
      %s221 = ssub.s32 %s13, 1
      // Predicated region
      $region13: #{gnr_forward.3} parent=11 // pred_check
        %p222 = pneg %p76
      $region14: #{gnr_forward.3} parent=11 // pred_check_branch
        %224 = sbr.rel (%p222) target = $region16
      $region15: #{gnr_forward.3} parent=11 // pred_region
        _
      $region16: #{gnr_forward.3} parent=11 // pred_fallthru
        _
      // Predicated region
      $region17: #{gnr_forward.3} parent=11 // pred_check
        %p225 = pneg %p97
      $region18: #{gnr_forward.3} parent=11 // pred_check_branch
        %227 = sbr.rel (%p225) target = $region20
      $region19: #{gnr_forward.3} parent=11 // pred_region
        _
      $region20: #{gnr_forward.3} parent=11 // pred_fallthru
        _
      // Predicated region
      $region21: #{gnr_forward.3} parent=11 // pred_check
        %p228 = pneg %p118
      $region22: #{gnr_forward.3} parent=11 // pred_check_branch
        %230 = sbr.rel (%p228) target = $region24
      $region23: #{gnr_forward.3} parent=11 // pred_region
        _
      $region24: #{gnr_forward.3} parent=11 // pred_fallthru
        _
      // Predicated region
      $region25: #{gnr_forward.3} parent=11 // pred_check
        %p231 = pneg %p139
      $region26: #{gnr_forward.3} parent=11 // pred_check_branch
        %233 = sbr.rel (%p231) target = $region28
      $region27: #{gnr_forward.3} parent=11 // pred_region
        _
      $region28: #{gnr_forward.3} parent=11 // pred_fallthru
        _
      // Predicated region
      $region29: #{gnr_forward.3} parent=11 // pred_check
        %p234 = pneg %p160
      $region30: #{gnr_forward.3} parent=11 // pred_check_branch
        %236 = sbr.rel (%p234) target = $region32
      $region31: #{gnr_forward.3} parent=11 // pred_region
        _
      $region32: #{gnr_forward.3} parent=11 // pred_fallthru
        _
      // Predicated region
      $region33: #{gnr_forward.3} parent=11 // pred_check
        %p237 = pneg %p181
      $region34: #{gnr_forward.3} parent=11 // pred_check_branch
        %239 = sbr.rel (%p237) target = $region36
      $region35: #{gnr_forward.3} parent=11 // pred_region
        _
      $region36: #{gnr_forward.3} parent=11 // pred_fallthru
        _
    $region12: #{gnr_forward.3} parent=5 // pred_fallthru
      _
    %p240 = scmp.lt.s32.totalorder %s13, 4
    // Predicated region
    $region37: #{gnr_forward.3} parent=5 // pred_check
      %p241 = pneg %p240
    $region38: #{gnr_forward.3} parent=5 // pred_check_branch
      %243 = sbr.rel (%p241) target = $region40
    $region39: #{gnr_forward.3} parent=5 // pred_region
      // Predicated region
      $region41: #{gnr_forward.3} parent=39 // pred_check
        %p244 = pneg %p49
      $region42: #{gnr_forward.3} parent=39 // pred_check_branch
        %246 = sbr.rel (%p244) target = $region44
      $region43: #{gnr_forward.3} parent=39 // pred_region
        %s247 = smul.u32 %s20, 2
        %s248 = sadd.s32 %s247, %s21
        %s249 = smul.u32 256, %s248
        %p250 = scmp.lt.s32.totalorder %s249, 1023
        %s251 = scalar_select %p250, %s249, 1023
        %s252 = smul.addr %s251, 4
        %s253 = scalar_lea.vmem %s0, %s252
        %s254 = smul.u32 %s20, 2
        %s255 = sadd.s32 %s254, %s21
        %s256 = smul.u32 256, %s255
      $region44: #{gnr_forward.3} parent=39 // pred_fallthru
        _
    $region40: #{gnr_forward.3} parent=5 // pred_fallthru
      _
    %p257 = scmp.le.s32.totalorder 1, %s13
    %p258 = scmp.lt.s32.totalorder %s13, 5
    %p259 = pnand %p257, %p258
    %p260 = pneg %p259
    // Predicated region
    $region45: #{gnr_forward.3} parent=5 // pred_check
      _
    $region46: #{gnr_forward.3} parent=5 // pred_check_branch
      %262 = sbr.rel (%p259) target = $region48
    $region47: #{gnr_forward.3} parent=5 // pred_region
      %s263 = ssub.s32 %s13, 1
      %s264 = smul.u32 %s22, 2
      %s265 = sadd.s32 %s264, %s23
      %s266 = smul.u32 256, %s265
      %p267 = scmp.lt.s32.totalorder %s266, 1023
      %s268 = scalar_select %p267, %s266, 1023
      %s269 = smul.addr %s268, 4
      %s270 = scalar_lea.vmem %s0, %s269
      %p271 = pneg %p55
      %p272 = pneg %p52
      %p273 = pneg %p76
      %p274 = pneg %p73
      %p275 = pneg %p97
      %p276 = pneg %p94
      %p277 = pneg %p118
      %p278 = pneg %p115
      %p279 = pneg %p139
      %p280 = pneg %p136
      %p281 = pneg %p160
      %p282 = pneg %p157
      %p283 = pneg %p181
      %p284 = pneg %p178
      %p285 = pneg %p207
      %p286 = pneg %p204
      %p287 = scmp.lt.s32.totalorder %s22, 1
      %s288 = scalar_select %p287, %s22, 1
      %s289 = scalar_lea.vmem %s7, %s288
      %s290 = smul.u32 %s22, 2
      %s291 = sadd.s32 %s290, %s23
      %s292 = smul.u32 256, %s291
      %p293 = scmp.lt.s32.totalorder %s292, 1023
      %s294 = scalar_select %p293, %s292, 1023
      %s295 = smul.addr %s294, 4
      %s296 = scalar_lea.vmem %s0, %s295
      %s297 = smul.u32 %s22, 2
      %s298 = sadd.s32 %s297, %s23
      %s299 = smul.u32 256, %s298
      %p300 = scmp.lt.s32.totalorder %s22, 1
      %s301 = scalar_select %p300, %s22, 1
      %s302 = scalar_lea.vmem %s7, %s301
      %p304 = scmp.eq.s32.totalorder %s23, 0
      // Predicated region
      $region49: #{gnr_forward.3} parent=47 // pred_check
        %p305 = pneg %p304
      $region50: #{gnr_forward.3} parent=47 // pred_check_branch
        %307 = sbr.rel (%p305) target = $region52
      $region51: #{gnr_forward.3} parent=47 // pred_region
        %308 = vst [vmem:[#allocation2] sm:$0xff] 0.0
        %309 = vst [vmem:[#allocation2 + $0x8] sm:$0xff] 0.0
        %310 = vst [vmem:[#allocation2 + $0x10] sm:$0xff] 0.0
        %311 = vst [vmem:[#allocation2 + $0x18] sm:$0xff] 0.0
        %312 = vst [vmem:[#allocation2 + $0x20] sm:$0xff] 0.0
        %313 = vst [vmem:[#allocation2 + $0x28] sm:$0xff] 0.0
        %314 = vst [vmem:[#allocation2 + $0x30] sm:$0xff] 0.0
        %315 = vst [vmem:[#allocation2 + $0x38] sm:$0xff] 0.0
        %316 = vst [vmem:[#allocation2 + $0x40] sm:$0xff] 0.0
        %317 = vst [vmem:[#allocation2 + $0x48] sm:$0xff] 0.0
        %318 = vst [vmem:[#allocation2 + $0x50] sm:$0xff] 0.0
        %319 = vst [vmem:[#allocation2 + $0x58] sm:$0xff] 0.0
        %320 = vst [vmem:[#allocation2 + $0x60] sm:$0xff] 0.0
        %321 = vst [vmem:[#allocation2 + $0x68] sm:$0xff] 0.0
        %322 = vst [vmem:[#allocation2 + $0x70] sm:$0xff] 0.0
        %323 = vst [vmem:[#allocation2 + $0x78] sm:$0xff] 0.0
        %324 = vst [vmem:[#allocation2 + $0x80] sm:$0xff] 0.0
        %325 = vst [vmem:[#allocation2 + $0x88] sm:$0xff] 0.0
        %326 = vst [vmem:[#allocation2 + $0x90] sm:$0xff] 0.0
        %327 = vst [vmem:[#allocation2 + $0x98] sm:$0xff] 0.0
        %328 = vst [vmem:[#allocation2 + $0xa0] sm:$0xff] 0.0
        %329 = vst [vmem:[#allocation2 + $0xa8] sm:$0xff] 0.0
        %330 = vst [vmem:[#allocation2 + $0xb0] sm:$0xff] 0.0
        %331 = vst [vmem:[#allocation2 + $0xb8] sm:$0xff] 0.0
        %332 = vst [vmem:[#allocation2 + $0xc0] sm:$0xff] 0.0
        %333 = vst [vmem:[#allocation2 + $0xc8] sm:$0xff] 0.0
        %334 = vst [vmem:[#allocation2 + $0xd0] sm:$0xff] 0.0
        %335 = vst [vmem:[#allocation2 + $0xd8] sm:$0xff] 0.0
        %336 = vst [vmem:[#allocation2 + $0xe0] sm:$0xff] 0.0
        %337 = vst [vmem:[#allocation2 + $0xe8] sm:$0xff] 0.0
        %338 = vst [vmem:[#allocation2 + $0xf0] sm:$0xff] 0.0
        %339 = vst [vmem:[#allocation2 + $0xf8] sm:$0xff] 0.0
        %340 = vst [vmem:[#allocation2 + $0x100] sm:$0xff] 0.0
        %341 = vst [vmem:[#allocation2 + $0x108] sm:$0xff] 0.0
        %342 = vst [vmem:[#allocation2 + $0x110] sm:$0xff] 0.0
        %343 = vst [vmem:[#allocation2 + $0x118] sm:$0xff] 0.0
        %344 = vst [vmem:[#allocation2 + $0x120] sm:$0xff] 0.0
        %345 = vst [vmem:[#allocation2 + $0x128] sm:$0xff] 0.0
        %346 = vst [vmem:[#allocation2 + $0x130] sm:$0xff] 0.0
        %347 = vst [vmem:[#allocation2 + $0x138] sm:$0xff] 0.0
        %348 = vst [vmem:[#allocation2 + $0x140] sm:$0xff] 0.0
        %349 = vst [vmem:[#allocation2 + $0x148] sm:$0xff] 0.0
        %350 = vst [vmem:[#allocation2 + $0x150] sm:$0xff] 0.0
        %351 = vst [vmem:[#allocation2 + $0x158] sm:$0xff] 0.0
        %352 = vst [vmem:[#allocation2 + $0x160] sm:$0xff] 0.0
        %353 = vst [vmem:[#allocation2 + $0x168] sm:$0xff] 0.0
        %354 = vst [vmem:[#allocation2 + $0x170] sm:$0xff] 0.0
        %355 = vst [vmem:[#allocation2 + $0x178] sm:$0xff] 0.0
        %356 = vst [vmem:[#allocation2 + $0x180] sm:$0xff] 0.0
        %357 = vst [vmem:[#allocation2 + $0x188] sm:$0xff] 0.0
        %358 = vst [vmem:[#allocation2 + $0x190] sm:$0xff] 0.0
        %359 = vst [vmem:[#allocation2 + $0x198] sm:$0xff] 0.0
        %360 = vst [vmem:[#allocation2 + $0x1a0] sm:$0xff] 0.0
        %361 = vst [vmem:[#allocation2 + $0x1a8] sm:$0xff] 0.0
        %362 = vst [vmem:[#allocation2 + $0x1b0] sm:$0xff] 0.0
        %363 = vst [vmem:[#allocation2 + $0x1b8] sm:$0xff] 0.0
        %364 = vst [vmem:[#allocation2 + $0x1c0] sm:$0xff] 0.0
        %365 = vst [vmem:[#allocation2 + $0x1c8] sm:$0xff] 0.0
        %366 = vst [vmem:[#allocation2 + $0x1d0] sm:$0xff] 0.0
        %367 = vst [vmem:[#allocation2 + $0x1d8] sm:$0xff] 0.0
        %368 = vst [vmem:[#allocation2 + $0x1e0] sm:$0xff] 0.0
        %369 = vst [vmem:[#allocation2 + $0x1e8] sm:$0xff] 0.0
        %370 = vst [vmem:[#allocation2 + $0x1f0] sm:$0xff] 0.0
        %371 = vst [vmem:[#allocation2 + $0x1f8] sm:$0xff] 0.0
        %372 = vst [vmem:[#allocation2 + $0x200] sm:$0xff] 0.0
        %373 = vst [vmem:[#allocation2 + $0x208] sm:$0xff] 0.0
        %374 = vst [vmem:[#allocation2 + $0x210] sm:$0xff] 0.0
        %375 = vst [vmem:[#allocation2 + $0x218] sm:$0xff] 0.0
        %376 = vst [vmem:[#allocation2 + $0x220] sm:$0xff] 0.0
        %377 = vst [vmem:[#allocation2 + $0x228] sm:$0xff] 0.0
        %378 = vst [vmem:[#allocation2 + $0x230] sm:$0xff] 0.0
        %379 = vst [vmem:[#allocation2 + $0x238] sm:$0xff] 0.0
        %380 = vst [vmem:[#allocation2 + $0x240] sm:$0xff] 0.0
        %381 = vst [vmem:[#allocation2 + $0x248] sm:$0xff] 0.0
        %382 = vst [vmem:[#allocation2 + $0x250] sm:$0xff] 0.0
        %383 = vst [vmem:[#allocation2 + $0x258] sm:$0xff] 0.0
        %384 = vst [vmem:[#allocation2 + $0x260] sm:$0xff] 0.0
        %385 = vst [vmem:[#allocation2 + $0x268] sm:$0xff] 0.0
        %386 = vst [vmem:[#allocation2 + $0x270] sm:$0xff] 0.0
        %387 = vst [vmem:[#allocation2 + $0x278] sm:$0xff] 0.0
        %388 = vst [vmem:[#allocation2 + $0x280] sm:$0xff] 0.0
        %389 = vst [vmem:[#allocation2 + $0x288] sm:$0xff] 0.0
        %390 = vst [vmem:[#allocation2 + $0x290] sm:$0xff] 0.0
        %391 = vst [vmem:[#allocation2 + $0x298] sm:$0xff] 0.0
        %392 = vst [vmem:[#allocation2 + $0x2a0] sm:$0xff] 0.0
        %393 = vst [vmem:[#allocation2 + $0x2a8] sm:$0xff] 0.0
        %394 = vst [vmem:[#allocation2 + $0x2b0] sm:$0xff] 0.0
        %395 = vst [vmem:[#allocation2 + $0x2b8] sm:$0xff] 0.0
        %396 = vst [vmem:[#allocation2 + $0x2c0] sm:$0xff] 0.0
        %397 = vst [vmem:[#allocation2 + $0x2c8] sm:$0xff] 0.0
        %398 = vst [vmem:[#allocation2 + $0x2d0] sm:$0xff] 0.0
        %399 = vst [vmem:[#allocation2 + $0x2d8] sm:$0xff] 0.0
        %400 = vst [vmem:[#allocation2 + $0x2e0] sm:$0xff] 0.0
        %401 = vst [vmem:[#allocation2 + $0x2e8] sm:$0xff] 0.0
        %402 = vst [vmem:[#allocation2 + $0x2f0] sm:$0xff] 0.0
        %403 = vst [vmem:[#allocation2 + $0x2f8] sm:$0xff] 0.0
        %404 = vst [vmem:[#allocation2 + $0x300] sm:$0xff] 0.0
        %405 = vst [vmem:[#allocation2 + $0x308] sm:$0xff] 0.0
        %406 = vst [vmem:[#allocation2 + $0x310] sm:$0xff] 0.0
        %407 = vst [vmem:[#allocation2 + $0x318] sm:$0xff] 0.0
        %408 = vst [vmem:[#allocation2 + $0x320] sm:$0xff] 0.0
        %409 = vst [vmem:[#allocation2 + $0x328] sm:$0xff] 0.0
        %410 = vst [vmem:[#allocation2 + $0x330] sm:$0xff] 0.0
        %411 = vst [vmem:[#allocation2 + $0x338] sm:$0xff] 0.0
        %412 = vst [vmem:[#allocation2 + $0x340] sm:$0xff] 0.0
        %413 = vst [vmem:[#allocation2 + $0x348] sm:$0xff] 0.0
        %414 = vst [vmem:[#allocation2 + $0x350] sm:$0xff] 0.0
        %415 = vst [vmem:[#allocation2 + $0x358] sm:$0xff] 0.0
        %416 = vst [vmem:[#allocation2 + $0x360] sm:$0xff] 0.0
        %417 = vst [vmem:[#allocation2 + $0x368] sm:$0xff] 0.0
        %418 = vst [vmem:[#allocation2 + $0x370] sm:$0xff] 0.0
        %419 = vst [vmem:[#allocation2 + $0x378] sm:$0xff] 0.0
        %420 = vst [vmem:[#allocation2 + $0x380] sm:$0xff] 0.0
        %421 = vst [vmem:[#allocation2 + $0x388] sm:$0xff] 0.0
        %422 = vst [vmem:[#allocation2 + $0x390] sm:$0xff] 0.0
        %423 = vst [vmem:[#allocation2 + $0x398] sm:$0xff] 0.0
        %424 = vst [vmem:[#allocation2 + $0x3a0] sm:$0xff] 0.0
        %425 = vst [vmem:[#allocation2 + $0x3a8] sm:$0xff] 0.0
        %426 = vst [vmem:[#allocation2 + $0x3b0] sm:$0xff] 0.0
        %427 = vst [vmem:[#allocation2 + $0x3b8] sm:$0xff] 0.0
        %428 = vst [vmem:[#allocation2 + $0x3c0] sm:$0xff] 0.0
        %429 = vst [vmem:[#allocation2 + $0x3c8] sm:$0xff] 0.0
        %430 = vst [vmem:[#allocation2 + $0x3d0] sm:$0xff] 0.0
        %431 = vst [vmem:[#allocation2 + $0x3d8] sm:$0xff] 0.0
        %432 = vst [vmem:[#allocation2 + $0x3e0] sm:$0xff] 0.0
        %433 = vst [vmem:[#allocation2 + $0x3e8] sm:$0xff] 0.0
        %434 = vst [vmem:[#allocation2 + $0x3f0] sm:$0xff] 0.0
        %435 = vst [vmem:[#allocation2 + $0x3f8] sm:$0xff] 0.0
        %436 = vst [vmem:[#allocation2 + $0x400] sm:$0xff] 0.0
        %437 = vst [vmem:[#allocation2 + $0x408] sm:$0xff] 0.0
        %438 = vst [vmem:[#allocation2 + $0x410] sm:$0xff] 0.0
        %439 = vst [vmem:[#allocation2 + $0x418] sm:$0xff] 0.0
        %440 = vst [vmem:[#allocation2 + $0x420] sm:$0xff] 0.0
        %441 = vst [vmem:[#allocation2 + $0x428] sm:$0xff] 0.0
        %442 = vst [vmem:[#allocation2 + $0x430] sm:$0xff] 0.0
        %443 = vst [vmem:[#allocation2 + $0x438] sm:$0xff] 0.0
        %444 = vst [vmem:[#allocation2 + $0x440] sm:$0xff] 0.0
        %445 = vst [vmem:[#allocation2 + $0x448] sm:$0xff] 0.0
        %446 = vst [vmem:[#allocation2 + $0x450] sm:$0xff] 0.0
        %447 = vst [vmem:[#allocation2 + $0x458] sm:$0xff] 0.0
        %448 = vst [vmem:[#allocation2 + $0x460] sm:$0xff] 0.0
        %449 = vst [vmem:[#allocation2 + $0x468] sm:$0xff] 0.0
        %450 = vst [vmem:[#allocation2 + $0x470] sm:$0xff] 0.0
        %451 = vst [vmem:[#allocation2 + $0x478] sm:$0xff] 0.0
        %452 = vst [vmem:[#allocation2 + $0x480] sm:$0xff] 0.0
        %453 = vst [vmem:[#allocation2 + $0x488] sm:$0xff] 0.0
        %454 = vst [vmem:[#allocation2 + $0x490] sm:$0xff] 0.0
        %455 = vst [vmem:[#allocation2 + $0x498] sm:$0xff] 0.0
        %456 = vst [vmem:[#allocation2 + $0x4a0] sm:$0xff] 0.0
        %457 = vst [vmem:[#allocation2 + $0x4a8] sm:$0xff] 0.0
        %458 = vst [vmem:[#allocation2 + $0x4b0] sm:$0xff] 0.0
        %459 = vst [vmem:[#allocation2 + $0x4b8] sm:$0xff] 0.0
        %460 = vst [vmem:[#allocation2 + $0x4c0] sm:$0xff] 0.0
        %461 = vst [vmem:[#allocation2 + $0x4c8] sm:$0xff] 0.0
        %462 = vst [vmem:[#allocation2 + $0x4d0] sm:$0xff] 0.0
        %463 = vst [vmem:[#allocation2 + $0x4d8] sm:$0xff] 0.0
        %464 = vst [vmem:[#allocation2 + $0x4e0] sm:$0xff] 0.0
        %465 = vst [vmem:[#allocation2 + $0x4e8] sm:$0xff] 0.0
        %466 = vst [vmem:[#allocation2 + $0x4f0] sm:$0xff] 0.0
        %467 = vst [vmem:[#allocation2 + $0x4f8] sm:$0xff] 0.0
        %468 = vst [vmem:[#allocation2 + $0x500] sm:$0xff] 0.0
        %469 = vst [vmem:[#allocation2 + $0x508] sm:$0xff] 0.0
        %470 = vst [vmem:[#allocation2 + $0x510] sm:$0xff] 0.0
        %471 = vst [vmem:[#allocation2 + $0x518] sm:$0xff] 0.0
        %472 = vst [vmem:[#allocation2 + $0x520] sm:$0xff] 0.0
        %473 = vst [vmem:[#allocation2 + $0x528] sm:$0xff] 0.0
        %474 = vst [vmem:[#allocation2 + $0x530] sm:$0xff] 0.0
        %475 = vst [vmem:[#allocation2 + $0x538] sm:$0xff] 0.0
        %476 = vst [vmem:[#allocation2 + $0x540] sm:$0xff] 0.0
        %477 = vst [vmem:[#allocation2 + $0x548] sm:$0xff] 0.0
        %478 = vst [vmem:[#allocation2 + $0x550] sm:$0xff] 0.0
        %479 = vst [vmem:[#allocation2 + $0x558] sm:$0xff] 0.0
        %480 = vst [vmem:[#allocation2 + $0x560] sm:$0xff] 0.0
        %481 = vst [vmem:[#allocation2 + $0x568] sm:$0xff] 0.0
        %482 = vst [vmem:[#allocation2 + $0x570] sm:$0xff] 0.0
        %483 = vst [vmem:[#allocation2 + $0x578] sm:$0xff] 0.0
        %484 = vst [vmem:[#allocation2 + $0x580] sm:$0xff] 0.0
        %485 = vst [vmem:[#allocation2 + $0x588] sm:$0xff] 0.0
        %486 = vst [vmem:[#allocation2 + $0x590] sm:$0xff] 0.0
        %487 = vst [vmem:[#allocation2 + $0x598] sm:$0xff] 0.0
        %488 = vst [vmem:[#allocation2 + $0x5a0] sm:$0xff] 0.0
        %489 = vst [vmem:[#allocation2 + $0x5a8] sm:$0xff] 0.0
        %490 = vst [vmem:[#allocation2 + $0x5b0] sm:$0xff] 0.0
        %491 = vst [vmem:[#allocation2 + $0x5b8] sm:$0xff] 0.0
        %492 = vst [vmem:[#allocation2 + $0x5c0] sm:$0xff] 0.0
        %493 = vst [vmem:[#allocation2 + $0x5c8] sm:$0xff] 0.0
        %494 = vst [vmem:[#allocation2 + $0x5d0] sm:$0xff] 0.0
        %495 = vst [vmem:[#allocation2 + $0x5d8] sm:$0xff] 0.0
        %496 = vst [vmem:[#allocation2 + $0x5e0] sm:$0xff] 0.0
        %497 = vst [vmem:[#allocation2 + $0x5e8] sm:$0xff] 0.0
        %498 = vst [vmem:[#allocation2 + $0x5f0] sm:$0xff] 0.0
        %499 = vst [vmem:[#allocation2 + $0x5f8] sm:$0xff] 0.0
        %500 = vst [vmem:[#allocation2 + $0x600] sm:$0xff] 0.0
        %501 = vst [vmem:[#allocation2 + $0x608] sm:$0xff] 0.0
        %502 = vst [vmem:[#allocation2 + $0x610] sm:$0xff] 0.0
        %503 = vst [vmem:[#allocation2 + $0x618] sm:$0xff] 0.0
        %504 = vst [vmem:[#allocation2 + $0x620] sm:$0xff] 0.0
        %505 = vst [vmem:[#allocation2 + $0x628] sm:$0xff] 0.0
        %506 = vst [vmem:[#allocation2 + $0x630] sm:$0xff] 0.0
        %507 = vst [vmem:[#allocation2 + $0x638] sm:$0xff] 0.0
        %508 = vst [vmem:[#allocation2 + $0x640] sm:$0xff] 0.0
        %509 = vst [vmem:[#allocation2 + $0x648] sm:$0xff] 0.0
        %510 = vst [vmem:[#allocation2 + $0x650] sm:$0xff] 0.0
        %511 = vst [vmem:[#allocation2 + $0x658] sm:$0xff] 0.0
        %512 = vst [vmem:[#allocation2 + $0x660] sm:$0xff] 0.0
        %513 = vst [vmem:[#allocation2 + $0x668] sm:$0xff] 0.0
        %514 = vst [vmem:[#allocation2 + $0x670] sm:$0xff] 0.0
        %515 = vst [vmem:[#allocation2 + $0x678] sm:$0xff] 0.0
        %516 = vst [vmem:[#allocation2 + $0x680] sm:$0xff] 0.0
        %517 = vst [vmem:[#allocation2 + $0x688] sm:$0xff] 0.0
        %518 = vst [vmem:[#allocation2 + $0x690] sm:$0xff] 0.0
        %519 = vst [vmem:[#allocation2 + $0x698] sm:$0xff] 0.0
        %520 = vst [vmem:[#allocation2 + $0x6a0] sm:$0xff] 0.0
        %521 = vst [vmem:[#allocation2 + $0x6a8] sm:$0xff] 0.0
        %522 = vst [vmem:[#allocation2 + $0x6b0] sm:$0xff] 0.0
        %523 = vst [vmem:[#allocation2 + $0x6b8] sm:$0xff] 0.0
        %524 = vst [vmem:[#allocation2 + $0x6c0] sm:$0xff] 0.0
        %525 = vst [vmem:[#allocation2 + $0x6c8] sm:$0xff] 0.0
        %526 = vst [vmem:[#allocation2 + $0x6d0] sm:$0xff] 0.0
        %527 = vst [vmem:[#allocation2 + $0x6d8] sm:$0xff] 0.0
        %528 = vst [vmem:[#allocation2 + $0x6e0] sm:$0xff] 0.0
        %529 = vst [vmem:[#allocation2 + $0x6e8] sm:$0xff] 0.0
        %530 = vst [vmem:[#allocation2 + $0x6f0] sm:$0xff] 0.0
        %531 = vst [vmem:[#allocation2 + $0x6f8] sm:$0xff] 0.0
        %532 = vst [vmem:[#allocation2 + $0x700] sm:$0xff] 0.0
        %533 = vst [vmem:[#allocation2 + $0x708] sm:$0xff] 0.0
        %534 = vst [vmem:[#allocation2 + $0x710] sm:$0xff] 0.0
        %535 = vst [vmem:[#allocation2 + $0x718] sm:$0xff] 0.0
        %536 = vst [vmem:[#allocation2 + $0x720] sm:$0xff] 0.0
        %537 = vst [vmem:[#allocation2 + $0x728] sm:$0xff] 0.0
        %538 = vst [vmem:[#allocation2 + $0x730] sm:$0xff] 0.0
        %539 = vst [vmem:[#allocation2 + $0x738] sm:$0xff] 0.0
        %540 = vst [vmem:[#allocation2 + $0x740] sm:$0xff] 0.0
        %541 = vst [vmem:[#allocation2 + $0x748] sm:$0xff] 0.0
        %542 = vst [vmem:[#allocation2 + $0x750] sm:$0xff] 0.0
        %543 = vst [vmem:[#allocation2 + $0x758] sm:$0xff] 0.0
        %544 = vst [vmem:[#allocation2 + $0x760] sm:$0xff] 0.0
        %545 = vst [vmem:[#allocation2 + $0x768] sm:$0xff] 0.0
        %546 = vst [vmem:[#allocation2 + $0x770] sm:$0xff] 0.0
        %547 = vst [vmem:[#allocation2 + $0x778] sm:$0xff] 0.0
        %548 = vst [vmem:[#allocation2 + $0x780] sm:$0xff] 0.0
        %549 = vst [vmem:[#allocation2 + $0x788] sm:$0xff] 0.0
        %550 = vst [vmem:[#allocation2 + $0x790] sm:$0xff] 0.0
        %551 = vst [vmem:[#allocation2 + $0x798] sm:$0xff] 0.0
        %552 = vst [vmem:[#allocation2 + $0x7a0] sm:$0xff] 0.0
        %553 = vst [vmem:[#allocation2 + $0x7a8] sm:$0xff] 0.0
        %554 = vst [vmem:[#allocation2 + $0x7b0] sm:$0xff] 0.0
        %555 = vst [vmem:[#allocation2 + $0x7b8] sm:$0xff] 0.0
        %556 = vst [vmem:[#allocation2 + $0x7c0] sm:$0xff] 0.0
        %557 = vst [vmem:[#allocation2 + $0x7c8] sm:$0xff] 0.0
        %558 = vst [vmem:[#allocation2 + $0x7d0] sm:$0xff] 0.0
        %559 = vst [vmem:[#allocation2 + $0x7d8] sm:$0xff] 0.0
        %560 = vst [vmem:[#allocation2 + $0x7e0] sm:$0xff] 0.0
        %561 = vst [vmem:[#allocation2 + $0x7e8] sm:$0xff] 0.0
        %562 = vst [vmem:[#allocation2 + $0x7f0] sm:$0xff] 0.0
        %563 = vst [vmem:[#allocation2 + $0x7f8] sm:$0xff] 0.0
      $region52: #{gnr_forward.3} parent=47 // pred_fallthru
        _
      %v564 = vld [vmem:[%s296] sm:$0xf]
      %v565 = vld [vmem:[%s296 + $0x4] sm:$0xf]
      %v566 = vld [vmem:[%s296 + $0x8] sm:$0xf]
      %v567 = vld [vmem:[%s296 + $0xc] sm:$0xf]
      %v568 = vld [vmem:[%s296 + $0x10] sm:$0xf]
      %v569 = vld [vmem:[%s296 + $0x14] sm:$0xf]
      %v570 = vld [vmem:[%s296 + $0x18] sm:$0xf]
      %v571 = vld [vmem:[%s296 + $0x1c] sm:$0xf]
      %v572 = vld [vmem:[%s296 + $0x20] sm:$0xf]
      %v573 = vld [vmem:[%s296 + $0x24] sm:$0xf]
      %v574 = vld [vmem:[%s296 + $0x28] sm:$0xf]
      %v575 = vld [vmem:[%s296 + $0x2c] sm:$0xf]
      %v576 = vld [vmem:[%s296 + $0x30] sm:$0xf]
      %v577 = vld [vmem:[%s296 + $0x34] sm:$0xf]
      %v578 = vld [vmem:[%s296 + $0x38] sm:$0xf]
      %v579 = vld [vmem:[%s296 + $0x3c] sm:$0xf]
      %v580 = vld [vmem:[%s296 + $0x40] sm:$0xf]
      %v581 = vld [vmem:[%s296 + $0x44] sm:$0xf]
      %v582 = vld [vmem:[%s296 + $0x48] sm:$0xf]
      %v583 = vld [vmem:[%s296 + $0x4c] sm:$0xf]
      %v584 = vld [vmem:[%s296 + $0x50] sm:$0xf]
      %v585 = vld [vmem:[%s296 + $0x54] sm:$0xf]
      %v586 = vld [vmem:[%s296 + $0x58] sm:$0xf]
      %v587 = vld [vmem:[%s296 + $0x5c] sm:$0xf]
      %v588 = vld [vmem:[%s296 + $0x60] sm:$0xf]
      %v589 = vld [vmem:[%s296 + $0x64] sm:$0xf]
      %v590 = vld [vmem:[%s296 + $0x68] sm:$0xf]
      %v591 = vld [vmem:[%s296 + $0x6c] sm:$0xf]
      %v592 = vld [vmem:[%s296 + $0x70] sm:$0xf]
      %v593 = vld [vmem:[%s296 + $0x74] sm:$0xf]
      %v594 = vld [vmem:[%s296 + $0x78] sm:$0xf]
      %v595 = vld [vmem:[%s296 + $0x7c] sm:$0xf]
      %v596 = vld [vmem:[%s296 + $0x80] sm:$0xf]
      %v597 = vld [vmem:[%s296 + $0x84] sm:$0xf]
      %v598 = vld [vmem:[%s296 + $0x88] sm:$0xf]
      %v599 = vld [vmem:[%s296 + $0x8c] sm:$0xf]
      %v600 = vld [vmem:[%s296 + $0x90] sm:$0xf]
      %v601 = vld [vmem:[%s296 + $0x94] sm:$0xf]
      %v602 = vld [vmem:[%s296 + $0x98] sm:$0xf]
      %v603 = vld [vmem:[%s296 + $0x9c] sm:$0xf]
      %v604 = vld [vmem:[%s296 + $0xa0] sm:$0xf]
      %v605 = vld [vmem:[%s296 + $0xa4] sm:$0xf]
      %v606 = vld [vmem:[%s296 + $0xa8] sm:$0xf]
      %v607 = vld [vmem:[%s296 + $0xac] sm:$0xf]
      %v608 = vld [vmem:[%s296 + $0xb0] sm:$0xf]
      %v609 = vld [vmem:[%s296 + $0xb4] sm:$0xf]
      %v610 = vld [vmem:[%s296 + $0xb8] sm:$0xf]
      %v611 = vld [vmem:[%s296 + $0xbc] sm:$0xf]
      %v612 = vld [vmem:[%s296 + $0xc0] sm:$0xf]
      %v613 = vld [vmem:[%s296 + $0xc4] sm:$0xf]
      %v614 = vld [vmem:[%s296 + $0xc8] sm:$0xf]
      %v615 = vld [vmem:[%s296 + $0xcc] sm:$0xf]
      %v616 = vld [vmem:[%s296 + $0xd0] sm:$0xf]
      %v617 = vld [vmem:[%s296 + $0xd4] sm:$0xf]
      %v618 = vld [vmem:[%s296 + $0xd8] sm:$0xf]
      %v619 = vld [vmem:[%s296 + $0xdc] sm:$0xf]
      %v620 = vld [vmem:[%s296 + $0xe0] sm:$0xf]
      %v621 = vld [vmem:[%s296 + $0xe4] sm:$0xf]
      %v622 = vld [vmem:[%s296 + $0xe8] sm:$0xf]
      %v623 = vld [vmem:[%s296 + $0xec] sm:$0xf]
      %v624 = vld [vmem:[%s296 + $0xf0] sm:$0xf]
      %v625 = vld [vmem:[%s296 + $0xf4] sm:$0xf]
      %v626 = vld [vmem:[%s296 + $0xf8] sm:$0xf]
      %v627 = vld [vmem:[%s296 + $0xfc] sm:$0xf]
      %v628 = vld [vmem:[%s296 + $0x100] sm:$0xf]
      %v629 = vld [vmem:[%s296 + $0x104] sm:$0xf]
      %v630 = vld [vmem:[%s296 + $0x108] sm:$0xf]
      %v631 = vld [vmem:[%s296 + $0x10c] sm:$0xf]
      %v632 = vld [vmem:[%s296 + $0x110] sm:$0xf]
      %v633 = vld [vmem:[%s296 + $0x114] sm:$0xf]
      %v634 = vld [vmem:[%s296 + $0x118] sm:$0xf]
      %v635 = vld [vmem:[%s296 + $0x11c] sm:$0xf]
      %v636 = vld [vmem:[%s296 + $0x120] sm:$0xf]
      %v637 = vld [vmem:[%s296 + $0x124] sm:$0xf]
      %v638 = vld [vmem:[%s296 + $0x128] sm:$0xf]
      %v639 = vld [vmem:[%s296 + $0x12c] sm:$0xf]
      %v640 = vld [vmem:[%s296 + $0x130] sm:$0xf]
      %v641 = vld [vmem:[%s296 + $0x134] sm:$0xf]
      %v642 = vld [vmem:[%s296 + $0x138] sm:$0xf]
      %v643 = vld [vmem:[%s296 + $0x13c] sm:$0xf]
      %v644 = vld [vmem:[%s296 + $0x140] sm:$0xf]
      %v645 = vld [vmem:[%s296 + $0x144] sm:$0xf]
      %v646 = vld [vmem:[%s296 + $0x148] sm:$0xf]
      %v647 = vld [vmem:[%s296 + $0x14c] sm:$0xf]
      %v648 = vld [vmem:[%s296 + $0x150] sm:$0xf]
      %v649 = vld [vmem:[%s296 + $0x154] sm:$0xf]
      %v650 = vld [vmem:[%s296 + $0x158] sm:$0xf]
      %v651 = vld [vmem:[%s296 + $0x15c] sm:$0xf]
      %v652 = vld [vmem:[%s296 + $0x160] sm:$0xf]
      %v653 = vld [vmem:[%s296 + $0x164] sm:$0xf]
      %v654 = vld [vmem:[%s296 + $0x168] sm:$0xf]
      %v655 = vld [vmem:[%s296 + $0x16c] sm:$0xf]
      %v656 = vld [vmem:[%s296 + $0x170] sm:$0xf]
      %v657 = vld [vmem:[%s296 + $0x174] sm:$0xf]
      %v658 = vld [vmem:[%s296 + $0x178] sm:$0xf]
      %v659 = vld [vmem:[%s296 + $0x17c] sm:$0xf]
      %v660 = vld [vmem:[%s296 + $0x180] sm:$0xf]
      %v661 = vld [vmem:[%s296 + $0x184] sm:$0xf]
      %v662 = vld [vmem:[%s296 + $0x188] sm:$0xf]
      %v663 = vld [vmem:[%s296 + $0x18c] sm:$0xf]
      %v664 = vld [vmem:[%s296 + $0x190] sm:$0xf]
      %v665 = vld [vmem:[%s296 + $0x194] sm:$0xf]
      %v666 = vld [vmem:[%s296 + $0x198] sm:$0xf]
      %v667 = vld [vmem:[%s296 + $0x19c] sm:$0xf]
      %v668 = vld [vmem:[%s296 + $0x1a0] sm:$0xf]
      %v669 = vld [vmem:[%s296 + $0x1a4] sm:$0xf]
      %v670 = vld [vmem:[%s296 + $0x1a8] sm:$0xf]
      %v671 = vld [vmem:[%s296 + $0x1ac] sm:$0xf]
      %v672 = vld [vmem:[%s296 + $0x1b0] sm:$0xf]
      %v673 = vld [vmem:[%s296 + $0x1b4] sm:$0xf]
      %v674 = vld [vmem:[%s296 + $0x1b8] sm:$0xf]
      %v675 = vld [vmem:[%s296 + $0x1bc] sm:$0xf]
      %v676 = vld [vmem:[%s296 + $0x1c0] sm:$0xf]
      %v677 = vld [vmem:[%s296 + $0x1c4] sm:$0xf]
      %v678 = vld [vmem:[%s296 + $0x1c8] sm:$0xf]
      %v679 = vld [vmem:[%s296 + $0x1cc] sm:$0xf]
      %v680 = vld [vmem:[%s296 + $0x1d0] sm:$0xf]
      %v681 = vld [vmem:[%s296 + $0x1d4] sm:$0xf]
      %v682 = vld [vmem:[%s296 + $0x1d8] sm:$0xf]
      %v683 = vld [vmem:[%s296 + $0x1dc] sm:$0xf]
      %v684 = vld [vmem:[%s296 + $0x1e0] sm:$0xf]
      %v685 = vld [vmem:[%s296 + $0x1e4] sm:$0xf]
      %v686 = vld [vmem:[%s296 + $0x1e8] sm:$0xf]
      %v687 = vld [vmem:[%s296 + $0x1ec] sm:$0xf]
      %v688 = vld [vmem:[%s296 + $0x1f0] sm:$0xf]
      %v689 = vld [vmem:[%s296 + $0x1f4] sm:$0xf]
      %v690 = vld [vmem:[%s296 + $0x1f8] sm:$0xf]
      %v691 = vld [vmem:[%s296 + $0x1fc] sm:$0xf]
      %v692 = vld [vmem:[%s296 + $0x200] sm:$0xf]
      %v693 = vld [vmem:[%s296 + $0x204] sm:$0xf]
      %v694 = vld [vmem:[%s296 + $0x208] sm:$0xf]
      %v695 = vld [vmem:[%s296 + $0x20c] sm:$0xf]
      %v696 = vld [vmem:[%s296 + $0x210] sm:$0xf]
      %v697 = vld [vmem:[%s296 + $0x214] sm:$0xf]
      %v698 = vld [vmem:[%s296 + $0x218] sm:$0xf]
      %v699 = vld [vmem:[%s296 + $0x21c] sm:$0xf]
      %v700 = vld [vmem:[%s296 + $0x220] sm:$0xf]
      %v701 = vld [vmem:[%s296 + $0x224] sm:$0xf]
      %v702 = vld [vmem:[%s296 + $0x228] sm:$0xf]
      %v703 = vld [vmem:[%s296 + $0x22c] sm:$0xf]
      %v704 = vld [vmem:[%s296 + $0x230] sm:$0xf]
      %v705 = vld [vmem:[%s296 + $0x234] sm:$0xf]
      %v706 = vld [vmem:[%s296 + $0x238] sm:$0xf]
      %v707 = vld [vmem:[%s296 + $0x23c] sm:$0xf]
      %v708 = vld [vmem:[%s296 + $0x240] sm:$0xf]
      %v709 = vld [vmem:[%s296 + $0x244] sm:$0xf]
      %v710 = vld [vmem:[%s296 + $0x248] sm:$0xf]
      %v711 = vld [vmem:[%s296 + $0x24c] sm:$0xf]
      %v712 = vld [vmem:[%s296 + $0x250] sm:$0xf]
      %v713 = vld [vmem:[%s296 + $0x254] sm:$0xf]
      %v714 = vld [vmem:[%s296 + $0x258] sm:$0xf]
      %v715 = vld [vmem:[%s296 + $0x25c] sm:$0xf]
      %v716 = vld [vmem:[%s296 + $0x260] sm:$0xf]
      %v717 = vld [vmem:[%s296 + $0x264] sm:$0xf]
      %v718 = vld [vmem:[%s296 + $0x268] sm:$0xf]
      %v719 = vld [vmem:[%s296 + $0x26c] sm:$0xf]
      %v720 = vld [vmem:[%s296 + $0x270] sm:$0xf]
      %v721 = vld [vmem:[%s296 + $0x274] sm:$0xf]
      %v722 = vld [vmem:[%s296 + $0x278] sm:$0xf]
      %v723 = vld [vmem:[%s296 + $0x27c] sm:$0xf]
      %v724 = vld [vmem:[%s296 + $0x280] sm:$0xf]
      %v725 = vld [vmem:[%s296 + $0x284] sm:$0xf]
      %v726 = vld [vmem:[%s296 + $0x288] sm:$0xf]
      %v727 = vld [vmem:[%s296 + $0x28c] sm:$0xf]
      %v728 = vld [vmem:[%s296 + $0x290] sm:$0xf]
      %v729 = vld [vmem:[%s296 + $0x294] sm:$0xf]
      %v730 = vld [vmem:[%s296 + $0x298] sm:$0xf]
      %v731 = vld [vmem:[%s296 + $0x29c] sm:$0xf]
      %v732 = vld [vmem:[%s296 + $0x2a0] sm:$0xf]
      %v733 = vld [vmem:[%s296 + $0x2a4] sm:$0xf]
      %v734 = vld [vmem:[%s296 + $0x2a8] sm:$0xf]
      %v735 = vld [vmem:[%s296 + $0x2ac] sm:$0xf]
      %v736 = vld [vmem:[%s296 + $0x2b0] sm:$0xf]
      %v737 = vld [vmem:[%s296 + $0x2b4] sm:$0xf]
      %v738 = vld [vmem:[%s296 + $0x2b8] sm:$0xf]
      %v739 = vld [vmem:[%s296 + $0x2bc] sm:$0xf]
      %v740 = vld [vmem:[%s296 + $0x2c0] sm:$0xf]
      %v741 = vld [vmem:[%s296 + $0x2c4] sm:$0xf]
      %v742 = vld [vmem:[%s296 + $0x2c8] sm:$0xf]
      %v743 = vld [vmem:[%s296 + $0x2cc] sm:$0xf]
      %v744 = vld [vmem:[%s296 + $0x2d0] sm:$0xf]
      %v745 = vld [vmem:[%s296 + $0x2d4] sm:$0xf]
      %v746 = vld [vmem:[%s296 + $0x2d8] sm:$0xf]
      %v747 = vld [vmem:[%s296 + $0x2dc] sm:$0xf]
      %v748 = vld [vmem:[%s296 + $0x2e0] sm:$0xf]
      %v749 = vld [vmem:[%s296 + $0x2e4] sm:$0xf]
      %v750 = vld [vmem:[%s296 + $0x2e8] sm:$0xf]
      %v751 = vld [vmem:[%s296 + $0x2ec] sm:$0xf]
      %v752 = vld [vmem:[%s296 + $0x2f0] sm:$0xf]
      %v753 = vld [vmem:[%s296 + $0x2f4] sm:$0xf]
      %v754 = vld [vmem:[%s296 + $0x2f8] sm:$0xf]
      %v755 = vld [vmem:[%s296 + $0x2fc] sm:$0xf]
      %v756 = vld [vmem:[%s296 + $0x300] sm:$0xf]
      %v757 = vld [vmem:[%s296 + $0x304] sm:$0xf]
      %v758 = vld [vmem:[%s296 + $0x308] sm:$0xf]
      %v759 = vld [vmem:[%s296 + $0x30c] sm:$0xf]
      %v760 = vld [vmem:[%s296 + $0x310] sm:$0xf]
      %v761 = vld [vmem:[%s296 + $0x314] sm:$0xf]
      %v762 = vld [vmem:[%s296 + $0x318] sm:$0xf]
      %v763 = vld [vmem:[%s296 + $0x31c] sm:$0xf]
      %v764 = vld [vmem:[%s296 + $0x320] sm:$0xf]
      %v765 = vld [vmem:[%s296 + $0x324] sm:$0xf]
      %v766 = vld [vmem:[%s296 + $0x328] sm:$0xf]
      %v767 = vld [vmem:[%s296 + $0x32c] sm:$0xf]
      %v768 = vld [vmem:[%s296 + $0x330] sm:$0xf]
      %v769 = vld [vmem:[%s296 + $0x334] sm:$0xf]
      %v770 = vld [vmem:[%s296 + $0x338] sm:$0xf]
      %v771 = vld [vmem:[%s296 + $0x33c] sm:$0xf]
      %v772 = vld [vmem:[%s296 + $0x340] sm:$0xf]
      %v773 = vld [vmem:[%s296 + $0x344] sm:$0xf]
      %v774 = vld [vmem:[%s296 + $0x348] sm:$0xf]
      %v775 = vld [vmem:[%s296 + $0x34c] sm:$0xf]
      %v776 = vld [vmem:[%s296 + $0x350] sm:$0xf]
      %v777 = vld [vmem:[%s296 + $0x354] sm:$0xf]
      %v778 = vld [vmem:[%s296 + $0x358] sm:$0xf]
      %v779 = vld [vmem:[%s296 + $0x35c] sm:$0xf]
      %v780 = vld [vmem:[%s296 + $0x360] sm:$0xf]
      %v781 = vld [vmem:[%s296 + $0x364] sm:$0xf]
      %v782 = vld [vmem:[%s296 + $0x368] sm:$0xf]
      %v783 = vld [vmem:[%s296 + $0x36c] sm:$0xf]
      %v784 = vld [vmem:[%s296 + $0x370] sm:$0xf]
      %v785 = vld [vmem:[%s296 + $0x374] sm:$0xf]
      %v786 = vld [vmem:[%s296 + $0x378] sm:$0xf]
      %v787 = vld [vmem:[%s296 + $0x37c] sm:$0xf]
      %v788 = vld [vmem:[%s296 + $0x380] sm:$0xf]
      %v789 = vld [vmem:[%s296 + $0x384] sm:$0xf]
      %v790 = vld [vmem:[%s296 + $0x388] sm:$0xf]
      %v791 = vld [vmem:[%s296 + $0x38c] sm:$0xf]
      %v792 = vld [vmem:[%s296 + $0x390] sm:$0xf]
      %v793 = vld [vmem:[%s296 + $0x394] sm:$0xf]
      %v794 = vld [vmem:[%s296 + $0x398] sm:$0xf]
      %v795 = vld [vmem:[%s296 + $0x39c] sm:$0xf]
      %v796 = vld [vmem:[%s296 + $0x3a0] sm:$0xf]
      %v797 = vld [vmem:[%s296 + $0x3a4] sm:$0xf]
      %v798 = vld [vmem:[%s296 + $0x3a8] sm:$0xf]
      %v799 = vld [vmem:[%s296 + $0x3ac] sm:$0xf]
      %v800 = vld [vmem:[%s296 + $0x3b0] sm:$0xf]
      %v801 = vld [vmem:[%s296 + $0x3b4] sm:$0xf]
      %v802 = vld [vmem:[%s296 + $0x3b8] sm:$0xf]
      %v803 = vld [vmem:[%s296 + $0x3bc] sm:$0xf]
      %v804 = vld [vmem:[%s296 + $0x3c0] sm:$0xf]
      %v805 = vld [vmem:[%s296 + $0x3c4] sm:$0xf]
      %v806 = vld [vmem:[%s296 + $0x3c8] sm:$0xf]
      %v807 = vld [vmem:[%s296 + $0x3cc] sm:$0xf]
      %v808 = vld [vmem:[%s296 + $0x3d0] sm:$0xf]
      %v809 = vld [vmem:[%s296 + $0x3d4] sm:$0xf]
      %v810 = vld [vmem:[%s296 + $0x3d8] sm:$0xf]
      %v811 = vld [vmem:[%s296 + $0x3dc] sm:$0xf]
      %v812 = vld [vmem:[%s296 + $0x3e0] sm:$0xf]
      %v813 = vld [vmem:[%s296 + $0x3e4] sm:$0xf]
      %v814 = vld [vmem:[%s296 + $0x3e8] sm:$0xf]
      %v815 = vld [vmem:[%s296 + $0x3ec] sm:$0xf]
      %v816 = vld [vmem:[%s296 + $0x3f0] sm:$0xf]
      %v817 = vld [vmem:[%s296 + $0x3f4] sm:$0xf]
      %v818 = vld [vmem:[%s296 + $0x3f8] sm:$0xf]
      %v819 = vld [vmem:[%s296 + $0x3fc] sm:$0xf]
      %v820 = vld [vmem:[%s1] sm:$0xf]
      %v821 = vld [vmem:[%s1 + $0x4] sm:$0xf]
      %v822 = vld [vmem:[%s1 + $0x8] sm:$0xf]
      %v823 = vld [vmem:[%s1 + $0xc] sm:$0xf]
      %v824 = vld [vmem:[%s1 + $0x10] sm:$0xf]
      %v825 = vld [vmem:[%s1 + $0x14] sm:$0xf]
      %v826 = vld [vmem:[%s1 + $0x18] sm:$0xf]
      %v827 = vld [vmem:[%s1 + $0x1c] sm:$0xf]
      %v828 = vld [vmem:[%s1 + $0x20] sm:$0xf]
      %v829 = vld [vmem:[%s1 + $0x24] sm:$0xf]
      %v830 = vld [vmem:[%s1 + $0x28] sm:$0xf]
      %v831 = vld [vmem:[%s1 + $0x2c] sm:$0xf]
      %v832 = vld [vmem:[%s1 + $0x30] sm:$0xf]
      %v833 = vld [vmem:[%s1 + $0x34] sm:$0xf]
      %v834 = vld [vmem:[%s1 + $0x38] sm:$0xf]
      %v835 = vld [vmem:[%s1 + $0x3c] sm:$0xf]
      %v836 = vld [vmem:[%s2] sm:$0x1]
      %v838 = vlaneseq
      %v839 = vshrl.u32 %v838, 7
      %v840 = vsub.s32 0, %v839
      %v841 = vrot.slane %v836, %v840
      %v1099 = vunpack.c.l.b16 %v564
      %v1100 = vunpack.c.l.b16 %v565
      %v1101 = vunpack.c.l.b16 %v566
      %v1102 = vunpack.c.l.b16 %v567
      %v1103 = vunpack.c.l.b16 %v568
      %v1104 = vunpack.c.l.b16 %v569
      %v1105 = vunpack.c.l.b16 %v570
      %v1106 = vunpack.c.l.b16 %v571
      %v1107 = vunpack.c.l.b16 %v572
      %v1108 = vunpack.c.l.b16 %v573
      %v1109 = vunpack.c.l.b16 %v574
      %v1110 = vunpack.c.l.b16 %v575
      %v1111 = vunpack.c.l.b16 %v576
      %v1112 = vunpack.c.l.b16 %v577
      %v1113 = vunpack.c.l.b16 %v578
      %v1114 = vunpack.c.l.b16 %v579
      %v1115 = vunpack.c.l.b16 %v580
      %v1116 = vunpack.c.l.b16 %v581
      %v1117 = vunpack.c.l.b16 %v582
      %v1118 = vunpack.c.l.b16 %v583
      %v1119 = vunpack.c.l.b16 %v584
      %v1120 = vunpack.c.l.b16 %v585
      %v1121 = vunpack.c.l.b16 %v586
      %v1122 = vunpack.c.l.b16 %v587
      %v1123 = vunpack.c.l.b16 %v588
      %v1124 = vunpack.c.l.b16 %v589
      %v1125 = vunpack.c.l.b16 %v590
      %v1126 = vunpack.c.l.b16 %v591
      %v1127 = vunpack.c.l.b16 %v592
      %v1128 = vunpack.c.l.b16 %v593
      %v1129 = vunpack.c.l.b16 %v594
      %v1130 = vunpack.c.l.b16 %v595
      %v1131 = vunpack.c.l.b16 %v596
      %v1132 = vunpack.c.l.b16 %v597
      %v1133 = vunpack.c.l.b16 %v598
      %v1134 = vunpack.c.l.b16 %v599
      %v1135 = vunpack.c.l.b16 %v600
      %v1136 = vunpack.c.l.b16 %v601
      %v1137 = vunpack.c.l.b16 %v602
      %v1138 = vunpack.c.l.b16 %v603
      %v1139 = vunpack.c.l.b16 %v604
      %v1140 = vunpack.c.l.b16 %v605
      %v1141 = vunpack.c.l.b16 %v606
      %v1142 = vunpack.c.l.b16 %v607
      %v1143 = vunpack.c.l.b16 %v608
      %v1144 = vunpack.c.l.b16 %v609
      %v1145 = vunpack.c.l.b16 %v610
      %v1146 = vunpack.c.l.b16 %v611
      %v1147 = vunpack.c.l.b16 %v612
      %v1148 = vunpack.c.l.b16 %v613
      %v1149 = vunpack.c.l.b16 %v614
      %v1150 = vunpack.c.l.b16 %v615
      %v1151 = vunpack.c.l.b16 %v616
      %v1152 = vunpack.c.l.b16 %v617
      %v1153 = vunpack.c.l.b16 %v618
      %v1154 = vunpack.c.l.b16 %v619
      %v1155 = vunpack.c.l.b16 %v620
      %v1156 = vunpack.c.l.b16 %v621
      %v1157 = vunpack.c.l.b16 %v622
      %v1158 = vunpack.c.l.b16 %v623
      %v1159 = vunpack.c.l.b16 %v624
      %v1160 = vunpack.c.l.b16 %v625
      %v1161 = vunpack.c.l.b16 %v626
      %v1162 = vunpack.c.l.b16 %v627
      %v1163 = vunpack.c.l.b16 %v628
      %v1164 = vunpack.c.l.b16 %v629
      %v1165 = vunpack.c.l.b16 %v630
      %v1166 = vunpack.c.l.b16 %v631
      %v1167 = vunpack.c.l.b16 %v632
      %v1168 = vunpack.c.l.b16 %v633
      %v1169 = vunpack.c.l.b16 %v634
      %v1170 = vunpack.c.l.b16 %v635
      %v1171 = vunpack.c.l.b16 %v636
      %v1172 = vunpack.c.l.b16 %v637
      %v1173 = vunpack.c.l.b16 %v638
      %v1174 = vunpack.c.l.b16 %v639
      %v1175 = vunpack.c.l.b16 %v640
      %v1176 = vunpack.c.l.b16 %v641
      %v1177 = vunpack.c.l.b16 %v642
      %v1178 = vunpack.c.l.b16 %v643
      %v1179 = vunpack.c.l.b16 %v644
      %v1180 = vunpack.c.l.b16 %v645
      %v1181 = vunpack.c.l.b16 %v646
      %v1182 = vunpack.c.l.b16 %v647
      %v1183 = vunpack.c.l.b16 %v648
      %v1184 = vunpack.c.l.b16 %v649
      %v1185 = vunpack.c.l.b16 %v650
      %v1186 = vunpack.c.l.b16 %v651
      %v1187 = vunpack.c.l.b16 %v652
      %v1188 = vunpack.c.l.b16 %v653
      %v1189 = vunpack.c.l.b16 %v654
      %v1190 = vunpack.c.l.b16 %v655
      %v1191 = vunpack.c.l.b16 %v656
      %v1192 = vunpack.c.l.b16 %v657
      %v1193 = vunpack.c.l.b16 %v658
      %v1194 = vunpack.c.l.b16 %v659
      %v1195 = vunpack.c.l.b16 %v660
      %v1196 = vunpack.c.l.b16 %v661
      %v1197 = vunpack.c.l.b16 %v662
      %v1198 = vunpack.c.l.b16 %v663
      %v1199 = vunpack.c.l.b16 %v664
      %v1200 = vunpack.c.l.b16 %v665
      %v1201 = vunpack.c.l.b16 %v666
      %v1202 = vunpack.c.l.b16 %v667
      %v1203 = vunpack.c.l.b16 %v668
      %v1204 = vunpack.c.l.b16 %v669
      %v1205 = vunpack.c.l.b16 %v670
      %v1206 = vunpack.c.l.b16 %v671
      %v1207 = vunpack.c.l.b16 %v672
      %v1208 = vunpack.c.l.b16 %v673
      %v1209 = vunpack.c.l.b16 %v674
      %v1210 = vunpack.c.l.b16 %v675
      %v1211 = vunpack.c.l.b16 %v676
      %v1212 = vunpack.c.l.b16 %v677
      %v1213 = vunpack.c.l.b16 %v678
      %v1214 = vunpack.c.l.b16 %v679
      %v1215 = vunpack.c.l.b16 %v680
      %v1216 = vunpack.c.l.b16 %v681
      %v1217 = vunpack.c.l.b16 %v682
      %v1218 = vunpack.c.l.b16 %v683
      %v1219 = vunpack.c.l.b16 %v684
      %v1220 = vunpack.c.l.b16 %v685
      %v1221 = vunpack.c.l.b16 %v686
      %v1222 = vunpack.c.l.b16 %v687
      %v1223 = vunpack.c.l.b16 %v688
      %v1224 = vunpack.c.l.b16 %v689
      %v1225 = vunpack.c.l.b16 %v690
      %v1226 = vunpack.c.l.b16 %v691
      %v1227 = vunpack.c.l.b16 %v692
      %v1228 = vunpack.c.l.b16 %v693
      %v1229 = vunpack.c.l.b16 %v694
      %v1230 = vunpack.c.l.b16 %v695
      %v1231 = vunpack.c.l.b16 %v696
      %v1232 = vunpack.c.l.b16 %v697
      %v1233 = vunpack.c.l.b16 %v698
      %v1234 = vunpack.c.l.b16 %v699
      %v1235 = vunpack.c.l.b16 %v700
      %v1236 = vunpack.c.l.b16 %v701
      %v1237 = vunpack.c.l.b16 %v702
      %v1238 = vunpack.c.l.b16 %v703
      %v1239 = vunpack.c.l.b16 %v704
      %v1240 = vunpack.c.l.b16 %v705
      %v1241 = vunpack.c.l.b16 %v706
      %v1242 = vunpack.c.l.b16 %v707
      %v1243 = vunpack.c.l.b16 %v708
      %v1244 = vunpack.c.l.b16 %v709
      %v1245 = vunpack.c.l.b16 %v710
      %v1246 = vunpack.c.l.b16 %v711
      %v1247 = vunpack.c.l.b16 %v712
      %v1248 = vunpack.c.l.b16 %v713
      %v1249 = vunpack.c.l.b16 %v714
      %v1250 = vunpack.c.l.b16 %v715
      %v1251 = vunpack.c.l.b16 %v716
      %v1252 = vunpack.c.l.b16 %v717
      %v1253 = vunpack.c.l.b16 %v718
      %v1254 = vunpack.c.l.b16 %v719
      %v1255 = vunpack.c.l.b16 %v720
      %v1256 = vunpack.c.l.b16 %v721
      %v1257 = vunpack.c.l.b16 %v722
      %v1258 = vunpack.c.l.b16 %v723
      %v1259 = vunpack.c.l.b16 %v724
      %v1260 = vunpack.c.l.b16 %v725
      %v1261 = vunpack.c.l.b16 %v726
      %v1262 = vunpack.c.l.b16 %v727
      %v1263 = vunpack.c.l.b16 %v728
      %v1264 = vunpack.c.l.b16 %v729
      %v1265 = vunpack.c.l.b16 %v730
      %v1266 = vunpack.c.l.b16 %v731
      %v1267 = vunpack.c.l.b16 %v732
      %v1268 = vunpack.c.l.b16 %v733
      %v1269 = vunpack.c.l.b16 %v734
      %v1270 = vunpack.c.l.b16 %v735
      %v1271 = vunpack.c.l.b16 %v736
      %v1272 = vunpack.c.l.b16 %v737
      %v1273 = vunpack.c.l.b16 %v738
      %v1274 = vunpack.c.l.b16 %v739
      %v1275 = vunpack.c.l.b16 %v740
      %v1276 = vunpack.c.l.b16 %v741
      %v1277 = vunpack.c.l.b16 %v742
      %v1278 = vunpack.c.l.b16 %v743
      %v1279 = vunpack.c.l.b16 %v744
      %v1280 = vunpack.c.l.b16 %v745
      %v1281 = vunpack.c.l.b16 %v746
      %v1282 = vunpack.c.l.b16 %v747
      %v1283 = vunpack.c.l.b16 %v748
      %v1284 = vunpack.c.l.b16 %v749
      %v1285 = vunpack.c.l.b16 %v750
      %v1286 = vunpack.c.l.b16 %v751
      %v1287 = vunpack.c.l.b16 %v752
      %v1288 = vunpack.c.l.b16 %v753
      %v1289 = vunpack.c.l.b16 %v754
      %v1290 = vunpack.c.l.b16 %v755
      %v1291 = vunpack.c.l.b16 %v756
      %v1292 = vunpack.c.l.b16 %v757
      %v1293 = vunpack.c.l.b16 %v758
      %v1294 = vunpack.c.l.b16 %v759
      %v1295 = vunpack.c.l.b16 %v760
      %v1296 = vunpack.c.l.b16 %v761
      %v1297 = vunpack.c.l.b16 %v762
      %v1298 = vunpack.c.l.b16 %v763
      %v1299 = vunpack.c.l.b16 %v764
      %v1300 = vunpack.c.l.b16 %v765
      %v1301 = vunpack.c.l.b16 %v766
      %v1302 = vunpack.c.l.b16 %v767
      %v1303 = vunpack.c.l.b16 %v768
      %v1304 = vunpack.c.l.b16 %v769
      %v1305 = vunpack.c.l.b16 %v770
      %v1306 = vunpack.c.l.b16 %v771
      %v1307 = vunpack.c.l.b16 %v772
      %v1308 = vunpack.c.l.b16 %v773
      %v1309 = vunpack.c.l.b16 %v774
      %v1310 = vunpack.c.l.b16 %v775
      %v1311 = vunpack.c.l.b16 %v776
      %v1312 = vunpack.c.l.b16 %v777
      %v1313 = vunpack.c.l.b16 %v778
      %v1314 = vunpack.c.l.b16 %v779
      %v1315 = vunpack.c.l.b16 %v780
      %v1316 = vunpack.c.l.b16 %v781
      %v1317 = vunpack.c.l.b16 %v782
      %v1318 = vunpack.c.l.b16 %v783
      %v1319 = vunpack.c.l.b16 %v784
      %v1320 = vunpack.c.l.b16 %v785
      %v1321 = vunpack.c.l.b16 %v786
      %v1322 = vunpack.c.l.b16 %v787
      %v1323 = vunpack.c.l.b16 %v788
      %v1324 = vunpack.c.l.b16 %v789
      %v1325 = vunpack.c.l.b16 %v790
      %v1326 = vunpack.c.l.b16 %v791
      %v1327 = vunpack.c.l.b16 %v792
      %v1328 = vunpack.c.l.b16 %v793
      %v1329 = vunpack.c.l.b16 %v794
      %v1330 = vunpack.c.l.b16 %v795
      %v1331 = vunpack.c.l.b16 %v796
      %v1332 = vunpack.c.l.b16 %v797
      %v1333 = vunpack.c.l.b16 %v798
      %v1334 = vunpack.c.l.b16 %v799
      %v1335 = vunpack.c.l.b16 %v800
      %v1336 = vunpack.c.l.b16 %v801
      %v1337 = vunpack.c.l.b16 %v802
      %v1338 = vunpack.c.l.b16 %v803
      %v1339 = vunpack.c.l.b16 %v804
      %v1340 = vunpack.c.l.b16 %v805
      %v1341 = vunpack.c.l.b16 %v806
      %v1342 = vunpack.c.l.b16 %v807
      %v1343 = vunpack.c.l.b16 %v808
      %v1344 = vunpack.c.l.b16 %v809
      %v1345 = vunpack.c.l.b16 %v810
      %v1346 = vunpack.c.l.b16 %v811
      %v1347 = vunpack.c.l.b16 %v812
      %v1348 = vunpack.c.l.b16 %v813
      %v1349 = vunpack.c.l.b16 %v814
      %v1350 = vunpack.c.l.b16 %v815
      %v1351 = vunpack.c.l.b16 %v816
      %v1352 = vunpack.c.l.b16 %v817
      %v1353 = vunpack.c.l.b16 %v818
      %v1354 = vunpack.c.l.b16 %v819
      %v1355 = vpack.c.b16 %v1100, %v1099
      %v1356 = vpack.c.b16 %v1102, %v1101
      %v1357 = vpack.c.b16 %v1104, %v1103
      %v1358 = vpack.c.b16 %v1106, %v1105
      %v1359 = vpack.c.b16 %v1108, %v1107
      %v1360 = vpack.c.b16 %v1110, %v1109
      %v1361 = vpack.c.b16 %v1112, %v1111
      %v1362 = vpack.c.b16 %v1114, %v1113
      %v1363 = vpack.c.b16 %v1116, %v1115
      %v1364 = vpack.c.b16 %v1118, %v1117
      %v1365 = vpack.c.b16 %v1120, %v1119
      %v1366 = vpack.c.b16 %v1122, %v1121
      %v1367 = vpack.c.b16 %v1124, %v1123
      %v1368 = vpack.c.b16 %v1126, %v1125
      %v1369 = vpack.c.b16 %v1128, %v1127
      %v1370 = vpack.c.b16 %v1130, %v1129
      %v1371 = vpack.c.b16 %v1132, %v1131
      %v1372 = vpack.c.b16 %v1134, %v1133
      %v1373 = vpack.c.b16 %v1136, %v1135
      %v1374 = vpack.c.b16 %v1138, %v1137
      %v1375 = vpack.c.b16 %v1140, %v1139
      %v1376 = vpack.c.b16 %v1142, %v1141
      %v1377 = vpack.c.b16 %v1144, %v1143
      %v1378 = vpack.c.b16 %v1146, %v1145
      %v1379 = vpack.c.b16 %v1148, %v1147
      %v1380 = vpack.c.b16 %v1150, %v1149
      %v1381 = vpack.c.b16 %v1152, %v1151
      %v1382 = vpack.c.b16 %v1154, %v1153
      %v1383 = vpack.c.b16 %v1156, %v1155
      %v1384 = vpack.c.b16 %v1158, %v1157
      %v1385 = vpack.c.b16 %v1160, %v1159
      %v1386 = vpack.c.b16 %v1162, %v1161
      %v1387 = vpack.c.b16 %v1164, %v1163
      %v1388 = vpack.c.b16 %v1166, %v1165
      %v1389 = vpack.c.b16 %v1168, %v1167
      %v1390 = vpack.c.b16 %v1170, %v1169
      %v1391 = vpack.c.b16 %v1172, %v1171
      %v1392 = vpack.c.b16 %v1174, %v1173
      %v1393 = vpack.c.b16 %v1176, %v1175
      %v1394 = vpack.c.b16 %v1178, %v1177
      %v1395 = vpack.c.b16 %v1180, %v1179
      %v1396 = vpack.c.b16 %v1182, %v1181
      %v1397 = vpack.c.b16 %v1184, %v1183
      %v1398 = vpack.c.b16 %v1186, %v1185
      %v1399 = vpack.c.b16 %v1188, %v1187
      %v1400 = vpack.c.b16 %v1190, %v1189
      %v1401 = vpack.c.b16 %v1192, %v1191
      %v1402 = vpack.c.b16 %v1194, %v1193
      %v1403 = vpack.c.b16 %v1196, %v1195
      %v1404 = vpack.c.b16 %v1198, %v1197
      %v1405 = vpack.c.b16 %v1200, %v1199
      %v1406 = vpack.c.b16 %v1202, %v1201
      %v1407 = vpack.c.b16 %v1204, %v1203
      %v1408 = vpack.c.b16 %v1206, %v1205
      %v1409 = vpack.c.b16 %v1208, %v1207
      %v1410 = vpack.c.b16 %v1210, %v1209
      %v1411 = vpack.c.b16 %v1212, %v1211
      %v1412 = vpack.c.b16 %v1214, %v1213
      %v1413 = vpack.c.b16 %v1216, %v1215
      %v1414 = vpack.c.b16 %v1218, %v1217
      %v1415 = vpack.c.b16 %v1220, %v1219
      %v1416 = vpack.c.b16 %v1222, %v1221
      %v1417 = vpack.c.b16 %v1224, %v1223
      %v1418 = vpack.c.b16 %v1226, %v1225
      %v1419 = vpack.c.b16 %v1228, %v1227
      %v1420 = vpack.c.b16 %v1230, %v1229
      %v1421 = vpack.c.b16 %v1232, %v1231
      %v1422 = vpack.c.b16 %v1234, %v1233
      %v1423 = vpack.c.b16 %v1236, %v1235
      %v1424 = vpack.c.b16 %v1238, %v1237
      %v1425 = vpack.c.b16 %v1240, %v1239
      %v1426 = vpack.c.b16 %v1242, %v1241
      %v1427 = vpack.c.b16 %v1244, %v1243
      %v1428 = vpack.c.b16 %v1246, %v1245
      %v1429 = vpack.c.b16 %v1248, %v1247
      %v1430 = vpack.c.b16 %v1250, %v1249
      %v1431 = vpack.c.b16 %v1252, %v1251
      %v1432 = vpack.c.b16 %v1254, %v1253
      %v1433 = vpack.c.b16 %v1256, %v1255
      %v1434 = vpack.c.b16 %v1258, %v1257
      %v1435 = vpack.c.b16 %v1260, %v1259
      %v1436 = vpack.c.b16 %v1262, %v1261
      %v1437 = vpack.c.b16 %v1264, %v1263
      %v1438 = vpack.c.b16 %v1266, %v1265
      %v1439 = vpack.c.b16 %v1268, %v1267
      %v1440 = vpack.c.b16 %v1270, %v1269
      %v1441 = vpack.c.b16 %v1272, %v1271
      %v1442 = vpack.c.b16 %v1274, %v1273
      %v1443 = vpack.c.b16 %v1276, %v1275
      %v1444 = vpack.c.b16 %v1278, %v1277
      %v1445 = vpack.c.b16 %v1280, %v1279
      %v1446 = vpack.c.b16 %v1282, %v1281
      %v1447 = vpack.c.b16 %v1284, %v1283
      %v1448 = vpack.c.b16 %v1286, %v1285
      %v1449 = vpack.c.b16 %v1288, %v1287
      %v1450 = vpack.c.b16 %v1290, %v1289
      %v1451 = vpack.c.b16 %v1292, %v1291
      %v1452 = vpack.c.b16 %v1294, %v1293
      %v1453 = vpack.c.b16 %v1296, %v1295
      %v1454 = vpack.c.b16 %v1298, %v1297
      %v1455 = vpack.c.b16 %v1300, %v1299
      %v1456 = vpack.c.b16 %v1302, %v1301
      %v1457 = vpack.c.b16 %v1304, %v1303
      %v1458 = vpack.c.b16 %v1306, %v1305
      %v1459 = vpack.c.b16 %v1308, %v1307
      %v1460 = vpack.c.b16 %v1310, %v1309
      %v1461 = vpack.c.b16 %v1312, %v1311
      %v1462 = vpack.c.b16 %v1314, %v1313
      %v1463 = vpack.c.b16 %v1316, %v1315
      %v1464 = vpack.c.b16 %v1318, %v1317
      %v1465 = vpack.c.b16 %v1320, %v1319
      %v1466 = vpack.c.b16 %v1322, %v1321
      %v1467 = vpack.c.b16 %v1324, %v1323
      %v1468 = vpack.c.b16 %v1326, %v1325
      %v1469 = vpack.c.b16 %v1328, %v1327
      %v1470 = vpack.c.b16 %v1330, %v1329
      %v1471 = vpack.c.b16 %v1332, %v1331
      %v1472 = vpack.c.b16 %v1334, %v1333
      %v1473 = vpack.c.b16 %v1336, %v1335
      %v1474 = vpack.c.b16 %v1338, %v1337
      %v1475 = vpack.c.b16 %v1340, %v1339
      %v1476 = vpack.c.b16 %v1342, %v1341
      %v1477 = vpack.c.b16 %v1344, %v1343
      %v1478 = vpack.c.b16 %v1346, %v1345
      %v1479 = vpack.c.b16 %v1348, %v1347
      %v1480 = vpack.c.b16 %v1350, %v1349
      %v1481 = vpack.c.b16 %v1352, %v1351
      %v1482 = vpack.c.b16 %v1354, %v1353
      %v1627 = vunpack.c.l.b16 %v820
      %v1628 = vunpack.c.l.b16 %v821
      %v1629 = vunpack.c.l.b16 %v822
      %v1630 = vunpack.c.l.b16 %v823
      %v1631 = vunpack.c.l.b16 %v824
      %v1632 = vunpack.c.l.b16 %v825
      %v1633 = vunpack.c.l.b16 %v826
      %v1634 = vunpack.c.l.b16 %v827
      %v1635 = vunpack.c.l.b16 %v828
      %v1636 = vunpack.c.l.b16 %v829
      %v1637 = vunpack.c.l.b16 %v830
      %v1638 = vunpack.c.l.b16 %v831
      %v1639 = vunpack.c.l.b16 %v832
      %v1640 = vunpack.c.l.b16 %v833
      %v1641 = vunpack.c.l.b16 %v834
      %v1642 = vunpack.c.l.b16 %v835
      %v1643 = vpack.c.b16 %v1628, %v1627
      %v1644 = vpack.c.b16 %v1630, %v1629
      %v1645 = vpack.c.b16 %v1632, %v1631
      %v1646 = vpack.c.b16 %v1634, %v1633
      %v1647 = vpack.c.b16 %v1636, %v1635
      %v1648 = vpack.c.b16 %v1638, %v1637
      %v1649 = vpack.c.b16 %v1640, %v1639
      %v1650 = vpack.c.b16 %v1642, %v1641
      %1659 = vmatprep.subr.bf16.mxu0 0
      %1660 = vmatpush1.bf16.msra.mxu0 %v1643
      %1661 = vmatprep.subr.bf16.mxu0 0
      %1662 = vmatpush1.bf16.msra.mxu0 %v1644
      %1663 = vmatprep.subr.bf16.mxu0 0
      %1664 = vmatpush1.bf16.msra.mxu0 %v1645
      %1665 = vmatprep.subr.bf16.mxu0 0
      %1666 = vmatpush1.bf16.msra.mxu0 %v1646
      %1667 = vmatprep.subr.bf16.mxu0 0
      %1668 = vmatpush1.bf16.msra.mxu0 %v1647
      %1669 = vmatprep.subr.bf16.mxu0 0
      %1670 = vmatpush1.bf16.msra.mxu0 %v1648
      %1671 = vmatprep.subr.bf16.mxu0 0
      %1672 = vmatpush1.bf16.msra.mxu0 %v1649
      %1673 = vmatprep.subr.bf16.mxu0 0
      %1674 = vmatpush1.bf16.msra.mxu0 %v1650
      %1675 = vmatprep.subr.bf16.mxu0 0
      %1676 = vmatpush1.bf16.msra.mxu0 0
      %1677 = vmatprep.subr.bf16.mxu0 0
      %1678 = vmatpush1.bf16.msra.mxu0 0
      %1679 = vmatprep.subr.bf16.mxu0 0
      %1680 = vmatpush1.bf16.msra.mxu0 0
      %1681 = vmatprep.subr.bf16.mxu0 0
      %1682 = vmatpush1.bf16.msra.mxu0 0
      %1683 = vmatprep.subr.bf16.mxu0 0
      %1684 = vmatpush1.bf16.msra.mxu0 0
      %1685 = vmatprep.subr.bf16.mxu0 0
      %1686 = vmatpush1.bf16.msra.mxu0 0
      %1687 = vmatprep.subr.bf16.mxu0 0
      %1688 = vmatpush1.bf16.msra.mxu0 0
      %1689 = vmatprep.subr.bf16.mxu0 0
      %1690 = vmatpush1.bf16.msra.mxu0 0
      %1691 = vmatprep.mubr.bf16.mxu0 0
      %1692 = vmatmul.mubr.bf16.gmra.mrb[0].mxu0 %v1355
      %v1693 = vpop.f32.mrb[0].mxu0
      %v1694 = vadd.f32 %v841, %v1693
      %v1695 = vpop.f32.mrb[0].mxu0
      %v1696 = vpop.f32.mrb[0].mxu0
      %v1697 = vadd.f32 %v841, %v1696
      %v1698 = vpop.f32.mrb[0].mxu0
      %1699 = vmatprep.mubr.bf16.mxu0 0
      %1700 = vmatmul.mubr.bf16.gmra.mrb[0].mxu0 %v1356
      %v1701 = vpop.f32.mrb[0].mxu0
      %v1702 = vadd.f32 %v841, %v1701
      %v1703 = vpop.f32.mrb[0].mxu0
      %v1704 = vpop.f32.mrb[0].mxu0
      %v1705 = vadd.f32 %v841, %v1704
      %v1706 = vpop.f32.mrb[0].mxu0
      %1707 = vmatprep.mubr.bf16.mxu0 0
      %1708 = vmatmul.mubr.bf16.gmra.mrb[0].mxu0 %v1357
      %v1709 = vpop.f32.mrb[0].mxu0
      %v1710 = vadd.f32 %v841, %v1709
      %v1711 = vpop.f32.mrb[0].mxu0
      %v1712 = vpop.f32.mrb[0].mxu0
      %v1713 = vadd.f32 %v841, %v1712
      %v1714 = vpop.f32.mrb[0].mxu0
      %1715 = vmatprep.mubr.bf16.mxu0 0
      %1716 = vmatmul.mubr.bf16.gmra.mrb[0].mxu0 %v1358
      %v1717 = vpop.f32.mrb[0].mxu0
      %v1718 = vadd.f32 %v841, %v1717
      %v1719 = vpop.f32.mrb[0].mxu0
      %v1720 = vpop.f32.mrb[0].mxu0
      %v1721 = vadd.f32 %v841, %v1720
      %v1722 = vpop.f32.mrb[0].mxu0
      %1723 = vmatprep.mubr.bf16.mxu0 0
      %1724 = vmatmul.mubr.bf16.gmra.mrb[0].mxu0 %v1359
      %v1725 = vpop.f32.mrb[0].mxu0
      %v1726 = vadd.f32 %v841, %v1725
      %v1727 = vpop.f32.mrb[0].mxu0
      %v1728 = vpop.f32.mrb[0].mxu0
      %v1729 = vadd.f32 %v841, %v1728
      %v1730 = vpop.f32.mrb[0].mxu0
      %1731 = vmatprep.mubr.bf16.mxu0 0
      %1732 = vmatmul.mubr.bf16.gmra.mrb[0].mxu0 %v1360
      %v1733 = vpop.f32.mrb[0].mxu0
      %v1734 = vadd.f32 %v841, %v1733
      %v1735 = vpop.f32.mrb[0].mxu0
      %v1736 = vpop.f32.mrb[0].mxu0
      %v1737 = vadd.f32 %v841, %v1736
      %v1738 = vpop.f32.mrb[0].mxu0
      %1739 = vmatprep.mubr.bf16.mxu0 0
      %1740 = vmatmul.mubr.bf16.gmra.mrb[0].mxu0 %v1361
      %v1741 = vpop.f32.mrb[0].mxu0
      %v1742 = vadd.f32 %v841, %v1741
      %v1743 = vpop.f32.mrb[0].mxu0
      %v1744 = vpop.f32.mrb[0].mxu0
      %v1745 = vadd.f32 %v841, %v1744
      %v1746 = vpop.f32.mrb[0].mxu0
      %1747 = vmatprep.mubr.bf16.mxu0 0
      %1748 = vmatmul.mubr.bf16.gmra.mrb[0].mxu0 %v1362
      %v1749 = vpop.f32.mrb[0].mxu0
      %v1750 = vadd.f32 %v841, %v1749
      %v1751 = vpop.f32.mrb[0].mxu0
      %v1752 = vpop.f32.mrb[0].mxu0
      %v1753 = vadd.f32 %v841, %v1752
      %v1754 = vpop.f32.mrb[0].mxu0
      %1755 = vmatprep.mubr.bf16.mxu0 0
      %1756 = vmatmul.mubr.bf16.gmra.mrb[0].mxu0 %v1363
      %v1757 = vpop.f32.mrb[0].mxu0
      %v1758 = vadd.f32 %v841, %v1757
      %v1759 = vpop.f32.mrb[0].mxu0
      %v1760 = vpop.f32.mrb[0].mxu0
      %v1761 = vadd.f32 %v841, %v1760
      %v1762 = vpop.f32.mrb[0].mxu0
      %1763 = vmatprep.mubr.bf16.mxu0 0
      %1764 = vmatmul.mubr.bf16.gmra.mrb[0].mxu0 %v1364
      %v1765 = vpop.f32.mrb[0].mxu0
      %v1766 = vadd.f32 %v841, %v1765
      %v1767 = vpop.f32.mrb[0].mxu0
      %v1768 = vpop.f32.mrb[0].mxu0
      %v1769 = vadd.f32 %v841, %v1768
      %v1770 = vpop.f32.mrb[0].mxu0
      %1771 = vmatprep.mubr.bf16.mxu0 0
      %1772 = vmatmul.mubr.bf16.gmra.mrb[0].mxu0 %v1365
      %v1773 = vpop.f32.mrb[0].mxu0
      %v1774 = vadd.f32 %v841, %v1773
      %v1775 = vpop.f32.mrb[0].mxu0
      %v1776 = vpop.f32.mrb[0].mxu0
      %v1777 = vadd.f32 %v841, %v1776
      %v1778 = vpop.f32.mrb[0].mxu0
      %1779 = vmatprep.mubr.bf16.mxu0 0
      %1780 = vmatmul.mubr.bf16.gmra.mrb[0].mxu0 %v1366
      %v1781 = vpop.f32.mrb[0].mxu0
      %v1782 = vadd.f32 %v841, %v1781
      %v1783 = vpop.f32.mrb[0].mxu0
      %v1784 = vpop.f32.mrb[0].mxu0
      %v1785 = vadd.f32 %v841, %v1784
      %v1786 = vpop.f32.mrb[0].mxu0
      %1787 = vmatprep.mubr.bf16.mxu0 0
      %1788 = vmatmul.mubr.bf16.gmra.mrb[0].mxu0 %v1367
      %v1789 = vpop.f32.mrb[0].mxu0
      %v1790 = vadd.f32 %v841, %v1789
      %v1791 = vpop.f32.mrb[0].mxu0
      %v1792 = vpop.f32.mrb[0].mxu0
      %v1793 = vadd.f32 %v841, %v1792
      %v1794 = vpop.f32.mrb[0].mxu0
      %1795 = vmatprep.mubr.bf16.mxu0 0
      %1796 = vmatmul.mubr.bf16.gmra.mrb[0].mxu0 %v1368
      %v1797 = vpop.f32.mrb[0].mxu0
      %v1798 = vadd.f32 %v841, %v1797
      %v1799 = vpop.f32.mrb[0].mxu0
      %v1800 = vpop.f32.mrb[0].mxu0
      %v1801 = vadd.f32 %v841, %v1800
      %v1802 = vpop.f32.mrb[0].mxu0
      %1803 = vmatprep.mubr.bf16.mxu0 0
      %1804 = vmatmul.mubr.bf16.gmra.mrb[0].mxu0 %v1369
      %v1805 = vpop.f32.mrb[0].mxu0
      %v1806 = vadd.f32 %v841, %v1805
      %v1807 = vpop.f32.mrb[0].mxu0
      %v1808 = vpop.f32.mrb[0].mxu0
      %v1809 = vadd.f32 %v841, %v1808
      %v1810 = vpop.f32.mrb[0].mxu0
      %1811 = vmatprep.mubr.bf16.mxu0 0
      %1812 = vmatmul.mubr.bf16.gmra.mrb[0].mxu0 %v1370
      %v1813 = vpop.f32.mrb[0].mxu0
      %v1814 = vadd.f32 %v841, %v1813
      %v1815 = vpop.f32.mrb[0].mxu0
      %v1816 = vpop.f32.mrb[0].mxu0
      %v1817 = vadd.f32 %v841, %v1816
      %v1818 = vpop.f32.mrb[0].mxu0
      %1819 = vmatprep.mubr.bf16.mxu0 0
      %1820 = vmatmul.mubr.bf16.gmra.mrb[0].mxu0 %v1371
      %v1821 = vpop.f32.mrb[0].mxu0
      %v1822 = vadd.f32 %v841, %v1821
      %v1823 = vpop.f32.mrb[0].mxu0
      %v1824 = vpop.f32.mrb[0].mxu0
      %v1825 = vadd.f32 %v841, %v1824
      %v1826 = vpop.f32.mrb[0].mxu0
      %1827 = vmatprep.mubr.bf16.mxu0 0
      %1828 = vmatmul.mubr.bf16.gmra.mrb[0].mxu0 %v1372
      %v1829 = vpop.f32.mrb[0].mxu0
      %v1830 = vadd.f32 %v841, %v1829
      %v1831 = vpop.f32.mrb[0].mxu0
      %v1832 = vpop.f32.mrb[0].mxu0
      %v1833 = vadd.f32 %v841, %v1832
      %v1834 = vpop.f32.mrb[0].mxu0
      %1835 = vmatprep.mubr.bf16.mxu0 0
      %1836 = vmatmul.mubr.bf16.gmra.mrb[0].mxu0 %v1373
      %v1837 = vpop.f32.mrb[0].mxu0
      %v1838 = vadd.f32 %v841, %v1837
      %v1839 = vpop.f32.mrb[0].mxu0
      %v1840 = vpop.f32.mrb[0].mxu0
      %v1841 = vadd.f32 %v841, %v1840
      %v1842 = vpop.f32.mrb[0].mxu0
      %1843 = vmatprep.mubr.bf16.mxu0 0
      %1844 = vmatmul.mubr.bf16.gmra.mrb[0].mxu0 %v1374
      %v1845 = vpop.f32.mrb[0].mxu0
      %v1846 = vadd.f32 %v841, %v1845
      %v1847 = vpop.f32.mrb[0].mxu0
      %v1848 = vpop.f32.mrb[0].mxu0
      %v1849 = vadd.f32 %v841, %v1848
      %v1850 = vpop.f32.mrb[0].mxu0
      %1851 = vmatprep.mubr.bf16.mxu0 0
      %1852 = vmatmul.mubr.bf16.gmra.mrb[0].mxu0 %v1375
      %v1853 = vpop.f32.mrb[0].mxu0
      %v1854 = vadd.f32 %v841, %v1853
      %v1855 = vpop.f32.mrb[0].mxu0
      %v1856 = vpop.f32.mrb[0].mxu0
      %v1857 = vadd.f32 %v841, %v1856
      %v1858 = vpop.f32.mrb[0].mxu0
      %1859 = vmatprep.mubr.bf16.mxu0 0
      %1860 = vmatmul.mubr.bf16.gmra.mrb[0].mxu0 %v1376
      %v1861 = vpop.f32.mrb[0].mxu0
      %v1862 = vadd.f32 %v841, %v1861
      %v1863 = vpop.f32.mrb[0].mxu0
      %v1864 = vpop.f32.mrb[0].mxu0
      %v1865 = vadd.f32 %v841, %v1864
      %v1866 = vpop.f32.mrb[0].mxu0
      %1867 = vmatprep.mubr.bf16.mxu0 0
      %1868 = vmatmul.mubr.bf16.gmra.mrb[0].mxu0 %v1377
      %v1869 = vpop.f32.mrb[0].mxu0
      %v1870 = vadd.f32 %v841, %v1869
      %v1871 = vpop.f32.mrb[0].mxu0
      %v1872 = vpop.f32.mrb[0].mxu0
      %v1873 = vadd.f32 %v841, %v1872
      %v1874 = vpop.f32.mrb[0].mxu0
      %1875 = vmatprep.mubr.bf16.mxu0 0
      %1876 = vmatmul.mubr.bf16.gmra.mrb[0].mxu0 %v1378
      %v1877 = vpop.f32.mrb[0].mxu0
      %v1878 = vadd.f32 %v841, %v1877
      %v1879 = vpop.f32.mrb[0].mxu0
      %v1880 = vpop.f32.mrb[0].mxu0
      %v1881 = vadd.f32 %v841, %v1880
      %v1882 = vpop.f32.mrb[0].mxu0
      %1883 = vmatprep.mubr.bf16.mxu0 0
      %1884 = vmatmul.mubr.bf16.gmra.mrb[0].mxu0 %v1379
      %v1885 = vpop.f32.mrb[0].mxu0
      %v1886 = vadd.f32 %v841, %v1885
      %v1887 = vpop.f32.mrb[0].mxu0
      %v1888 = vpop.f32.mrb[0].mxu0
      %v1889 = vadd.f32 %v841, %v1888
      %v1890 = vpop.f32.mrb[0].mxu0
      %1891 = vmatprep.mubr.bf16.mxu0 0
      %1892 = vmatmul.mubr.bf16.gmra.mrb[0].mxu0 %v1380
      %v1893 = vpop.f32.mrb[0].mxu0
      %v1894 = vadd.f32 %v841, %v1893
      %v1895 = vpop.f32.mrb[0].mxu0
      %v1896 = vpop.f32.mrb[0].mxu0
      %v1897 = vadd.f32 %v841, %v1896
      %v1898 = vpop.f32.mrb[0].mxu0
      %1899 = vmatprep.mubr.bf16.mxu0 0
      %1900 = vmatmul.mubr.bf16.gmra.mrb[0].mxu0 %v1381
      %v1901 = vpop.f32.mrb[0].mxu0
      %v1902 = vadd.f32 %v841, %v1901
      %v1903 = vpop.f32.mrb[0].mxu0
      %v1904 = vpop.f32.mrb[0].mxu0
      %v1905 = vadd.f32 %v841, %v1904
      %v1906 = vpop.f32.mrb[0].mxu0
      %1907 = vmatprep.mubr.bf16.mxu0 0
      %1908 = vmatmul.mubr.bf16.gmra.mrb[0].mxu0 %v1382
      %v1909 = vpop.f32.mrb[0].mxu0
      %v1910 = vadd.f32 %v841, %v1909
      %v1911 = vpop.f32.mrb[0].mxu0
      %v1912 = vpop.f32.mrb[0].mxu0
      %v1913 = vadd.f32 %v841, %v1912
      %v1914 = vpop.f32.mrb[0].mxu0
      %1915 = vmatprep.mubr.bf16.mxu0 0
      %1916 = vmatmul.mubr.bf16.gmra.mrb[0].mxu0 %v1383
      %v1917 = vpop.f32.mrb[0].mxu0
      %v1918 = vadd.f32 %v841, %v1917
      %v1919 = vpop.f32.mrb[0].mxu0
      %v1920 = vpop.f32.mrb[0].mxu0
      %v1921 = vadd.f32 %v841, %v1920
      %v1922 = vpop.f32.mrb[0].mxu0
      %1923 = vmatprep.mubr.bf16.mxu0 0
      %1924 = vmatmul.mubr.bf16.gmra.mrb[0].mxu0 %v1384
      %v1925 = vpop.f32.mrb[0].mxu0
      %v1926 = vadd.f32 %v841, %v1925
      %v1927 = vpop.f32.mrb[0].mxu0
      %v1928 = vpop.f32.mrb[0].mxu0
      %v1929 = vadd.f32 %v841, %v1928
      %v1930 = vpop.f32.mrb[0].mxu0
      %1931 = vmatprep.mubr.bf16.mxu0 0
      %1932 = vmatmul.mubr.bf16.gmra.mrb[0].mxu0 %v1385
      %v1933 = vpop.f32.mrb[0].mxu0
      %v1934 = vadd.f32 %v841, %v1933
      %v1935 = vpop.f32.mrb[0].mxu0
      %v1936 = vpop.f32.mrb[0].mxu0
      %v1937 = vadd.f32 %v841, %v1936
      %v1938 = vpop.f32.mrb[0].mxu0
      %1939 = vmatprep.mubr.bf16.mxu0 0
      %1940 = vmatmul.mubr.bf16.gmra.mrb[0].mxu0 %v1386
      %v1941 = vpop.f32.mrb[0].mxu0
      %v1942 = vadd.f32 %v841, %v1941
      %v1943 = vpop.f32.mrb[0].mxu0
      %v1944 = vpop.f32.mrb[0].mxu0
      %v1945 = vadd.f32 %v841, %v1944
      %v1946 = vpop.f32.mrb[0].mxu0
      %1947 = vmatprep.mubr.bf16.mxu0 0
      %1948 = vmatmul.mubr.bf16.gmra.mrb[0].mxu0 %v1387
      %v1949 = vpop.f32.mrb[0].mxu0
      %v1950 = vadd.f32 %v841, %v1949
      %v1951 = vpop.f32.mrb[0].mxu0
      %v1952 = vpop.f32.mrb[0].mxu0
      %v1953 = vadd.f32 %v841, %v1952
      %v1954 = vpop.f32.mrb[0].mxu0
      %1955 = vmatprep.mubr.bf16.mxu0 0
      %1956 = vmatmul.mubr.bf16.gmra.mrb[0].mxu0 %v1388
      %v1957 = vpop.f32.mrb[0].mxu0
      %v1958 = vadd.f32 %v841, %v1957
      %v1959 = vpop.f32.mrb[0].mxu0
      %v1960 = vpop.f32.mrb[0].mxu0
      %v1961 = vadd.f32 %v841, %v1960
      %v1962 = vpop.f32.mrb[0].mxu0
      %1963 = vmatprep.mubr.bf16.mxu0 0
      %1964 = vmatmul.mubr.bf16.gmra.mrb[0].mxu0 %v1389
      %v1965 = vpop.f32.mrb[0].mxu0
      %v1966 = vadd.f32 %v841, %v1965
      %v1967 = vpop.f32.mrb[0].mxu0
      %v1968 = vpop.f32.mrb[0].mxu0
      %v1969 = vadd.f32 %v841, %v1968
      %v1970 = vpop.f32.mrb[0].mxu0
      %1971 = vmatprep.mubr.bf16.mxu0 0
      %1972 = vmatmul.mubr.bf16.gmra.mrb[0].mxu0 %v1390
      %v1973 = vpop.f32.mrb[0].mxu0
      %v1974 = vadd.f32 %v841, %v1973
      %v1975 = vpop.f32.mrb[0].mxu0
      %v1976 = vpop.f32.mrb[0].mxu0
      %v1977 = vadd.f32 %v841, %v1976
      %v1978 = vpop.f32.mrb[0].mxu0
      %1979 = vmatprep.mubr.bf16.mxu0 0
      %1980 = vmatmul.mubr.bf16.gmra.mrb[0].mxu0 %v1391
      %v1981 = vpop.f32.mrb[0].mxu0
      %v1982 = vadd.f32 %v841, %v1981
      %v1983 = vpop.f32.mrb[0].mxu0
      %v1984 = vpop.f32.mrb[0].mxu0
      %v1985 = vadd.f32 %v841, %v1984
      %v1986 = vpop.f32.mrb[0].mxu0
      %1987 = vmatprep.mubr.bf16.mxu0 0
      %1988 = vmatmul.mubr.bf16.gmra.mrb[0].mxu0 %v1392
      %v1989 = vpop.f32.mrb[0].mxu0
      %v1990 = vadd.f32 %v841, %v1989
      %v1991 = vpop.f32.mrb[0].mxu0
      %v1992 = vpop.f32.mrb[0].mxu0
      %v1993 = vadd.f32 %v841, %v1992
      %v1994 = vpop.f32.mrb[0].mxu0
      %1995 = vmatprep.mubr.bf16.mxu0 0
      %1996 = vmatmul.mubr.bf16.gmra.mrb[0].mxu0 %v1393
      %v1997 = vpop.f32.mrb[0].mxu0
      %v1998 = vadd.f32 %v841, %v1997
      %v1999 = vpop.f32.mrb[0].mxu0
      %v2000 = vpop.f32.mrb[0].mxu0
      %v2001 = vadd.f32 %v841, %v2000
      %v2002 = vpop.f32.mrb[0].mxu0
      %2003 = vmatprep.mubr.bf16.mxu0 0
      %2004 = vmatmul.mubr.bf16.gmra.mrb[0].mxu0 %v1394
      %v2005 = vpop.f32.mrb[0].mxu0
      %v2006 = vadd.f32 %v841, %v2005
      %v2007 = vpop.f32.mrb[0].mxu0
      %v2008 = vpop.f32.mrb[0].mxu0
      %v2009 = vadd.f32 %v841, %v2008
      %v2010 = vpop.f32.mrb[0].mxu0
      %2011 = vmatprep.mubr.bf16.mxu0 0
      %2012 = vmatmul.mubr.bf16.gmra.mrb[0].mxu0 %v1395
      %v2013 = vpop.f32.mrb[0].mxu0
      %v2014 = vadd.f32 %v841, %v2013
      %v2015 = vpop.f32.mrb[0].mxu0
      %v2016 = vpop.f32.mrb[0].mxu0
      %v2017 = vadd.f32 %v841, %v2016
      %v2018 = vpop.f32.mrb[0].mxu0
      %2019 = vmatprep.mubr.bf16.mxu0 0
      %2020 = vmatmul.mubr.bf16.gmra.mrb[0].mxu0 %v1396
      %v2021 = vpop.f32.mrb[0].mxu0
      %v2022 = vadd.f32 %v841, %v2021
      %v2023 = vpop.f32.mrb[0].mxu0
      %v2024 = vpop.f32.mrb[0].mxu0
      %v2025 = vadd.f32 %v841, %v2024
      %v2026 = vpop.f32.mrb[0].mxu0
      %2027 = vmatprep.mubr.bf16.mxu0 0
      %2028 = vmatmul.mubr.bf16.gmra.mrb[0].mxu0 %v1397
      %v2029 = vpop.f32.mrb[0].mxu0
      %v2030 = vadd.f32 %v841, %v2029
      %v2031 = vpop.f32.mrb[0].mxu0
      %v2032 = vpop.f32.mrb[0].mxu0
      %v2033 = vadd.f32 %v841, %v2032
      %v2034 = vpop.f32.mrb[0].mxu0
      %2035 = vmatprep.mubr.bf16.mxu0 0
      %2036 = vmatmul.mubr.bf16.gmra.mrb[0].mxu0 %v1398
      %v2037 = vpop.f32.mrb[0].mxu0
      %v2038 = vadd.f32 %v841, %v2037
      %v2039 = vpop.f32.mrb[0].mxu0
      %v2040 = vpop.f32.mrb[0].mxu0
      %v2041 = vadd.f32 %v841, %v2040
      %v2042 = vpop.f32.mrb[0].mxu0
      %2043 = vmatprep.mubr.bf16.mxu0 0
      %2044 = vmatmul.mubr.bf16.gmra.mrb[0].mxu0 %v1399
      %v2045 = vpop.f32.mrb[0].mxu0
      %v2046 = vadd.f32 %v841, %v2045
      %v2047 = vpop.f32.mrb[0].mxu0
      %v2048 = vpop.f32.mrb[0].mxu0
      %v2049 = vadd.f32 %v841, %v2048
      %v2050 = vpop.f32.mrb[0].mxu0
      %2051 = vmatprep.mubr.bf16.mxu0 0
      %2052 = vmatmul.mubr.bf16.gmra.mrb[0].mxu0 %v1400
      %v2053 = vpop.f32.mrb[0].mxu0
      %v2054 = vadd.f32 %v841, %v2053
      %v2055 = vpop.f32.mrb[0].mxu0
      %v2056 = vpop.f32.mrb[0].mxu0
      %v2057 = vadd.f32 %v841, %v2056
      %v2058 = vpop.f32.mrb[0].mxu0
      %2059 = vmatprep.mubr.bf16.mxu0 0
      %2060 = vmatmul.mubr.bf16.gmra.mrb[0].mxu0 %v1401
      %v2061 = vpop.f32.mrb[0].mxu0
      %v2062 = vadd.f32 %v841, %v2061
      %v2063 = vpop.f32.mrb[0].mxu0
      %v2064 = vpop.f32.mrb[0].mxu0
      %v2065 = vadd.f32 %v841, %v2064
      %v2066 = vpop.f32.mrb[0].mxu0
      %2067 = vmatprep.mubr.bf16.mxu0 0
      %2068 = vmatmul.mubr.bf16.gmra.mrb[0].mxu0 %v1402
      %v2069 = vpop.f32.mrb[0].mxu0
      %v2070 = vadd.f32 %v841, %v2069
      %v2071 = vpop.f32.mrb[0].mxu0
      %v2072 = vpop.f32.mrb[0].mxu0
      %v2073 = vadd.f32 %v841, %v2072
      %v2074 = vpop.f32.mrb[0].mxu0
      %2075 = vmatprep.mubr.bf16.mxu0 0
      %2076 = vmatmul.mubr.bf16.gmra.mrb[0].mxu0 %v1403
      %v2077 = vpop.f32.mrb[0].mxu0
      %v2078 = vadd.f32 %v841, %v2077
      %v2079 = vpop.f32.mrb[0].mxu0
      %v2080 = vpop.f32.mrb[0].mxu0
      %v2081 = vadd.f32 %v841, %v2080
      %v2082 = vpop.f32.mrb[0].mxu0
      %2083 = vmatprep.mubr.bf16.mxu0 0
      %2084 = vmatmul.mubr.bf16.gmra.mrb[0].mxu0 %v1404
      %v2085 = vpop.f32.mrb[0].mxu0
      %v2086 = vadd.f32 %v841, %v2085
      %v2087 = vpop.f32.mrb[0].mxu0
      %v2088 = vpop.f32.mrb[0].mxu0
      %v2089 = vadd.f32 %v841, %v2088
      %v2090 = vpop.f32.mrb[0].mxu0
      %2091 = vmatprep.mubr.bf16.mxu0 0
      %2092 = vmatmul.mubr.bf16.gmra.mrb[0].mxu0 %v1405
      %v2093 = vpop.f32.mrb[0].mxu0
      %v2094 = vadd.f32 %v841, %v2093
      %v2095 = vpop.f32.mrb[0].mxu0
      %v2096 = vpop.f32.mrb[0].mxu0
      %v2097 = vadd.f32 %v841, %v2096
      %v2098 = vpop.f32.mrb[0].mxu0
      %2099 = vmatprep.mubr.bf16.mxu0 0
      %2100 = vmatmul.mubr.bf16.gmra.mrb[0].mxu0 %v1406
      %v2101 = vpop.f32.mrb[0].mxu0
      %v2102 = vadd.f32 %v841, %v2101
      %v2103 = vpop.f32.mrb[0].mxu0
      %v2104 = vpop.f32.mrb[0].mxu0
      %v2105 = vadd.f32 %v841, %v2104
      %v2106 = vpop.f32.mrb[0].mxu0
      %2107 = vmatprep.mubr.bf16.mxu0 0
      %2108 = vmatmul.mubr.bf16.gmra.mrb[0].mxu0 %v1407
      %v2109 = vpop.f32.mrb[0].mxu0
      %v2110 = vadd.f32 %v841, %v2109
      %v2111 = vpop.f32.mrb[0].mxu0
      %v2112 = vpop.f32.mrb[0].mxu0
      %v2113 = vadd.f32 %v841, %v2112
      %v2114 = vpop.f32.mrb[0].mxu0
      %2115 = vmatprep.mubr.bf16.mxu0 0
      %2116 = vmatmul.mubr.bf16.gmra.mrb[0].mxu0 %v1408
      %v2117 = vpop.f32.mrb[0].mxu0
      %v2118 = vadd.f32 %v841, %v2117
      %v2119 = vpop.f32.mrb[0].mxu0
      %v2120 = vpop.f32.mrb[0].mxu0
      %v2121 = vadd.f32 %v841, %v2120
      %v2122 = vpop.f32.mrb[0].mxu0
      %2123 = vmatprep.mubr.bf16.mxu0 0
      %2124 = vmatmul.mubr.bf16.gmra.mrb[0].mxu0 %v1409
      %v2125 = vpop.f32.mrb[0].mxu0
      %v2126 = vadd.f32 %v841, %v2125
      %v2127 = vpop.f32.mrb[0].mxu0
      %v2128 = vpop.f32.mrb[0].mxu0
      %v2129 = vadd.f32 %v841, %v2128
      %v2130 = vpop.f32.mrb[0].mxu0
      %2131 = vmatprep.mubr.bf16.mxu0 0
      %2132 = vmatmul.mubr.bf16.gmra.mrb[0].mxu0 %v1410
      %v2133 = vpop.f32.mrb[0].mxu0
      %v2134 = vadd.f32 %v841, %v2133
      %v2135 = vpop.f32.mrb[0].mxu0
      %v2136 = vpop.f32.mrb[0].mxu0
      %v2137 = vadd.f32 %v841, %v2136
      %v2138 = vpop.f32.mrb[0].mxu0
      %2139 = vmatprep.mubr.bf16.mxu0 0
      %2140 = vmatmul.mubr.bf16.gmra.mrb[0].mxu0 %v1411
      %v2141 = vpop.f32.mrb[0].mxu0
      %v2142 = vadd.f32 %v841, %v2141
      %v2143 = vpop.f32.mrb[0].mxu0
      %v2144 = vpop.f32.mrb[0].mxu0
      %v2145 = vadd.f32 %v841, %v2144
      %v2146 = vpop.f32.mrb[0].mxu0
      %2147 = vmatprep.mubr.bf16.mxu0 0
      %2148 = vmatmul.mubr.bf16.gmra.mrb[0].mxu0 %v1412
      %v2149 = vpop.f32.mrb[0].mxu0
      %v2150 = vadd.f32 %v841, %v2149
      %v2151 = vpop.f32.mrb[0].mxu0
      %v2152 = vpop.f32.mrb[0].mxu0
      %v2153 = vadd.f32 %v841, %v2152
      %v2154 = vpop.f32.mrb[0].mxu0
      %2155 = vmatprep.mubr.bf16.mxu0 0
      %2156 = vmatmul.mubr.bf16.gmra.mrb[0].mxu0 %v1413
      %v2157 = vpop.f32.mrb[0].mxu0
      %v2158 = vadd.f32 %v841, %v2157
      %v2159 = vpop.f32.mrb[0].mxu0
      %v2160 = vpop.f32.mrb[0].mxu0
      %v2161 = vadd.f32 %v841, %v2160
      %v2162 = vpop.f32.mrb[0].mxu0
      %2163 = vmatprep.mubr.bf16.mxu0 0
      %2164 = vmatmul.mubr.bf16.gmra.mrb[0].mxu0 %v1414
      %v2165 = vpop.f32.mrb[0].mxu0
      %v2166 = vadd.f32 %v841, %v2165
      %v2167 = vpop.f32.mrb[0].mxu0
      %v2168 = vpop.f32.mrb[0].mxu0
      %v2169 = vadd.f32 %v841, %v2168
      %v2170 = vpop.f32.mrb[0].mxu0
      %2171 = vmatprep.mubr.bf16.mxu0 0
      %2172 = vmatmul.mubr.bf16.gmra.mrb[0].mxu0 %v1415
      %v2173 = vpop.f32.mrb[0].mxu0
      %v2174 = vadd.f32 %v841, %v2173
      %v2175 = vpop.f32.mrb[0].mxu0
      %v2176 = vpop.f32.mrb[0].mxu0
      %v2177 = vadd.f32 %v841, %v2176
      %v2178 = vpop.f32.mrb[0].mxu0
      %2179 = vmatprep.mubr.bf16.mxu0 0
      %2180 = vmatmul.mubr.bf16.gmra.mrb[0].mxu0 %v1416
      %v2181 = vpop.f32.mrb[0].mxu0
      %v2182 = vadd.f32 %v841, %v2181
      %v2183 = vpop.f32.mrb[0].mxu0
      %v2184 = vpop.f32.mrb[0].mxu0
      %v2185 = vadd.f32 %v841, %v2184
      %v2186 = vpop.f32.mrb[0].mxu0
      %2187 = vmatprep.mubr.bf16.mxu0 0
      %2188 = vmatmul.mubr.bf16.gmra.mrb[0].mxu0 %v1417
      %v2189 = vpop.f32.mrb[0].mxu0
      %v2190 = vadd.f32 %v841, %v2189
      %v2191 = vpop.f32.mrb[0].mxu0
      %v2192 = vpop.f32.mrb[0].mxu0
      %v2193 = vadd.f32 %v841, %v2192
      %v2194 = vpop.f32.mrb[0].mxu0
      %2195 = vmatprep.mubr.bf16.mxu0 0
      %2196 = vmatmul.mubr.bf16.gmra.mrb[0].mxu0 %v1418
      %v2197 = vpop.f32.mrb[0].mxu0
      %v2198 = vadd.f32 %v841, %v2197
      %v2199 = vpop.f32.mrb[0].mxu0
      %v2200 = vpop.f32.mrb[0].mxu0
      %v2201 = vadd.f32 %v841, %v2200
      %v2202 = vpop.f32.mrb[0].mxu0
      %2203 = vmatprep.mubr.bf16.mxu0 0
      %2204 = vmatmul.mubr.bf16.gmra.mrb[0].mxu0 %v1419
      %v2205 = vpop.f32.mrb[0].mxu0
      %v2206 = vadd.f32 %v841, %v2205
      %v2207 = vpop.f32.mrb[0].mxu0
      %v2208 = vpop.f32.mrb[0].mxu0
      %v2209 = vadd.f32 %v841, %v2208
      %v2210 = vpop.f32.mrb[0].mxu0
      %2211 = vmatprep.mubr.bf16.mxu0 0
      %2212 = vmatmul.mubr.bf16.gmra.mrb[0].mxu0 %v1420
      %v2213 = vpop.f32.mrb[0].mxu0
      %v2214 = vadd.f32 %v841, %v2213
      %v2215 = vpop.f32.mrb[0].mxu0
      %v2216 = vpop.f32.mrb[0].mxu0
      %v2217 = vadd.f32 %v841, %v2216
      %v2218 = vpop.f32.mrb[0].mxu0
      %2219 = vmatprep.mubr.bf16.mxu0 0
      %2220 = vmatmul.mubr.bf16.gmra.mrb[0].mxu0 %v1421
      %v2221 = vpop.f32.mrb[0].mxu0
      %v2222 = vadd.f32 %v841, %v2221
      %v2223 = vpop.f32.mrb[0].mxu0
      %v2224 = vpop.f32.mrb[0].mxu0
      %v2225 = vadd.f32 %v841, %v2224
      %v2226 = vpop.f32.mrb[0].mxu0
      %2227 = vmatprep.mubr.bf16.mxu0 0
      %2228 = vmatmul.mubr.bf16.gmra.mrb[0].mxu0 %v1422
      %v2229 = vpop.f32.mrb[0].mxu0
      %v2230 = vadd.f32 %v841, %v2229
      %v2231 = vpop.f32.mrb[0].mxu0
      %v2232 = vpop.f32.mrb[0].mxu0
      %v2233 = vadd.f32 %v841, %v2232
      %v2234 = vpop.f32.mrb[0].mxu0
      %2235 = vmatprep.mubr.bf16.mxu0 0
      %2236 = vmatmul.mubr.bf16.gmra.mrb[0].mxu0 %v1423
      %v2237 = vpop.f32.mrb[0].mxu0
      %v2238 = vadd.f32 %v841, %v2237
      %v2239 = vpop.f32.mrb[0].mxu0
      %v2240 = vpop.f32.mrb[0].mxu0
      %v2241 = vadd.f32 %v841, %v2240
      %v2242 = vpop.f32.mrb[0].mxu0
      %2243 = vmatprep.mubr.bf16.mxu0 0
      %2244 = vmatmul.mubr.bf16.gmra.mrb[0].mxu0 %v1424
      %v2245 = vpop.f32.mrb[0].mxu0
      %v2246 = vadd.f32 %v841, %v2245
      %v2247 = vpop.f32.mrb[0].mxu0
      %v2248 = vpop.f32.mrb[0].mxu0
      %v2249 = vadd.f32 %v841, %v2248
      %v2250 = vpop.f32.mrb[0].mxu0
      %2251 = vmatprep.mubr.bf16.mxu0 0
      %2252 = vmatmul.mubr.bf16.gmra.mrb[0].mxu0 %v1425
      %v2253 = vpop.f32.mrb[0].mxu0
      %v2254 = vadd.f32 %v841, %v2253
      %v2255 = vpop.f32.mrb[0].mxu0
      %v2256 = vpop.f32.mrb[0].mxu0
      %v2257 = vadd.f32 %v841, %v2256
      %v2258 = vpop.f32.mrb[0].mxu0
      %2259 = vmatprep.mubr.bf16.mxu0 0
      %2260 = vmatmul.mubr.bf16.gmra.mrb[0].mxu0 %v1426
      %v2261 = vpop.f32.mrb[0].mxu0
      %v2262 = vadd.f32 %v841, %v2261
      %v2263 = vpop.f32.mrb[0].mxu0
      %v2264 = vpop.f32.mrb[0].mxu0
      %v2265 = vadd.f32 %v841, %v2264
      %v2266 = vpop.f32.mrb[0].mxu0
      %2267 = vmatprep.mubr.bf16.mxu0 0
      %2268 = vmatmul.mubr.bf16.gmra.mrb[0].mxu0 %v1427
      %v2269 = vpop.f32.mrb[0].mxu0
      %v2270 = vadd.f32 %v841, %v2269
      %v2271 = vpop.f32.mrb[0].mxu0
      %v2272 = vpop.f32.mrb[0].mxu0
      %v2273 = vadd.f32 %v841, %v2272
      %v2274 = vpop.f32.mrb[0].mxu0
      %2275 = vmatprep.mubr.bf16.mxu0 0
      %2276 = vmatmul.mubr.bf16.gmra.mrb[0].mxu0 %v1428
      %v2277 = vpop.f32.mrb[0].mxu0
      %v2278 = vadd.f32 %v841, %v2277
      %v2279 = vpop.f32.mrb[0].mxu0
      %v2280 = vpop.f32.mrb[0].mxu0
      %v2281 = vadd.f32 %v841, %v2280
      %v2282 = vpop.f32.mrb[0].mxu0
      %2283 = vmatprep.mubr.bf16.mxu0 0
      %2284 = vmatmul.mubr.bf16.gmra.mrb[0].mxu0 %v1429
      %v2285 = vpop.f32.mrb[0].mxu0
      %v2286 = vadd.f32 %v841, %v2285
      %v2287 = vpop.f32.mrb[0].mxu0
      %v2288 = vpop.f32.mrb[0].mxu0
      %v2289 = vadd.f32 %v841, %v2288
      %v2290 = vpop.f32.mrb[0].mxu0
      %2291 = vmatprep.mubr.bf16.mxu0 0
      %2292 = vmatmul.mubr.bf16.gmra.mrb[0].mxu0 %v1430
      %v2293 = vpop.f32.mrb[0].mxu0
      %v2294 = vadd.f32 %v841, %v2293
      %v2295 = vpop.f32.mrb[0].mxu0
      %v2296 = vpop.f32.mrb[0].mxu0
      %v2297 = vadd.f32 %v841, %v2296
      %v2298 = vpop.f32.mrb[0].mxu0
      %2299 = vmatprep.mubr.bf16.mxu0 0
      %2300 = vmatmul.mubr.bf16.gmra.mrb[0].mxu0 %v1431
      %v2301 = vpop.f32.mrb[0].mxu0
      %v2302 = vadd.f32 %v841, %v2301
      %v2303 = vpop.f32.mrb[0].mxu0
      %v2304 = vpop.f32.mrb[0].mxu0
      %v2305 = vadd.f32 %v841, %v2304
      %v2306 = vpop.f32.mrb[0].mxu0
      %2307 = vmatprep.mubr.bf16.mxu0 0
      %2308 = vmatmul.mubr.bf16.gmra.mrb[0].mxu0 %v1432
      %v2309 = vpop.f32.mrb[0].mxu0
      %v2310 = vadd.f32 %v841, %v2309
      %v2311 = vpop.f32.mrb[0].mxu0
      %v2312 = vpop.f32.mrb[0].mxu0
      %v2313 = vadd.f32 %v841, %v2312
      %v2314 = vpop.f32.mrb[0].mxu0
      %2315 = vmatprep.mubr.bf16.mxu0 0
      %2316 = vmatmul.mubr.bf16.gmra.mrb[0].mxu0 %v1433
      %v2317 = vpop.f32.mrb[0].mxu0
      %v2318 = vadd.f32 %v841, %v2317
      %v2319 = vpop.f32.mrb[0].mxu0
      %v2320 = vpop.f32.mrb[0].mxu0
      %v2321 = vadd.f32 %v841, %v2320
      %v2322 = vpop.f32.mrb[0].mxu0
      %2323 = vmatprep.mubr.bf16.mxu0 0
      %2324 = vmatmul.mubr.bf16.gmra.mrb[0].mxu0 %v1434
      %v2325 = vpop.f32.mrb[0].mxu0
      %v2326 = vadd.f32 %v841, %v2325
      %v2327 = vpop.f32.mrb[0].mxu0
      %v2328 = vpop.f32.mrb[0].mxu0
      %v2329 = vadd.f32 %v841, %v2328
      %v2330 = vpop.f32.mrb[0].mxu0
      %2331 = vmatprep.mubr.bf16.mxu0 0
      %2332 = vmatmul.mubr.bf16.gmra.mrb[0].mxu0 %v1435
      %v2333 = vpop.f32.mrb[0].mxu0
      %v2334 = vadd.f32 %v841, %v2333
      %v2335 = vpop.f32.mrb[0].mxu0
      %v2336 = vpop.f32.mrb[0].mxu0
      %v2337 = vadd.f32 %v841, %v2336
      %v2338 = vpop.f32.mrb[0].mxu0
      %2339 = vmatprep.mubr.bf16.mxu0 0
      %2340 = vmatmul.mubr.bf16.gmra.mrb[0].mxu0 %v1436
      %v2341 = vpop.f32.mrb[0].mxu0
      %v2342 = vadd.f32 %v841, %v2341
      %v2343 = vpop.f32.mrb[0].mxu0
      %v2344 = vpop.f32.mrb[0].mxu0
      %v2345 = vadd.f32 %v841, %v2344
      %v2346 = vpop.f32.mrb[0].mxu0
      %2347 = vmatprep.mubr.bf16.mxu0 0
      %2348 = vmatmul.mubr.bf16.gmra.mrb[0].mxu0 %v1437
      %v2349 = vpop.f32.mrb[0].mxu0
      %v2350 = vadd.f32 %v841, %v2349
      %v2351 = vpop.f32.mrb[0].mxu0
      %v2352 = vpop.f32.mrb[0].mxu0
      %v2353 = vadd.f32 %v841, %v2352
      %v2354 = vpop.f32.mrb[0].mxu0
      %2355 = vmatprep.mubr.bf16.mxu0 0
      %2356 = vmatmul.mubr.bf16.gmra.mrb[0].mxu0 %v1438
      %v2357 = vpop.f32.mrb[0].mxu0
      %v2358 = vadd.f32 %v841, %v2357
      %v2359 = vpop.f32.mrb[0].mxu0
      %v2360 = vpop.f32.mrb[0].mxu0
      %v2361 = vadd.f32 %v841, %v2360
      %v2362 = vpop.f32.mrb[0].mxu0
      %2363 = vmatprep.mubr.bf16.mxu0 0
      %2364 = vmatmul.mubr.bf16.gmra.mrb[0].mxu0 %v1439
      %v2365 = vpop.f32.mrb[0].mxu0
      %v2366 = vadd.f32 %v841, %v2365
      %v2367 = vpop.f32.mrb[0].mxu0
      %v2368 = vpop.f32.mrb[0].mxu0
      %v2369 = vadd.f32 %v841, %v2368
      %v2370 = vpop.f32.mrb[0].mxu0
      %2371 = vmatprep.mubr.bf16.mxu0 0
      %2372 = vmatmul.mubr.bf16.gmra.mrb[0].mxu0 %v1440
      %v2373 = vpop.f32.mrb[0].mxu0
      %v2374 = vadd.f32 %v841, %v2373
      %v2375 = vpop.f32.mrb[0].mxu0
      %v2376 = vpop.f32.mrb[0].mxu0
      %v2377 = vadd.f32 %v841, %v2376
      %v2378 = vpop.f32.mrb[0].mxu0
      %2379 = vmatprep.mubr.bf16.mxu0 0
      %2380 = vmatmul.mubr.bf16.gmra.mrb[0].mxu0 %v1441
      %v2381 = vpop.f32.mrb[0].mxu0
      %v2382 = vadd.f32 %v841, %v2381
      %v2383 = vpop.f32.mrb[0].mxu0
      %v2384 = vpop.f32.mrb[0].mxu0
      %v2385 = vadd.f32 %v841, %v2384
      %v2386 = vpop.f32.mrb[0].mxu0
      %2387 = vmatprep.mubr.bf16.mxu0 0
      %2388 = vmatmul.mubr.bf16.gmra.mrb[0].mxu0 %v1442
      %v2389 = vpop.f32.mrb[0].mxu0
      %v2390 = vadd.f32 %v841, %v2389
      %v2391 = vpop.f32.mrb[0].mxu0
      %v2392 = vpop.f32.mrb[0].mxu0
      %v2393 = vadd.f32 %v841, %v2392
      %v2394 = vpop.f32.mrb[0].mxu0
      %2395 = vmatprep.mubr.bf16.mxu0 0
      %2396 = vmatmul.mubr.bf16.gmra.mrb[0].mxu0 %v1443
      %v2397 = vpop.f32.mrb[0].mxu0
      %v2398 = vadd.f32 %v841, %v2397
      %v2399 = vpop.f32.mrb[0].mxu0
      %v2400 = vpop.f32.mrb[0].mxu0
      %v2401 = vadd.f32 %v841, %v2400
      %v2402 = vpop.f32.mrb[0].mxu0
      %2403 = vmatprep.mubr.bf16.mxu0 0
      %2404 = vmatmul.mubr.bf16.gmra.mrb[0].mxu0 %v1444
      %v2405 = vpop.f32.mrb[0].mxu0
      %v2406 = vadd.f32 %v841, %v2405
      %v2407 = vpop.f32.mrb[0].mxu0
      %v2408 = vpop.f32.mrb[0].mxu0
      %v2409 = vadd.f32 %v841, %v2408
      %v2410 = vpop.f32.mrb[0].mxu0
      %2411 = vmatprep.mubr.bf16.mxu0 0
      %2412 = vmatmul.mubr.bf16.gmra.mrb[0].mxu0 %v1445
      %v2413 = vpop.f32.mrb[0].mxu0
      %v2414 = vadd.f32 %v841, %v2413
      %v2415 = vpop.f32.mrb[0].mxu0
      %v2416 = vpop.f32.mrb[0].mxu0
      %v2417 = vadd.f32 %v841, %v2416
      %v2418 = vpop.f32.mrb[0].mxu0
      %2419 = vmatprep.mubr.bf16.mxu0 0
      %2420 = vmatmul.mubr.bf16.gmra.mrb[0].mxu0 %v1446
      %v2421 = vpop.f32.mrb[0].mxu0
      %v2422 = vadd.f32 %v841, %v2421
      %v2423 = vpop.f32.mrb[0].mxu0
      %v2424 = vpop.f32.mrb[0].mxu0
      %v2425 = vadd.f32 %v841, %v2424
      %v2426 = vpop.f32.mrb[0].mxu0
      %2427 = vmatprep.mubr.bf16.mxu0 0
      %2428 = vmatmul.mubr.bf16.gmra.mrb[0].mxu0 %v1447
      %v2429 = vpop.f32.mrb[0].mxu0
      %v2430 = vadd.f32 %v841, %v2429
      %v2431 = vpop.f32.mrb[0].mxu0
      %v2432 = vpop.f32.mrb[0].mxu0
      %v2433 = vadd.f32 %v841, %v2432
      %v2434 = vpop.f32.mrb[0].mxu0
      %2435 = vmatprep.mubr.bf16.mxu0 0
      %2436 = vmatmul.mubr.bf16.gmra.mrb[0].mxu0 %v1448
      %v2437 = vpop.f32.mrb[0].mxu0
      %v2438 = vadd.f32 %v841, %v2437
      %v2439 = vpop.f32.mrb[0].mxu0
      %v2440 = vpop.f32.mrb[0].mxu0
      %v2441 = vadd.f32 %v841, %v2440
      %v2442 = vpop.f32.mrb[0].mxu0
      %2443 = vmatprep.mubr.bf16.mxu0 0
      %2444 = vmatmul.mubr.bf16.gmra.mrb[0].mxu0 %v1449
      %v2445 = vpop.f32.mrb[0].mxu0
      %v2446 = vadd.f32 %v841, %v2445
      %v2447 = vpop.f32.mrb[0].mxu0
      %v2448 = vpop.f32.mrb[0].mxu0
      %v2449 = vadd.f32 %v841, %v2448
      %v2450 = vpop.f32.mrb[0].mxu0
      %2451 = vmatprep.mubr.bf16.mxu0 0
      %2452 = vmatmul.mubr.bf16.gmra.mrb[0].mxu0 %v1450
      %v2453 = vpop.f32.mrb[0].mxu0
      %v2454 = vadd.f32 %v841, %v2453
      %v2455 = vpop.f32.mrb[0].mxu0
      %v2456 = vpop.f32.mrb[0].mxu0
      %v2457 = vadd.f32 %v841, %v2456
      %v2458 = vpop.f32.mrb[0].mxu0
      %2459 = vmatprep.mubr.bf16.mxu0 0
      %2460 = vmatmul.mubr.bf16.gmra.mrb[0].mxu0 %v1451
      %v2461 = vpop.f32.mrb[0].mxu0
      %v2462 = vadd.f32 %v841, %v2461
      %v2463 = vpop.f32.mrb[0].mxu0
      %v2464 = vpop.f32.mrb[0].mxu0
      %v2465 = vadd.f32 %v841, %v2464
      %v2466 = vpop.f32.mrb[0].mxu0
      %2467 = vmatprep.mubr.bf16.mxu0 0
      %2468 = vmatmul.mubr.bf16.gmra.mrb[0].mxu0 %v1452
      %v2469 = vpop.f32.mrb[0].mxu0
      %v2470 = vadd.f32 %v841, %v2469
      %v2471 = vpop.f32.mrb[0].mxu0
      %v2472 = vpop.f32.mrb[0].mxu0
      %v2473 = vadd.f32 %v841, %v2472
      %v2474 = vpop.f32.mrb[0].mxu0
      %2475 = vmatprep.mubr.bf16.mxu0 0
      %2476 = vmatmul.mubr.bf16.gmra.mrb[0].mxu0 %v1453
      %v2477 = vpop.f32.mrb[0].mxu0
      %v2478 = vadd.f32 %v841, %v2477
      %v2479 = vpop.f32.mrb[0].mxu0
      %v2480 = vpop.f32.mrb[0].mxu0
      %v2481 = vadd.f32 %v841, %v2480
      %v2482 = vpop.f32.mrb[0].mxu0
      %2483 = vmatprep.mubr.bf16.mxu0 0
      %2484 = vmatmul.mubr.bf16.gmra.mrb[0].mxu0 %v1454
      %v2485 = vpop.f32.mrb[0].mxu0
      %v2486 = vadd.f32 %v841, %v2485
      %v2487 = vpop.f32.mrb[0].mxu0
      %v2488 = vpop.f32.mrb[0].mxu0
      %v2489 = vadd.f32 %v841, %v2488
      %v2490 = vpop.f32.mrb[0].mxu0
      %2491 = vmatprep.mubr.bf16.mxu0 0
      %2492 = vmatmul.mubr.bf16.gmra.mrb[0].mxu0 %v1455
      %v2493 = vpop.f32.mrb[0].mxu0
      %v2494 = vadd.f32 %v841, %v2493
      %v2495 = vpop.f32.mrb[0].mxu0
      %v2496 = vpop.f32.mrb[0].mxu0
      %v2497 = vadd.f32 %v841, %v2496
      %v2498 = vpop.f32.mrb[0].mxu0
      %2499 = vmatprep.mubr.bf16.mxu0 0
      %2500 = vmatmul.mubr.bf16.gmra.mrb[0].mxu0 %v1456
      %v2501 = vpop.f32.mrb[0].mxu0
      %v2502 = vadd.f32 %v841, %v2501
      %v2503 = vpop.f32.mrb[0].mxu0
      %v2504 = vpop.f32.mrb[0].mxu0
      %v2505 = vadd.f32 %v841, %v2504
      %v2506 = vpop.f32.mrb[0].mxu0
      %2507 = vmatprep.mubr.bf16.mxu0 0
      %2508 = vmatmul.mubr.bf16.gmra.mrb[0].mxu0 %v1457
      %v2509 = vpop.f32.mrb[0].mxu0
      %v2510 = vadd.f32 %v841, %v2509
      %v2511 = vpop.f32.mrb[0].mxu0
      %v2512 = vpop.f32.mrb[0].mxu0
      %v2513 = vadd.f32 %v841, %v2512
      %v2514 = vpop.f32.mrb[0].mxu0
      %2515 = vmatprep.mubr.bf16.mxu0 0
      %2516 = vmatmul.mubr.bf16.gmra.mrb[0].mxu0 %v1458
      %v2517 = vpop.f32.mrb[0].mxu0
      %v2518 = vadd.f32 %v841, %v2517
      %v2519 = vpop.f32.mrb[0].mxu0
      %v2520 = vpop.f32.mrb[0].mxu0
      %v2521 = vadd.f32 %v841, %v2520
      %v2522 = vpop.f32.mrb[0].mxu0
      %2523 = vmatprep.mubr.bf16.mxu0 0
      %2524 = vmatmul.mubr.bf16.gmra.mrb[0].mxu0 %v1459
      %v2525 = vpop.f32.mrb[0].mxu0
      %v2526 = vadd.f32 %v841, %v2525
      %v2527 = vpop.f32.mrb[0].mxu0
      %v2528 = vpop.f32.mrb[0].mxu0
      %v2529 = vadd.f32 %v841, %v2528
      %v2530 = vpop.f32.mrb[0].mxu0
      %2531 = vmatprep.mubr.bf16.mxu0 0
      %2532 = vmatmul.mubr.bf16.gmra.mrb[0].mxu0 %v1460
      %v2533 = vpop.f32.mrb[0].mxu0
      %v2534 = vadd.f32 %v841, %v2533
      %v2535 = vpop.f32.mrb[0].mxu0
      %v2536 = vpop.f32.mrb[0].mxu0
      %v2537 = vadd.f32 %v841, %v2536
      %v2538 = vpop.f32.mrb[0].mxu0
      %2539 = vmatprep.mubr.bf16.mxu0 0
      %2540 = vmatmul.mubr.bf16.gmra.mrb[0].mxu0 %v1461
      %v2541 = vpop.f32.mrb[0].mxu0
      %v2542 = vadd.f32 %v841, %v2541
      %v2543 = vpop.f32.mrb[0].mxu0
      %v2544 = vpop.f32.mrb[0].mxu0
      %v2545 = vadd.f32 %v841, %v2544
      %v2546 = vpop.f32.mrb[0].mxu0
      %2547 = vmatprep.mubr.bf16.mxu0 0
      %2548 = vmatmul.mubr.bf16.gmra.mrb[0].mxu0 %v1462
      %v2549 = vpop.f32.mrb[0].mxu0
      %v2550 = vadd.f32 %v841, %v2549
      %v2551 = vpop.f32.mrb[0].mxu0
      %v2552 = vpop.f32.mrb[0].mxu0
      %v2553 = vadd.f32 %v841, %v2552
      %v2554 = vpop.f32.mrb[0].mxu0
      %2555 = vmatprep.mubr.bf16.mxu0 0
      %2556 = vmatmul.mubr.bf16.gmra.mrb[0].mxu0 %v1463
      %v2557 = vpop.f32.mrb[0].mxu0
      %v2558 = vadd.f32 %v841, %v2557
      %v2559 = vpop.f32.mrb[0].mxu0
      %v2560 = vpop.f32.mrb[0].mxu0
      %v2561 = vadd.f32 %v841, %v2560
      %v2562 = vpop.f32.mrb[0].mxu0
      %2563 = vmatprep.mubr.bf16.mxu0 0
      %2564 = vmatmul.mubr.bf16.gmra.mrb[0].mxu0 %v1464
      %v2565 = vpop.f32.mrb[0].mxu0
      %v2566 = vadd.f32 %v841, %v2565
      %v2567 = vpop.f32.mrb[0].mxu0
      %v2568 = vpop.f32.mrb[0].mxu0
      %v2569 = vadd.f32 %v841, %v2568
      %v2570 = vpop.f32.mrb[0].mxu0
      %2571 = vmatprep.mubr.bf16.mxu0 0
      %2572 = vmatmul.mubr.bf16.gmra.mrb[0].mxu0 %v1465
      %v2573 = vpop.f32.mrb[0].mxu0
      %v2574 = vadd.f32 %v841, %v2573
      %v2575 = vpop.f32.mrb[0].mxu0
      %v2576 = vpop.f32.mrb[0].mxu0
      %v2577 = vadd.f32 %v841, %v2576
      %v2578 = vpop.f32.mrb[0].mxu0
      %2579 = vmatprep.mubr.bf16.mxu0 0
      %2580 = vmatmul.mubr.bf16.gmra.mrb[0].mxu0 %v1466
      %v2581 = vpop.f32.mrb[0].mxu0
      %v2582 = vadd.f32 %v841, %v2581
      %v2583 = vpop.f32.mrb[0].mxu0
      %v2584 = vpop.f32.mrb[0].mxu0
      %v2585 = vadd.f32 %v841, %v2584
      %v2586 = vpop.f32.mrb[0].mxu0
      %2587 = vmatprep.mubr.bf16.mxu0 0
      %2588 = vmatmul.mubr.bf16.gmra.mrb[0].mxu0 %v1467
      %v2589 = vpop.f32.mrb[0].mxu0
      %v2590 = vadd.f32 %v841, %v2589
      %v2591 = vpop.f32.mrb[0].mxu0
      %v2592 = vpop.f32.mrb[0].mxu0
      %v2593 = vadd.f32 %v841, %v2592
      %v2594 = vpop.f32.mrb[0].mxu0
      %2595 = vmatprep.mubr.bf16.mxu0 0
      %2596 = vmatmul.mubr.bf16.gmra.mrb[0].mxu0 %v1468
      %v2597 = vpop.f32.mrb[0].mxu0
      %v2598 = vadd.f32 %v841, %v2597
      %v2599 = vpop.f32.mrb[0].mxu0
      %v2600 = vpop.f32.mrb[0].mxu0
      %v2601 = vadd.f32 %v841, %v2600
      %v2602 = vpop.f32.mrb[0].mxu0
      %2603 = vmatprep.mubr.bf16.mxu0 0
      %2604 = vmatmul.mubr.bf16.gmra.mrb[0].mxu0 %v1469
      %v2605 = vpop.f32.mrb[0].mxu0
      %v2606 = vadd.f32 %v841, %v2605
      %v2607 = vpop.f32.mrb[0].mxu0
      %v2608 = vpop.f32.mrb[0].mxu0
      %v2609 = vadd.f32 %v841, %v2608
      %v2610 = vpop.f32.mrb[0].mxu0
      %2611 = vmatprep.mubr.bf16.mxu0 0
      %2612 = vmatmul.mubr.bf16.gmra.mrb[0].mxu0 %v1470
      %v2613 = vpop.f32.mrb[0].mxu0
      %v2614 = vadd.f32 %v841, %v2613
      %v2615 = vpop.f32.mrb[0].mxu0
      %v2616 = vpop.f32.mrb[0].mxu0
      %v2617 = vadd.f32 %v841, %v2616
      %v2618 = vpop.f32.mrb[0].mxu0
      %2619 = vmatprep.mubr.bf16.mxu0 0
      %2620 = vmatmul.mubr.bf16.gmra.mrb[0].mxu0 %v1471
      %v2621 = vpop.f32.mrb[0].mxu0
      %v2622 = vadd.f32 %v841, %v2621
      %v2623 = vpop.f32.mrb[0].mxu0
      %v2624 = vpop.f32.mrb[0].mxu0
      %v2625 = vadd.f32 %v841, %v2624
      %v2626 = vpop.f32.mrb[0].mxu0
      %2627 = vmatprep.mubr.bf16.mxu0 0
      %2628 = vmatmul.mubr.bf16.gmra.mrb[0].mxu0 %v1472
      %v2629 = vpop.f32.mrb[0].mxu0
      %v2630 = vadd.f32 %v841, %v2629
      %v2631 = vpop.f32.mrb[0].mxu0
      %v2632 = vpop.f32.mrb[0].mxu0
      %v2633 = vadd.f32 %v841, %v2632
      %v2634 = vpop.f32.mrb[0].mxu0
      %2635 = vmatprep.mubr.bf16.mxu0 0
      %2636 = vmatmul.mubr.bf16.gmra.mrb[0].mxu0 %v1473
      %v2637 = vpop.f32.mrb[0].mxu0
      %v2638 = vadd.f32 %v841, %v2637
      %v2639 = vpop.f32.mrb[0].mxu0
      %v2640 = vpop.f32.mrb[0].mxu0
      %v2641 = vadd.f32 %v841, %v2640
      %v2642 = vpop.f32.mrb[0].mxu0
      %2643 = vmatprep.mubr.bf16.mxu0 0
      %2644 = vmatmul.mubr.bf16.gmra.mrb[0].mxu0 %v1474
      %v2645 = vpop.f32.mrb[0].mxu0
      %v2646 = vadd.f32 %v841, %v2645
      %v2647 = vpop.f32.mrb[0].mxu0
      %v2648 = vpop.f32.mrb[0].mxu0
      %v2649 = vadd.f32 %v841, %v2648
      %v2650 = vpop.f32.mrb[0].mxu0
      %2651 = vmatprep.mubr.bf16.mxu0 0
      %2652 = vmatmul.mubr.bf16.gmra.mrb[0].mxu0 %v1475
      %v2653 = vpop.f32.mrb[0].mxu0
      %v2654 = vadd.f32 %v841, %v2653
      %v2655 = vpop.f32.mrb[0].mxu0
      %v2656 = vpop.f32.mrb[0].mxu0
      %v2657 = vadd.f32 %v841, %v2656
      %v2658 = vpop.f32.mrb[0].mxu0
      %2659 = vmatprep.mubr.bf16.mxu0 0
      %2660 = vmatmul.mubr.bf16.gmra.mrb[0].mxu0 %v1476
      %v2661 = vpop.f32.mrb[0].mxu0
      %v2662 = vadd.f32 %v841, %v2661
      %v2663 = vpop.f32.mrb[0].mxu0
      %v2664 = vpop.f32.mrb[0].mxu0
      %v2665 = vadd.f32 %v841, %v2664
      %v2666 = vpop.f32.mrb[0].mxu0
      %2667 = vmatprep.mubr.bf16.mxu0 0
      %2668 = vmatmul.mubr.bf16.gmra.mrb[0].mxu0 %v1477
      %v2669 = vpop.f32.mrb[0].mxu0
      %v2670 = vadd.f32 %v841, %v2669
      %v2671 = vpop.f32.mrb[0].mxu0
      %v2672 = vpop.f32.mrb[0].mxu0
      %v2673 = vadd.f32 %v841, %v2672
      %v2674 = vpop.f32.mrb[0].mxu0
      %2675 = vmatprep.mubr.bf16.mxu0 0
      %2676 = vmatmul.mubr.bf16.gmra.mrb[0].mxu0 %v1478
      %v2677 = vpop.f32.mrb[0].mxu0
      %v2678 = vadd.f32 %v841, %v2677
      %v2679 = vpop.f32.mrb[0].mxu0
      %v2680 = vpop.f32.mrb[0].mxu0
      %v2681 = vadd.f32 %v841, %v2680
      %v2682 = vpop.f32.mrb[0].mxu0
      %2683 = vmatprep.mubr.bf16.mxu0 0
      %2684 = vmatmul.mubr.bf16.gmra.mrb[0].mxu0 %v1479
      %v2685 = vpop.f32.mrb[0].mxu0
      %v2686 = vadd.f32 %v841, %v2685
      %v2687 = vpop.f32.mrb[0].mxu0
      %v2688 = vpop.f32.mrb[0].mxu0
      %v2689 = vadd.f32 %v841, %v2688
      %v2690 = vpop.f32.mrb[0].mxu0
      %2691 = vmatprep.mubr.bf16.mxu0 0
      %2692 = vmatmul.mubr.bf16.gmra.mrb[0].mxu0 %v1480
      %v2693 = vpop.f32.mrb[0].mxu0
      %v2694 = vadd.f32 %v841, %v2693
      %v2695 = vpop.f32.mrb[0].mxu0
      %v2696 = vpop.f32.mrb[0].mxu0
      %v2697 = vadd.f32 %v841, %v2696
      %v2698 = vpop.f32.mrb[0].mxu0
      %2699 = vmatprep.mubr.bf16.mxu0 0
      %2700 = vmatmul.mubr.bf16.gmra.mrb[0].mxu0 %v1481
      %v2701 = vpop.f32.mrb[0].mxu0
      %v2702 = vadd.f32 %v841, %v2701
      %v2703 = vpop.f32.mrb[0].mxu0
      %v2704 = vpop.f32.mrb[0].mxu0
      %v2705 = vadd.f32 %v841, %v2704
      %v2706 = vpop.f32.mrb[0].mxu0
      %2707 = vmatprep.mubr.bf16.mxu0 0
      %2708 = vmatmul.mubr.bf16.gmra.mrb[0].mxu0 %v1482
      %v2709 = vpop.f32.mrb[0].mxu0
      %v2710 = vadd.f32 %v841, %v2709
      %v2711 = vpop.f32.mrb[0].mxu0
      %v2712 = vpop.f32.mrb[0].mxu0
      %v2713 = vadd.f32 %v841, %v2712
      %v2714 = vpop.f32.mrb[0].mxu0
      %2715 = vdwg.mxu0
      %v2716 = vmax.f32 %v1694, 0.0
      %v2717 = vmax.f32 %v1697, 0.0
      %v2718 = vmax.f32 %v1702, 0.0
      %v2719 = vmax.f32 %v1705, 0.0
      %v2720 = vmax.f32 %v1710, 0.0
      %v2721 = vmax.f32 %v1713, 0.0
      %v2722 = vmax.f32 %v1718, 0.0
      %v2723 = vmax.f32 %v1721, 0.0
      %v2724 = vmax.f32 %v1726, 0.0
      %v2725 = vmax.f32 %v1729, 0.0
      %v2726 = vmax.f32 %v1734, 0.0
      %v2727 = vmax.f32 %v1737, 0.0
      %v2728 = vmax.f32 %v1742, 0.0
      %v2729 = vmax.f32 %v1745, 0.0
      %v2730 = vmax.f32 %v1750, 0.0
      %v2731 = vmax.f32 %v1753, 0.0
      %v2732 = vmax.f32 %v1758, 0.0
      %v2733 = vmax.f32 %v1761, 0.0
      %v2734 = vmax.f32 %v1766, 0.0
      %v2735 = vmax.f32 %v1769, 0.0
      %v2736 = vmax.f32 %v1774, 0.0
      %v2737 = vmax.f32 %v1777, 0.0
      %v2738 = vmax.f32 %v1782, 0.0
      %v2739 = vmax.f32 %v1785, 0.0
      %v2740 = vmax.f32 %v1790, 0.0
      %v2741 = vmax.f32 %v1793, 0.0
      %v2742 = vmax.f32 %v1798, 0.0
      %v2743 = vmax.f32 %v1801, 0.0
      %v2744 = vmax.f32 %v1806, 0.0
      %v2745 = vmax.f32 %v1809, 0.0
      %v2746 = vmax.f32 %v1814, 0.0
      %v2747 = vmax.f32 %v1817, 0.0
      %v2748 = vmax.f32 %v1822, 0.0
      %v2749 = vmax.f32 %v1825, 0.0
      %v2750 = vmax.f32 %v1830, 0.0
      %v2751 = vmax.f32 %v1833, 0.0
      %v2752 = vmax.f32 %v1838, 0.0
      %v2753 = vmax.f32 %v1841, 0.0
      %v2754 = vmax.f32 %v1846, 0.0
      %v2755 = vmax.f32 %v1849, 0.0
      %v2756 = vmax.f32 %v1854, 0.0
      %v2757 = vmax.f32 %v1857, 0.0
      %v2758 = vmax.f32 %v1862, 0.0
      %v2759 = vmax.f32 %v1865, 0.0
      %v2760 = vmax.f32 %v1870, 0.0
      %v2761 = vmax.f32 %v1873, 0.0
      %v2762 = vmax.f32 %v1878, 0.0
      %v2763 = vmax.f32 %v1881, 0.0
      %v2764 = vmax.f32 %v1886, 0.0
      %v2765 = vmax.f32 %v1889, 0.0
      %v2766 = vmax.f32 %v1894, 0.0
      %v2767 = vmax.f32 %v1897, 0.0
      %v2768 = vmax.f32 %v1902, 0.0
      %v2769 = vmax.f32 %v1905, 0.0
      %v2770 = vmax.f32 %v1910, 0.0
      %v2771 = vmax.f32 %v1913, 0.0
      %v2772 = vmax.f32 %v1918, 0.0
      %v2773 = vmax.f32 %v1921, 0.0
      %v2774 = vmax.f32 %v1926, 0.0
      %v2775 = vmax.f32 %v1929, 0.0
      %v2776 = vmax.f32 %v1934, 0.0
      %v2777 = vmax.f32 %v1937, 0.0
      %v2778 = vmax.f32 %v1942, 0.0
      %v2779 = vmax.f32 %v1945, 0.0
      %v2780 = vmax.f32 %v1950, 0.0
      %v2781 = vmax.f32 %v1953, 0.0
      %v2782 = vmax.f32 %v1958, 0.0
      %v2783 = vmax.f32 %v1961, 0.0
      %v2784 = vmax.f32 %v1966, 0.0
      %v2785 = vmax.f32 %v1969, 0.0
      %v2786 = vmax.f32 %v1974, 0.0
      %v2787 = vmax.f32 %v1977, 0.0
      %v2788 = vmax.f32 %v1982, 0.0
      %v2789 = vmax.f32 %v1985, 0.0
      %v2790 = vmax.f32 %v1990, 0.0
      %v2791 = vmax.f32 %v1993, 0.0
      %v2792 = vmax.f32 %v1998, 0.0
      %v2793 = vmax.f32 %v2001, 0.0
      %v2794 = vmax.f32 %v2006, 0.0
      %v2795 = vmax.f32 %v2009, 0.0
      %v2796 = vmax.f32 %v2014, 0.0
      %v2797 = vmax.f32 %v2017, 0.0
      %v2798 = vmax.f32 %v2022, 0.0
      %v2799 = vmax.f32 %v2025, 0.0
      %v2800 = vmax.f32 %v2030, 0.0
      %v2801 = vmax.f32 %v2033, 0.0
      %v2802 = vmax.f32 %v2038, 0.0
      %v2803 = vmax.f32 %v2041, 0.0
      %v2804 = vmax.f32 %v2046, 0.0
      %v2805 = vmax.f32 %v2049, 0.0
      %v2806 = vmax.f32 %v2054, 0.0
      %v2807 = vmax.f32 %v2057, 0.0
      %v2808 = vmax.f32 %v2062, 0.0
      %v2809 = vmax.f32 %v2065, 0.0
      %v2810 = vmax.f32 %v2070, 0.0
      %v2811 = vmax.f32 %v2073, 0.0
      %v2812 = vmax.f32 %v2078, 0.0
      %v2813 = vmax.f32 %v2081, 0.0
      %v2814 = vmax.f32 %v2086, 0.0
      %v2815 = vmax.f32 %v2089, 0.0
      %v2816 = vmax.f32 %v2094, 0.0
      %v2817 = vmax.f32 %v2097, 0.0
      %v2818 = vmax.f32 %v2102, 0.0
      %v2819 = vmax.f32 %v2105, 0.0
      %v2820 = vmax.f32 %v2110, 0.0
      %v2821 = vmax.f32 %v2113, 0.0
      %v2822 = vmax.f32 %v2118, 0.0
      %v2823 = vmax.f32 %v2121, 0.0
      %v2824 = vmax.f32 %v2126, 0.0
      %v2825 = vmax.f32 %v2129, 0.0
      %v2826 = vmax.f32 %v2134, 0.0
      %v2827 = vmax.f32 %v2137, 0.0
      %v2828 = vmax.f32 %v2142, 0.0
      %v2829 = vmax.f32 %v2145, 0.0
      %v2830 = vmax.f32 %v2150, 0.0
      %v2831 = vmax.f32 %v2153, 0.0
      %v2832 = vmax.f32 %v2158, 0.0
      %v2833 = vmax.f32 %v2161, 0.0
      %v2834 = vmax.f32 %v2166, 0.0
      %v2835 = vmax.f32 %v2169, 0.0
      %v2836 = vmax.f32 %v2174, 0.0
      %v2837 = vmax.f32 %v2177, 0.0
      %v2838 = vmax.f32 %v2182, 0.0
      %v2839 = vmax.f32 %v2185, 0.0
      %v2840 = vmax.f32 %v2190, 0.0
      %v2841 = vmax.f32 %v2193, 0.0
      %v2842 = vmax.f32 %v2198, 0.0
      %v2843 = vmax.f32 %v2201, 0.0
      %v2844 = vmax.f32 %v2206, 0.0
      %v2845 = vmax.f32 %v2209, 0.0
      %v2846 = vmax.f32 %v2214, 0.0
      %v2847 = vmax.f32 %v2217, 0.0
      %v2848 = vmax.f32 %v2222, 0.0
      %v2849 = vmax.f32 %v2225, 0.0
      %v2850 = vmax.f32 %v2230, 0.0
      %v2851 = vmax.f32 %v2233, 0.0
      %v2852 = vmax.f32 %v2238, 0.0
      %v2853 = vmax.f32 %v2241, 0.0
      %v2854 = vmax.f32 %v2246, 0.0
      %v2855 = vmax.f32 %v2249, 0.0
      %v2856 = vmax.f32 %v2254, 0.0
      %v2857 = vmax.f32 %v2257, 0.0
      %v2858 = vmax.f32 %v2262, 0.0
      %v2859 = vmax.f32 %v2265, 0.0
      %v2860 = vmax.f32 %v2270, 0.0
      %v2861 = vmax.f32 %v2273, 0.0
      %v2862 = vmax.f32 %v2278, 0.0
      %v2863 = vmax.f32 %v2281, 0.0
      %v2864 = vmax.f32 %v2286, 0.0
      %v2865 = vmax.f32 %v2289, 0.0
      %v2866 = vmax.f32 %v2294, 0.0
      %v2867 = vmax.f32 %v2297, 0.0
      %v2868 = vmax.f32 %v2302, 0.0
      %v2869 = vmax.f32 %v2305, 0.0
      %v2870 = vmax.f32 %v2310, 0.0
      %v2871 = vmax.f32 %v2313, 0.0
      %v2872 = vmax.f32 %v2318, 0.0
      %v2873 = vmax.f32 %v2321, 0.0
      %v2874 = vmax.f32 %v2326, 0.0
      %v2875 = vmax.f32 %v2329, 0.0
      %v2876 = vmax.f32 %v2334, 0.0
      %v2877 = vmax.f32 %v2337, 0.0
      %v2878 = vmax.f32 %v2342, 0.0
      %v2879 = vmax.f32 %v2345, 0.0
      %v2880 = vmax.f32 %v2350, 0.0
      %v2881 = vmax.f32 %v2353, 0.0
      %v2882 = vmax.f32 %v2358, 0.0
      %v2883 = vmax.f32 %v2361, 0.0
      %v2884 = vmax.f32 %v2366, 0.0
      %v2885 = vmax.f32 %v2369, 0.0
      %v2886 = vmax.f32 %v2374, 0.0
      %v2887 = vmax.f32 %v2377, 0.0
      %v2888 = vmax.f32 %v2382, 0.0
      %v2889 = vmax.f32 %v2385, 0.0
      %v2890 = vmax.f32 %v2390, 0.0
      %v2891 = vmax.f32 %v2393, 0.0
      %v2892 = vmax.f32 %v2398, 0.0
      %v2893 = vmax.f32 %v2401, 0.0
      %v2894 = vmax.f32 %v2406, 0.0
      %v2895 = vmax.f32 %v2409, 0.0
      %v2896 = vmax.f32 %v2414, 0.0
      %v2897 = vmax.f32 %v2417, 0.0
      %v2898 = vmax.f32 %v2422, 0.0
      %v2899 = vmax.f32 %v2425, 0.0
      %v2900 = vmax.f32 %v2430, 0.0
      %v2901 = vmax.f32 %v2433, 0.0
      %v2902 = vmax.f32 %v2438, 0.0
      %v2903 = vmax.f32 %v2441, 0.0
      %v2904 = vmax.f32 %v2446, 0.0
      %v2905 = vmax.f32 %v2449, 0.0
      %v2906 = vmax.f32 %v2454, 0.0
      %v2907 = vmax.f32 %v2457, 0.0
      %v2908 = vmax.f32 %v2462, 0.0
      %v2909 = vmax.f32 %v2465, 0.0
      %v2910 = vmax.f32 %v2470, 0.0
      %v2911 = vmax.f32 %v2473, 0.0
      %v2912 = vmax.f32 %v2478, 0.0
      %v2913 = vmax.f32 %v2481, 0.0
      %v2914 = vmax.f32 %v2486, 0.0
      %v2915 = vmax.f32 %v2489, 0.0
      %v2916 = vmax.f32 %v2494, 0.0
      %v2917 = vmax.f32 %v2497, 0.0
      %v2918 = vmax.f32 %v2502, 0.0
      %v2919 = vmax.f32 %v2505, 0.0
      %v2920 = vmax.f32 %v2510, 0.0
      %v2921 = vmax.f32 %v2513, 0.0
      %v2922 = vmax.f32 %v2518, 0.0
      %v2923 = vmax.f32 %v2521, 0.0
      %v2924 = vmax.f32 %v2526, 0.0
      %v2925 = vmax.f32 %v2529, 0.0
      %v2926 = vmax.f32 %v2534, 0.0
      %v2927 = vmax.f32 %v2537, 0.0
      %v2928 = vmax.f32 %v2542, 0.0
      %v2929 = vmax.f32 %v2545, 0.0
      %v2930 = vmax.f32 %v2550, 0.0
      %v2931 = vmax.f32 %v2553, 0.0
      %v2932 = vmax.f32 %v2558, 0.0
      %v2933 = vmax.f32 %v2561, 0.0
      %v2934 = vmax.f32 %v2566, 0.0
      %v2935 = vmax.f32 %v2569, 0.0
      %v2936 = vmax.f32 %v2574, 0.0
      %v2937 = vmax.f32 %v2577, 0.0
      %v2938 = vmax.f32 %v2582, 0.0
      %v2939 = vmax.f32 %v2585, 0.0
      %v2940 = vmax.f32 %v2590, 0.0
      %v2941 = vmax.f32 %v2593, 0.0
      %v2942 = vmax.f32 %v2598, 0.0
      %v2943 = vmax.f32 %v2601, 0.0
      %v2944 = vmax.f32 %v2606, 0.0
      %v2945 = vmax.f32 %v2609, 0.0
      %v2946 = vmax.f32 %v2614, 0.0
      %v2947 = vmax.f32 %v2617, 0.0
      %v2948 = vmax.f32 %v2622, 0.0
      %v2949 = vmax.f32 %v2625, 0.0
      %v2950 = vmax.f32 %v2630, 0.0
      %v2951 = vmax.f32 %v2633, 0.0
      %v2952 = vmax.f32 %v2638, 0.0
      %v2953 = vmax.f32 %v2641, 0.0
      %v2954 = vmax.f32 %v2646, 0.0
      %v2955 = vmax.f32 %v2649, 0.0
      %v2956 = vmax.f32 %v2654, 0.0
      %v2957 = vmax.f32 %v2657, 0.0
      %v2958 = vmax.f32 %v2662, 0.0
      %v2959 = vmax.f32 %v2665, 0.0
      %v2960 = vmax.f32 %v2670, 0.0
      %v2961 = vmax.f32 %v2673, 0.0
      %v2962 = vmax.f32 %v2678, 0.0
      %v2963 = vmax.f32 %v2681, 0.0
      %v2964 = vmax.f32 %v2686, 0.0
      %v2965 = vmax.f32 %v2689, 0.0
      %v2966 = vmax.f32 %v2694, 0.0
      %v2967 = vmax.f32 %v2697, 0.0
      %v2968 = vmax.f32 %v2702, 0.0
      %v2969 = vmax.f32 %v2705, 0.0
      %v2970 = vmax.f32 %v2710, 0.0
      %v2971 = vmax.f32 %v2713, 0.0
      %v2972 = vpack.c.bf16 %v2717, %v2716
      %v2973 = vpack.c.bf16 %v2719, %v2718
      %v2974 = vpack.c.bf16 %v2721, %v2720
      %v2975 = vpack.c.bf16 %v2723, %v2722
      %v2976 = vpack.c.bf16 %v2725, %v2724
      %v2977 = vpack.c.bf16 %v2727, %v2726
      %v2978 = vpack.c.bf16 %v2729, %v2728
      %v2979 = vpack.c.bf16 %v2731, %v2730
      %v2980 = vpack.c.bf16 %v2733, %v2732
      %v2981 = vpack.c.bf16 %v2735, %v2734
      %v2982 = vpack.c.bf16 %v2737, %v2736
      %v2983 = vpack.c.bf16 %v2739, %v2738
      %v2984 = vpack.c.bf16 %v2741, %v2740
      %v2985 = vpack.c.bf16 %v2743, %v2742
      %v2986 = vpack.c.bf16 %v2745, %v2744
      %v2987 = vpack.c.bf16 %v2747, %v2746
      %v2988 = vpack.c.bf16 %v2749, %v2748
      %v2989 = vpack.c.bf16 %v2751, %v2750
      %v2990 = vpack.c.bf16 %v2753, %v2752
      %v2991 = vpack.c.bf16 %v2755, %v2754
      %v2992 = vpack.c.bf16 %v2757, %v2756
      %v2993 = vpack.c.bf16 %v2759, %v2758
      %v2994 = vpack.c.bf16 %v2761, %v2760
      %v2995 = vpack.c.bf16 %v2763, %v2762
      %v2996 = vpack.c.bf16 %v2765, %v2764
      %v2997 = vpack.c.bf16 %v2767, %v2766
      %v2998 = vpack.c.bf16 %v2769, %v2768
      %v2999 = vpack.c.bf16 %v2771, %v2770
      %v3000 = vpack.c.bf16 %v2773, %v2772
      %v3001 = vpack.c.bf16 %v2775, %v2774
      %v3002 = vpack.c.bf16 %v2777, %v2776
      %v3003 = vpack.c.bf16 %v2779, %v2778
      %v3004 = vpack.c.bf16 %v2781, %v2780
      %v3005 = vpack.c.bf16 %v2783, %v2782
      %v3006 = vpack.c.bf16 %v2785, %v2784
      %v3007 = vpack.c.bf16 %v2787, %v2786
      %v3008 = vpack.c.bf16 %v2789, %v2788
      %v3009 = vpack.c.bf16 %v2791, %v2790
      %v3010 = vpack.c.bf16 %v2793, %v2792
      %v3011 = vpack.c.bf16 %v2795, %v2794
      %v3012 = vpack.c.bf16 %v2797, %v2796
      %v3013 = vpack.c.bf16 %v2799, %v2798
      %v3014 = vpack.c.bf16 %v2801, %v2800
      %v3015 = vpack.c.bf16 %v2803, %v2802
      %v3016 = vpack.c.bf16 %v2805, %v2804
      %v3017 = vpack.c.bf16 %v2807, %v2806
      %v3018 = vpack.c.bf16 %v2809, %v2808
      %v3019 = vpack.c.bf16 %v2811, %v2810
      %v3020 = vpack.c.bf16 %v2813, %v2812
      %v3021 = vpack.c.bf16 %v2815, %v2814
      %v3022 = vpack.c.bf16 %v2817, %v2816
      %v3023 = vpack.c.bf16 %v2819, %v2818
      %v3024 = vpack.c.bf16 %v2821, %v2820
      %v3025 = vpack.c.bf16 %v2823, %v2822
      %v3026 = vpack.c.bf16 %v2825, %v2824
      %v3027 = vpack.c.bf16 %v2827, %v2826
      %v3028 = vpack.c.bf16 %v2829, %v2828
      %v3029 = vpack.c.bf16 %v2831, %v2830
      %v3030 = vpack.c.bf16 %v2833, %v2832
      %v3031 = vpack.c.bf16 %v2835, %v2834
      %v3032 = vpack.c.bf16 %v2837, %v2836
      %v3033 = vpack.c.bf16 %v2839, %v2838
      %v3034 = vpack.c.bf16 %v2841, %v2840
      %v3035 = vpack.c.bf16 %v2843, %v2842
      %v3036 = vpack.c.bf16 %v2845, %v2844
      %v3037 = vpack.c.bf16 %v2847, %v2846
      %v3038 = vpack.c.bf16 %v2849, %v2848
      %v3039 = vpack.c.bf16 %v2851, %v2850
      %v3040 = vpack.c.bf16 %v2853, %v2852
      %v3041 = vpack.c.bf16 %v2855, %v2854
      %v3042 = vpack.c.bf16 %v2857, %v2856
      %v3043 = vpack.c.bf16 %v2859, %v2858
      %v3044 = vpack.c.bf16 %v2861, %v2860
      %v3045 = vpack.c.bf16 %v2863, %v2862
      %v3046 = vpack.c.bf16 %v2865, %v2864
      %v3047 = vpack.c.bf16 %v2867, %v2866
      %v3048 = vpack.c.bf16 %v2869, %v2868
      %v3049 = vpack.c.bf16 %v2871, %v2870
      %v3050 = vpack.c.bf16 %v2873, %v2872
      %v3051 = vpack.c.bf16 %v2875, %v2874
      %v3052 = vpack.c.bf16 %v2877, %v2876
      %v3053 = vpack.c.bf16 %v2879, %v2878
      %v3054 = vpack.c.bf16 %v2881, %v2880
      %v3055 = vpack.c.bf16 %v2883, %v2882
      %v3056 = vpack.c.bf16 %v2885, %v2884
      %v3057 = vpack.c.bf16 %v2887, %v2886
      %v3058 = vpack.c.bf16 %v2889, %v2888
      %v3059 = vpack.c.bf16 %v2891, %v2890
      %v3060 = vpack.c.bf16 %v2893, %v2892
      %v3061 = vpack.c.bf16 %v2895, %v2894
      %v3062 = vpack.c.bf16 %v2897, %v2896
      %v3063 = vpack.c.bf16 %v2899, %v2898
      %v3064 = vpack.c.bf16 %v2901, %v2900
      %v3065 = vpack.c.bf16 %v2903, %v2902
      %v3066 = vpack.c.bf16 %v2905, %v2904
      %v3067 = vpack.c.bf16 %v2907, %v2906
      %v3068 = vpack.c.bf16 %v2909, %v2908
      %v3069 = vpack.c.bf16 %v2911, %v2910
      %v3070 = vpack.c.bf16 %v2913, %v2912
      %v3071 = vpack.c.bf16 %v2915, %v2914
      %v3072 = vpack.c.bf16 %v2917, %v2916
      %v3073 = vpack.c.bf16 %v2919, %v2918
      %v3074 = vpack.c.bf16 %v2921, %v2920
      %v3075 = vpack.c.bf16 %v2923, %v2922
      %v3076 = vpack.c.bf16 %v2925, %v2924
      %v3077 = vpack.c.bf16 %v2927, %v2926
      %v3078 = vpack.c.bf16 %v2929, %v2928
      %v3079 = vpack.c.bf16 %v2931, %v2930
      %v3080 = vpack.c.bf16 %v2933, %v2932
      %v3081 = vpack.c.bf16 %v2935, %v2934
      %v3082 = vpack.c.bf16 %v2937, %v2936
      %v3083 = vpack.c.bf16 %v2939, %v2938
      %v3084 = vpack.c.bf16 %v2941, %v2940
      %v3085 = vpack.c.bf16 %v2943, %v2942
      %v3086 = vpack.c.bf16 %v2945, %v2944
      %v3087 = vpack.c.bf16 %v2947, %v2946
      %v3088 = vpack.c.bf16 %v2949, %v2948
      %v3089 = vpack.c.bf16 %v2951, %v2950
      %v3090 = vpack.c.bf16 %v2953, %v2952
      %v3091 = vpack.c.bf16 %v2955, %v2954
      %v3092 = vpack.c.bf16 %v2957, %v2956
      %v3093 = vpack.c.bf16 %v2959, %v2958
      %v3094 = vpack.c.bf16 %v2961, %v2960
      %v3095 = vpack.c.bf16 %v2963, %v2962
      %v3096 = vpack.c.bf16 %v2965, %v2964
      %v3097 = vpack.c.bf16 %v2967, %v2966
      %v3098 = vpack.c.bf16 %v2969, %v2968
      %v3099 = vpack.c.bf16 %v2971, %v2970
      %v3100 = vld [vmem:[%s3] sm:$0xf]
      %v3101 = vld [vmem:[%s3 + $0x4] sm:$0xf]
      %v3102 = vld [vmem:[%s3 + $0x8] sm:$0xf]
      %v3103 = vld [vmem:[%s3 + $0xc] sm:$0xf]
      %v3104 = vld [vmem:[%s3 + $0x10] sm:$0xf]
      %v3105 = vld [vmem:[%s3 + $0x14] sm:$0xf]
      %v3106 = vld [vmem:[%s3 + $0x18] sm:$0xf]
      %v3107 = vld [vmem:[%s3 + $0x1c] sm:$0xf]
      %v3108 = vld [vmem:[%s3 + $0x20] sm:$0xf]
      %v3109 = vld [vmem:[%s3 + $0x24] sm:$0xf]
      %v3110 = vld [vmem:[%s3 + $0x28] sm:$0xf]
      %v3111 = vld [vmem:[%s3 + $0x2c] sm:$0xf]
      %v3112 = vld [vmem:[%s3 + $0x30] sm:$0xf]
      %v3113 = vld [vmem:[%s3 + $0x34] sm:$0xf]
      %v3114 = vld [vmem:[%s3 + $0x38] sm:$0xf]
      %v3115 = vld [vmem:[%s3 + $0x3c] sm:$0xf]
      %v3116 = vld [vmem:[%s4] sm:$0x1]
      %v3118 = vlaneseq
      %v3119 = vshrl.u32 %v3118, 7
      %v3120 = vsub.s32 0, %v3119
      %v3121 = vrot.slane %v3116, %v3120
      %v3139 = vunpack.c.l.b16 %v3100
      %v3140 = vunpack.c.l.b16 %v3101
      %v3141 = vunpack.c.l.b16 %v3102
      %v3142 = vunpack.c.l.b16 %v3103
      %v3143 = vunpack.c.l.b16 %v3104
      %v3144 = vunpack.c.l.b16 %v3105
      %v3145 = vunpack.c.l.b16 %v3106
      %v3146 = vunpack.c.l.b16 %v3107
      %v3147 = vunpack.c.l.b16 %v3108
      %v3148 = vunpack.c.l.b16 %v3109
      %v3149 = vunpack.c.l.b16 %v3110
      %v3150 = vunpack.c.l.b16 %v3111
      %v3151 = vunpack.c.l.b16 %v3112
      %v3152 = vunpack.c.l.b16 %v3113
      %v3153 = vunpack.c.l.b16 %v3114
      %v3154 = vunpack.c.l.b16 %v3115
      %v3155 = vpack.c.b16 %v3140, %v3139
      %v3156 = vpack.c.b16 %v3142, %v3141
      %v3157 = vpack.c.b16 %v3144, %v3143
      %v3158 = vpack.c.b16 %v3146, %v3145
      %v3159 = vpack.c.b16 %v3148, %v3147
      %v3160 = vpack.c.b16 %v3150, %v3149
      %v3161 = vpack.c.b16 %v3152, %v3151
      %v3162 = vpack.c.b16 %v3154, %v3153
      %3171 = vmatprep.subr.bf16.mxu0 0
      %3172 = vmatpush1.bf16.msra.mxu0 %v3155
      %3173 = vmatprep.subr.bf16.mxu0 0
      %3174 = vmatpush1.bf16.msra.mxu0 %v3156
      %3175 = vmatprep.subr.bf16.mxu0 0
      %3176 = vmatpush1.bf16.msra.mxu0 %v3157
      %3177 = vmatprep.subr.bf16.mxu0 0
      %3178 = vmatpush1.bf16.msra.mxu0 %v3158
      %3179 = vmatprep.subr.bf16.mxu0 0
      %3180 = vmatpush1.bf16.msra.mxu0 %v3159
      %3181 = vmatprep.subr.bf16.mxu0 0
      %3182 = vmatpush1.bf16.msra.mxu0 %v3160
      %3183 = vmatprep.subr.bf16.mxu0 0
      %3184 = vmatpush1.bf16.msra.mxu0 %v3161
      %3185 = vmatprep.subr.bf16.mxu0 0
      %3186 = vmatpush1.bf16.msra.mxu0 %v3162
      %3187 = vmatprep.subr.bf16.mxu0 0
      %3188 = vmatpush1.bf16.msra.mxu0 0
      %3189 = vmatprep.subr.bf16.mxu0 0
      %3190 = vmatpush1.bf16.msra.mxu0 0
      %3191 = vmatprep.subr.bf16.mxu0 0
      %3192 = vmatpush1.bf16.msra.mxu0 0
      %3193 = vmatprep.subr.bf16.mxu0 0
      %3194 = vmatpush1.bf16.msra.mxu0 0
      %3195 = vmatprep.subr.bf16.mxu0 0
      %3196 = vmatpush1.bf16.msra.mxu0 0
      %3197 = vmatprep.subr.bf16.mxu0 0
      %3198 = vmatpush1.bf16.msra.mxu0 0
      %3199 = vmatprep.subr.bf16.mxu0 0
      %3200 = vmatpush1.bf16.msra.mxu0 0
      %3201 = vmatprep.subr.bf16.mxu0 0
      %3202 = vmatpush1.bf16.msra.mxu0 0
      %3203 = vmatprep.mubr.bf16.mxu0 0
      %3204 = vmatmul.mubr.bf16.gmra.mrb[0].mxu0 %v2972
      %v3205 = vpop.f32.mrb[0].mxu0
      %v3206 = vadd.f32 %v3121, %v3205
      %v3207 = vpop.f32.mrb[0].mxu0
      %v3208 = vpop.f32.mrb[0].mxu0
      %v3209 = vadd.f32 %v3121, %v3208
      %v3210 = vpop.f32.mrb[0].mxu0
      %3211 = vmatprep.mubr.bf16.mxu0 0
      %3212 = vmatmul.mubr.bf16.gmra.mrb[0].mxu0 %v2973
      %v3213 = vpop.f32.mrb[0].mxu0
      %v3214 = vadd.f32 %v3121, %v3213
      %v3215 = vpop.f32.mrb[0].mxu0
      %v3216 = vpop.f32.mrb[0].mxu0
      %v3217 = vadd.f32 %v3121, %v3216
      %v3218 = vpop.f32.mrb[0].mxu0
      %3219 = vmatprep.mubr.bf16.mxu0 0
      %3220 = vmatmul.mubr.bf16.gmra.mrb[0].mxu0 %v2974
      %v3221 = vpop.f32.mrb[0].mxu0
      %v3222 = vadd.f32 %v3121, %v3221
      %v3223 = vpop.f32.mrb[0].mxu0
      %v3224 = vpop.f32.mrb[0].mxu0
      %v3225 = vadd.f32 %v3121, %v3224
      %v3226 = vpop.f32.mrb[0].mxu0
      %3227 = vmatprep.mubr.bf16.mxu0 0
      %3228 = vmatmul.mubr.bf16.gmra.mrb[0].mxu0 %v2975
      %v3229 = vpop.f32.mrb[0].mxu0
      %v3230 = vadd.f32 %v3121, %v3229
      %v3231 = vpop.f32.mrb[0].mxu0
      %v3232 = vpop.f32.mrb[0].mxu0
      %v3233 = vadd.f32 %v3121, %v3232
      %v3234 = vpop.f32.mrb[0].mxu0
      %3235 = vmatprep.mubr.bf16.mxu0 0
      %3236 = vmatmul.mubr.bf16.gmra.mrb[0].mxu0 %v2976
      %v3237 = vpop.f32.mrb[0].mxu0
      %v3238 = vadd.f32 %v3121, %v3237
      %v3239 = vpop.f32.mrb[0].mxu0
      %v3240 = vpop.f32.mrb[0].mxu0
      %v3241 = vadd.f32 %v3121, %v3240
      %v3242 = vpop.f32.mrb[0].mxu0
      %3243 = vmatprep.mubr.bf16.mxu0 0
      %3244 = vmatmul.mubr.bf16.gmra.mrb[0].mxu0 %v2977
      %v3245 = vpop.f32.mrb[0].mxu0
      %v3246 = vadd.f32 %v3121, %v3245
      %v3247 = vpop.f32.mrb[0].mxu0
      %v3248 = vpop.f32.mrb[0].mxu0
      %v3249 = vadd.f32 %v3121, %v3248
      %v3250 = vpop.f32.mrb[0].mxu0
      %3251 = vmatprep.mubr.bf16.mxu0 0
      %3252 = vmatmul.mubr.bf16.gmra.mrb[0].mxu0 %v2978
      %v3253 = vpop.f32.mrb[0].mxu0
      %v3254 = vadd.f32 %v3121, %v3253
      %v3255 = vpop.f32.mrb[0].mxu0
      %v3256 = vpop.f32.mrb[0].mxu0
      %v3257 = vadd.f32 %v3121, %v3256
      %v3258 = vpop.f32.mrb[0].mxu0
      %3259 = vmatprep.mubr.bf16.mxu0 0
      %3260 = vmatmul.mubr.bf16.gmra.mrb[0].mxu0 %v2979
      %v3261 = vpop.f32.mrb[0].mxu0
      %v3262 = vadd.f32 %v3121, %v3261
      %v3263 = vpop.f32.mrb[0].mxu0
      %v3264 = vpop.f32.mrb[0].mxu0
      %v3265 = vadd.f32 %v3121, %v3264
      %v3266 = vpop.f32.mrb[0].mxu0
      %3267 = vmatprep.mubr.bf16.mxu0 0
      %3268 = vmatmul.mubr.bf16.gmra.mrb[0].mxu0 %v2980
      %v3269 = vpop.f32.mrb[0].mxu0
      %v3270 = vadd.f32 %v3121, %v3269
      %v3271 = vpop.f32.mrb[0].mxu0
      %v3272 = vpop.f32.mrb[0].mxu0
      %v3273 = vadd.f32 %v3121, %v3272
      %v3274 = vpop.f32.mrb[0].mxu0
      %3275 = vmatprep.mubr.bf16.mxu0 0
      %3276 = vmatmul.mubr.bf16.gmra.mrb[0].mxu0 %v2981
      %v3277 = vpop.f32.mrb[0].mxu0
      %v3278 = vadd.f32 %v3121, %v3277
      %v3279 = vpop.f32.mrb[0].mxu0
      %v3280 = vpop.f32.mrb[0].mxu0
      %v3281 = vadd.f32 %v3121, %v3280
      %v3282 = vpop.f32.mrb[0].mxu0
      %3283 = vmatprep.mubr.bf16.mxu0 0
      %3284 = vmatmul.mubr.bf16.gmra.mrb[0].mxu0 %v2982
      %v3285 = vpop.f32.mrb[0].mxu0
      %v3286 = vadd.f32 %v3121, %v3285
      %v3287 = vpop.f32.mrb[0].mxu0
      %v3288 = vpop.f32.mrb[0].mxu0
      %v3289 = vadd.f32 %v3121, %v3288
      %v3290 = vpop.f32.mrb[0].mxu0
      %3291 = vmatprep.mubr.bf16.mxu0 0
      %3292 = vmatmul.mubr.bf16.gmra.mrb[0].mxu0 %v2983
      %v3293 = vpop.f32.mrb[0].mxu0
      %v3294 = vadd.f32 %v3121, %v3293
      %v3295 = vpop.f32.mrb[0].mxu0
      %v3296 = vpop.f32.mrb[0].mxu0
      %v3297 = vadd.f32 %v3121, %v3296
      %v3298 = vpop.f32.mrb[0].mxu0
      %3299 = vmatprep.mubr.bf16.mxu0 0
      %3300 = vmatmul.mubr.bf16.gmra.mrb[0].mxu0 %v2984
      %v3301 = vpop.f32.mrb[0].mxu0
      %v3302 = vadd.f32 %v3121, %v3301
      %v3303 = vpop.f32.mrb[0].mxu0
      %v3304 = vpop.f32.mrb[0].mxu0
      %v3305 = vadd.f32 %v3121, %v3304
      %v3306 = vpop.f32.mrb[0].mxu0
      %3307 = vmatprep.mubr.bf16.mxu0 0
      %3308 = vmatmul.mubr.bf16.gmra.mrb[0].mxu0 %v2985
      %v3309 = vpop.f32.mrb[0].mxu0
      %v3310 = vadd.f32 %v3121, %v3309
      %v3311 = vpop.f32.mrb[0].mxu0
      %v3312 = vpop.f32.mrb[0].mxu0
      %v3313 = vadd.f32 %v3121, %v3312
      %v3314 = vpop.f32.mrb[0].mxu0
      %3315 = vmatprep.mubr.bf16.mxu0 0
      %3316 = vmatmul.mubr.bf16.gmra.mrb[0].mxu0 %v2986
      %v3317 = vpop.f32.mrb[0].mxu0
      %v3318 = vadd.f32 %v3121, %v3317
      %v3319 = vpop.f32.mrb[0].mxu0
      %v3320 = vpop.f32.mrb[0].mxu0
      %v3321 = vadd.f32 %v3121, %v3320
      %v3322 = vpop.f32.mrb[0].mxu0
      %3323 = vmatprep.mubr.bf16.mxu0 0
      %3324 = vmatmul.mubr.bf16.gmra.mrb[0].mxu0 %v2987
      %v3325 = vpop.f32.mrb[0].mxu0
      %v3326 = vadd.f32 %v3121, %v3325
      %v3327 = vpop.f32.mrb[0].mxu0
      %v3328 = vpop.f32.mrb[0].mxu0
      %v3329 = vadd.f32 %v3121, %v3328
      %v3330 = vpop.f32.mrb[0].mxu0
      %3331 = vmatprep.mubr.bf16.mxu0 0
      %3332 = vmatmul.mubr.bf16.gmra.mrb[0].mxu0 %v2988
      %v3333 = vpop.f32.mrb[0].mxu0
      %v3334 = vadd.f32 %v3121, %v3333
      %v3335 = vpop.f32.mrb[0].mxu0
      %v3336 = vpop.f32.mrb[0].mxu0
      %v3337 = vadd.f32 %v3121, %v3336
      %v3338 = vpop.f32.mrb[0].mxu0
      %3339 = vmatprep.mubr.bf16.mxu0 0
      %3340 = vmatmul.mubr.bf16.gmra.mrb[0].mxu0 %v2989
      %v3341 = vpop.f32.mrb[0].mxu0
      %v3342 = vadd.f32 %v3121, %v3341
      %v3343 = vpop.f32.mrb[0].mxu0
      %v3344 = vpop.f32.mrb[0].mxu0
      %v3345 = vadd.f32 %v3121, %v3344
      %v3346 = vpop.f32.mrb[0].mxu0
      %3347 = vmatprep.mubr.bf16.mxu0 0
      %3348 = vmatmul.mubr.bf16.gmra.mrb[0].mxu0 %v2990
      %v3349 = vpop.f32.mrb[0].mxu0
      %v3350 = vadd.f32 %v3121, %v3349
      %v3351 = vpop.f32.mrb[0].mxu0
      %v3352 = vpop.f32.mrb[0].mxu0
      %v3353 = vadd.f32 %v3121, %v3352
      %v3354 = vpop.f32.mrb[0].mxu0
      %3355 = vmatprep.mubr.bf16.mxu0 0
      %3356 = vmatmul.mubr.bf16.gmra.mrb[0].mxu0 %v2991
      %v3357 = vpop.f32.mrb[0].mxu0
      %v3358 = vadd.f32 %v3121, %v3357
      %v3359 = vpop.f32.mrb[0].mxu0
      %v3360 = vpop.f32.mrb[0].mxu0
      %v3361 = vadd.f32 %v3121, %v3360
      %v3362 = vpop.f32.mrb[0].mxu0
      %3363 = vmatprep.mubr.bf16.mxu0 0
      %3364 = vmatmul.mubr.bf16.gmra.mrb[0].mxu0 %v2992
      %v3365 = vpop.f32.mrb[0].mxu0
      %v3366 = vadd.f32 %v3121, %v3365
      %v3367 = vpop.f32.mrb[0].mxu0
      %v3368 = vpop.f32.mrb[0].mxu0
      %v3369 = vadd.f32 %v3121, %v3368
      %v3370 = vpop.f32.mrb[0].mxu0
      %3371 = vmatprep.mubr.bf16.mxu0 0
      %3372 = vmatmul.mubr.bf16.gmra.mrb[0].mxu0 %v2993
      %v3373 = vpop.f32.mrb[0].mxu0
      %v3374 = vadd.f32 %v3121, %v3373
      %v3375 = vpop.f32.mrb[0].mxu0
      %v3376 = vpop.f32.mrb[0].mxu0
      %v3377 = vadd.f32 %v3121, %v3376
      %v3378 = vpop.f32.mrb[0].mxu0
      %3379 = vmatprep.mubr.bf16.mxu0 0
      %3380 = vmatmul.mubr.bf16.gmra.mrb[0].mxu0 %v2994
      %v3381 = vpop.f32.mrb[0].mxu0
      %v3382 = vadd.f32 %v3121, %v3381
      %v3383 = vpop.f32.mrb[0].mxu0
      %v3384 = vpop.f32.mrb[0].mxu0
      %v3385 = vadd.f32 %v3121, %v3384
      %v3386 = vpop.f32.mrb[0].mxu0
      %3387 = vmatprep.mubr.bf16.mxu0 0
      %3388 = vmatmul.mubr.bf16.gmra.mrb[0].mxu0 %v2995
      %v3389 = vpop.f32.mrb[0].mxu0
      %v3390 = vadd.f32 %v3121, %v3389
      %v3391 = vpop.f32.mrb[0].mxu0
      %v3392 = vpop.f32.mrb[0].mxu0
      %v3393 = vadd.f32 %v3121, %v3392
      %v3394 = vpop.f32.mrb[0].mxu0
      %3395 = vmatprep.mubr.bf16.mxu0 0
      %3396 = vmatmul.mubr.bf16.gmra.mrb[0].mxu0 %v2996
      %v3397 = vpop.f32.mrb[0].mxu0
      %v3398 = vadd.f32 %v3121, %v3397
      %v3399 = vpop.f32.mrb[0].mxu0
      %v3400 = vpop.f32.mrb[0].mxu0
      %v3401 = vadd.f32 %v3121, %v3400
      %v3402 = vpop.f32.mrb[0].mxu0
      %3403 = vmatprep.mubr.bf16.mxu0 0
      %3404 = vmatmul.mubr.bf16.gmra.mrb[0].mxu0 %v2997
      %v3405 = vpop.f32.mrb[0].mxu0
      %v3406 = vadd.f32 %v3121, %v3405
      %v3407 = vpop.f32.mrb[0].mxu0
      %v3408 = vpop.f32.mrb[0].mxu0
      %v3409 = vadd.f32 %v3121, %v3408
      %v3410 = vpop.f32.mrb[0].mxu0
      %3411 = vmatprep.mubr.bf16.mxu0 0
      %3412 = vmatmul.mubr.bf16.gmra.mrb[0].mxu0 %v2998
      %v3413 = vpop.f32.mrb[0].mxu0
      %v3414 = vadd.f32 %v3121, %v3413
      %v3415 = vpop.f32.mrb[0].mxu0
      %v3416 = vpop.f32.mrb[0].mxu0
      %v3417 = vadd.f32 %v3121, %v3416
      %v3418 = vpop.f32.mrb[0].mxu0
      %3419 = vmatprep.mubr.bf16.mxu0 0
      %3420 = vmatmul.mubr.bf16.gmra.mrb[0].mxu0 %v2999
      %v3421 = vpop.f32.mrb[0].mxu0
      %v3422 = vadd.f32 %v3121, %v3421
      %v3423 = vpop.f32.mrb[0].mxu0
      %v3424 = vpop.f32.mrb[0].mxu0
      %v3425 = vadd.f32 %v3121, %v3424
      %v3426 = vpop.f32.mrb[0].mxu0
      %3427 = vmatprep.mubr.bf16.mxu0 0
      %3428 = vmatmul.mubr.bf16.gmra.mrb[0].mxu0 %v3000
      %v3429 = vpop.f32.mrb[0].mxu0
      %v3430 = vadd.f32 %v3121, %v3429
      %v3431 = vpop.f32.mrb[0].mxu0
      %v3432 = vpop.f32.mrb[0].mxu0
      %v3433 = vadd.f32 %v3121, %v3432
      %v3434 = vpop.f32.mrb[0].mxu0
      %3435 = vmatprep.mubr.bf16.mxu0 0
      %3436 = vmatmul.mubr.bf16.gmra.mrb[0].mxu0 %v3001
      %v3437 = vpop.f32.mrb[0].mxu0
      %v3438 = vadd.f32 %v3121, %v3437
      %v3439 = vpop.f32.mrb[0].mxu0
      %v3440 = vpop.f32.mrb[0].mxu0
      %v3441 = vadd.f32 %v3121, %v3440
      %v3442 = vpop.f32.mrb[0].mxu0
      %3443 = vmatprep.mubr.bf16.mxu0 0
      %3444 = vmatmul.mubr.bf16.gmra.mrb[0].mxu0 %v3002
      %v3445 = vpop.f32.mrb[0].mxu0
      %v3446 = vadd.f32 %v3121, %v3445
      %v3447 = vpop.f32.mrb[0].mxu0
      %v3448 = vpop.f32.mrb[0].mxu0
      %v3449 = vadd.f32 %v3121, %v3448
      %v3450 = vpop.f32.mrb[0].mxu0
      %3451 = vmatprep.mubr.bf16.mxu0 0
      %3452 = vmatmul.mubr.bf16.gmra.mrb[0].mxu0 %v3003
      %v3453 = vpop.f32.mrb[0].mxu0
      %v3454 = vadd.f32 %v3121, %v3453
      %v3455 = vpop.f32.mrb[0].mxu0
      %v3456 = vpop.f32.mrb[0].mxu0
      %v3457 = vadd.f32 %v3121, %v3456
      %v3458 = vpop.f32.mrb[0].mxu0
      %3459 = vmatprep.mubr.bf16.mxu0 0
      %3460 = vmatmul.mubr.bf16.gmra.mrb[0].mxu0 %v3004
      %v3461 = vpop.f32.mrb[0].mxu0
      %v3462 = vadd.f32 %v3121, %v3461
      %v3463 = vpop.f32.mrb[0].mxu0
      %v3464 = vpop.f32.mrb[0].mxu0
      %v3465 = vadd.f32 %v3121, %v3464
      %v3466 = vpop.f32.mrb[0].mxu0
      %3467 = vmatprep.mubr.bf16.mxu0 0
      %3468 = vmatmul.mubr.bf16.gmra.mrb[0].mxu0 %v3005
      %v3469 = vpop.f32.mrb[0].mxu0
      %v3470 = vadd.f32 %v3121, %v3469
      %v3471 = vpop.f32.mrb[0].mxu0
      %v3472 = vpop.f32.mrb[0].mxu0
      %v3473 = vadd.f32 %v3121, %v3472
      %v3474 = vpop.f32.mrb[0].mxu0
      %3475 = vmatprep.mubr.bf16.mxu0 0
      %3476 = vmatmul.mubr.bf16.gmra.mrb[0].mxu0 %v3006
      %v3477 = vpop.f32.mrb[0].mxu0
      %v3478 = vadd.f32 %v3121, %v3477
      %v3479 = vpop.f32.mrb[0].mxu0
      %v3480 = vpop.f32.mrb[0].mxu0
      %v3481 = vadd.f32 %v3121, %v3480
      %v3482 = vpop.f32.mrb[0].mxu0
      %3483 = vmatprep.mubr.bf16.mxu0 0
      %3484 = vmatmul.mubr.bf16.gmra.mrb[0].mxu0 %v3007
      %v3485 = vpop.f32.mrb[0].mxu0
      %v3486 = vadd.f32 %v3121, %v3485
      %v3487 = vpop.f32.mrb[0].mxu0
      %v3488 = vpop.f32.mrb[0].mxu0
      %v3489 = vadd.f32 %v3121, %v3488
      %v3490 = vpop.f32.mrb[0].mxu0
      %3491 = vmatprep.mubr.bf16.mxu0 0
      %3492 = vmatmul.mubr.bf16.gmra.mrb[0].mxu0 %v3008
      %v3493 = vpop.f32.mrb[0].mxu0
      %v3494 = vadd.f32 %v3121, %v3493
      %v3495 = vpop.f32.mrb[0].mxu0
      %v3496 = vpop.f32.mrb[0].mxu0
      %v3497 = vadd.f32 %v3121, %v3496
      %v3498 = vpop.f32.mrb[0].mxu0
      %3499 = vmatprep.mubr.bf16.mxu0 0
      %3500 = vmatmul.mubr.bf16.gmra.mrb[0].mxu0 %v3009
      %v3501 = vpop.f32.mrb[0].mxu0
      %v3502 = vadd.f32 %v3121, %v3501
      %v3503 = vpop.f32.mrb[0].mxu0
      %v3504 = vpop.f32.mrb[0].mxu0
      %v3505 = vadd.f32 %v3121, %v3504
      %v3506 = vpop.f32.mrb[0].mxu0
      %3507 = vmatprep.mubr.bf16.mxu0 0
      %3508 = vmatmul.mubr.bf16.gmra.mrb[0].mxu0 %v3010
      %v3509 = vpop.f32.mrb[0].mxu0
      %v3510 = vadd.f32 %v3121, %v3509
      %v3511 = vpop.f32.mrb[0].mxu0
      %v3512 = vpop.f32.mrb[0].mxu0
      %v3513 = vadd.f32 %v3121, %v3512
      %v3514 = vpop.f32.mrb[0].mxu0
      %3515 = vmatprep.mubr.bf16.mxu0 0
      %3516 = vmatmul.mubr.bf16.gmra.mrb[0].mxu0 %v3011
      %v3517 = vpop.f32.mrb[0].mxu0
      %v3518 = vadd.f32 %v3121, %v3517
      %v3519 = vpop.f32.mrb[0].mxu0
      %v3520 = vpop.f32.mrb[0].mxu0
      %v3521 = vadd.f32 %v3121, %v3520
      %v3522 = vpop.f32.mrb[0].mxu0
      %3523 = vmatprep.mubr.bf16.mxu0 0
      %3524 = vmatmul.mubr.bf16.gmra.mrb[0].mxu0 %v3012
      %v3525 = vpop.f32.mrb[0].mxu0
      %v3526 = vadd.f32 %v3121, %v3525
      %v3527 = vpop.f32.mrb[0].mxu0
      %v3528 = vpop.f32.mrb[0].mxu0
      %v3529 = vadd.f32 %v3121, %v3528
      %v3530 = vpop.f32.mrb[0].mxu0
      %3531 = vmatprep.mubr.bf16.mxu0 0
      %3532 = vmatmul.mubr.bf16.gmra.mrb[0].mxu0 %v3013
      %v3533 = vpop.f32.mrb[0].mxu0
      %v3534 = vadd.f32 %v3121, %v3533
      %v3535 = vpop.f32.mrb[0].mxu0
      %v3536 = vpop.f32.mrb[0].mxu0
      %v3537 = vadd.f32 %v3121, %v3536
      %v3538 = vpop.f32.mrb[0].mxu0
      %3539 = vmatprep.mubr.bf16.mxu0 0
      %3540 = vmatmul.mubr.bf16.gmra.mrb[0].mxu0 %v3014
      %v3541 = vpop.f32.mrb[0].mxu0
      %v3542 = vadd.f32 %v3121, %v3541
      %v3543 = vpop.f32.mrb[0].mxu0
      %v3544 = vpop.f32.mrb[0].mxu0
      %v3545 = vadd.f32 %v3121, %v3544
      %v3546 = vpop.f32.mrb[0].mxu0
      %3547 = vmatprep.mubr.bf16.mxu0 0
      %3548 = vmatmul.mubr.bf16.gmra.mrb[0].mxu0 %v3015
      %v3549 = vpop.f32.mrb[0].mxu0
      %v3550 = vadd.f32 %v3121, %v3549
      %v3551 = vpop.f32.mrb[0].mxu0
      %v3552 = vpop.f32.mrb[0].mxu0
      %v3553 = vadd.f32 %v3121, %v3552
      %v3554 = vpop.f32.mrb[0].mxu0
      %3555 = vmatprep.mubr.bf16.mxu0 0
      %3556 = vmatmul.mubr.bf16.gmra.mrb[0].mxu0 %v3016
      %v3557 = vpop.f32.mrb[0].mxu0
      %v3558 = vadd.f32 %v3121, %v3557
      %v3559 = vpop.f32.mrb[0].mxu0
      %v3560 = vpop.f32.mrb[0].mxu0
      %v3561 = vadd.f32 %v3121, %v3560
      %v3562 = vpop.f32.mrb[0].mxu0
      %3563 = vmatprep.mubr.bf16.mxu0 0
      %3564 = vmatmul.mubr.bf16.gmra.mrb[0].mxu0 %v3017
      %v3565 = vpop.f32.mrb[0].mxu0
      %v3566 = vadd.f32 %v3121, %v3565
      %v3567 = vpop.f32.mrb[0].mxu0
      %v3568 = vpop.f32.mrb[0].mxu0
      %v3569 = vadd.f32 %v3121, %v3568
      %v3570 = vpop.f32.mrb[0].mxu0
      %3571 = vmatprep.mubr.bf16.mxu0 0
      %3572 = vmatmul.mubr.bf16.gmra.mrb[0].mxu0 %v3018
      %v3573 = vpop.f32.mrb[0].mxu0
      %v3574 = vadd.f32 %v3121, %v3573
      %v3575 = vpop.f32.mrb[0].mxu0
      %v3576 = vpop.f32.mrb[0].mxu0
      %v3577 = vadd.f32 %v3121, %v3576
      %v3578 = vpop.f32.mrb[0].mxu0
      %3579 = vmatprep.mubr.bf16.mxu0 0
      %3580 = vmatmul.mubr.bf16.gmra.mrb[0].mxu0 %v3019
      %v3581 = vpop.f32.mrb[0].mxu0
      %v3582 = vadd.f32 %v3121, %v3581
      %v3583 = vpop.f32.mrb[0].mxu0
      %v3584 = vpop.f32.mrb[0].mxu0
      %v3585 = vadd.f32 %v3121, %v3584
      %v3586 = vpop.f32.mrb[0].mxu0
      %3587 = vmatprep.mubr.bf16.mxu0 0
      %3588 = vmatmul.mubr.bf16.gmra.mrb[0].mxu0 %v3020
      %v3589 = vpop.f32.mrb[0].mxu0
      %v3590 = vadd.f32 %v3121, %v3589
      %v3591 = vpop.f32.mrb[0].mxu0
      %v3592 = vpop.f32.mrb[0].mxu0
      %v3593 = vadd.f32 %v3121, %v3592
      %v3594 = vpop.f32.mrb[0].mxu0
      %3595 = vmatprep.mubr.bf16.mxu0 0
      %3596 = vmatmul.mubr.bf16.gmra.mrb[0].mxu0 %v3021
      %v3597 = vpop.f32.mrb[0].mxu0
      %v3598 = vadd.f32 %v3121, %v3597
      %v3599 = vpop.f32.mrb[0].mxu0
      %v3600 = vpop.f32.mrb[0].mxu0
      %v3601 = vadd.f32 %v3121, %v3600
      %v3602 = vpop.f32.mrb[0].mxu0
      %3603 = vmatprep.mubr.bf16.mxu0 0
      %3604 = vmatmul.mubr.bf16.gmra.mrb[0].mxu0 %v3022
      %v3605 = vpop.f32.mrb[0].mxu0
      %v3606 = vadd.f32 %v3121, %v3605
      %v3607 = vpop.f32.mrb[0].mxu0
      %v3608 = vpop.f32.mrb[0].mxu0
      %v3609 = vadd.f32 %v3121, %v3608
      %v3610 = vpop.f32.mrb[0].mxu0
      %3611 = vmatprep.mubr.bf16.mxu0 0
      %3612 = vmatmul.mubr.bf16.gmra.mrb[0].mxu0 %v3023
      %v3613 = vpop.f32.mrb[0].mxu0
      %v3614 = vadd.f32 %v3121, %v3613
      %v3615 = vpop.f32.mrb[0].mxu0
      %v3616 = vpop.f32.mrb[0].mxu0
      %v3617 = vadd.f32 %v3121, %v3616
      %v3618 = vpop.f32.mrb[0].mxu0
      %3619 = vmatprep.mubr.bf16.mxu0 0
      %3620 = vmatmul.mubr.bf16.gmra.mrb[0].mxu0 %v3024
      %v3621 = vpop.f32.mrb[0].mxu0
      %v3622 = vadd.f32 %v3121, %v3621
      %v3623 = vpop.f32.mrb[0].mxu0
      %v3624 = vpop.f32.mrb[0].mxu0
      %v3625 = vadd.f32 %v3121, %v3624
      %v3626 = vpop.f32.mrb[0].mxu0
      %3627 = vmatprep.mubr.bf16.mxu0 0
      %3628 = vmatmul.mubr.bf16.gmra.mrb[0].mxu0 %v3025
      %v3629 = vpop.f32.mrb[0].mxu0
      %v3630 = vadd.f32 %v3121, %v3629
      %v3631 = vpop.f32.mrb[0].mxu0
      %v3632 = vpop.f32.mrb[0].mxu0
      %v3633 = vadd.f32 %v3121, %v3632
      %v3634 = vpop.f32.mrb[0].mxu0
      %3635 = vmatprep.mubr.bf16.mxu0 0
      %3636 = vmatmul.mubr.bf16.gmra.mrb[0].mxu0 %v3026
      %v3637 = vpop.f32.mrb[0].mxu0
      %v3638 = vadd.f32 %v3121, %v3637
      %v3639 = vpop.f32.mrb[0].mxu0
      %v3640 = vpop.f32.mrb[0].mxu0
      %v3641 = vadd.f32 %v3121, %v3640
      %v3642 = vpop.f32.mrb[0].mxu0
      %3643 = vmatprep.mubr.bf16.mxu0 0
      %3644 = vmatmul.mubr.bf16.gmra.mrb[0].mxu0 %v3027
      %v3645 = vpop.f32.mrb[0].mxu0
      %v3646 = vadd.f32 %v3121, %v3645
      %v3647 = vpop.f32.mrb[0].mxu0
      %v3648 = vpop.f32.mrb[0].mxu0
      %v3649 = vadd.f32 %v3121, %v3648
      %v3650 = vpop.f32.mrb[0].mxu0
      %3651 = vmatprep.mubr.bf16.mxu0 0
      %3652 = vmatmul.mubr.bf16.gmra.mrb[0].mxu0 %v3028
      %v3653 = vpop.f32.mrb[0].mxu0
      %v3654 = vadd.f32 %v3121, %v3653
      %v3655 = vpop.f32.mrb[0].mxu0
      %v3656 = vpop.f32.mrb[0].mxu0
      %v3657 = vadd.f32 %v3121, %v3656
      %v3658 = vpop.f32.mrb[0].mxu0
      %3659 = vmatprep.mubr.bf16.mxu0 0
      %3660 = vmatmul.mubr.bf16.gmra.mrb[0].mxu0 %v3029
      %v3661 = vpop.f32.mrb[0].mxu0
      %v3662 = vadd.f32 %v3121, %v3661
      %v3663 = vpop.f32.mrb[0].mxu0
      %v3664 = vpop.f32.mrb[0].mxu0
      %v3665 = vadd.f32 %v3121, %v3664
      %v3666 = vpop.f32.mrb[0].mxu0
      %3667 = vmatprep.mubr.bf16.mxu0 0
      %3668 = vmatmul.mubr.bf16.gmra.mrb[0].mxu0 %v3030
      %v3669 = vpop.f32.mrb[0].mxu0
      %v3670 = vadd.f32 %v3121, %v3669
      %v3671 = vpop.f32.mrb[0].mxu0
      %v3672 = vpop.f32.mrb[0].mxu0
      %v3673 = vadd.f32 %v3121, %v3672
      %v3674 = vpop.f32.mrb[0].mxu0
      %3675 = vmatprep.mubr.bf16.mxu0 0
      %3676 = vmatmul.mubr.bf16.gmra.mrb[0].mxu0 %v3031
      %v3677 = vpop.f32.mrb[0].mxu0
      %v3678 = vadd.f32 %v3121, %v3677
      %v3679 = vpop.f32.mrb[0].mxu0
      %v3680 = vpop.f32.mrb[0].mxu0
      %v3681 = vadd.f32 %v3121, %v3680
      %v3682 = vpop.f32.mrb[0].mxu0
      %3683 = vmatprep.mubr.bf16.mxu0 0
      %3684 = vmatmul.mubr.bf16.gmra.mrb[0].mxu0 %v3032
      %v3685 = vpop.f32.mrb[0].mxu0
      %v3686 = vadd.f32 %v3121, %v3685
      %v3687 = vpop.f32.mrb[0].mxu0
      %v3688 = vpop.f32.mrb[0].mxu0
      %v3689 = vadd.f32 %v3121, %v3688
      %v3690 = vpop.f32.mrb[0].mxu0
      %3691 = vmatprep.mubr.bf16.mxu0 0
      %3692 = vmatmul.mubr.bf16.gmra.mrb[0].mxu0 %v3033
      %v3693 = vpop.f32.mrb[0].mxu0
      %v3694 = vadd.f32 %v3121, %v3693
      %v3695 = vpop.f32.mrb[0].mxu0
      %v3696 = vpop.f32.mrb[0].mxu0
      %v3697 = vadd.f32 %v3121, %v3696
      %v3698 = vpop.f32.mrb[0].mxu0
      %3699 = vmatprep.mubr.bf16.mxu0 0
      %3700 = vmatmul.mubr.bf16.gmra.mrb[0].mxu0 %v3034
      %v3701 = vpop.f32.mrb[0].mxu0
      %v3702 = vadd.f32 %v3121, %v3701
      %v3703 = vpop.f32.mrb[0].mxu0
      %v3704 = vpop.f32.mrb[0].mxu0
      %v3705 = vadd.f32 %v3121, %v3704
      %v3706 = vpop.f32.mrb[0].mxu0
      %3707 = vmatprep.mubr.bf16.mxu0 0
      %3708 = vmatmul.mubr.bf16.gmra.mrb[0].mxu0 %v3035
      %v3709 = vpop.f32.mrb[0].mxu0
      %v3710 = vadd.f32 %v3121, %v3709
      %v3711 = vpop.f32.mrb[0].mxu0
      %v3712 = vpop.f32.mrb[0].mxu0
      %v3713 = vadd.f32 %v3121, %v3712
      %v3714 = vpop.f32.mrb[0].mxu0
      %3715 = vmatprep.mubr.bf16.mxu0 0
      %3716 = vmatmul.mubr.bf16.gmra.mrb[0].mxu0 %v3036
      %v3717 = vpop.f32.mrb[0].mxu0
      %v3718 = vadd.f32 %v3121, %v3717
      %v3719 = vpop.f32.mrb[0].mxu0
      %v3720 = vpop.f32.mrb[0].mxu0
      %v3721 = vadd.f32 %v3121, %v3720
      %v3722 = vpop.f32.mrb[0].mxu0
      %3723 = vmatprep.mubr.bf16.mxu0 0
      %3724 = vmatmul.mubr.bf16.gmra.mrb[0].mxu0 %v3037
      %v3725 = vpop.f32.mrb[0].mxu0
      %v3726 = vadd.f32 %v3121, %v3725
      %v3727 = vpop.f32.mrb[0].mxu0
      %v3728 = vpop.f32.mrb[0].mxu0
      %v3729 = vadd.f32 %v3121, %v3728
      %v3730 = vpop.f32.mrb[0].mxu0
      %3731 = vmatprep.mubr.bf16.mxu0 0
      %3732 = vmatmul.mubr.bf16.gmra.mrb[0].mxu0 %v3038
      %v3733 = vpop.f32.mrb[0].mxu0
      %v3734 = vadd.f32 %v3121, %v3733
      %v3735 = vpop.f32.mrb[0].mxu0
      %v3736 = vpop.f32.mrb[0].mxu0
      %v3737 = vadd.f32 %v3121, %v3736
      %v3738 = vpop.f32.mrb[0].mxu0
      %3739 = vmatprep.mubr.bf16.mxu0 0
      %3740 = vmatmul.mubr.bf16.gmra.mrb[0].mxu0 %v3039
      %v3741 = vpop.f32.mrb[0].mxu0
      %v3742 = vadd.f32 %v3121, %v3741
      %v3743 = vpop.f32.mrb[0].mxu0
      %v3744 = vpop.f32.mrb[0].mxu0
      %v3745 = vadd.f32 %v3121, %v3744
      %v3746 = vpop.f32.mrb[0].mxu0
      %3747 = vmatprep.mubr.bf16.mxu0 0
      %3748 = vmatmul.mubr.bf16.gmra.mrb[0].mxu0 %v3040
      %v3749 = vpop.f32.mrb[0].mxu0
      %v3750 = vadd.f32 %v3121, %v3749
      %v3751 = vpop.f32.mrb[0].mxu0
      %v3752 = vpop.f32.mrb[0].mxu0
      %v3753 = vadd.f32 %v3121, %v3752
      %v3754 = vpop.f32.mrb[0].mxu0
      %3755 = vmatprep.mubr.bf16.mxu0 0
      %3756 = vmatmul.mubr.bf16.gmra.mrb[0].mxu0 %v3041
      %v3757 = vpop.f32.mrb[0].mxu0
      %v3758 = vadd.f32 %v3121, %v3757
      %v3759 = vpop.f32.mrb[0].mxu0
      %v3760 = vpop.f32.mrb[0].mxu0
      %v3761 = vadd.f32 %v3121, %v3760
      %v3762 = vpop.f32.mrb[0].mxu0
      %3763 = vmatprep.mubr.bf16.mxu0 0
      %3764 = vmatmul.mubr.bf16.gmra.mrb[0].mxu0 %v3042
      %v3765 = vpop.f32.mrb[0].mxu0
      %v3766 = vadd.f32 %v3121, %v3765
      %v3767 = vpop.f32.mrb[0].mxu0
      %v3768 = vpop.f32.mrb[0].mxu0
      %v3769 = vadd.f32 %v3121, %v3768
      %v3770 = vpop.f32.mrb[0].mxu0
      %3771 = vmatprep.mubr.bf16.mxu0 0
      %3772 = vmatmul.mubr.bf16.gmra.mrb[0].mxu0 %v3043
      %v3773 = vpop.f32.mrb[0].mxu0
      %v3774 = vadd.f32 %v3121, %v3773
      %v3775 = vpop.f32.mrb[0].mxu0
      %v3776 = vpop.f32.mrb[0].mxu0
      %v3777 = vadd.f32 %v3121, %v3776
      %v3778 = vpop.f32.mrb[0].mxu0
      %3779 = vmatprep.mubr.bf16.mxu0 0
      %3780 = vmatmul.mubr.bf16.gmra.mrb[0].mxu0 %v3044
      %v3781 = vpop.f32.mrb[0].mxu0
      %v3782 = vadd.f32 %v3121, %v3781
      %v3783 = vpop.f32.mrb[0].mxu0
      %v3784 = vpop.f32.mrb[0].mxu0
      %v3785 = vadd.f32 %v3121, %v3784
      %v3786 = vpop.f32.mrb[0].mxu0
      %3787 = vmatprep.mubr.bf16.mxu0 0
      %3788 = vmatmul.mubr.bf16.gmra.mrb[0].mxu0 %v3045
      %v3789 = vpop.f32.mrb[0].mxu0
      %v3790 = vadd.f32 %v3121, %v3789
      %v3791 = vpop.f32.mrb[0].mxu0
      %v3792 = vpop.f32.mrb[0].mxu0
      %v3793 = vadd.f32 %v3121, %v3792
      %v3794 = vpop.f32.mrb[0].mxu0
      %3795 = vmatprep.mubr.bf16.mxu0 0
      %3796 = vmatmul.mubr.bf16.gmra.mrb[0].mxu0 %v3046
      %v3797 = vpop.f32.mrb[0].mxu0
      %v3798 = vadd.f32 %v3121, %v3797
      %v3799 = vpop.f32.mrb[0].mxu0
      %v3800 = vpop.f32.mrb[0].mxu0
      %v3801 = vadd.f32 %v3121, %v3800
      %v3802 = vpop.f32.mrb[0].mxu0
      %3803 = vmatprep.mubr.bf16.mxu0 0
      %3804 = vmatmul.mubr.bf16.gmra.mrb[0].mxu0 %v3047
      %v3805 = vpop.f32.mrb[0].mxu0
      %v3806 = vadd.f32 %v3121, %v3805
      %v3807 = vpop.f32.mrb[0].mxu0
      %v3808 = vpop.f32.mrb[0].mxu0
      %v3809 = vadd.f32 %v3121, %v3808
      %v3810 = vpop.f32.mrb[0].mxu0
      %3811 = vmatprep.mubr.bf16.mxu0 0
      %3812 = vmatmul.mubr.bf16.gmra.mrb[0].mxu0 %v3048
      %v3813 = vpop.f32.mrb[0].mxu0
      %v3814 = vadd.f32 %v3121, %v3813
      %v3815 = vpop.f32.mrb[0].mxu0
      %v3816 = vpop.f32.mrb[0].mxu0
      %v3817 = vadd.f32 %v3121, %v3816
      %v3818 = vpop.f32.mrb[0].mxu0
      %3819 = vmatprep.mubr.bf16.mxu0 0
      %3820 = vmatmul.mubr.bf16.gmra.mrb[0].mxu0 %v3049
      %v3821 = vpop.f32.mrb[0].mxu0
      %v3822 = vadd.f32 %v3121, %v3821
      %v3823 = vpop.f32.mrb[0].mxu0
      %v3824 = vpop.f32.mrb[0].mxu0
      %v3825 = vadd.f32 %v3121, %v3824
      %v3826 = vpop.f32.mrb[0].mxu0
      %3827 = vmatprep.mubr.bf16.mxu0 0
      %3828 = vmatmul.mubr.bf16.gmra.mrb[0].mxu0 %v3050
      %v3829 = vpop.f32.mrb[0].mxu0
      %v3830 = vadd.f32 %v3121, %v3829
      %v3831 = vpop.f32.mrb[0].mxu0
      %v3832 = vpop.f32.mrb[0].mxu0
      %v3833 = vadd.f32 %v3121, %v3832
      %v3834 = vpop.f32.mrb[0].mxu0
      %3835 = vmatprep.mubr.bf16.mxu0 0
      %3836 = vmatmul.mubr.bf16.gmra.mrb[0].mxu0 %v3051
      %v3837 = vpop.f32.mrb[0].mxu0
      %v3838 = vadd.f32 %v3121, %v3837
      %v3839 = vpop.f32.mrb[0].mxu0
      %v3840 = vpop.f32.mrb[0].mxu0
      %v3841 = vadd.f32 %v3121, %v3840
      %v3842 = vpop.f32.mrb[0].mxu0
      %3843 = vmatprep.mubr.bf16.mxu0 0
      %3844 = vmatmul.mubr.bf16.gmra.mrb[0].mxu0 %v3052
      %v3845 = vpop.f32.mrb[0].mxu0
      %v3846 = vadd.f32 %v3121, %v3845
      %v3847 = vpop.f32.mrb[0].mxu0
      %v3848 = vpop.f32.mrb[0].mxu0
      %v3849 = vadd.f32 %v3121, %v3848
      %v3850 = vpop.f32.mrb[0].mxu0
      %3851 = vmatprep.mubr.bf16.mxu0 0
      %3852 = vmatmul.mubr.bf16.gmra.mrb[0].mxu0 %v3053
      %v3853 = vpop.f32.mrb[0].mxu0
      %v3854 = vadd.f32 %v3121, %v3853
      %v3855 = vpop.f32.mrb[0].mxu0
      %v3856 = vpop.f32.mrb[0].mxu0
      %v3857 = vadd.f32 %v3121, %v3856
      %v3858 = vpop.f32.mrb[0].mxu0
      %3859 = vmatprep.mubr.bf16.mxu0 0
      %3860 = vmatmul.mubr.bf16.gmra.mrb[0].mxu0 %v3054
      %v3861 = vpop.f32.mrb[0].mxu0
      %v3862 = vadd.f32 %v3121, %v3861
      %v3863 = vpop.f32.mrb[0].mxu0
      %v3864 = vpop.f32.mrb[0].mxu0
      %v3865 = vadd.f32 %v3121, %v3864
      %v3866 = vpop.f32.mrb[0].mxu0
      %3867 = vmatprep.mubr.bf16.mxu0 0
      %3868 = vmatmul.mubr.bf16.gmra.mrb[0].mxu0 %v3055
      %v3869 = vpop.f32.mrb[0].mxu0
      %v3870 = vadd.f32 %v3121, %v3869
      %v3871 = vpop.f32.mrb[0].mxu0
      %v3872 = vpop.f32.mrb[0].mxu0
      %v3873 = vadd.f32 %v3121, %v3872
      %v3874 = vpop.f32.mrb[0].mxu0
      %3875 = vmatprep.mubr.bf16.mxu0 0
      %3876 = vmatmul.mubr.bf16.gmra.mrb[0].mxu0 %v3056
      %v3877 = vpop.f32.mrb[0].mxu0
      %v3878 = vadd.f32 %v3121, %v3877
      %v3879 = vpop.f32.mrb[0].mxu0
      %v3880 = vpop.f32.mrb[0].mxu0
      %v3881 = vadd.f32 %v3121, %v3880
      %v3882 = vpop.f32.mrb[0].mxu0
      %3883 = vmatprep.mubr.bf16.mxu0 0
      %3884 = vmatmul.mubr.bf16.gmra.mrb[0].mxu0 %v3057
      %v3885 = vpop.f32.mrb[0].mxu0
      %v3886 = vadd.f32 %v3121, %v3885
      %v3887 = vpop.f32.mrb[0].mxu0
      %v3888 = vpop.f32.mrb[0].mxu0
      %v3889 = vadd.f32 %v3121, %v3888
      %v3890 = vpop.f32.mrb[0].mxu0
      %3891 = vmatprep.mubr.bf16.mxu0 0
      %3892 = vmatmul.mubr.bf16.gmra.mrb[0].mxu0 %v3058
      %v3893 = vpop.f32.mrb[0].mxu0
      %v3894 = vadd.f32 %v3121, %v3893
      %v3895 = vpop.f32.mrb[0].mxu0
      %v3896 = vpop.f32.mrb[0].mxu0
      %v3897 = vadd.f32 %v3121, %v3896
      %v3898 = vpop.f32.mrb[0].mxu0
      %3899 = vmatprep.mubr.bf16.mxu0 0
      %3900 = vmatmul.mubr.bf16.gmra.mrb[0].mxu0 %v3059
      %v3901 = vpop.f32.mrb[0].mxu0
      %v3902 = vadd.f32 %v3121, %v3901
      %v3903 = vpop.f32.mrb[0].mxu0
      %v3904 = vpop.f32.mrb[0].mxu0
      %v3905 = vadd.f32 %v3121, %v3904
      %v3906 = vpop.f32.mrb[0].mxu0
      %3907 = vmatprep.mubr.bf16.mxu0 0
      %3908 = vmatmul.mubr.bf16.gmra.mrb[0].mxu0 %v3060
      %v3909 = vpop.f32.mrb[0].mxu0
      %v3910 = vadd.f32 %v3121, %v3909
      %v3911 = vpop.f32.mrb[0].mxu0
      %v3912 = vpop.f32.mrb[0].mxu0
      %v3913 = vadd.f32 %v3121, %v3912
      %v3914 = vpop.f32.mrb[0].mxu0
      %3915 = vmatprep.mubr.bf16.mxu0 0
      %3916 = vmatmul.mubr.bf16.gmra.mrb[0].mxu0 %v3061
      %v3917 = vpop.f32.mrb[0].mxu0
      %v3918 = vadd.f32 %v3121, %v3917
      %v3919 = vpop.f32.mrb[0].mxu0
      %v3920 = vpop.f32.mrb[0].mxu0
      %v3921 = vadd.f32 %v3121, %v3920
      %v3922 = vpop.f32.mrb[0].mxu0
      %3923 = vmatprep.mubr.bf16.mxu0 0
      %3924 = vmatmul.mubr.bf16.gmra.mrb[0].mxu0 %v3062
      %v3925 = vpop.f32.mrb[0].mxu0
      %v3926 = vadd.f32 %v3121, %v3925
      %v3927 = vpop.f32.mrb[0].mxu0
      %v3928 = vpop.f32.mrb[0].mxu0
      %v3929 = vadd.f32 %v3121, %v3928
      %v3930 = vpop.f32.mrb[0].mxu0
      %3931 = vmatprep.mubr.bf16.mxu0 0
      %3932 = vmatmul.mubr.bf16.gmra.mrb[0].mxu0 %v3063
      %v3933 = vpop.f32.mrb[0].mxu0
      %v3934 = vadd.f32 %v3121, %v3933
      %v3935 = vpop.f32.mrb[0].mxu0
      %v3936 = vpop.f32.mrb[0].mxu0
      %v3937 = vadd.f32 %v3121, %v3936
      %v3938 = vpop.f32.mrb[0].mxu0
      %3939 = vmatprep.mubr.bf16.mxu0 0
      %3940 = vmatmul.mubr.bf16.gmra.mrb[0].mxu0 %v3064
      %v3941 = vpop.f32.mrb[0].mxu0
      %v3942 = vadd.f32 %v3121, %v3941
      %v3943 = vpop.f32.mrb[0].mxu0
      %v3944 = vpop.f32.mrb[0].mxu0
      %v3945 = vadd.f32 %v3121, %v3944
      %v3946 = vpop.f32.mrb[0].mxu0
      %3947 = vmatprep.mubr.bf16.mxu0 0
      %3948 = vmatmul.mubr.bf16.gmra.mrb[0].mxu0 %v3065
      %v3949 = vpop.f32.mrb[0].mxu0
      %v3950 = vadd.f32 %v3121, %v3949
      %v3951 = vpop.f32.mrb[0].mxu0
      %v3952 = vpop.f32.mrb[0].mxu0
      %v3953 = vadd.f32 %v3121, %v3952
      %v3954 = vpop.f32.mrb[0].mxu0
      %3955 = vmatprep.mubr.bf16.mxu0 0
      %3956 = vmatmul.mubr.bf16.gmra.mrb[0].mxu0 %v3066
      %v3957 = vpop.f32.mrb[0].mxu0
      %v3958 = vadd.f32 %v3121, %v3957
      %v3959 = vpop.f32.mrb[0].mxu0
      %v3960 = vpop.f32.mrb[0].mxu0
      %v3961 = vadd.f32 %v3121, %v3960
      %v3962 = vpop.f32.mrb[0].mxu0
      %3963 = vmatprep.mubr.bf16.mxu0 0
      %3964 = vmatmul.mubr.bf16.gmra.mrb[0].mxu0 %v3067
      %v3965 = vpop.f32.mrb[0].mxu0
      %v3966 = vadd.f32 %v3121, %v3965
      %v3967 = vpop.f32.mrb[0].mxu0
      %v3968 = vpop.f32.mrb[0].mxu0
      %v3969 = vadd.f32 %v3121, %v3968
      %v3970 = vpop.f32.mrb[0].mxu0
      %3971 = vmatprep.mubr.bf16.mxu0 0
      %3972 = vmatmul.mubr.bf16.gmra.mrb[0].mxu0 %v3068
      %v3973 = vpop.f32.mrb[0].mxu0
      %v3974 = vadd.f32 %v3121, %v3973
      %v3975 = vpop.f32.mrb[0].mxu0
      %v3976 = vpop.f32.mrb[0].mxu0
      %v3977 = vadd.f32 %v3121, %v3976
      %v3978 = vpop.f32.mrb[0].mxu0
      %3979 = vmatprep.mubr.bf16.mxu0 0
      %3980 = vmatmul.mubr.bf16.gmra.mrb[0].mxu0 %v3069
      %v3981 = vpop.f32.mrb[0].mxu0
      %v3982 = vadd.f32 %v3121, %v3981
      %v3983 = vpop.f32.mrb[0].mxu0
      %v3984 = vpop.f32.mrb[0].mxu0
      %v3985 = vadd.f32 %v3121, %v3984
      %v3986 = vpop.f32.mrb[0].mxu0
      %3987 = vmatprep.mubr.bf16.mxu0 0
      %3988 = vmatmul.mubr.bf16.gmra.mrb[0].mxu0 %v3070
      %v3989 = vpop.f32.mrb[0].mxu0
      %v3990 = vadd.f32 %v3121, %v3989
      %v3991 = vpop.f32.mrb[0].mxu0
      %v3992 = vpop.f32.mrb[0].mxu0
      %v3993 = vadd.f32 %v3121, %v3992
      %v3994 = vpop.f32.mrb[0].mxu0
      %3995 = vmatprep.mubr.bf16.mxu0 0
      %3996 = vmatmul.mubr.bf16.gmra.mrb[0].mxu0 %v3071
      %v3997 = vpop.f32.mrb[0].mxu0
      %v3998 = vadd.f32 %v3121, %v3997
      %v3999 = vpop.f32.mrb[0].mxu0
      %v4000 = vpop.f32.mrb[0].mxu0
      %v4001 = vadd.f32 %v3121, %v4000
      %v4002 = vpop.f32.mrb[0].mxu0
      %4003 = vmatprep.mubr.bf16.mxu0 0
      %4004 = vmatmul.mubr.bf16.gmra.mrb[0].mxu0 %v3072
      %v4005 = vpop.f32.mrb[0].mxu0
      %v4006 = vadd.f32 %v3121, %v4005
      %v4007 = vpop.f32.mrb[0].mxu0
      %v4008 = vpop.f32.mrb[0].mxu0
      %v4009 = vadd.f32 %v3121, %v4008
      %v4010 = vpop.f32.mrb[0].mxu0
      %4011 = vmatprep.mubr.bf16.mxu0 0
      %4012 = vmatmul.mubr.bf16.gmra.mrb[0].mxu0 %v3073
      %v4013 = vpop.f32.mrb[0].mxu0
      %v4014 = vadd.f32 %v3121, %v4013
      %v4015 = vpop.f32.mrb[0].mxu0
      %v4016 = vpop.f32.mrb[0].mxu0
      %v4017 = vadd.f32 %v3121, %v4016
      %v4018 = vpop.f32.mrb[0].mxu0
      %4019 = vmatprep.mubr.bf16.mxu0 0
      %4020 = vmatmul.mubr.bf16.gmra.mrb[0].mxu0 %v3074
      %v4021 = vpop.f32.mrb[0].mxu0
      %v4022 = vadd.f32 %v3121, %v4021
      %v4023 = vpop.f32.mrb[0].mxu0
      %v4024 = vpop.f32.mrb[0].mxu0
      %v4025 = vadd.f32 %v3121, %v4024
      %v4026 = vpop.f32.mrb[0].mxu0
      %4027 = vmatprep.mubr.bf16.mxu0 0
      %4028 = vmatmul.mubr.bf16.gmra.mrb[0].mxu0 %v3075
      %v4029 = vpop.f32.mrb[0].mxu0
      %v4030 = vadd.f32 %v3121, %v4029
      %v4031 = vpop.f32.mrb[0].mxu0
      %v4032 = vpop.f32.mrb[0].mxu0
      %v4033 = vadd.f32 %v3121, %v4032
      %v4034 = vpop.f32.mrb[0].mxu0
      %4035 = vmatprep.mubr.bf16.mxu0 0
      %4036 = vmatmul.mubr.bf16.gmra.mrb[0].mxu0 %v3076
      %v4037 = vpop.f32.mrb[0].mxu0
      %v4038 = vadd.f32 %v3121, %v4037
      %v4039 = vpop.f32.mrb[0].mxu0
      %v4040 = vpop.f32.mrb[0].mxu0
      %v4041 = vadd.f32 %v3121, %v4040
      %v4042 = vpop.f32.mrb[0].mxu0
      %4043 = vmatprep.mubr.bf16.mxu0 0
      %4044 = vmatmul.mubr.bf16.gmra.mrb[0].mxu0 %v3077
      %v4045 = vpop.f32.mrb[0].mxu0
      %v4046 = vadd.f32 %v3121, %v4045
      %v4047 = vpop.f32.mrb[0].mxu0
      %v4048 = vpop.f32.mrb[0].mxu0
      %v4049 = vadd.f32 %v3121, %v4048
      %v4050 = vpop.f32.mrb[0].mxu0
      %4051 = vmatprep.mubr.bf16.mxu0 0
      %4052 = vmatmul.mubr.bf16.gmra.mrb[0].mxu0 %v3078
      %v4053 = vpop.f32.mrb[0].mxu0
      %v4054 = vadd.f32 %v3121, %v4053
      %v4055 = vpop.f32.mrb[0].mxu0
      %v4056 = vpop.f32.mrb[0].mxu0
      %v4057 = vadd.f32 %v3121, %v4056
      %v4058 = vpop.f32.mrb[0].mxu0
      %4059 = vmatprep.mubr.bf16.mxu0 0
      %4060 = vmatmul.mubr.bf16.gmra.mrb[0].mxu0 %v3079
      %v4061 = vpop.f32.mrb[0].mxu0
      %v4062 = vadd.f32 %v3121, %v4061
      %v4063 = vpop.f32.mrb[0].mxu0
      %v4064 = vpop.f32.mrb[0].mxu0
      %v4065 = vadd.f32 %v3121, %v4064
      %v4066 = vpop.f32.mrb[0].mxu0
      %4067 = vmatprep.mubr.bf16.mxu0 0
      %4068 = vmatmul.mubr.bf16.gmra.mrb[0].mxu0 %v3080
      %v4069 = vpop.f32.mrb[0].mxu0
      %v4070 = vadd.f32 %v3121, %v4069
      %v4071 = vpop.f32.mrb[0].mxu0
      %v4072 = vpop.f32.mrb[0].mxu0
      %v4073 = vadd.f32 %v3121, %v4072
      %v4074 = vpop.f32.mrb[0].mxu0
      %4075 = vmatprep.mubr.bf16.mxu0 0
      %4076 = vmatmul.mubr.bf16.gmra.mrb[0].mxu0 %v3081
      %v4077 = vpop.f32.mrb[0].mxu0
      %v4078 = vadd.f32 %v3121, %v4077
      %v4079 = vpop.f32.mrb[0].mxu0
      %v4080 = vpop.f32.mrb[0].mxu0
      %v4081 = vadd.f32 %v3121, %v4080
      %v4082 = vpop.f32.mrb[0].mxu0
      %4083 = vmatprep.mubr.bf16.mxu0 0
      %4084 = vmatmul.mubr.bf16.gmra.mrb[0].mxu0 %v3082
      %v4085 = vpop.f32.mrb[0].mxu0
      %v4086 = vadd.f32 %v3121, %v4085
      %v4087 = vpop.f32.mrb[0].mxu0
      %v4088 = vpop.f32.mrb[0].mxu0
      %v4089 = vadd.f32 %v3121, %v4088
      %v4090 = vpop.f32.mrb[0].mxu0
      %4091 = vmatprep.mubr.bf16.mxu0 0
      %4092 = vmatmul.mubr.bf16.gmra.mrb[0].mxu0 %v3083
      %v4093 = vpop.f32.mrb[0].mxu0
      %v4094 = vadd.f32 %v3121, %v4093
      %v4095 = vpop.f32.mrb[0].mxu0
      %v4096 = vpop.f32.mrb[0].mxu0
      %v4097 = vadd.f32 %v3121, %v4096
      %v4098 = vpop.f32.mrb[0].mxu0
      %4099 = vmatprep.mubr.bf16.mxu0 0
      %4100 = vmatmul.mubr.bf16.gmra.mrb[0].mxu0 %v3084
      %v4101 = vpop.f32.mrb[0].mxu0
      %v4102 = vadd.f32 %v3121, %v4101
      %v4103 = vpop.f32.mrb[0].mxu0
      %v4104 = vpop.f32.mrb[0].mxu0
      %v4105 = vadd.f32 %v3121, %v4104
      %v4106 = vpop.f32.mrb[0].mxu0
      %4107 = vmatprep.mubr.bf16.mxu0 0
      %4108 = vmatmul.mubr.bf16.gmra.mrb[0].mxu0 %v3085
      %v4109 = vpop.f32.mrb[0].mxu0
      %v4110 = vadd.f32 %v3121, %v4109
      %v4111 = vpop.f32.mrb[0].mxu0
      %v4112 = vpop.f32.mrb[0].mxu0
      %v4113 = vadd.f32 %v3121, %v4112
      %v4114 = vpop.f32.mrb[0].mxu0
      %4115 = vmatprep.mubr.bf16.mxu0 0
      %4116 = vmatmul.mubr.bf16.gmra.mrb[0].mxu0 %v3086
      %v4117 = vpop.f32.mrb[0].mxu0
      %v4118 = vadd.f32 %v3121, %v4117
      %v4119 = vpop.f32.mrb[0].mxu0
      %v4120 = vpop.f32.mrb[0].mxu0
      %v4121 = vadd.f32 %v3121, %v4120
      %v4122 = vpop.f32.mrb[0].mxu0
      %4123 = vmatprep.mubr.bf16.mxu0 0
      %4124 = vmatmul.mubr.bf16.gmra.mrb[0].mxu0 %v3087
      %v4125 = vpop.f32.mrb[0].mxu0
      %v4126 = vadd.f32 %v3121, %v4125
      %v4127 = vpop.f32.mrb[0].mxu0
      %v4128 = vpop.f32.mrb[0].mxu0
      %v4129 = vadd.f32 %v3121, %v4128
      %v4130 = vpop.f32.mrb[0].mxu0
      %4131 = vmatprep.mubr.bf16.mxu0 0
      %4132 = vmatmul.mubr.bf16.gmra.mrb[0].mxu0 %v3088
      %v4133 = vpop.f32.mrb[0].mxu0
      %v4134 = vadd.f32 %v3121, %v4133
      %v4135 = vpop.f32.mrb[0].mxu0
      %v4136 = vpop.f32.mrb[0].mxu0
      %v4137 = vadd.f32 %v3121, %v4136
      %v4138 = vpop.f32.mrb[0].mxu0
      %4139 = vmatprep.mubr.bf16.mxu0 0
      %4140 = vmatmul.mubr.bf16.gmra.mrb[0].mxu0 %v3089
      %v4141 = vpop.f32.mrb[0].mxu0
      %v4142 = vadd.f32 %v3121, %v4141
      %v4143 = vpop.f32.mrb[0].mxu0
      %v4144 = vpop.f32.mrb[0].mxu0
      %v4145 = vadd.f32 %v3121, %v4144
      %v4146 = vpop.f32.mrb[0].mxu0
      %4147 = vmatprep.mubr.bf16.mxu0 0
      %4148 = vmatmul.mubr.bf16.gmra.mrb[0].mxu0 %v3090
      %v4149 = vpop.f32.mrb[0].mxu0
      %v4150 = vadd.f32 %v3121, %v4149
      %v4151 = vpop.f32.mrb[0].mxu0
      %v4152 = vpop.f32.mrb[0].mxu0
      %v4153 = vadd.f32 %v3121, %v4152
      %v4154 = vpop.f32.mrb[0].mxu0
      %4155 = vmatprep.mubr.bf16.mxu0 0
      %4156 = vmatmul.mubr.bf16.gmra.mrb[0].mxu0 %v3091
      %v4157 = vpop.f32.mrb[0].mxu0
      %v4158 = vadd.f32 %v3121, %v4157
      %v4159 = vpop.f32.mrb[0].mxu0
      %v4160 = vpop.f32.mrb[0].mxu0
      %v4161 = vadd.f32 %v3121, %v4160
      %v4162 = vpop.f32.mrb[0].mxu0
      %4163 = vmatprep.mubr.bf16.mxu0 0
      %4164 = vmatmul.mubr.bf16.gmra.mrb[0].mxu0 %v3092
      %v4165 = vpop.f32.mrb[0].mxu0
      %v4166 = vadd.f32 %v3121, %v4165
      %v4167 = vpop.f32.mrb[0].mxu0
      %v4168 = vpop.f32.mrb[0].mxu0
      %v4169 = vadd.f32 %v3121, %v4168
      %v4170 = vpop.f32.mrb[0].mxu0
      %4171 = vmatprep.mubr.bf16.mxu0 0
      %4172 = vmatmul.mubr.bf16.gmra.mrb[0].mxu0 %v3093
      %v4173 = vpop.f32.mrb[0].mxu0
      %v4174 = vadd.f32 %v3121, %v4173
      %v4175 = vpop.f32.mrb[0].mxu0
      %v4176 = vpop.f32.mrb[0].mxu0
      %v4177 = vadd.f32 %v3121, %v4176
      %v4178 = vpop.f32.mrb[0].mxu0
      %4179 = vmatprep.mubr.bf16.mxu0 0
      %4180 = vmatmul.mubr.bf16.gmra.mrb[0].mxu0 %v3094
      %v4181 = vpop.f32.mrb[0].mxu0
      %v4182 = vadd.f32 %v3121, %v4181
      %v4183 = vpop.f32.mrb[0].mxu0
      %v4184 = vpop.f32.mrb[0].mxu0
      %v4185 = vadd.f32 %v3121, %v4184
      %v4186 = vpop.f32.mrb[0].mxu0
      %4187 = vmatprep.mubr.bf16.mxu0 0
      %4188 = vmatmul.mubr.bf16.gmra.mrb[0].mxu0 %v3095
      %v4189 = vpop.f32.mrb[0].mxu0
      %v4190 = vadd.f32 %v3121, %v4189
      %v4191 = vpop.f32.mrb[0].mxu0
      %v4192 = vpop.f32.mrb[0].mxu0
      %v4193 = vadd.f32 %v3121, %v4192
      %v4194 = vpop.f32.mrb[0].mxu0
      %4195 = vmatprep.mubr.bf16.mxu0 0
      %4196 = vmatmul.mubr.bf16.gmra.mrb[0].mxu0 %v3096
      %v4197 = vpop.f32.mrb[0].mxu0
      %v4198 = vadd.f32 %v3121, %v4197
      %v4199 = vpop.f32.mrb[0].mxu0
      %v4200 = vpop.f32.mrb[0].mxu0
      %v4201 = vadd.f32 %v3121, %v4200
      %v4202 = vpop.f32.mrb[0].mxu0
      %4203 = vmatprep.mubr.bf16.mxu0 0
      %4204 = vmatmul.mubr.bf16.gmra.mrb[0].mxu0 %v3097
      %v4205 = vpop.f32.mrb[0].mxu0
      %v4206 = vadd.f32 %v3121, %v4205
      %v4207 = vpop.f32.mrb[0].mxu0
      %v4208 = vpop.f32.mrb[0].mxu0
      %v4209 = vadd.f32 %v3121, %v4208
      %v4210 = vpop.f32.mrb[0].mxu0
      %4211 = vmatprep.mubr.bf16.mxu0 0
      %4212 = vmatmul.mubr.bf16.gmra.mrb[0].mxu0 %v3098
      %v4213 = vpop.f32.mrb[0].mxu0
      %v4214 = vadd.f32 %v3121, %v4213
      %v4215 = vpop.f32.mrb[0].mxu0
      %v4216 = vpop.f32.mrb[0].mxu0
      %v4217 = vadd.f32 %v3121, %v4216
      %v4218 = vpop.f32.mrb[0].mxu0
      %4219 = vmatprep.mubr.bf16.mxu0 0
      %4220 = vmatmul.mubr.bf16.gmra.mrb[0].mxu0 %v3099
      %v4221 = vpop.f32.mrb[0].mxu0
      %v4222 = vadd.f32 %v3121, %v4221
      %v4223 = vpop.f32.mrb[0].mxu0
      %v4224 = vpop.f32.mrb[0].mxu0
      %v4225 = vadd.f32 %v3121, %v4224
      %v4226 = vpop.f32.mrb[0].mxu0
      %4227 = vdwg.mxu0
      %v4228 = vmax.f32 %v3206, 0.0
      %v4229 = vmax.f32 %v3209, 0.0
      %v4230 = vmax.f32 %v3214, 0.0
      %v4231 = vmax.f32 %v3217, 0.0
      %v4232 = vmax.f32 %v3222, 0.0
      %v4233 = vmax.f32 %v3225, 0.0
      %v4234 = vmax.f32 %v3230, 0.0
      %v4235 = vmax.f32 %v3233, 0.0
      %v4236 = vmax.f32 %v3238, 0.0
      %v4237 = vmax.f32 %v3241, 0.0
      %v4238 = vmax.f32 %v3246, 0.0
      %v4239 = vmax.f32 %v3249, 0.0
      %v4240 = vmax.f32 %v3254, 0.0
      %v4241 = vmax.f32 %v3257, 0.0
      %v4242 = vmax.f32 %v3262, 0.0
      %v4243 = vmax.f32 %v3265, 0.0
      %v4244 = vmax.f32 %v3270, 0.0
      %v4245 = vmax.f32 %v3273, 0.0
      %v4246 = vmax.f32 %v3278, 0.0
      %v4247 = vmax.f32 %v3281, 0.0
      %v4248 = vmax.f32 %v3286, 0.0
      %v4249 = vmax.f32 %v3289, 0.0
      %v4250 = vmax.f32 %v3294, 0.0
      %v4251 = vmax.f32 %v3297, 0.0
      %v4252 = vmax.f32 %v3302, 0.0
      %v4253 = vmax.f32 %v3305, 0.0
      %v4254 = vmax.f32 %v3310, 0.0
      %v4255 = vmax.f32 %v3313, 0.0
      %v4256 = vmax.f32 %v3318, 0.0
      %v4257 = vmax.f32 %v3321, 0.0
      %v4258 = vmax.f32 %v3326, 0.0
      %v4259 = vmax.f32 %v3329, 0.0
      %v4260 = vmax.f32 %v3334, 0.0
      %v4261 = vmax.f32 %v3337, 0.0
      %v4262 = vmax.f32 %v3342, 0.0
      %v4263 = vmax.f32 %v3345, 0.0
      %v4264 = vmax.f32 %v3350, 0.0
      %v4265 = vmax.f32 %v3353, 0.0
      %v4266 = vmax.f32 %v3358, 0.0
      %v4267 = vmax.f32 %v3361, 0.0
      %v4268 = vmax.f32 %v3366, 0.0
      %v4269 = vmax.f32 %v3369, 0.0
      %v4270 = vmax.f32 %v3374, 0.0
      %v4271 = vmax.f32 %v3377, 0.0
      %v4272 = vmax.f32 %v3382, 0.0
      %v4273 = vmax.f32 %v3385, 0.0
      %v4274 = vmax.f32 %v3390, 0.0
      %v4275 = vmax.f32 %v3393, 0.0
      %v4276 = vmax.f32 %v3398, 0.0
      %v4277 = vmax.f32 %v3401, 0.0
      %v4278 = vmax.f32 %v3406, 0.0
      %v4279 = vmax.f32 %v3409, 0.0
      %v4280 = vmax.f32 %v3414, 0.0
      %v4281 = vmax.f32 %v3417, 0.0
      %v4282 = vmax.f32 %v3422, 0.0
      %v4283 = vmax.f32 %v3425, 0.0
      %v4284 = vmax.f32 %v3430, 0.0
      %v4285 = vmax.f32 %v3433, 0.0
      %v4286 = vmax.f32 %v3438, 0.0
      %v4287 = vmax.f32 %v3441, 0.0
      %v4288 = vmax.f32 %v3446, 0.0
      %v4289 = vmax.f32 %v3449, 0.0
      %v4290 = vmax.f32 %v3454, 0.0
      %v4291 = vmax.f32 %v3457, 0.0
      %v4292 = vmax.f32 %v3462, 0.0
      %v4293 = vmax.f32 %v3465, 0.0
      %v4294 = vmax.f32 %v3470, 0.0
      %v4295 = vmax.f32 %v3473, 0.0
      %v4296 = vmax.f32 %v3478, 0.0
      %v4297 = vmax.f32 %v3481, 0.0
      %v4298 = vmax.f32 %v3486, 0.0
      %v4299 = vmax.f32 %v3489, 0.0
      %v4300 = vmax.f32 %v3494, 0.0
      %v4301 = vmax.f32 %v3497, 0.0
      %v4302 = vmax.f32 %v3502, 0.0
      %v4303 = vmax.f32 %v3505, 0.0
      %v4304 = vmax.f32 %v3510, 0.0
      %v4305 = vmax.f32 %v3513, 0.0
      %v4306 = vmax.f32 %v3518, 0.0
      %v4307 = vmax.f32 %v3521, 0.0
      %v4308 = vmax.f32 %v3526, 0.0
      %v4309 = vmax.f32 %v3529, 0.0
      %v4310 = vmax.f32 %v3534, 0.0
      %v4311 = vmax.f32 %v3537, 0.0
      %v4312 = vmax.f32 %v3542, 0.0
      %v4313 = vmax.f32 %v3545, 0.0
      %v4314 = vmax.f32 %v3550, 0.0
      %v4315 = vmax.f32 %v3553, 0.0
      %v4316 = vmax.f32 %v3558, 0.0
      %v4317 = vmax.f32 %v3561, 0.0
      %v4318 = vmax.f32 %v3566, 0.0
      %v4319 = vmax.f32 %v3569, 0.0
      %v4320 = vmax.f32 %v3574, 0.0
      %v4321 = vmax.f32 %v3577, 0.0
      %v4322 = vmax.f32 %v3582, 0.0
      %v4323 = vmax.f32 %v3585, 0.0
      %v4324 = vmax.f32 %v3590, 0.0
      %v4325 = vmax.f32 %v3593, 0.0
      %v4326 = vmax.f32 %v3598, 0.0
      %v4327 = vmax.f32 %v3601, 0.0
      %v4328 = vmax.f32 %v3606, 0.0
      %v4329 = vmax.f32 %v3609, 0.0
      %v4330 = vmax.f32 %v3614, 0.0
      %v4331 = vmax.f32 %v3617, 0.0
      %v4332 = vmax.f32 %v3622, 0.0
      %v4333 = vmax.f32 %v3625, 0.0
      %v4334 = vmax.f32 %v3630, 0.0
      %v4335 = vmax.f32 %v3633, 0.0
      %v4336 = vmax.f32 %v3638, 0.0
      %v4337 = vmax.f32 %v3641, 0.0
      %v4338 = vmax.f32 %v3646, 0.0
      %v4339 = vmax.f32 %v3649, 0.0
      %v4340 = vmax.f32 %v3654, 0.0
      %v4341 = vmax.f32 %v3657, 0.0
      %v4342 = vmax.f32 %v3662, 0.0
      %v4343 = vmax.f32 %v3665, 0.0
      %v4344 = vmax.f32 %v3670, 0.0
      %v4345 = vmax.f32 %v3673, 0.0
      %v4346 = vmax.f32 %v3678, 0.0
      %v4347 = vmax.f32 %v3681, 0.0
      %v4348 = vmax.f32 %v3686, 0.0
      %v4349 = vmax.f32 %v3689, 0.0
      %v4350 = vmax.f32 %v3694, 0.0
      %v4351 = vmax.f32 %v3697, 0.0
      %v4352 = vmax.f32 %v3702, 0.0
      %v4353 = vmax.f32 %v3705, 0.0
      %v4354 = vmax.f32 %v3710, 0.0
      %v4355 = vmax.f32 %v3713, 0.0
      %v4356 = vmax.f32 %v3718, 0.0
      %v4357 = vmax.f32 %v3721, 0.0
      %v4358 = vmax.f32 %v3726, 0.0
      %v4359 = vmax.f32 %v3729, 0.0
      %v4360 = vmax.f32 %v3734, 0.0
      %v4361 = vmax.f32 %v3737, 0.0
      %v4362 = vmax.f32 %v3742, 0.0
      %v4363 = vmax.f32 %v3745, 0.0
      %v4364 = vmax.f32 %v3750, 0.0
      %v4365 = vmax.f32 %v3753, 0.0
      %v4366 = vmax.f32 %v3758, 0.0
      %v4367 = vmax.f32 %v3761, 0.0
      %v4368 = vmax.f32 %v3766, 0.0
      %v4369 = vmax.f32 %v3769, 0.0
      %v4370 = vmax.f32 %v3774, 0.0
      %v4371 = vmax.f32 %v3777, 0.0
      %v4372 = vmax.f32 %v3782, 0.0
      %v4373 = vmax.f32 %v3785, 0.0
      %v4374 = vmax.f32 %v3790, 0.0
      %v4375 = vmax.f32 %v3793, 0.0
      %v4376 = vmax.f32 %v3798, 0.0
      %v4377 = vmax.f32 %v3801, 0.0
      %v4378 = vmax.f32 %v3806, 0.0
      %v4379 = vmax.f32 %v3809, 0.0
      %v4380 = vmax.f32 %v3814, 0.0
      %v4381 = vmax.f32 %v3817, 0.0
      %v4382 = vmax.f32 %v3822, 0.0
      %v4383 = vmax.f32 %v3825, 0.0
      %v4384 = vmax.f32 %v3830, 0.0
      %v4385 = vmax.f32 %v3833, 0.0
      %v4386 = vmax.f32 %v3838, 0.0
      %v4387 = vmax.f32 %v3841, 0.0
      %v4388 = vmax.f32 %v3846, 0.0
      %v4389 = vmax.f32 %v3849, 0.0
      %v4390 = vmax.f32 %v3854, 0.0
      %v4391 = vmax.f32 %v3857, 0.0
      %v4392 = vmax.f32 %v3862, 0.0
      %v4393 = vmax.f32 %v3865, 0.0
      %v4394 = vmax.f32 %v3870, 0.0
      %v4395 = vmax.f32 %v3873, 0.0
      %v4396 = vmax.f32 %v3878, 0.0
      %v4397 = vmax.f32 %v3881, 0.0
      %v4398 = vmax.f32 %v3886, 0.0
      %v4399 = vmax.f32 %v3889, 0.0
      %v4400 = vmax.f32 %v3894, 0.0
      %v4401 = vmax.f32 %v3897, 0.0
      %v4402 = vmax.f32 %v3902, 0.0
      %v4403 = vmax.f32 %v3905, 0.0
      %v4404 = vmax.f32 %v3910, 0.0
      %v4405 = vmax.f32 %v3913, 0.0
      %v4406 = vmax.f32 %v3918, 0.0
      %v4407 = vmax.f32 %v3921, 0.0
      %v4408 = vmax.f32 %v3926, 0.0
      %v4409 = vmax.f32 %v3929, 0.0
      %v4410 = vmax.f32 %v3934, 0.0
      %v4411 = vmax.f32 %v3937, 0.0
      %v4412 = vmax.f32 %v3942, 0.0
      %v4413 = vmax.f32 %v3945, 0.0
      %v4414 = vmax.f32 %v3950, 0.0
      %v4415 = vmax.f32 %v3953, 0.0
      %v4416 = vmax.f32 %v3958, 0.0
      %v4417 = vmax.f32 %v3961, 0.0
      %v4418 = vmax.f32 %v3966, 0.0
      %v4419 = vmax.f32 %v3969, 0.0
      %v4420 = vmax.f32 %v3974, 0.0
      %v4421 = vmax.f32 %v3977, 0.0
      %v4422 = vmax.f32 %v3982, 0.0
      %v4423 = vmax.f32 %v3985, 0.0
      %v4424 = vmax.f32 %v3990, 0.0
      %v4425 = vmax.f32 %v3993, 0.0
      %v4426 = vmax.f32 %v3998, 0.0
      %v4427 = vmax.f32 %v4001, 0.0
      %v4428 = vmax.f32 %v4006, 0.0
      %v4429 = vmax.f32 %v4009, 0.0
      %v4430 = vmax.f32 %v4014, 0.0
      %v4431 = vmax.f32 %v4017, 0.0
      %v4432 = vmax.f32 %v4022, 0.0
      %v4433 = vmax.f32 %v4025, 0.0
      %v4434 = vmax.f32 %v4030, 0.0
      %v4435 = vmax.f32 %v4033, 0.0
      %v4436 = vmax.f32 %v4038, 0.0
      %v4437 = vmax.f32 %v4041, 0.0
      %v4438 = vmax.f32 %v4046, 0.0
      %v4439 = vmax.f32 %v4049, 0.0
      %v4440 = vmax.f32 %v4054, 0.0
      %v4441 = vmax.f32 %v4057, 0.0
      %v4442 = vmax.f32 %v4062, 0.0
      %v4443 = vmax.f32 %v4065, 0.0
      %v4444 = vmax.f32 %v4070, 0.0
      %v4445 = vmax.f32 %v4073, 0.0
      %v4446 = vmax.f32 %v4078, 0.0
      %v4447 = vmax.f32 %v4081, 0.0
      %v4448 = vmax.f32 %v4086, 0.0
      %v4449 = vmax.f32 %v4089, 0.0
      %v4450 = vmax.f32 %v4094, 0.0
      %v4451 = vmax.f32 %v4097, 0.0
      %v4452 = vmax.f32 %v4102, 0.0
      %v4453 = vmax.f32 %v4105, 0.0
      %v4454 = vmax.f32 %v4110, 0.0
      %v4455 = vmax.f32 %v4113, 0.0
      %v4456 = vmax.f32 %v4118, 0.0
      %v4457 = vmax.f32 %v4121, 0.0
      %v4458 = vmax.f32 %v4126, 0.0
      %v4459 = vmax.f32 %v4129, 0.0
      %v4460 = vmax.f32 %v4134, 0.0
      %v4461 = vmax.f32 %v4137, 0.0
      %v4462 = vmax.f32 %v4142, 0.0
      %v4463 = vmax.f32 %v4145, 0.0
      %v4464 = vmax.f32 %v4150, 0.0
      %v4465 = vmax.f32 %v4153, 0.0
      %v4466 = vmax.f32 %v4158, 0.0
      %v4467 = vmax.f32 %v4161, 0.0
      %v4468 = vmax.f32 %v4166, 0.0
      %v4469 = vmax.f32 %v4169, 0.0
      %v4470 = vmax.f32 %v4174, 0.0
      %v4471 = vmax.f32 %v4177, 0.0
      %v4472 = vmax.f32 %v4182, 0.0
      %v4473 = vmax.f32 %v4185, 0.0
      %v4474 = vmax.f32 %v4190, 0.0
      %v4475 = vmax.f32 %v4193, 0.0
      %v4476 = vmax.f32 %v4198, 0.0
      %v4477 = vmax.f32 %v4201, 0.0
      %v4478 = vmax.f32 %v4206, 0.0
      %v4479 = vmax.f32 %v4209, 0.0
      %v4480 = vmax.f32 %v4214, 0.0
      %v4481 = vmax.f32 %v4217, 0.0
      %v4482 = vmax.f32 %v4222, 0.0
      %v4483 = vmax.f32 %v4225, 0.0
      %v4484 = vpack.c.bf16 %v4229, %v4228
      %v4485 = vpack.c.bf16 %v4231, %v4230
      %v4486 = vpack.c.bf16 %v4233, %v4232
      %v4487 = vpack.c.bf16 %v4235, %v4234
      %v4488 = vpack.c.bf16 %v4237, %v4236
      %v4489 = vpack.c.bf16 %v4239, %v4238
      %v4490 = vpack.c.bf16 %v4241, %v4240
      %v4491 = vpack.c.bf16 %v4243, %v4242
      %v4492 = vpack.c.bf16 %v4245, %v4244
      %v4493 = vpack.c.bf16 %v4247, %v4246
      %v4494 = vpack.c.bf16 %v4249, %v4248
      %v4495 = vpack.c.bf16 %v4251, %v4250
      %v4496 = vpack.c.bf16 %v4253, %v4252
      %v4497 = vpack.c.bf16 %v4255, %v4254
      %v4498 = vpack.c.bf16 %v4257, %v4256
      %v4499 = vpack.c.bf16 %v4259, %v4258
      %v4500 = vpack.c.bf16 %v4261, %v4260
      %v4501 = vpack.c.bf16 %v4263, %v4262
      %v4502 = vpack.c.bf16 %v4265, %v4264
      %v4503 = vpack.c.bf16 %v4267, %v4266
      %v4504 = vpack.c.bf16 %v4269, %v4268
      %v4505 = vpack.c.bf16 %v4271, %v4270
      %v4506 = vpack.c.bf16 %v4273, %v4272
      %v4507 = vpack.c.bf16 %v4275, %v4274
      %v4508 = vpack.c.bf16 %v4277, %v4276
      %v4509 = vpack.c.bf16 %v4279, %v4278
      %v4510 = vpack.c.bf16 %v4281, %v4280
      %v4511 = vpack.c.bf16 %v4283, %v4282
      %v4512 = vpack.c.bf16 %v4285, %v4284
      %v4513 = vpack.c.bf16 %v4287, %v4286
      %v4514 = vpack.c.bf16 %v4289, %v4288
      %v4515 = vpack.c.bf16 %v4291, %v4290
      %v4516 = vpack.c.bf16 %v4293, %v4292
      %v4517 = vpack.c.bf16 %v4295, %v4294
      %v4518 = vpack.c.bf16 %v4297, %v4296
      %v4519 = vpack.c.bf16 %v4299, %v4298
      %v4520 = vpack.c.bf16 %v4301, %v4300
      %v4521 = vpack.c.bf16 %v4303, %v4302
      %v4522 = vpack.c.bf16 %v4305, %v4304
      %v4523 = vpack.c.bf16 %v4307, %v4306
      %v4524 = vpack.c.bf16 %v4309, %v4308
      %v4525 = vpack.c.bf16 %v4311, %v4310
      %v4526 = vpack.c.bf16 %v4313, %v4312
      %v4527 = vpack.c.bf16 %v4315, %v4314
      %v4528 = vpack.c.bf16 %v4317, %v4316
      %v4529 = vpack.c.bf16 %v4319, %v4318
      %v4530 = vpack.c.bf16 %v4321, %v4320
      %v4531 = vpack.c.bf16 %v4323, %v4322
      %v4532 = vpack.c.bf16 %v4325, %v4324
      %v4533 = vpack.c.bf16 %v4327, %v4326
      %v4534 = vpack.c.bf16 %v4329, %v4328
      %v4535 = vpack.c.bf16 %v4331, %v4330
      %v4536 = vpack.c.bf16 %v4333, %v4332
      %v4537 = vpack.c.bf16 %v4335, %v4334
      %v4538 = vpack.c.bf16 %v4337, %v4336
      %v4539 = vpack.c.bf16 %v4339, %v4338
      %v4540 = vpack.c.bf16 %v4341, %v4340
      %v4541 = vpack.c.bf16 %v4343, %v4342
      %v4542 = vpack.c.bf16 %v4345, %v4344
      %v4543 = vpack.c.bf16 %v4347, %v4346
      %v4544 = vpack.c.bf16 %v4349, %v4348
      %v4545 = vpack.c.bf16 %v4351, %v4350
      %v4546 = vpack.c.bf16 %v4353, %v4352
      %v4547 = vpack.c.bf16 %v4355, %v4354
      %v4548 = vpack.c.bf16 %v4357, %v4356
      %v4549 = vpack.c.bf16 %v4359, %v4358
      %v4550 = vpack.c.bf16 %v4361, %v4360
      %v4551 = vpack.c.bf16 %v4363, %v4362
      %v4552 = vpack.c.bf16 %v4365, %v4364
      %v4553 = vpack.c.bf16 %v4367, %v4366
      %v4554 = vpack.c.bf16 %v4369, %v4368
      %v4555 = vpack.c.bf16 %v4371, %v4370
      %v4556 = vpack.c.bf16 %v4373, %v4372
      %v4557 = vpack.c.bf16 %v4375, %v4374
      %v4558 = vpack.c.bf16 %v4377, %v4376
      %v4559 = vpack.c.bf16 %v4379, %v4378
      %v4560 = vpack.c.bf16 %v4381, %v4380
      %v4561 = vpack.c.bf16 %v4383, %v4382
      %v4562 = vpack.c.bf16 %v4385, %v4384
      %v4563 = vpack.c.bf16 %v4387, %v4386
      %v4564 = vpack.c.bf16 %v4389, %v4388
      %v4565 = vpack.c.bf16 %v4391, %v4390
      %v4566 = vpack.c.bf16 %v4393, %v4392
      %v4567 = vpack.c.bf16 %v4395, %v4394
      %v4568 = vpack.c.bf16 %v4397, %v4396
      %v4569 = vpack.c.bf16 %v4399, %v4398
      %v4570 = vpack.c.bf16 %v4401, %v4400
      %v4571 = vpack.c.bf16 %v4403, %v4402
      %v4572 = vpack.c.bf16 %v4405, %v4404
      %v4573 = vpack.c.bf16 %v4407, %v4406
      %v4574 = vpack.c.bf16 %v4409, %v4408
      %v4575 = vpack.c.bf16 %v4411, %v4410
      %v4576 = vpack.c.bf16 %v4413, %v4412
      %v4577 = vpack.c.bf16 %v4415, %v4414
      %v4578 = vpack.c.bf16 %v4417, %v4416
      %v4579 = vpack.c.bf16 %v4419, %v4418
      %v4580 = vpack.c.bf16 %v4421, %v4420
      %v4581 = vpack.c.bf16 %v4423, %v4422
      %v4582 = vpack.c.bf16 %v4425, %v4424
      %v4583 = vpack.c.bf16 %v4427, %v4426
      %v4584 = vpack.c.bf16 %v4429, %v4428
      %v4585 = vpack.c.bf16 %v4431, %v4430
      %v4586 = vpack.c.bf16 %v4433, %v4432
      %v4587 = vpack.c.bf16 %v4435, %v4434
      %v4588 = vpack.c.bf16 %v4437, %v4436
      %v4589 = vpack.c.bf16 %v4439, %v4438
      %v4590 = vpack.c.bf16 %v4441, %v4440
      %v4591 = vpack.c.bf16 %v4443, %v4442
      %v4592 = vpack.c.bf16 %v4445, %v4444
      %v4593 = vpack.c.bf16 %v4447, %v4446
      %v4594 = vpack.c.bf16 %v4449, %v4448
      %v4595 = vpack.c.bf16 %v4451, %v4450
      %v4596 = vpack.c.bf16 %v4453, %v4452
      %v4597 = vpack.c.bf16 %v4455, %v4454
      %v4598 = vpack.c.bf16 %v4457, %v4456
      %v4599 = vpack.c.bf16 %v4459, %v4458
      %v4600 = vpack.c.bf16 %v4461, %v4460
      %v4601 = vpack.c.bf16 %v4463, %v4462
      %v4602 = vpack.c.bf16 %v4465, %v4464
      %v4603 = vpack.c.bf16 %v4467, %v4466
      %v4604 = vpack.c.bf16 %v4469, %v4468
      %v4605 = vpack.c.bf16 %v4471, %v4470
      %v4606 = vpack.c.bf16 %v4473, %v4472
      %v4607 = vpack.c.bf16 %v4475, %v4474
      %v4608 = vpack.c.bf16 %v4477, %v4476
      %v4609 = vpack.c.bf16 %v4479, %v4478
      %v4610 = vpack.c.bf16 %v4481, %v4480
      %v4611 = vpack.c.bf16 %v4483, %v4482
      %v4612 = vld [vmem:[%s5] sm:$0xf]
      %v4613 = vld [vmem:[%s5 + $0x4] sm:$0xf]
      %v4614 = vld [vmem:[%s5 + $0x8] sm:$0xf]
      %v4615 = vld [vmem:[%s5 + $0xc] sm:$0xf]
      %v4616 = vld [vmem:[%s5 + $0x10] sm:$0xf]
      %v4617 = vld [vmem:[%s5 + $0x14] sm:$0xf]
      %v4618 = vld [vmem:[%s5 + $0x18] sm:$0xf]
      %v4619 = vld [vmem:[%s5 + $0x1c] sm:$0xf]
      %v4620 = vld [vmem:[%s5 + $0x20] sm:$0xf]
      %v4621 = vld [vmem:[%s5 + $0x24] sm:$0xf]
      %v4622 = vld [vmem:[%s5 + $0x28] sm:$0xf]
      %v4623 = vld [vmem:[%s5 + $0x2c] sm:$0xf]
      %v4624 = vld [vmem:[%s5 + $0x30] sm:$0xf]
      %v4625 = vld [vmem:[%s5 + $0x34] sm:$0xf]
      %v4626 = vld [vmem:[%s5 + $0x38] sm:$0xf]
      %v4627 = vld [vmem:[%s5 + $0x3c] sm:$0xf]
      %v4628 = vld [vmem:[%s6] sm:$0x1]
      %v4630 = vlaneseq
      %v4631 = vshrl.u32 %v4630, 7
      %v4632 = vsub.s32 0, %v4631
      %v4633 = vrot.slane %v4628, %v4632
      %v4651 = vunpack.c.l.b16 %v4612
      %v4652 = vunpack.c.l.b16 %v4613
      %v4653 = vunpack.c.l.b16 %v4614
      %v4654 = vunpack.c.l.b16 %v4615
      %v4655 = vunpack.c.l.b16 %v4616
      %v4656 = vunpack.c.l.b16 %v4617
      %v4657 = vunpack.c.l.b16 %v4618
      %v4658 = vunpack.c.l.b16 %v4619
      %v4659 = vunpack.c.l.b16 %v4620
      %v4660 = vunpack.c.l.b16 %v4621
      %v4661 = vunpack.c.l.b16 %v4622
      %v4662 = vunpack.c.l.b16 %v4623
      %v4663 = vunpack.c.l.b16 %v4624
      %v4664 = vunpack.c.l.b16 %v4625
      %v4665 = vunpack.c.l.b16 %v4626
      %v4666 = vunpack.c.l.b16 %v4627
      %v4667 = vpack.c.b16 %v4652, %v4651
      %v4668 = vpack.c.b16 %v4654, %v4653
      %v4669 = vpack.c.b16 %v4656, %v4655
      %v4670 = vpack.c.b16 %v4658, %v4657
      %v4671 = vpack.c.b16 %v4660, %v4659
      %v4672 = vpack.c.b16 %v4662, %v4661
      %v4673 = vpack.c.b16 %v4664, %v4663
      %v4674 = vpack.c.b16 %v4666, %v4665
      %4683 = vmatprep.subr.bf16.mxu0 0
      %4684 = vmatpush1.bf16.msra.mxu0 %v4667
      %4685 = vmatprep.subr.bf16.mxu0 0
      %4686 = vmatpush1.bf16.msra.mxu0 %v4668
      %4687 = vmatprep.subr.bf16.mxu0 0
      %4688 = vmatpush1.bf16.msra.mxu0 %v4669
      %4689 = vmatprep.subr.bf16.mxu0 0
      %4690 = vmatpush1.bf16.msra.mxu0 %v4670
      %4691 = vmatprep.subr.bf16.mxu0 0
      %4692 = vmatpush1.bf16.msra.mxu0 %v4671
      %4693 = vmatprep.subr.bf16.mxu0 0
      %4694 = vmatpush1.bf16.msra.mxu0 %v4672
      %4695 = vmatprep.subr.bf16.mxu0 0
      %4696 = vmatpush1.bf16.msra.mxu0 %v4673
      %4697 = vmatprep.subr.bf16.mxu0 0
      %4698 = vmatpush1.bf16.msra.mxu0 %v4674
      %4699 = vmatprep.subr.bf16.mxu0 0
      %4700 = vmatpush1.bf16.msra.mxu0 0
      %4701 = vmatprep.subr.bf16.mxu0 0
      %4702 = vmatpush1.bf16.msra.mxu0 0
      %4703 = vmatprep.subr.bf16.mxu0 0
      %4704 = vmatpush1.bf16.msra.mxu0 0
      %4705 = vmatprep.subr.bf16.mxu0 0
      %4706 = vmatpush1.bf16.msra.mxu0 0
      %4707 = vmatprep.subr.bf16.mxu0 0
      %4708 = vmatpush1.bf16.msra.mxu0 0
      %4709 = vmatprep.subr.bf16.mxu0 0
      %4710 = vmatpush1.bf16.msra.mxu0 0
      %4711 = vmatprep.subr.bf16.mxu0 0
      %4712 = vmatpush1.bf16.msra.mxu0 0
      %4713 = vmatprep.subr.bf16.mxu0 0
      %4714 = vmatpush1.bf16.msra.mxu0 0
      %4715 = vmatprep.mubr.bf16.mxu0 0
      %4716 = vmatmul.mubr.bf16.gmra.mrb[0].mxu0 %v4484
      %v4717 = vpop.f32.mrb[0].mxu0
      %v4718 = vadd.f32 %v4633, %v4717
      %v4719 = vpop.f32.mrb[0].mxu0
      %v4720 = vpop.f32.mrb[0].mxu0
      %v4721 = vadd.f32 %v4633, %v4720
      %v4722 = vpop.f32.mrb[0].mxu0
      %4723 = vmatprep.mubr.bf16.mxu0 0
      %4724 = vmatmul.mubr.bf16.gmra.mrb[0].mxu0 %v4485
      %v4725 = vpop.f32.mrb[0].mxu0
      %v4726 = vadd.f32 %v4633, %v4725
      %v4727 = vpop.f32.mrb[0].mxu0
      %v4728 = vpop.f32.mrb[0].mxu0
      %v4729 = vadd.f32 %v4633, %v4728
      %v4730 = vpop.f32.mrb[0].mxu0
      %4731 = vmatprep.mubr.bf16.mxu0 0
      %4732 = vmatmul.mubr.bf16.gmra.mrb[0].mxu0 %v4486
      %v4733 = vpop.f32.mrb[0].mxu0
      %v4734 = vadd.f32 %v4633, %v4733
      %v4735 = vpop.f32.mrb[0].mxu0
      %v4736 = vpop.f32.mrb[0].mxu0
      %v4737 = vadd.f32 %v4633, %v4736
      %v4738 = vpop.f32.mrb[0].mxu0
      %4739 = vmatprep.mubr.bf16.mxu0 0
      %4740 = vmatmul.mubr.bf16.gmra.mrb[0].mxu0 %v4487
      %v4741 = vpop.f32.mrb[0].mxu0
      %v4742 = vadd.f32 %v4633, %v4741
      %v4743 = vpop.f32.mrb[0].mxu0
      %v4744 = vpop.f32.mrb[0].mxu0
      %v4745 = vadd.f32 %v4633, %v4744
      %v4746 = vpop.f32.mrb[0].mxu0
      %4747 = vmatprep.mubr.bf16.mxu0 0
      %4748 = vmatmul.mubr.bf16.gmra.mrb[0].mxu0 %v4488
      %v4749 = vpop.f32.mrb[0].mxu0
      %v4750 = vadd.f32 %v4633, %v4749
      %v4751 = vpop.f32.mrb[0].mxu0
      %v4752 = vpop.f32.mrb[0].mxu0
      %v4753 = vadd.f32 %v4633, %v4752
      %v4754 = vpop.f32.mrb[0].mxu0
      %4755 = vmatprep.mubr.bf16.mxu0 0
      %4756 = vmatmul.mubr.bf16.gmra.mrb[0].mxu0 %v4489
      %v4757 = vpop.f32.mrb[0].mxu0
      %v4758 = vadd.f32 %v4633, %v4757
      %v4759 = vpop.f32.mrb[0].mxu0
      %v4760 = vpop.f32.mrb[0].mxu0
      %v4761 = vadd.f32 %v4633, %v4760
      %v4762 = vpop.f32.mrb[0].mxu0
      %4763 = vmatprep.mubr.bf16.mxu0 0
      %4764 = vmatmul.mubr.bf16.gmra.mrb[0].mxu0 %v4490
      %v4765 = vpop.f32.mrb[0].mxu0
      %v4766 = vadd.f32 %v4633, %v4765
      %v4767 = vpop.f32.mrb[0].mxu0
      %v4768 = vpop.f32.mrb[0].mxu0
      %v4769 = vadd.f32 %v4633, %v4768
      %v4770 = vpop.f32.mrb[0].mxu0
      %4771 = vmatprep.mubr.bf16.mxu0 0
      %4772 = vmatmul.mubr.bf16.gmra.mrb[0].mxu0 %v4491
      %v4773 = vpop.f32.mrb[0].mxu0
      %v4774 = vadd.f32 %v4633, %v4773
      %v4775 = vpop.f32.mrb[0].mxu0
      %v4776 = vpop.f32.mrb[0].mxu0
      %v4777 = vadd.f32 %v4633, %v4776
      %v4778 = vpop.f32.mrb[0].mxu0
      %4779 = vmatprep.mubr.bf16.mxu0 0
      %4780 = vmatmul.mubr.bf16.gmra.mrb[0].mxu0 %v4492
      %v4781 = vpop.f32.mrb[0].mxu0
      %v4782 = vadd.f32 %v4633, %v4781
      %v4783 = vpop.f32.mrb[0].mxu0
      %v4784 = vpop.f32.mrb[0].mxu0
      %v4785 = vadd.f32 %v4633, %v4784
      %v4786 = vpop.f32.mrb[0].mxu0
      %4787 = vmatprep.mubr.bf16.mxu0 0
      %4788 = vmatmul.mubr.bf16.gmra.mrb[0].mxu0 %v4493
      %v4789 = vpop.f32.mrb[0].mxu0
      %v4790 = vadd.f32 %v4633, %v4789
      %v4791 = vpop.f32.mrb[0].mxu0
      %v4792 = vpop.f32.mrb[0].mxu0
      %v4793 = vadd.f32 %v4633, %v4792
      %v4794 = vpop.f32.mrb[0].mxu0
      %4795 = vmatprep.mubr.bf16.mxu0 0
      %4796 = vmatmul.mubr.bf16.gmra.mrb[0].mxu0 %v4494
      %v4797 = vpop.f32.mrb[0].mxu0
      %v4798 = vadd.f32 %v4633, %v4797
      %v4799 = vpop.f32.mrb[0].mxu0
      %v4800 = vpop.f32.mrb[0].mxu0
      %v4801 = vadd.f32 %v4633, %v4800
      %v4802 = vpop.f32.mrb[0].mxu0
      %4803 = vmatprep.mubr.bf16.mxu0 0
      %4804 = vmatmul.mubr.bf16.gmra.mrb[0].mxu0 %v4495
      %v4805 = vpop.f32.mrb[0].mxu0
      %v4806 = vadd.f32 %v4633, %v4805
      %v4807 = vpop.f32.mrb[0].mxu0
      %v4808 = vpop.f32.mrb[0].mxu0
      %v4809 = vadd.f32 %v4633, %v4808
      %v4810 = vpop.f32.mrb[0].mxu0
      %4811 = vmatprep.mubr.bf16.mxu0 0
      %4812 = vmatmul.mubr.bf16.gmra.mrb[0].mxu0 %v4496
      %v4813 = vpop.f32.mrb[0].mxu0
      %v4814 = vadd.f32 %v4633, %v4813
      %v4815 = vpop.f32.mrb[0].mxu0
      %v4816 = vpop.f32.mrb[0].mxu0
      %v4817 = vadd.f32 %v4633, %v4816
      %v4818 = vpop.f32.mrb[0].mxu0
      %4819 = vmatprep.mubr.bf16.mxu0 0
      %4820 = vmatmul.mubr.bf16.gmra.mrb[0].mxu0 %v4497
      %v4821 = vpop.f32.mrb[0].mxu0
      %v4822 = vadd.f32 %v4633, %v4821
      %v4823 = vpop.f32.mrb[0].mxu0
      %v4824 = vpop.f32.mrb[0].mxu0
      %v4825 = vadd.f32 %v4633, %v4824
      %v4826 = vpop.f32.mrb[0].mxu0
      %4827 = vmatprep.mubr.bf16.mxu0 0
      %4828 = vmatmul.mubr.bf16.gmra.mrb[0].mxu0 %v4498
      %v4829 = vpop.f32.mrb[0].mxu0
      %v4830 = vadd.f32 %v4633, %v4829
      %v4831 = vpop.f32.mrb[0].mxu0
      %v4832 = vpop.f32.mrb[0].mxu0
      %v4833 = vadd.f32 %v4633, %v4832
      %v4834 = vpop.f32.mrb[0].mxu0
      %4835 = vmatprep.mubr.bf16.mxu0 0
      %4836 = vmatmul.mubr.bf16.gmra.mrb[0].mxu0 %v4499
      %v4837 = vpop.f32.mrb[0].mxu0
      %v4838 = vadd.f32 %v4633, %v4837
      %v4839 = vpop.f32.mrb[0].mxu0
      %v4840 = vpop.f32.mrb[0].mxu0
      %v4841 = vadd.f32 %v4633, %v4840
      %v4842 = vpop.f32.mrb[0].mxu0
      %4843 = vmatprep.mubr.bf16.mxu0 0
      %4844 = vmatmul.mubr.bf16.gmra.mrb[0].mxu0 %v4500
      %v4845 = vpop.f32.mrb[0].mxu0
      %v4846 = vadd.f32 %v4633, %v4845
      %v4847 = vpop.f32.mrb[0].mxu0
      %v4848 = vpop.f32.mrb[0].mxu0
      %v4849 = vadd.f32 %v4633, %v4848
      %v4850 = vpop.f32.mrb[0].mxu0
      %4851 = vmatprep.mubr.bf16.mxu0 0
      %4852 = vmatmul.mubr.bf16.gmra.mrb[0].mxu0 %v4501
      %v4853 = vpop.f32.mrb[0].mxu0
      %v4854 = vadd.f32 %v4633, %v4853
      %v4855 = vpop.f32.mrb[0].mxu0
      %v4856 = vpop.f32.mrb[0].mxu0
      %v4857 = vadd.f32 %v4633, %v4856
      %v4858 = vpop.f32.mrb[0].mxu0
      %4859 = vmatprep.mubr.bf16.mxu0 0
      %4860 = vmatmul.mubr.bf16.gmra.mrb[0].mxu0 %v4502
      %v4861 = vpop.f32.mrb[0].mxu0
      %v4862 = vadd.f32 %v4633, %v4861
      %v4863 = vpop.f32.mrb[0].mxu0
      %v4864 = vpop.f32.mrb[0].mxu0
      %v4865 = vadd.f32 %v4633, %v4864
      %v4866 = vpop.f32.mrb[0].mxu0
      %4867 = vmatprep.mubr.bf16.mxu0 0
      %4868 = vmatmul.mubr.bf16.gmra.mrb[0].mxu0 %v4503
      %v4869 = vpop.f32.mrb[0].mxu0
      %v4870 = vadd.f32 %v4633, %v4869
      %v4871 = vpop.f32.mrb[0].mxu0
      %v4872 = vpop.f32.mrb[0].mxu0
      %v4873 = vadd.f32 %v4633, %v4872
      %v4874 = vpop.f32.mrb[0].mxu0
      %4875 = vmatprep.mubr.bf16.mxu0 0
      %4876 = vmatmul.mubr.bf16.gmra.mrb[0].mxu0 %v4504
      %v4877 = vpop.f32.mrb[0].mxu0
      %v4878 = vadd.f32 %v4633, %v4877
      %v4879 = vpop.f32.mrb[0].mxu0
      %v4880 = vpop.f32.mrb[0].mxu0
      %v4881 = vadd.f32 %v4633, %v4880
      %v4882 = vpop.f32.mrb[0].mxu0
      %4883 = vmatprep.mubr.bf16.mxu0 0
      %4884 = vmatmul.mubr.bf16.gmra.mrb[0].mxu0 %v4505
      %v4885 = vpop.f32.mrb[0].mxu0
      %v4886 = vadd.f32 %v4633, %v4885
      %v4887 = vpop.f32.mrb[0].mxu0
      %v4888 = vpop.f32.mrb[0].mxu0
      %v4889 = vadd.f32 %v4633, %v4888
      %v4890 = vpop.f32.mrb[0].mxu0
      %4891 = vmatprep.mubr.bf16.mxu0 0
      %4892 = vmatmul.mubr.bf16.gmra.mrb[0].mxu0 %v4506
      %v4893 = vpop.f32.mrb[0].mxu0
      %v4894 = vadd.f32 %v4633, %v4893
      %v4895 = vpop.f32.mrb[0].mxu0
      %v4896 = vpop.f32.mrb[0].mxu0
      %v4897 = vadd.f32 %v4633, %v4896
      %v4898 = vpop.f32.mrb[0].mxu0
      %4899 = vmatprep.mubr.bf16.mxu0 0
      %4900 = vmatmul.mubr.bf16.gmra.mrb[0].mxu0 %v4507
      %v4901 = vpop.f32.mrb[0].mxu0
      %v4902 = vadd.f32 %v4633, %v4901
      %v4903 = vpop.f32.mrb[0].mxu0
      %v4904 = vpop.f32.mrb[0].mxu0
      %v4905 = vadd.f32 %v4633, %v4904
      %v4906 = vpop.f32.mrb[0].mxu0
      %4907 = vmatprep.mubr.bf16.mxu0 0
      %4908 = vmatmul.mubr.bf16.gmra.mrb[0].mxu0 %v4508
      %v4909 = vpop.f32.mrb[0].mxu0
      %v4910 = vadd.f32 %v4633, %v4909
      %v4911 = vpop.f32.mrb[0].mxu0
      %v4912 = vpop.f32.mrb[0].mxu0
      %v4913 = vadd.f32 %v4633, %v4912
      %v4914 = vpop.f32.mrb[0].mxu0
      %4915 = vmatprep.mubr.bf16.mxu0 0
      %4916 = vmatmul.mubr.bf16.gmra.mrb[0].mxu0 %v4509
      %v4917 = vpop.f32.mrb[0].mxu0
      %v4918 = vadd.f32 %v4633, %v4917
      %v4919 = vpop.f32.mrb[0].mxu0
      %v4920 = vpop.f32.mrb[0].mxu0
      %v4921 = vadd.f32 %v4633, %v4920
      %v4922 = vpop.f32.mrb[0].mxu0
      %4923 = vmatprep.mubr.bf16.mxu0 0
      %4924 = vmatmul.mubr.bf16.gmra.mrb[0].mxu0 %v4510
      %v4925 = vpop.f32.mrb[0].mxu0
      %v4926 = vadd.f32 %v4633, %v4925
      %v4927 = vpop.f32.mrb[0].mxu0
      %v4928 = vpop.f32.mrb[0].mxu0
      %v4929 = vadd.f32 %v4633, %v4928
      %v4930 = vpop.f32.mrb[0].mxu0
      %4931 = vmatprep.mubr.bf16.mxu0 0
      %4932 = vmatmul.mubr.bf16.gmra.mrb[0].mxu0 %v4511
      %v4933 = vpop.f32.mrb[0].mxu0
      %v4934 = vadd.f32 %v4633, %v4933
      %v4935 = vpop.f32.mrb[0].mxu0
      %v4936 = vpop.f32.mrb[0].mxu0
      %v4937 = vadd.f32 %v4633, %v4936
      %v4938 = vpop.f32.mrb[0].mxu0
      %4939 = vmatprep.mubr.bf16.mxu0 0
      %4940 = vmatmul.mubr.bf16.gmra.mrb[0].mxu0 %v4512
      %v4941 = vpop.f32.mrb[0].mxu0
      %v4942 = vadd.f32 %v4633, %v4941
      %v4943 = vpop.f32.mrb[0].mxu0
      %v4944 = vpop.f32.mrb[0].mxu0
      %v4945 = vadd.f32 %v4633, %v4944
      %v4946 = vpop.f32.mrb[0].mxu0
      %4947 = vmatprep.mubr.bf16.mxu0 0
      %4948 = vmatmul.mubr.bf16.gmra.mrb[0].mxu0 %v4513
      %v4949 = vpop.f32.mrb[0].mxu0
      %v4950 = vadd.f32 %v4633, %v4949
      %v4951 = vpop.f32.mrb[0].mxu0
      %v4952 = vpop.f32.mrb[0].mxu0
      %v4953 = vadd.f32 %v4633, %v4952
      %v4954 = vpop.f32.mrb[0].mxu0
      %4955 = vmatprep.mubr.bf16.mxu0 0
      %4956 = vmatmul.mubr.bf16.gmra.mrb[0].mxu0 %v4514
      %v4957 = vpop.f32.mrb[0].mxu0
      %v4958 = vadd.f32 %v4633, %v4957
      %v4959 = vpop.f32.mrb[0].mxu0
      %v4960 = vpop.f32.mrb[0].mxu0
      %v4961 = vadd.f32 %v4633, %v4960
      %v4962 = vpop.f32.mrb[0].mxu0
      %4963 = vmatprep.mubr.bf16.mxu0 0
      %4964 = vmatmul.mubr.bf16.gmra.mrb[0].mxu0 %v4515
      %v4965 = vpop.f32.mrb[0].mxu0
      %v4966 = vadd.f32 %v4633, %v4965
      %v4967 = vpop.f32.mrb[0].mxu0
      %v4968 = vpop.f32.mrb[0].mxu0
      %v4969 = vadd.f32 %v4633, %v4968
      %v4970 = vpop.f32.mrb[0].mxu0
      %4971 = vmatprep.mubr.bf16.mxu0 0
      %4972 = vmatmul.mubr.bf16.gmra.mrb[0].mxu0 %v4516
      %v4973 = vpop.f32.mrb[0].mxu0
      %v4974 = vadd.f32 %v4633, %v4973
      %v4975 = vpop.f32.mrb[0].mxu0
      %v4976 = vpop.f32.mrb[0].mxu0
      %v4977 = vadd.f32 %v4633, %v4976
      %v4978 = vpop.f32.mrb[0].mxu0
      %4979 = vmatprep.mubr.bf16.mxu0 0
      %4980 = vmatmul.mubr.bf16.gmra.mrb[0].mxu0 %v4517
      %v4981 = vpop.f32.mrb[0].mxu0
      %v4982 = vadd.f32 %v4633, %v4981
      %v4983 = vpop.f32.mrb[0].mxu0
      %v4984 = vpop.f32.mrb[0].mxu0
      %v4985 = vadd.f32 %v4633, %v4984
      %v4986 = vpop.f32.mrb[0].mxu0
      %4987 = vmatprep.mubr.bf16.mxu0 0
      %4988 = vmatmul.mubr.bf16.gmra.mrb[0].mxu0 %v4518
      %v4989 = vpop.f32.mrb[0].mxu0
      %v4990 = vadd.f32 %v4633, %v4989
      %v4991 = vpop.f32.mrb[0].mxu0
      %v4992 = vpop.f32.mrb[0].mxu0
      %v4993 = vadd.f32 %v4633, %v4992
      %v4994 = vpop.f32.mrb[0].mxu0
      %4995 = vmatprep.mubr.bf16.mxu0 0
      %4996 = vmatmul.mubr.bf16.gmra.mrb[0].mxu0 %v4519
      %v4997 = vpop.f32.mrb[0].mxu0
      %v4998 = vadd.f32 %v4633, %v4997
      %v4999 = vpop.f32.mrb[0].mxu0
      %v5000 = vpop.f32.mrb[0].mxu0
      %v5001 = vadd.f32 %v4633, %v5000
      %v5002 = vpop.f32.mrb[0].mxu0
      %5003 = vmatprep.mubr.bf16.mxu0 0
      %5004 = vmatmul.mubr.bf16.gmra.mrb[0].mxu0 %v4520
      %v5005 = vpop.f32.mrb[0].mxu0
      %v5006 = vadd.f32 %v4633, %v5005
      %v5007 = vpop.f32.mrb[0].mxu0
      %v5008 = vpop.f32.mrb[0].mxu0
      %v5009 = vadd.f32 %v4633, %v5008
      %v5010 = vpop.f32.mrb[0].mxu0
      %5011 = vmatprep.mubr.bf16.mxu0 0
      %5012 = vmatmul.mubr.bf16.gmra.mrb[0].mxu0 %v4521
      %v5013 = vpop.f32.mrb[0].mxu0
      %v5014 = vadd.f32 %v4633, %v5013
      %v5015 = vpop.f32.mrb[0].mxu0
      %v5016 = vpop.f32.mrb[0].mxu0
      %v5017 = vadd.f32 %v4633, %v5016
      %v5018 = vpop.f32.mrb[0].mxu0
      %5019 = vmatprep.mubr.bf16.mxu0 0
      %5020 = vmatmul.mubr.bf16.gmra.mrb[0].mxu0 %v4522
      %v5021 = vpop.f32.mrb[0].mxu0
      %v5022 = vadd.f32 %v4633, %v5021
      %v5023 = vpop.f32.mrb[0].mxu0
      %v5024 = vpop.f32.mrb[0].mxu0
      %v5025 = vadd.f32 %v4633, %v5024
      %v5026 = vpop.f32.mrb[0].mxu0
      %5027 = vmatprep.mubr.bf16.mxu0 0
      %5028 = vmatmul.mubr.bf16.gmra.mrb[0].mxu0 %v4523
      %v5029 = vpop.f32.mrb[0].mxu0
      %v5030 = vadd.f32 %v4633, %v5029
      %v5031 = vpop.f32.mrb[0].mxu0
      %v5032 = vpop.f32.mrb[0].mxu0
      %v5033 = vadd.f32 %v4633, %v5032
      %v5034 = vpop.f32.mrb[0].mxu0
      %5035 = vmatprep.mubr.bf16.mxu0 0
      %5036 = vmatmul.mubr.bf16.gmra.mrb[0].mxu0 %v4524
      %v5037 = vpop.f32.mrb[0].mxu0
      %v5038 = vadd.f32 %v4633, %v5037
      %v5039 = vpop.f32.mrb[0].mxu0
      %v5040 = vpop.f32.mrb[0].mxu0
      %v5041 = vadd.f32 %v4633, %v5040
      %v5042 = vpop.f32.mrb[0].mxu0
      %5043 = vmatprep.mubr.bf16.mxu0 0
      %5044 = vmatmul.mubr.bf16.gmra.mrb[0].mxu0 %v4525
      %v5045 = vpop.f32.mrb[0].mxu0
      %v5046 = vadd.f32 %v4633, %v5045
      %v5047 = vpop.f32.mrb[0].mxu0
      %v5048 = vpop.f32.mrb[0].mxu0
      %v5049 = vadd.f32 %v4633, %v5048
      %v5050 = vpop.f32.mrb[0].mxu0
      %5051 = vmatprep.mubr.bf16.mxu0 0
      %5052 = vmatmul.mubr.bf16.gmra.mrb[0].mxu0 %v4526
      %v5053 = vpop.f32.mrb[0].mxu0
      %v5054 = vadd.f32 %v4633, %v5053
      %v5055 = vpop.f32.mrb[0].mxu0
      %v5056 = vpop.f32.mrb[0].mxu0
      %v5057 = vadd.f32 %v4633, %v5056
      %v5058 = vpop.f32.mrb[0].mxu0
      %5059 = vmatprep.mubr.bf16.mxu0 0
      %5060 = vmatmul.mubr.bf16.gmra.mrb[0].mxu0 %v4527
      %v5061 = vpop.f32.mrb[0].mxu0
      %v5062 = vadd.f32 %v4633, %v5061
      %v5063 = vpop.f32.mrb[0].mxu0
      %v5064 = vpop.f32.mrb[0].mxu0
      %v5065 = vadd.f32 %v4633, %v5064
      %v5066 = vpop.f32.mrb[0].mxu0
      %5067 = vmatprep.mubr.bf16.mxu0 0
      %5068 = vmatmul.mubr.bf16.gmra.mrb[0].mxu0 %v4528
      %v5069 = vpop.f32.mrb[0].mxu0
      %v5070 = vadd.f32 %v4633, %v5069
      %v5071 = vpop.f32.mrb[0].mxu0
      %v5072 = vpop.f32.mrb[0].mxu0
      %v5073 = vadd.f32 %v4633, %v5072
      %v5074 = vpop.f32.mrb[0].mxu0
      %5075 = vmatprep.mubr.bf16.mxu0 0
      %5076 = vmatmul.mubr.bf16.gmra.mrb[0].mxu0 %v4529
      %v5077 = vpop.f32.mrb[0].mxu0
      %v5078 = vadd.f32 %v4633, %v5077
      %v5079 = vpop.f32.mrb[0].mxu0
      %v5080 = vpop.f32.mrb[0].mxu0
      %v5081 = vadd.f32 %v4633, %v5080
      %v5082 = vpop.f32.mrb[0].mxu0
      %5083 = vmatprep.mubr.bf16.mxu0 0
      %5084 = vmatmul.mubr.bf16.gmra.mrb[0].mxu0 %v4530
      %v5085 = vpop.f32.mrb[0].mxu0
      %v5086 = vadd.f32 %v4633, %v5085
      %v5087 = vpop.f32.mrb[0].mxu0
      %v5088 = vpop.f32.mrb[0].mxu0
      %v5089 = vadd.f32 %v4633, %v5088
      %v5090 = vpop.f32.mrb[0].mxu0
      %5091 = vmatprep.mubr.bf16.mxu0 0
      %5092 = vmatmul.mubr.bf16.gmra.mrb[0].mxu0 %v4531
      %v5093 = vpop.f32.mrb[0].mxu0
      %v5094 = vadd.f32 %v4633, %v5093
      %v5095 = vpop.f32.mrb[0].mxu0
      %v5096 = vpop.f32.mrb[0].mxu0
      %v5097 = vadd.f32 %v4633, %v5096
      %v5098 = vpop.f32.mrb[0].mxu0
      %5099 = vmatprep.mubr.bf16.mxu0 0
      %5100 = vmatmul.mubr.bf16.gmra.mrb[0].mxu0 %v4532
      %v5101 = vpop.f32.mrb[0].mxu0
      %v5102 = vadd.f32 %v4633, %v5101
      %v5103 = vpop.f32.mrb[0].mxu0
      %v5104 = vpop.f32.mrb[0].mxu0
      %v5105 = vadd.f32 %v4633, %v5104
      %v5106 = vpop.f32.mrb[0].mxu0
      %5107 = vmatprep.mubr.bf16.mxu0 0
      %5108 = vmatmul.mubr.bf16.gmra.mrb[0].mxu0 %v4533
      %v5109 = vpop.f32.mrb[0].mxu0
      %v5110 = vadd.f32 %v4633, %v5109
      %v5111 = vpop.f32.mrb[0].mxu0
      %v5112 = vpop.f32.mrb[0].mxu0
      %v5113 = vadd.f32 %v4633, %v5112
      %v5114 = vpop.f32.mrb[0].mxu0
      %5115 = vmatprep.mubr.bf16.mxu0 0
      %5116 = vmatmul.mubr.bf16.gmra.mrb[0].mxu0 %v4534
      %v5117 = vpop.f32.mrb[0].mxu0
      %v5118 = vadd.f32 %v4633, %v5117
      %v5119 = vpop.f32.mrb[0].mxu0
      %v5120 = vpop.f32.mrb[0].mxu0
      %v5121 = vadd.f32 %v4633, %v5120
      %v5122 = vpop.f32.mrb[0].mxu0
      %5123 = vmatprep.mubr.bf16.mxu0 0
      %5124 = vmatmul.mubr.bf16.gmra.mrb[0].mxu0 %v4535
      %v5125 = vpop.f32.mrb[0].mxu0
      %v5126 = vadd.f32 %v4633, %v5125
      %v5127 = vpop.f32.mrb[0].mxu0
      %v5128 = vpop.f32.mrb[0].mxu0
      %v5129 = vadd.f32 %v4633, %v5128
      %v5130 = vpop.f32.mrb[0].mxu0
      %5131 = vmatprep.mubr.bf16.mxu0 0
      %5132 = vmatmul.mubr.bf16.gmra.mrb[0].mxu0 %v4536
      %v5133 = vpop.f32.mrb[0].mxu0
      %v5134 = vadd.f32 %v4633, %v5133
      %v5135 = vpop.f32.mrb[0].mxu0
      %v5136 = vpop.f32.mrb[0].mxu0
      %v5137 = vadd.f32 %v4633, %v5136
      %v5138 = vpop.f32.mrb[0].mxu0
      %5139 = vmatprep.mubr.bf16.mxu0 0
      %5140 = vmatmul.mubr.bf16.gmra.mrb[0].mxu0 %v4537
      %v5141 = vpop.f32.mrb[0].mxu0
      %v5142 = vadd.f32 %v4633, %v5141
      %v5143 = vpop.f32.mrb[0].mxu0
      %v5144 = vpop.f32.mrb[0].mxu0
      %v5145 = vadd.f32 %v4633, %v5144
      %v5146 = vpop.f32.mrb[0].mxu0
      %5147 = vmatprep.mubr.bf16.mxu0 0
      %5148 = vmatmul.mubr.bf16.gmra.mrb[0].mxu0 %v4538
      %v5149 = vpop.f32.mrb[0].mxu0
      %v5150 = vadd.f32 %v4633, %v5149
      %v5151 = vpop.f32.mrb[0].mxu0
      %v5152 = vpop.f32.mrb[0].mxu0
      %v5153 = vadd.f32 %v4633, %v5152
      %v5154 = vpop.f32.mrb[0].mxu0
      %5155 = vmatprep.mubr.bf16.mxu0 0
      %5156 = vmatmul.mubr.bf16.gmra.mrb[0].mxu0 %v4539
      %v5157 = vpop.f32.mrb[0].mxu0
      %v5158 = vadd.f32 %v4633, %v5157
      %v5159 = vpop.f32.mrb[0].mxu0
      %v5160 = vpop.f32.mrb[0].mxu0
      %v5161 = vadd.f32 %v4633, %v5160
      %v5162 = vpop.f32.mrb[0].mxu0
      %5163 = vmatprep.mubr.bf16.mxu0 0
      %5164 = vmatmul.mubr.bf16.gmra.mrb[0].mxu0 %v4540
      %v5165 = vpop.f32.mrb[0].mxu0
      %v5166 = vadd.f32 %v4633, %v5165
      %v5167 = vpop.f32.mrb[0].mxu0
      %v5168 = vpop.f32.mrb[0].mxu0
      %v5169 = vadd.f32 %v4633, %v5168
      %v5170 = vpop.f32.mrb[0].mxu0
      %5171 = vmatprep.mubr.bf16.mxu0 0
      %5172 = vmatmul.mubr.bf16.gmra.mrb[0].mxu0 %v4541
      %v5173 = vpop.f32.mrb[0].mxu0
      %v5174 = vadd.f32 %v4633, %v5173
      %v5175 = vpop.f32.mrb[0].mxu0
      %v5176 = vpop.f32.mrb[0].mxu0
      %v5177 = vadd.f32 %v4633, %v5176
      %v5178 = vpop.f32.mrb[0].mxu0
      %5179 = vmatprep.mubr.bf16.mxu0 0
      %5180 = vmatmul.mubr.bf16.gmra.mrb[0].mxu0 %v4542
      %v5181 = vpop.f32.mrb[0].mxu0
      %v5182 = vadd.f32 %v4633, %v5181
      %v5183 = vpop.f32.mrb[0].mxu0
      %v5184 = vpop.f32.mrb[0].mxu0
      %v5185 = vadd.f32 %v4633, %v5184
      %v5186 = vpop.f32.mrb[0].mxu0
      %5187 = vmatprep.mubr.bf16.mxu0 0
      %5188 = vmatmul.mubr.bf16.gmra.mrb[0].mxu0 %v4543
      %v5189 = vpop.f32.mrb[0].mxu0
      %v5190 = vadd.f32 %v4633, %v5189
      %v5191 = vpop.f32.mrb[0].mxu0
      %v5192 = vpop.f32.mrb[0].mxu0
      %v5193 = vadd.f32 %v4633, %v5192
      %v5194 = vpop.f32.mrb[0].mxu0
      %5195 = vmatprep.mubr.bf16.mxu0 0
      %5196 = vmatmul.mubr.bf16.gmra.mrb[0].mxu0 %v4544
      %v5197 = vpop.f32.mrb[0].mxu0
      %v5198 = vadd.f32 %v4633, %v5197
      %v5199 = vpop.f32.mrb[0].mxu0
      %v5200 = vpop.f32.mrb[0].mxu0
      %v5201 = vadd.f32 %v4633, %v5200
      %v5202 = vpop.f32.mrb[0].mxu0
      %5203 = vmatprep.mubr.bf16.mxu0 0
      %5204 = vmatmul.mubr.bf16.gmra.mrb[0].mxu0 %v4545
      %v5205 = vpop.f32.mrb[0].mxu0
      %v5206 = vadd.f32 %v4633, %v5205
      %v5207 = vpop.f32.mrb[0].mxu0
      %v5208 = vpop.f32.mrb[0].mxu0
      %v5209 = vadd.f32 %v4633, %v5208
      %v5210 = vpop.f32.mrb[0].mxu0
      %5211 = vmatprep.mubr.bf16.mxu0 0
      %5212 = vmatmul.mubr.bf16.gmra.mrb[0].mxu0 %v4546
      %v5213 = vpop.f32.mrb[0].mxu0
      %v5214 = vadd.f32 %v4633, %v5213
      %v5215 = vpop.f32.mrb[0].mxu0
      %v5216 = vpop.f32.mrb[0].mxu0
      %v5217 = vadd.f32 %v4633, %v5216
      %v5218 = vpop.f32.mrb[0].mxu0
      %5219 = vmatprep.mubr.bf16.mxu0 0
      %5220 = vmatmul.mubr.bf16.gmra.mrb[0].mxu0 %v4547
      %v5221 = vpop.f32.mrb[0].mxu0
      %v5222 = vadd.f32 %v4633, %v5221
      %v5223 = vpop.f32.mrb[0].mxu0
      %v5224 = vpop.f32.mrb[0].mxu0
      %v5225 = vadd.f32 %v4633, %v5224
      %v5226 = vpop.f32.mrb[0].mxu0
      %5227 = vmatprep.mubr.bf16.mxu0 0
      %5228 = vmatmul.mubr.bf16.gmra.mrb[0].mxu0 %v4548
      %v5229 = vpop.f32.mrb[0].mxu0
      %v5230 = vadd.f32 %v4633, %v5229
      %v5231 = vpop.f32.mrb[0].mxu0
      %v5232 = vpop.f32.mrb[0].mxu0
      %v5233 = vadd.f32 %v4633, %v5232
      %v5234 = vpop.f32.mrb[0].mxu0
      %5235 = vmatprep.mubr.bf16.mxu0 0
      %5236 = vmatmul.mubr.bf16.gmra.mrb[0].mxu0 %v4549
      %v5237 = vpop.f32.mrb[0].mxu0
      %v5238 = vadd.f32 %v4633, %v5237
      %v5239 = vpop.f32.mrb[0].mxu0
      %v5240 = vpop.f32.mrb[0].mxu0
      %v5241 = vadd.f32 %v4633, %v5240
      %v5242 = vpop.f32.mrb[0].mxu0
      %5243 = vmatprep.mubr.bf16.mxu0 0
      %5244 = vmatmul.mubr.bf16.gmra.mrb[0].mxu0 %v4550
      %v5245 = vpop.f32.mrb[0].mxu0
      %v5246 = vadd.f32 %v4633, %v5245
      %v5247 = vpop.f32.mrb[0].mxu0
      %v5248 = vpop.f32.mrb[0].mxu0
      %v5249 = vadd.f32 %v4633, %v5248
      %v5250 = vpop.f32.mrb[0].mxu0
      %5251 = vmatprep.mubr.bf16.mxu0 0
      %5252 = vmatmul.mubr.bf16.gmra.mrb[0].mxu0 %v4551
      %v5253 = vpop.f32.mrb[0].mxu0
      %v5254 = vadd.f32 %v4633, %v5253
      %v5255 = vpop.f32.mrb[0].mxu0
      %v5256 = vpop.f32.mrb[0].mxu0
      %v5257 = vadd.f32 %v4633, %v5256
      %v5258 = vpop.f32.mrb[0].mxu0
      %5259 = vmatprep.mubr.bf16.mxu0 0
      %5260 = vmatmul.mubr.bf16.gmra.mrb[0].mxu0 %v4552
      %v5261 = vpop.f32.mrb[0].mxu0
      %v5262 = vadd.f32 %v4633, %v5261
      %v5263 = vpop.f32.mrb[0].mxu0
      %v5264 = vpop.f32.mrb[0].mxu0
      %v5265 = vadd.f32 %v4633, %v5264
      %v5266 = vpop.f32.mrb[0].mxu0
      %5267 = vmatprep.mubr.bf16.mxu0 0
      %5268 = vmatmul.mubr.bf16.gmra.mrb[0].mxu0 %v4553
      %v5269 = vpop.f32.mrb[0].mxu0
      %v5270 = vadd.f32 %v4633, %v5269
      %v5271 = vpop.f32.mrb[0].mxu0
      %v5272 = vpop.f32.mrb[0].mxu0
      %v5273 = vadd.f32 %v4633, %v5272
      %v5274 = vpop.f32.mrb[0].mxu0
      %5275 = vmatprep.mubr.bf16.mxu0 0
      %5276 = vmatmul.mubr.bf16.gmra.mrb[0].mxu0 %v4554
      %v5277 = vpop.f32.mrb[0].mxu0
      %v5278 = vadd.f32 %v4633, %v5277
      %v5279 = vpop.f32.mrb[0].mxu0
      %v5280 = vpop.f32.mrb[0].mxu0
      %v5281 = vadd.f32 %v4633, %v5280
      %v5282 = vpop.f32.mrb[0].mxu0
      %5283 = vmatprep.mubr.bf16.mxu0 0
      %5284 = vmatmul.mubr.bf16.gmra.mrb[0].mxu0 %v4555
      %v5285 = vpop.f32.mrb[0].mxu0
      %v5286 = vadd.f32 %v4633, %v5285
      %v5287 = vpop.f32.mrb[0].mxu0
      %v5288 = vpop.f32.mrb[0].mxu0
      %v5289 = vadd.f32 %v4633, %v5288
      %v5290 = vpop.f32.mrb[0].mxu0
      %5291 = vmatprep.mubr.bf16.mxu0 0
      %5292 = vmatmul.mubr.bf16.gmra.mrb[0].mxu0 %v4556
      %v5293 = vpop.f32.mrb[0].mxu0
      %v5294 = vadd.f32 %v4633, %v5293
      %v5295 = vpop.f32.mrb[0].mxu0
      %v5296 = vpop.f32.mrb[0].mxu0
      %v5297 = vadd.f32 %v4633, %v5296
      %v5298 = vpop.f32.mrb[0].mxu0
      %5299 = vmatprep.mubr.bf16.mxu0 0
      %5300 = vmatmul.mubr.bf16.gmra.mrb[0].mxu0 %v4557
      %v5301 = vpop.f32.mrb[0].mxu0
      %v5302 = vadd.f32 %v4633, %v5301
      %v5303 = vpop.f32.mrb[0].mxu0
      %v5304 = vpop.f32.mrb[0].mxu0
      %v5305 = vadd.f32 %v4633, %v5304
      %v5306 = vpop.f32.mrb[0].mxu0
      %5307 = vmatprep.mubr.bf16.mxu0 0
      %5308 = vmatmul.mubr.bf16.gmra.mrb[0].mxu0 %v4558
      %v5309 = vpop.f32.mrb[0].mxu0
      %v5310 = vadd.f32 %v4633, %v5309
      %v5311 = vpop.f32.mrb[0].mxu0
      %v5312 = vpop.f32.mrb[0].mxu0
      %v5313 = vadd.f32 %v4633, %v5312
      %v5314 = vpop.f32.mrb[0].mxu0
      %5315 = vmatprep.mubr.bf16.mxu0 0
      %5316 = vmatmul.mubr.bf16.gmra.mrb[0].mxu0 %v4559
      %v5317 = vpop.f32.mrb[0].mxu0
      %v5318 = vadd.f32 %v4633, %v5317
      %v5319 = vpop.f32.mrb[0].mxu0
      %v5320 = vpop.f32.mrb[0].mxu0
      %v5321 = vadd.f32 %v4633, %v5320
      %v5322 = vpop.f32.mrb[0].mxu0
      %5323 = vmatprep.mubr.bf16.mxu0 0
      %5324 = vmatmul.mubr.bf16.gmra.mrb[0].mxu0 %v4560
      %v5325 = vpop.f32.mrb[0].mxu0
      %v5326 = vadd.f32 %v4633, %v5325
      %v5327 = vpop.f32.mrb[0].mxu0
      %v5328 = vpop.f32.mrb[0].mxu0
      %v5329 = vadd.f32 %v4633, %v5328
      %v5330 = vpop.f32.mrb[0].mxu0
      %5331 = vmatprep.mubr.bf16.mxu0 0
      %5332 = vmatmul.mubr.bf16.gmra.mrb[0].mxu0 %v4561
      %v5333 = vpop.f32.mrb[0].mxu0
      %v5334 = vadd.f32 %v4633, %v5333
      %v5335 = vpop.f32.mrb[0].mxu0
      %v5336 = vpop.f32.mrb[0].mxu0
      %v5337 = vadd.f32 %v4633, %v5336
      %v5338 = vpop.f32.mrb[0].mxu0
      %5339 = vmatprep.mubr.bf16.mxu0 0
      %5340 = vmatmul.mubr.bf16.gmra.mrb[0].mxu0 %v4562
      %v5341 = vpop.f32.mrb[0].mxu0
      %v5342 = vadd.f32 %v4633, %v5341
      %v5343 = vpop.f32.mrb[0].mxu0
      %v5344 = vpop.f32.mrb[0].mxu0
      %v5345 = vadd.f32 %v4633, %v5344
      %v5346 = vpop.f32.mrb[0].mxu0
      %5347 = vmatprep.mubr.bf16.mxu0 0
      %5348 = vmatmul.mubr.bf16.gmra.mrb[0].mxu0 %v4563
      %v5349 = vpop.f32.mrb[0].mxu0
      %v5350 = vadd.f32 %v4633, %v5349
      %v5351 = vpop.f32.mrb[0].mxu0
      %v5352 = vpop.f32.mrb[0].mxu0
      %v5353 = vadd.f32 %v4633, %v5352
      %v5354 = vpop.f32.mrb[0].mxu0
      %5355 = vmatprep.mubr.bf16.mxu0 0
      %5356 = vmatmul.mubr.bf16.gmra.mrb[0].mxu0 %v4564
      %v5357 = vpop.f32.mrb[0].mxu0
      %v5358 = vadd.f32 %v4633, %v5357
      %v5359 = vpop.f32.mrb[0].mxu0
      %v5360 = vpop.f32.mrb[0].mxu0
      %v5361 = vadd.f32 %v4633, %v5360
      %v5362 = vpop.f32.mrb[0].mxu0
      %5363 = vmatprep.mubr.bf16.mxu0 0
      %5364 = vmatmul.mubr.bf16.gmra.mrb[0].mxu0 %v4565
      %v5365 = vpop.f32.mrb[0].mxu0
      %v5366 = vadd.f32 %v4633, %v5365
      %v5367 = vpop.f32.mrb[0].mxu0
      %v5368 = vpop.f32.mrb[0].mxu0
      %v5369 = vadd.f32 %v4633, %v5368
      %v5370 = vpop.f32.mrb[0].mxu0
      %5371 = vmatprep.mubr.bf16.mxu0 0
      %5372 = vmatmul.mubr.bf16.gmra.mrb[0].mxu0 %v4566
      %v5373 = vpop.f32.mrb[0].mxu0
      %v5374 = vadd.f32 %v4633, %v5373
      %v5375 = vpop.f32.mrb[0].mxu0
      %v5376 = vpop.f32.mrb[0].mxu0
      %v5377 = vadd.f32 %v4633, %v5376
      %v5378 = vpop.f32.mrb[0].mxu0
      %5379 = vmatprep.mubr.bf16.mxu0 0
      %5380 = vmatmul.mubr.bf16.gmra.mrb[0].mxu0 %v4567
      %v5381 = vpop.f32.mrb[0].mxu0
      %v5382 = vadd.f32 %v4633, %v5381
      %v5383 = vpop.f32.mrb[0].mxu0
      %v5384 = vpop.f32.mrb[0].mxu0
      %v5385 = vadd.f32 %v4633, %v5384
      %v5386 = vpop.f32.mrb[0].mxu0
      %5387 = vmatprep.mubr.bf16.mxu0 0
      %5388 = vmatmul.mubr.bf16.gmra.mrb[0].mxu0 %v4568
      %v5389 = vpop.f32.mrb[0].mxu0
      %v5390 = vadd.f32 %v4633, %v5389
      %v5391 = vpop.f32.mrb[0].mxu0
      %v5392 = vpop.f32.mrb[0].mxu0
      %v5393 = vadd.f32 %v4633, %v5392
      %v5394 = vpop.f32.mrb[0].mxu0
      %5395 = vmatprep.mubr.bf16.mxu0 0
      %5396 = vmatmul.mubr.bf16.gmra.mrb[0].mxu0 %v4569
      %v5397 = vpop.f32.mrb[0].mxu0
      %v5398 = vadd.f32 %v4633, %v5397
      %v5399 = vpop.f32.mrb[0].mxu0
      %v5400 = vpop.f32.mrb[0].mxu0
      %v5401 = vadd.f32 %v4633, %v5400
      %v5402 = vpop.f32.mrb[0].mxu0
      %5403 = vmatprep.mubr.bf16.mxu0 0
      %5404 = vmatmul.mubr.bf16.gmra.mrb[0].mxu0 %v4570
      %v5405 = vpop.f32.mrb[0].mxu0
      %v5406 = vadd.f32 %v4633, %v5405
      %v5407 = vpop.f32.mrb[0].mxu0
      %v5408 = vpop.f32.mrb[0].mxu0
      %v5409 = vadd.f32 %v4633, %v5408
      %v5410 = vpop.f32.mrb[0].mxu0
      %5411 = vmatprep.mubr.bf16.mxu0 0
      %5412 = vmatmul.mubr.bf16.gmra.mrb[0].mxu0 %v4571
      %v5413 = vpop.f32.mrb[0].mxu0
      %v5414 = vadd.f32 %v4633, %v5413
      %v5415 = vpop.f32.mrb[0].mxu0
      %v5416 = vpop.f32.mrb[0].mxu0
      %v5417 = vadd.f32 %v4633, %v5416
      %v5418 = vpop.f32.mrb[0].mxu0
      %5419 = vmatprep.mubr.bf16.mxu0 0
      %5420 = vmatmul.mubr.bf16.gmra.mrb[0].mxu0 %v4572
      %v5421 = vpop.f32.mrb[0].mxu0
      %v5422 = vadd.f32 %v4633, %v5421
      %v5423 = vpop.f32.mrb[0].mxu0
      %v5424 = vpop.f32.mrb[0].mxu0
      %v5425 = vadd.f32 %v4633, %v5424
      %v5426 = vpop.f32.mrb[0].mxu0
      %5427 = vmatprep.mubr.bf16.mxu0 0
      %5428 = vmatmul.mubr.bf16.gmra.mrb[0].mxu0 %v4573
      %v5429 = vpop.f32.mrb[0].mxu0
      %v5430 = vadd.f32 %v4633, %v5429
      %v5431 = vpop.f32.mrb[0].mxu0
      %v5432 = vpop.f32.mrb[0].mxu0
      %v5433 = vadd.f32 %v4633, %v5432
      %v5434 = vpop.f32.mrb[0].mxu0
      %5435 = vmatprep.mubr.bf16.mxu0 0
      %5436 = vmatmul.mubr.bf16.gmra.mrb[0].mxu0 %v4574
      %v5437 = vpop.f32.mrb[0].mxu0
      %v5438 = vadd.f32 %v4633, %v5437
      %v5439 = vpop.f32.mrb[0].mxu0
      %v5440 = vpop.f32.mrb[0].mxu0
      %v5441 = vadd.f32 %v4633, %v5440
      %v5442 = vpop.f32.mrb[0].mxu0
      %5443 = vmatprep.mubr.bf16.mxu0 0
      %5444 = vmatmul.mubr.bf16.gmra.mrb[0].mxu0 %v4575
      %v5445 = vpop.f32.mrb[0].mxu0
      %v5446 = vadd.f32 %v4633, %v5445
      %v5447 = vpop.f32.mrb[0].mxu0
      %v5448 = vpop.f32.mrb[0].mxu0
      %v5449 = vadd.f32 %v4633, %v5448
      %v5450 = vpop.f32.mrb[0].mxu0
      %5451 = vmatprep.mubr.bf16.mxu0 0
      %5452 = vmatmul.mubr.bf16.gmra.mrb[0].mxu0 %v4576
      %v5453 = vpop.f32.mrb[0].mxu0
      %v5454 = vadd.f32 %v4633, %v5453
      %v5455 = vpop.f32.mrb[0].mxu0
      %v5456 = vpop.f32.mrb[0].mxu0
      %v5457 = vadd.f32 %v4633, %v5456
      %v5458 = vpop.f32.mrb[0].mxu0
      %5459 = vmatprep.mubr.bf16.mxu0 0
      %5460 = vmatmul.mubr.bf16.gmra.mrb[0].mxu0 %v4577
      %v5461 = vpop.f32.mrb[0].mxu0
      %v5462 = vadd.f32 %v4633, %v5461
      %v5463 = vpop.f32.mrb[0].mxu0
      %v5464 = vpop.f32.mrb[0].mxu0
      %v5465 = vadd.f32 %v4633, %v5464
      %v5466 = vpop.f32.mrb[0].mxu0
      %5467 = vmatprep.mubr.bf16.mxu0 0
      %5468 = vmatmul.mubr.bf16.gmra.mrb[0].mxu0 %v4578
      %v5469 = vpop.f32.mrb[0].mxu0
      %v5470 = vadd.f32 %v4633, %v5469
      %v5471 = vpop.f32.mrb[0].mxu0
      %v5472 = vpop.f32.mrb[0].mxu0
      %v5473 = vadd.f32 %v4633, %v5472
      %v5474 = vpop.f32.mrb[0].mxu0
      %5475 = vmatprep.mubr.bf16.mxu0 0
      %5476 = vmatmul.mubr.bf16.gmra.mrb[0].mxu0 %v4579
      %v5477 = vpop.f32.mrb[0].mxu0
      %v5478 = vadd.f32 %v4633, %v5477
      %v5479 = vpop.f32.mrb[0].mxu0
      %v5480 = vpop.f32.mrb[0].mxu0
      %v5481 = vadd.f32 %v4633, %v5480
      %v5482 = vpop.f32.mrb[0].mxu0
      %5483 = vmatprep.mubr.bf16.mxu0 0
      %5484 = vmatmul.mubr.bf16.gmra.mrb[0].mxu0 %v4580
      %v5485 = vpop.f32.mrb[0].mxu0
      %v5486 = vadd.f32 %v4633, %v5485
      %v5487 = vpop.f32.mrb[0].mxu0
      %v5488 = vpop.f32.mrb[0].mxu0
      %v5489 = vadd.f32 %v4633, %v5488
      %v5490 = vpop.f32.mrb[0].mxu0
      %5491 = vmatprep.mubr.bf16.mxu0 0
      %5492 = vmatmul.mubr.bf16.gmra.mrb[0].mxu0 %v4581
      %v5493 = vpop.f32.mrb[0].mxu0
      %v5494 = vadd.f32 %v4633, %v5493
      %v5495 = vpop.f32.mrb[0].mxu0
      %v5496 = vpop.f32.mrb[0].mxu0
      %v5497 = vadd.f32 %v4633, %v5496
      %v5498 = vpop.f32.mrb[0].mxu0
      %5499 = vmatprep.mubr.bf16.mxu0 0
      %5500 = vmatmul.mubr.bf16.gmra.mrb[0].mxu0 %v4582
      %v5501 = vpop.f32.mrb[0].mxu0
      %v5502 = vadd.f32 %v4633, %v5501
      %v5503 = vpop.f32.mrb[0].mxu0
      %v5504 = vpop.f32.mrb[0].mxu0
      %v5505 = vadd.f32 %v4633, %v5504
      %v5506 = vpop.f32.mrb[0].mxu0
      %5507 = vmatprep.mubr.bf16.mxu0 0
      %5508 = vmatmul.mubr.bf16.gmra.mrb[0].mxu0 %v4583
      %v5509 = vpop.f32.mrb[0].mxu0
      %v5510 = vadd.f32 %v4633, %v5509
      %v5511 = vpop.f32.mrb[0].mxu0
      %v5512 = vpop.f32.mrb[0].mxu0
      %v5513 = vadd.f32 %v4633, %v5512
      %v5514 = vpop.f32.mrb[0].mxu0
      %5515 = vmatprep.mubr.bf16.mxu0 0
      %5516 = vmatmul.mubr.bf16.gmra.mrb[0].mxu0 %v4584
      %v5517 = vpop.f32.mrb[0].mxu0
      %v5518 = vadd.f32 %v4633, %v5517
      %v5519 = vpop.f32.mrb[0].mxu0
      %v5520 = vpop.f32.mrb[0].mxu0
      %v5521 = vadd.f32 %v4633, %v5520
      %v5522 = vpop.f32.mrb[0].mxu0
      %5523 = vmatprep.mubr.bf16.mxu0 0
      %5524 = vmatmul.mubr.bf16.gmra.mrb[0].mxu0 %v4585
      %v5525 = vpop.f32.mrb[0].mxu0
      %v5526 = vadd.f32 %v4633, %v5525
      %v5527 = vpop.f32.mrb[0].mxu0
      %v5528 = vpop.f32.mrb[0].mxu0
      %v5529 = vadd.f32 %v4633, %v5528
      %v5530 = vpop.f32.mrb[0].mxu0
      %5531 = vmatprep.mubr.bf16.mxu0 0
      %5532 = vmatmul.mubr.bf16.gmra.mrb[0].mxu0 %v4586
      %v5533 = vpop.f32.mrb[0].mxu0
      %v5534 = vadd.f32 %v4633, %v5533
      %v5535 = vpop.f32.mrb[0].mxu0
      %v5536 = vpop.f32.mrb[0].mxu0
      %v5537 = vadd.f32 %v4633, %v5536
      %v5538 = vpop.f32.mrb[0].mxu0
      %5539 = vmatprep.mubr.bf16.mxu0 0
      %5540 = vmatmul.mubr.bf16.gmra.mrb[0].mxu0 %v4587
      %v5541 = vpop.f32.mrb[0].mxu0
      %v5542 = vadd.f32 %v4633, %v5541
      %v5543 = vpop.f32.mrb[0].mxu0
      %v5544 = vpop.f32.mrb[0].mxu0
      %v5545 = vadd.f32 %v4633, %v5544
      %v5546 = vpop.f32.mrb[0].mxu0
      %5547 = vmatprep.mubr.bf16.mxu0 0
      %5548 = vmatmul.mubr.bf16.gmra.mrb[0].mxu0 %v4588
      %v5549 = vpop.f32.mrb[0].mxu0
      %v5550 = vadd.f32 %v4633, %v5549
      %v5551 = vpop.f32.mrb[0].mxu0
      %v5552 = vpop.f32.mrb[0].mxu0
      %v5553 = vadd.f32 %v4633, %v5552
      %v5554 = vpop.f32.mrb[0].mxu0
      %5555 = vmatprep.mubr.bf16.mxu0 0
      %5556 = vmatmul.mubr.bf16.gmra.mrb[0].mxu0 %v4589
      %v5557 = vpop.f32.mrb[0].mxu0
      %v5558 = vadd.f32 %v4633, %v5557
      %v5559 = vpop.f32.mrb[0].mxu0
      %v5560 = vpop.f32.mrb[0].mxu0
      %v5561 = vadd.f32 %v4633, %v5560
      %v5562 = vpop.f32.mrb[0].mxu0
      %5563 = vmatprep.mubr.bf16.mxu0 0
      %5564 = vmatmul.mubr.bf16.gmra.mrb[0].mxu0 %v4590
      %v5565 = vpop.f32.mrb[0].mxu0
      %v5566 = vadd.f32 %v4633, %v5565
      %v5567 = vpop.f32.mrb[0].mxu0
      %v5568 = vpop.f32.mrb[0].mxu0
      %v5569 = vadd.f32 %v4633, %v5568
      %v5570 = vpop.f32.mrb[0].mxu0
      %5571 = vmatprep.mubr.bf16.mxu0 0
      %5572 = vmatmul.mubr.bf16.gmra.mrb[0].mxu0 %v4591
      %v5573 = vpop.f32.mrb[0].mxu0
      %v5574 = vadd.f32 %v4633, %v5573
      %v5575 = vpop.f32.mrb[0].mxu0
      %v5576 = vpop.f32.mrb[0].mxu0
      %v5577 = vadd.f32 %v4633, %v5576
      %v5578 = vpop.f32.mrb[0].mxu0
      %5579 = vmatprep.mubr.bf16.mxu0 0
      %5580 = vmatmul.mubr.bf16.gmra.mrb[0].mxu0 %v4592
      %v5581 = vpop.f32.mrb[0].mxu0
      %v5582 = vadd.f32 %v4633, %v5581
      %v5583 = vpop.f32.mrb[0].mxu0
      %v5584 = vpop.f32.mrb[0].mxu0
      %v5585 = vadd.f32 %v4633, %v5584
      %v5586 = vpop.f32.mrb[0].mxu0
      %5587 = vmatprep.mubr.bf16.mxu0 0
      %5588 = vmatmul.mubr.bf16.gmra.mrb[0].mxu0 %v4593
      %v5589 = vpop.f32.mrb[0].mxu0
      %v5590 = vadd.f32 %v4633, %v5589
      %v5591 = vpop.f32.mrb[0].mxu0
      %v5592 = vpop.f32.mrb[0].mxu0
      %v5593 = vadd.f32 %v4633, %v5592
      %v5594 = vpop.f32.mrb[0].mxu0
      %5595 = vmatprep.mubr.bf16.mxu0 0
      %5596 = vmatmul.mubr.bf16.gmra.mrb[0].mxu0 %v4594
      %v5597 = vpop.f32.mrb[0].mxu0
      %v5598 = vadd.f32 %v4633, %v5597
      %v5599 = vpop.f32.mrb[0].mxu0
      %v5600 = vpop.f32.mrb[0].mxu0
      %v5601 = vadd.f32 %v4633, %v5600
      %v5602 = vpop.f32.mrb[0].mxu0
      %5603 = vmatprep.mubr.bf16.mxu0 0
      %5604 = vmatmul.mubr.bf16.gmra.mrb[0].mxu0 %v4595
      %v5605 = vpop.f32.mrb[0].mxu0
      %v5606 = vadd.f32 %v4633, %v5605
      %v5607 = vpop.f32.mrb[0].mxu0
      %v5608 = vpop.f32.mrb[0].mxu0
      %v5609 = vadd.f32 %v4633, %v5608
      %v5610 = vpop.f32.mrb[0].mxu0
      %5611 = vmatprep.mubr.bf16.mxu0 0
      %5612 = vmatmul.mubr.bf16.gmra.mrb[0].mxu0 %v4596
      %v5613 = vpop.f32.mrb[0].mxu0
      %v5614 = vadd.f32 %v4633, %v5613
      %v5615 = vpop.f32.mrb[0].mxu0
      %v5616 = vpop.f32.mrb[0].mxu0
      %v5617 = vadd.f32 %v4633, %v5616
      %v5618 = vpop.f32.mrb[0].mxu0
      %5619 = vmatprep.mubr.bf16.mxu0 0
      %5620 = vmatmul.mubr.bf16.gmra.mrb[0].mxu0 %v4597
      %v5621 = vpop.f32.mrb[0].mxu0
      %v5622 = vadd.f32 %v4633, %v5621
      %v5623 = vpop.f32.mrb[0].mxu0
      %v5624 = vpop.f32.mrb[0].mxu0
      %v5625 = vadd.f32 %v4633, %v5624
      %v5626 = vpop.f32.mrb[0].mxu0
      %5627 = vmatprep.mubr.bf16.mxu0 0
      %5628 = vmatmul.mubr.bf16.gmra.mrb[0].mxu0 %v4598
      %v5629 = vpop.f32.mrb[0].mxu0
      %v5630 = vadd.f32 %v4633, %v5629
      %v5631 = vpop.f32.mrb[0].mxu0
      %v5632 = vpop.f32.mrb[0].mxu0
      %v5633 = vadd.f32 %v4633, %v5632
      %v5634 = vpop.f32.mrb[0].mxu0
      %5635 = vmatprep.mubr.bf16.mxu0 0
      %5636 = vmatmul.mubr.bf16.gmra.mrb[0].mxu0 %v4599
      %v5637 = vpop.f32.mrb[0].mxu0
      %v5638 = vadd.f32 %v4633, %v5637
      %v5639 = vpop.f32.mrb[0].mxu0
      %v5640 = vpop.f32.mrb[0].mxu0
      %v5641 = vadd.f32 %v4633, %v5640
      %v5642 = vpop.f32.mrb[0].mxu0
      %5643 = vmatprep.mubr.bf16.mxu0 0
      %5644 = vmatmul.mubr.bf16.gmra.mrb[0].mxu0 %v4600
      %v5645 = vpop.f32.mrb[0].mxu0
      %v5646 = vadd.f32 %v4633, %v5645
      %v5647 = vpop.f32.mrb[0].mxu0
      %v5648 = vpop.f32.mrb[0].mxu0
      %v5649 = vadd.f32 %v4633, %v5648
      %v5650 = vpop.f32.mrb[0].mxu0
      %5651 = vmatprep.mubr.bf16.mxu0 0
      %5652 = vmatmul.mubr.bf16.gmra.mrb[0].mxu0 %v4601
      %v5653 = vpop.f32.mrb[0].mxu0
      %v5654 = vadd.f32 %v4633, %v5653
      %v5655 = vpop.f32.mrb[0].mxu0
      %v5656 = vpop.f32.mrb[0].mxu0
      %v5657 = vadd.f32 %v4633, %v5656
      %v5658 = vpop.f32.mrb[0].mxu0
      %5659 = vmatprep.mubr.bf16.mxu0 0
      %5660 = vmatmul.mubr.bf16.gmra.mrb[0].mxu0 %v4602
      %v5661 = vpop.f32.mrb[0].mxu0
      %v5662 = vadd.f32 %v4633, %v5661
      %v5663 = vpop.f32.mrb[0].mxu0
      %v5664 = vpop.f32.mrb[0].mxu0
      %v5665 = vadd.f32 %v4633, %v5664
      %v5666 = vpop.f32.mrb[0].mxu0
      %5667 = vmatprep.mubr.bf16.mxu0 0
      %5668 = vmatmul.mubr.bf16.gmra.mrb[0].mxu0 %v4603
      %v5669 = vpop.f32.mrb[0].mxu0
      %v5670 = vadd.f32 %v4633, %v5669
      %v5671 = vpop.f32.mrb[0].mxu0
      %v5672 = vpop.f32.mrb[0].mxu0
      %v5673 = vadd.f32 %v4633, %v5672
      %v5674 = vpop.f32.mrb[0].mxu0
      %5675 = vmatprep.mubr.bf16.mxu0 0
      %5676 = vmatmul.mubr.bf16.gmra.mrb[0].mxu0 %v4604
      %v5677 = vpop.f32.mrb[0].mxu0
      %v5678 = vadd.f32 %v4633, %v5677
      %v5679 = vpop.f32.mrb[0].mxu0
      %v5680 = vpop.f32.mrb[0].mxu0
      %v5681 = vadd.f32 %v4633, %v5680
      %v5682 = vpop.f32.mrb[0].mxu0
      %5683 = vmatprep.mubr.bf16.mxu0 0
      %5684 = vmatmul.mubr.bf16.gmra.mrb[0].mxu0 %v4605
      %v5685 = vpop.f32.mrb[0].mxu0
      %v5686 = vadd.f32 %v4633, %v5685
      %v5687 = vpop.f32.mrb[0].mxu0
      %v5688 = vpop.f32.mrb[0].mxu0
      %v5689 = vadd.f32 %v4633, %v5688
      %v5690 = vpop.f32.mrb[0].mxu0
      %5691 = vmatprep.mubr.bf16.mxu0 0
      %5692 = vmatmul.mubr.bf16.gmra.mrb[0].mxu0 %v4606
      %v5693 = vpop.f32.mrb[0].mxu0
      %v5694 = vadd.f32 %v4633, %v5693
      %v5695 = vpop.f32.mrb[0].mxu0
      %v5696 = vpop.f32.mrb[0].mxu0
      %v5697 = vadd.f32 %v4633, %v5696
      %v5698 = vpop.f32.mrb[0].mxu0
      %5699 = vmatprep.mubr.bf16.mxu0 0
      %5700 = vmatmul.mubr.bf16.gmra.mrb[0].mxu0 %v4607
      %v5701 = vpop.f32.mrb[0].mxu0
      %v5702 = vadd.f32 %v4633, %v5701
      %v5703 = vpop.f32.mrb[0].mxu0
      %v5704 = vpop.f32.mrb[0].mxu0
      %v5705 = vadd.f32 %v4633, %v5704
      %v5706 = vpop.f32.mrb[0].mxu0
      %5707 = vmatprep.mubr.bf16.mxu0 0
      %5708 = vmatmul.mubr.bf16.gmra.mrb[0].mxu0 %v4608
      %v5709 = vpop.f32.mrb[0].mxu0
      %v5710 = vadd.f32 %v4633, %v5709
      %v5711 = vpop.f32.mrb[0].mxu0
      %v5712 = vpop.f32.mrb[0].mxu0
      %v5713 = vadd.f32 %v4633, %v5712
      %v5714 = vpop.f32.mrb[0].mxu0
      %5715 = vmatprep.mubr.bf16.mxu0 0
      %5716 = vmatmul.mubr.bf16.gmra.mrb[0].mxu0 %v4609
      %v5717 = vpop.f32.mrb[0].mxu0
      %v5718 = vadd.f32 %v4633, %v5717
      %v5719 = vpop.f32.mrb[0].mxu0
      %v5720 = vpop.f32.mrb[0].mxu0
      %v5721 = vadd.f32 %v4633, %v5720
      %v5722 = vpop.f32.mrb[0].mxu0
      %5723 = vmatprep.mubr.bf16.mxu0 0
      %5724 = vmatmul.mubr.bf16.gmra.mrb[0].mxu0 %v4610
      %v5725 = vpop.f32.mrb[0].mxu0
      %v5726 = vadd.f32 %v4633, %v5725
      %v5727 = vpop.f32.mrb[0].mxu0
      %v5728 = vpop.f32.mrb[0].mxu0
      %v5729 = vadd.f32 %v4633, %v5728
      %v5730 = vpop.f32.mrb[0].mxu0
      %5731 = vmatprep.mubr.bf16.mxu0 0
      %5732 = vmatmul.mubr.bf16.gmra.mrb[0].mxu0 %v4611
      %v5733 = vpop.f32.mrb[0].mxu0
      %v5734 = vadd.f32 %v4633, %v5733
      %v5735 = vpop.f32.mrb[0].mxu0
      %v5736 = vpop.f32.mrb[0].mxu0
      %v5737 = vadd.f32 %v4633, %v5736
      %v5738 = vpop.f32.mrb[0].mxu0
      %5739 = vdwg.mxu0
      %v5740 = vlaneseq
      %v5741 = vand.u32 %v5740, 127
      %vm5742 = vcmp.lt.s32.totalorder %v5741, 3
      %v5743 = vxor.u32 %v4718, 2147483648
      %v5744 = vxor.u32 %v4721, 2147483648
      %v5745 = vxor.u32 %v4726, 2147483648
      %v5746 = vxor.u32 %v4729, 2147483648
      %v5747 = vxor.u32 %v4734, 2147483648
      %v5748 = vxor.u32 %v4737, 2147483648
      %v5749 = vxor.u32 %v4742, 2147483648
      %v5750 = vxor.u32 %v4745, 2147483648
      %v5751 = vxor.u32 %v4750, 2147483648
      %v5752 = vxor.u32 %v4753, 2147483648
      %v5753 = vxor.u32 %v4758, 2147483648
      %v5754 = vxor.u32 %v4761, 2147483648
      %v5755 = vxor.u32 %v4766, 2147483648
      %v5756 = vxor.u32 %v4769, 2147483648
      %v5757 = vxor.u32 %v4774, 2147483648
      %v5758 = vxor.u32 %v4777, 2147483648
      %v5759 = vxor.u32 %v4782, 2147483648
      %v5760 = vxor.u32 %v4785, 2147483648
      %v5761 = vxor.u32 %v4790, 2147483648
      %v5762 = vxor.u32 %v4793, 2147483648
      %v5763 = vxor.u32 %v4798, 2147483648
      %v5764 = vxor.u32 %v4801, 2147483648
      %v5765 = vxor.u32 %v4806, 2147483648
      %v5766 = vxor.u32 %v4809, 2147483648
      %v5767 = vxor.u32 %v4814, 2147483648
      %v5768 = vxor.u32 %v4817, 2147483648
      %v5769 = vxor.u32 %v4822, 2147483648
      %v5770 = vxor.u32 %v4825, 2147483648
      %v5771 = vxor.u32 %v4830, 2147483648
      %v5772 = vxor.u32 %v4833, 2147483648
      %v5773 = vxor.u32 %v4838, 2147483648
      %v5774 = vxor.u32 %v4841, 2147483648
      %v5775 = vxor.u32 %v4846, 2147483648
      %v5776 = vxor.u32 %v4849, 2147483648
      %v5777 = vxor.u32 %v4854, 2147483648
      %v5778 = vxor.u32 %v4857, 2147483648
      %v5779 = vxor.u32 %v4862, 2147483648
      %v5780 = vxor.u32 %v4865, 2147483648
      %v5781 = vxor.u32 %v4870, 2147483648
      %v5782 = vxor.u32 %v4873, 2147483648
      %v5783 = vxor.u32 %v4878, 2147483648
      %v5784 = vxor.u32 %v4881, 2147483648
      %v5785 = vxor.u32 %v4886, 2147483648
      %v5786 = vxor.u32 %v4889, 2147483648
      %v5787 = vxor.u32 %v4894, 2147483648
      %v5788 = vxor.u32 %v4897, 2147483648
      %v5789 = vxor.u32 %v4902, 2147483648
      %v5790 = vxor.u32 %v4905, 2147483648
      %v5791 = vxor.u32 %v4910, 2147483648
      %v5792 = vxor.u32 %v4913, 2147483648
      %v5793 = vxor.u32 %v4918, 2147483648
      %v5794 = vxor.u32 %v4921, 2147483648
      %v5795 = vxor.u32 %v4926, 2147483648
      %v5796 = vxor.u32 %v4929, 2147483648
      %v5797 = vxor.u32 %v4934, 2147483648
      %v5798 = vxor.u32 %v4937, 2147483648
      %v5799 = vxor.u32 %v4942, 2147483648
      %v5800 = vxor.u32 %v4945, 2147483648
      %v5801 = vxor.u32 %v4950, 2147483648
      %v5802 = vxor.u32 %v4953, 2147483648
      %v5803 = vxor.u32 %v4958, 2147483648
      %v5804 = vxor.u32 %v4961, 2147483648
      %v5805 = vxor.u32 %v4966, 2147483648
      %v5806 = vxor.u32 %v4969, 2147483648
      %v5807 = vxor.u32 %v4974, 2147483648
      %v5808 = vxor.u32 %v4977, 2147483648
      %v5809 = vxor.u32 %v4982, 2147483648
      %v5810 = vxor.u32 %v4985, 2147483648
      %v5811 = vxor.u32 %v4990, 2147483648
      %v5812 = vxor.u32 %v4993, 2147483648
      %v5813 = vxor.u32 %v4998, 2147483648
      %v5814 = vxor.u32 %v5001, 2147483648
      %v5815 = vxor.u32 %v5006, 2147483648
      %v5816 = vxor.u32 %v5009, 2147483648
      %v5817 = vxor.u32 %v5014, 2147483648
      %v5818 = vxor.u32 %v5017, 2147483648
      %v5819 = vxor.u32 %v5022, 2147483648
      %v5820 = vxor.u32 %v5025, 2147483648
      %v5821 = vxor.u32 %v5030, 2147483648
      %v5822 = vxor.u32 %v5033, 2147483648
      %v5823 = vxor.u32 %v5038, 2147483648
      %v5824 = vxor.u32 %v5041, 2147483648
      %v5825 = vxor.u32 %v5046, 2147483648
      %v5826 = vxor.u32 %v5049, 2147483648
      %v5827 = vxor.u32 %v5054, 2147483648
      %v5828 = vxor.u32 %v5057, 2147483648
      %v5829 = vxor.u32 %v5062, 2147483648
      %v5830 = vxor.u32 %v5065, 2147483648
      %v5831 = vxor.u32 %v5070, 2147483648
      %v5832 = vxor.u32 %v5073, 2147483648
      %v5833 = vxor.u32 %v5078, 2147483648
      %v5834 = vxor.u32 %v5081, 2147483648
      %v5835 = vxor.u32 %v5086, 2147483648
      %v5836 = vxor.u32 %v5089, 2147483648
      %v5837 = vxor.u32 %v5094, 2147483648
      %v5838 = vxor.u32 %v5097, 2147483648
      %v5839 = vxor.u32 %v5102, 2147483648
      %v5840 = vxor.u32 %v5105, 2147483648
      %v5841 = vxor.u32 %v5110, 2147483648
      %v5842 = vxor.u32 %v5113, 2147483648
      %v5843 = vxor.u32 %v5118, 2147483648
      %v5844 = vxor.u32 %v5121, 2147483648
      %v5845 = vxor.u32 %v5126, 2147483648
      %v5846 = vxor.u32 %v5129, 2147483648
      %v5847 = vxor.u32 %v5134, 2147483648
      %v5848 = vxor.u32 %v5137, 2147483648
      %v5849 = vxor.u32 %v5142, 2147483648
      %v5850 = vxor.u32 %v5145, 2147483648
      %v5851 = vxor.u32 %v5150, 2147483648
      %v5852 = vxor.u32 %v5153, 2147483648
      %v5853 = vxor.u32 %v5158, 2147483648
      %v5854 = vxor.u32 %v5161, 2147483648
      %v5855 = vxor.u32 %v5166, 2147483648
      %v5856 = vxor.u32 %v5169, 2147483648
      %v5857 = vxor.u32 %v5174, 2147483648
      %v5858 = vxor.u32 %v5177, 2147483648
      %v5859 = vxor.u32 %v5182, 2147483648
      %v5860 = vxor.u32 %v5185, 2147483648
      %v5861 = vxor.u32 %v5190, 2147483648
      %v5862 = vxor.u32 %v5193, 2147483648
      %v5863 = vxor.u32 %v5198, 2147483648
      %v5864 = vxor.u32 %v5201, 2147483648
      %v5865 = vxor.u32 %v5206, 2147483648
      %v5866 = vxor.u32 %v5209, 2147483648
      %v5867 = vxor.u32 %v5214, 2147483648
      %v5868 = vxor.u32 %v5217, 2147483648
      %v5869 = vxor.u32 %v5222, 2147483648
      %v5870 = vxor.u32 %v5225, 2147483648
      %v5871 = vxor.u32 %v5230, 2147483648
      %v5872 = vxor.u32 %v5233, 2147483648
      %v5873 = vxor.u32 %v5238, 2147483648
      %v5874 = vxor.u32 %v5241, 2147483648
      %v5875 = vxor.u32 %v5246, 2147483648
      %v5876 = vxor.u32 %v5249, 2147483648
      %v5877 = vxor.u32 %v5254, 2147483648
      %v5878 = vxor.u32 %v5257, 2147483648
      %v5879 = vxor.u32 %v5262, 2147483648
      %v5880 = vxor.u32 %v5265, 2147483648
      %v5881 = vxor.u32 %v5270, 2147483648
      %v5882 = vxor.u32 %v5273, 2147483648
      %v5883 = vxor.u32 %v5278, 2147483648
      %v5884 = vxor.u32 %v5281, 2147483648
      %v5885 = vxor.u32 %v5286, 2147483648
      %v5886 = vxor.u32 %v5289, 2147483648
      %v5887 = vxor.u32 %v5294, 2147483648
      %v5888 = vxor.u32 %v5297, 2147483648
      %v5889 = vxor.u32 %v5302, 2147483648
      %v5890 = vxor.u32 %v5305, 2147483648
      %v5891 = vxor.u32 %v5310, 2147483648
      %v5892 = vxor.u32 %v5313, 2147483648
      %v5893 = vxor.u32 %v5318, 2147483648
      %v5894 = vxor.u32 %v5321, 2147483648
      %v5895 = vxor.u32 %v5326, 2147483648
      %v5896 = vxor.u32 %v5329, 2147483648
      %v5897 = vxor.u32 %v5334, 2147483648
      %v5898 = vxor.u32 %v5337, 2147483648
      %v5899 = vxor.u32 %v5342, 2147483648
      %v5900 = vxor.u32 %v5345, 2147483648
      %v5901 = vxor.u32 %v5350, 2147483648
      %v5902 = vxor.u32 %v5353, 2147483648
      %v5903 = vxor.u32 %v5358, 2147483648
      %v5904 = vxor.u32 %v5361, 2147483648
      %v5905 = vxor.u32 %v5366, 2147483648
      %v5906 = vxor.u32 %v5369, 2147483648
      %v5907 = vxor.u32 %v5374, 2147483648
      %v5908 = vxor.u32 %v5377, 2147483648
      %v5909 = vxor.u32 %v5382, 2147483648
      %v5910 = vxor.u32 %v5385, 2147483648
      %v5911 = vxor.u32 %v5390, 2147483648
      %v5912 = vxor.u32 %v5393, 2147483648
      %v5913 = vxor.u32 %v5398, 2147483648
      %v5914 = vxor.u32 %v5401, 2147483648
      %v5915 = vxor.u32 %v5406, 2147483648
      %v5916 = vxor.u32 %v5409, 2147483648
      %v5917 = vxor.u32 %v5414, 2147483648
      %v5918 = vxor.u32 %v5417, 2147483648
      %v5919 = vxor.u32 %v5422, 2147483648
      %v5920 = vxor.u32 %v5425, 2147483648
      %v5921 = vxor.u32 %v5430, 2147483648
      %v5922 = vxor.u32 %v5433, 2147483648
      %v5923 = vxor.u32 %v5438, 2147483648
      %v5924 = vxor.u32 %v5441, 2147483648
      %v5925 = vxor.u32 %v5446, 2147483648
      %v5926 = vxor.u32 %v5449, 2147483648
      %v5927 = vxor.u32 %v5454, 2147483648
      %v5928 = vxor.u32 %v5457, 2147483648
      %v5929 = vxor.u32 %v5462, 2147483648
      %v5930 = vxor.u32 %v5465, 2147483648
      %v5931 = vxor.u32 %v5470, 2147483648
      %v5932 = vxor.u32 %v5473, 2147483648
      %v5933 = vxor.u32 %v5478, 2147483648
      %v5934 = vxor.u32 %v5481, 2147483648
      %v5935 = vxor.u32 %v5486, 2147483648
      %v5936 = vxor.u32 %v5489, 2147483648
      %v5937 = vxor.u32 %v5494, 2147483648
      %v5938 = vxor.u32 %v5497, 2147483648
      %v5939 = vxor.u32 %v5502, 2147483648
      %v5940 = vxor.u32 %v5505, 2147483648
      %v5941 = vxor.u32 %v5510, 2147483648
      %v5942 = vxor.u32 %v5513, 2147483648
      %v5943 = vxor.u32 %v5518, 2147483648
      %v5944 = vxor.u32 %v5521, 2147483648
      %v5945 = vxor.u32 %v5526, 2147483648
      %v5946 = vxor.u32 %v5529, 2147483648
      %v5947 = vxor.u32 %v5534, 2147483648
      %v5948 = vxor.u32 %v5537, 2147483648
      %v5949 = vxor.u32 %v5542, 2147483648
      %v5950 = vxor.u32 %v5545, 2147483648
      %v5951 = vxor.u32 %v5550, 2147483648
      %v5952 = vxor.u32 %v5553, 2147483648
      %v5953 = vxor.u32 %v5558, 2147483648
      %v5954 = vxor.u32 %v5561, 2147483648
      %v5955 = vxor.u32 %v5566, 2147483648
      %v5956 = vxor.u32 %v5569, 2147483648
      %v5957 = vxor.u32 %v5574, 2147483648
      %v5958 = vxor.u32 %v5577, 2147483648
      %v5959 = vxor.u32 %v5582, 2147483648
      %v5960 = vxor.u32 %v5585, 2147483648
      %v5961 = vxor.u32 %v5590, 2147483648
      %v5962 = vxor.u32 %v5593, 2147483648
      %v5963 = vxor.u32 %v5598, 2147483648
      %v5964 = vxor.u32 %v5601, 2147483648
      %v5965 = vxor.u32 %v5606, 2147483648
      %v5966 = vxor.u32 %v5609, 2147483648
      %v5967 = vxor.u32 %v5614, 2147483648
      %v5968 = vxor.u32 %v5617, 2147483648
      %v5969 = vxor.u32 %v5622, 2147483648
      %v5970 = vxor.u32 %v5625, 2147483648
      %v5971 = vxor.u32 %v5630, 2147483648
      %v5972 = vxor.u32 %v5633, 2147483648
      %v5973 = vxor.u32 %v5638, 2147483648
      %v5974 = vxor.u32 %v5641, 2147483648
      %v5975 = vxor.u32 %v5646, 2147483648
      %v5976 = vxor.u32 %v5649, 2147483648
      %v5977 = vxor.u32 %v5654, 2147483648
      %v5978 = vxor.u32 %v5657, 2147483648
      %v5979 = vxor.u32 %v5662, 2147483648
      %v5980 = vxor.u32 %v5665, 2147483648
      %v5981 = vxor.u32 %v5670, 2147483648
      %v5982 = vxor.u32 %v5673, 2147483648
      %v5983 = vxor.u32 %v5678, 2147483648
      %v5984 = vxor.u32 %v5681, 2147483648
      %v5985 = vxor.u32 %v5686, 2147483648
      %v5986 = vxor.u32 %v5689, 2147483648
      %v5987 = vxor.u32 %v5694, 2147483648
      %v5988 = vxor.u32 %v5697, 2147483648
      %v5989 = vxor.u32 %v5702, 2147483648
      %v5990 = vxor.u32 %v5705, 2147483648
      %v5991 = vxor.u32 %v5710, 2147483648
      %v5992 = vxor.u32 %v5713, 2147483648
      %v5993 = vxor.u32 %v5718, 2147483648
      %v5994 = vxor.u32 %v5721, 2147483648
      %v5995 = vxor.u32 %v5726, 2147483648
      %v5996 = vxor.u32 %v5729, 2147483648
      %v5997 = vxor.u32 %v5734, 2147483648
      %v5998 = vxor.u32 %v5737, 2147483648
      %v5999 = vmul.f32 %v5743, 1.442695
      %v6000 = vpow.pop %v5999
      %v6001 = vmul.f32 %v5744, 1.442695
      %v6002 = vpow.pop %v6001
      %v6003 = vmul.f32 %v5745, 1.442695
      %v6004 = vpow.pop %v6003
      %v6005 = vmul.f32 %v5746, 1.442695
      %v6006 = vpow.pop %v6005
      %v6007 = vmul.f32 %v5747, 1.442695
      %v6008 = vpow.pop %v6007
      %v6009 = vmul.f32 %v5748, 1.442695
      %v6010 = vpow.pop %v6009
      %v6011 = vmul.f32 %v5749, 1.442695
      %v6012 = vpow.pop %v6011
      %v6013 = vmul.f32 %v5750, 1.442695
      %v6014 = vpow.pop %v6013
      %v6015 = vmul.f32 %v5751, 1.442695
      %v6016 = vpow.pop %v6015
      %v6017 = vmul.f32 %v5752, 1.442695
      %v6018 = vpow.pop %v6017
      %v6019 = vmul.f32 %v5753, 1.442695
      %v6020 = vpow.pop %v6019
      %v6021 = vmul.f32 %v5754, 1.442695
      %v6022 = vpow.pop %v6021
      %v6023 = vmul.f32 %v5755, 1.442695
      %v6024 = vpow.pop %v6023
      %v6025 = vmul.f32 %v5756, 1.442695
      %v6026 = vpow.pop %v6025
      %v6027 = vmul.f32 %v5757, 1.442695
      %v6028 = vpow.pop %v6027
      %v6029 = vmul.f32 %v5758, 1.442695
      %v6030 = vpow.pop %v6029
      %v6031 = vmul.f32 %v5759, 1.442695
      %v6032 = vpow.pop %v6031
      %v6033 = vmul.f32 %v5760, 1.442695
      %v6034 = vpow.pop %v6033
      %v6035 = vmul.f32 %v5761, 1.442695
      %v6036 = vpow.pop %v6035
      %v6037 = vmul.f32 %v5762, 1.442695
      %v6038 = vpow.pop %v6037
      %v6039 = vmul.f32 %v5763, 1.442695
      %v6040 = vpow.pop %v6039
      %v6041 = vmul.f32 %v5764, 1.442695
      %v6042 = vpow.pop %v6041
      %v6043 = vmul.f32 %v5765, 1.442695
      %v6044 = vpow.pop %v6043
      %v6045 = vmul.f32 %v5766, 1.442695
      %v6046 = vpow.pop %v6045
      %v6047 = vmul.f32 %v5767, 1.442695
      %v6048 = vpow.pop %v6047
      %v6049 = vmul.f32 %v5768, 1.442695
      %v6050 = vpow.pop %v6049
      %v6051 = vmul.f32 %v5769, 1.442695
      %v6052 = vpow.pop %v6051
      %v6053 = vmul.f32 %v5770, 1.442695
      %v6054 = vpow.pop %v6053
      %v6055 = vmul.f32 %v5771, 1.442695
      %v6056 = vpow.pop %v6055
      %v6057 = vmul.f32 %v5772, 1.442695
      %v6058 = vpow.pop %v6057
      %v6059 = vmul.f32 %v5773, 1.442695
      %v6060 = vpow.pop %v6059
      %v6061 = vmul.f32 %v5774, 1.442695
      %v6062 = vpow.pop %v6061
      %v6063 = vmul.f32 %v5775, 1.442695
      %v6064 = vpow.pop %v6063
      %v6065 = vmul.f32 %v5776, 1.442695
      %v6066 = vpow.pop %v6065
      %v6067 = vmul.f32 %v5777, 1.442695
      %v6068 = vpow.pop %v6067
      %v6069 = vmul.f32 %v5778, 1.442695
      %v6070 = vpow.pop %v6069
      %v6071 = vmul.f32 %v5779, 1.442695
      %v6072 = vpow.pop %v6071
      %v6073 = vmul.f32 %v5780, 1.442695
      %v6074 = vpow.pop %v6073
      %v6075 = vmul.f32 %v5781, 1.442695
      %v6076 = vpow.pop %v6075
      %v6077 = vmul.f32 %v5782, 1.442695
      %v6078 = vpow.pop %v6077
      %v6079 = vmul.f32 %v5783, 1.442695
      %v6080 = vpow.pop %v6079
      %v6081 = vmul.f32 %v5784, 1.442695
      %v6082 = vpow.pop %v6081
      %v6083 = vmul.f32 %v5785, 1.442695
      %v6084 = vpow.pop %v6083
      %v6085 = vmul.f32 %v5786, 1.442695
      %v6086 = vpow.pop %v6085
      %v6087 = vmul.f32 %v5787, 1.442695
      %v6088 = vpow.pop %v6087
      %v6089 = vmul.f32 %v5788, 1.442695
      %v6090 = vpow.pop %v6089
      %v6091 = vmul.f32 %v5789, 1.442695
      %v6092 = vpow.pop %v6091
      %v6093 = vmul.f32 %v5790, 1.442695
      %v6094 = vpow.pop %v6093
      %v6095 = vmul.f32 %v5791, 1.442695
      %v6096 = vpow.pop %v6095
      %v6097 = vmul.f32 %v5792, 1.442695
      %v6098 = vpow.pop %v6097
      %v6099 = vmul.f32 %v5793, 1.442695
      %v6100 = vpow.pop %v6099
      %v6101 = vmul.f32 %v5794, 1.442695
      %v6102 = vpow.pop %v6101
      %v6103 = vmul.f32 %v5795, 1.442695
      %v6104 = vpow.pop %v6103
      %v6105 = vmul.f32 %v5796, 1.442695
      %v6106 = vpow.pop %v6105
      %v6107 = vmul.f32 %v5797, 1.442695
      %v6108 = vpow.pop %v6107
      %v6109 = vmul.f32 %v5798, 1.442695
      %v6110 = vpow.pop %v6109
      %v6111 = vmul.f32 %v5799, 1.442695
      %v6112 = vpow.pop %v6111
      %v6113 = vmul.f32 %v5800, 1.442695
      %v6114 = vpow.pop %v6113
      %v6115 = vmul.f32 %v5801, 1.442695
      %v6116 = vpow.pop %v6115
      %v6117 = vmul.f32 %v5802, 1.442695
      %v6118 = vpow.pop %v6117
      %v6119 = vmul.f32 %v5803, 1.442695
      %v6120 = vpow.pop %v6119
      %v6121 = vmul.f32 %v5804, 1.442695
      %v6122 = vpow.pop %v6121
      %v6123 = vmul.f32 %v5805, 1.442695
      %v6124 = vpow.pop %v6123
      %v6125 = vmul.f32 %v5806, 1.442695
      %v6126 = vpow.pop %v6125
      %v6127 = vmul.f32 %v5807, 1.442695
      %v6128 = vpow.pop %v6127
      %v6129 = vmul.f32 %v5808, 1.442695
      %v6130 = vpow.pop %v6129
      %v6131 = vmul.f32 %v5809, 1.442695
      %v6132 = vpow.pop %v6131
      %v6133 = vmul.f32 %v5810, 1.442695
      %v6134 = vpow.pop %v6133
      %v6135 = vmul.f32 %v5811, 1.442695
      %v6136 = vpow.pop %v6135
      %v6137 = vmul.f32 %v5812, 1.442695
      %v6138 = vpow.pop %v6137
      %v6139 = vmul.f32 %v5813, 1.442695
      %v6140 = vpow.pop %v6139
      %v6141 = vmul.f32 %v5814, 1.442695
      %v6142 = vpow.pop %v6141
      %v6143 = vmul.f32 %v5815, 1.442695
      %v6144 = vpow.pop %v6143
      %v6145 = vmul.f32 %v5816, 1.442695
      %v6146 = vpow.pop %v6145
      %v6147 = vmul.f32 %v5817, 1.442695
      %v6148 = vpow.pop %v6147
      %v6149 = vmul.f32 %v5818, 1.442695
      %v6150 = vpow.pop %v6149
      %v6151 = vmul.f32 %v5819, 1.442695
      %v6152 = vpow.pop %v6151
      %v6153 = vmul.f32 %v5820, 1.442695
      %v6154 = vpow.pop %v6153
      %v6155 = vmul.f32 %v5821, 1.442695
      %v6156 = vpow.pop %v6155
      %v6157 = vmul.f32 %v5822, 1.442695
      %v6158 = vpow.pop %v6157
      %v6159 = vmul.f32 %v5823, 1.442695
      %v6160 = vpow.pop %v6159
      %v6161 = vmul.f32 %v5824, 1.442695
      %v6162 = vpow.pop %v6161
      %v6163 = vmul.f32 %v5825, 1.442695
      %v6164 = vpow.pop %v6163
      %v6165 = vmul.f32 %v5826, 1.442695
      %v6166 = vpow.pop %v6165
      %v6167 = vmul.f32 %v5827, 1.442695
      %v6168 = vpow.pop %v6167
      %v6169 = vmul.f32 %v5828, 1.442695
      %v6170 = vpow.pop %v6169
      %v6171 = vmul.f32 %v5829, 1.442695
      %v6172 = vpow.pop %v6171
      %v6173 = vmul.f32 %v5830, 1.442695
      %v6174 = vpow.pop %v6173
      %v6175 = vmul.f32 %v5831, 1.442695
      %v6176 = vpow.pop %v6175
      %v6177 = vmul.f32 %v5832, 1.442695
      %v6178 = vpow.pop %v6177
      %v6179 = vmul.f32 %v5833, 1.442695
      %v6180 = vpow.pop %v6179
      %v6181 = vmul.f32 %v5834, 1.442695
      %v6182 = vpow.pop %v6181
      %v6183 = vmul.f32 %v5835, 1.442695
      %v6184 = vpow.pop %v6183
      %v6185 = vmul.f32 %v5836, 1.442695
      %v6186 = vpow.pop %v6185
      %v6187 = vmul.f32 %v5837, 1.442695
      %v6188 = vpow.pop %v6187
      %v6189 = vmul.f32 %v5838, 1.442695
      %v6190 = vpow.pop %v6189
      %v6191 = vmul.f32 %v5839, 1.442695
      %v6192 = vpow.pop %v6191
      %v6193 = vmul.f32 %v5840, 1.442695
      %v6194 = vpow.pop %v6193
      %v6195 = vmul.f32 %v5841, 1.442695
      %v6196 = vpow.pop %v6195
      %v6197 = vmul.f32 %v5842, 1.442695
      %v6198 = vpow.pop %v6197
      %v6199 = vmul.f32 %v5843, 1.442695
      %v6200 = vpow.pop %v6199
      %v6201 = vmul.f32 %v5844, 1.442695
      %v6202 = vpow.pop %v6201
      %v6203 = vmul.f32 %v5845, 1.442695
      %v6204 = vpow.pop %v6203
      %v6205 = vmul.f32 %v5846, 1.442695
      %v6206 = vpow.pop %v6205
      %v6207 = vmul.f32 %v5847, 1.442695
      %v6208 = vpow.pop %v6207
      %v6209 = vmul.f32 %v5848, 1.442695
      %v6210 = vpow.pop %v6209
      %v6211 = vmul.f32 %v5849, 1.442695
      %v6212 = vpow.pop %v6211
      %v6213 = vmul.f32 %v5850, 1.442695
      %v6214 = vpow.pop %v6213
      %v6215 = vmul.f32 %v5851, 1.442695
      %v6216 = vpow.pop %v6215
      %v6217 = vmul.f32 %v5852, 1.442695
      %v6218 = vpow.pop %v6217
      %v6219 = vmul.f32 %v5853, 1.442695
      %v6220 = vpow.pop %v6219
      %v6221 = vmul.f32 %v5854, 1.442695
      %v6222 = vpow.pop %v6221
      %v6223 = vmul.f32 %v5855, 1.442695
      %v6224 = vpow.pop %v6223
      %v6225 = vmul.f32 %v5856, 1.442695
      %v6226 = vpow.pop %v6225
      %v6227 = vmul.f32 %v5857, 1.442695
      %v6228 = vpow.pop %v6227
      %v6229 = vmul.f32 %v5858, 1.442695
      %v6230 = vpow.pop %v6229
      %v6231 = vmul.f32 %v5859, 1.442695
      %v6232 = vpow.pop %v6231
      %v6233 = vmul.f32 %v5860, 1.442695
      %v6234 = vpow.pop %v6233
      %v6235 = vmul.f32 %v5861, 1.442695
      %v6236 = vpow.pop %v6235
      %v6237 = vmul.f32 %v5862, 1.442695
      %v6238 = vpow.pop %v6237
      %v6239 = vmul.f32 %v5863, 1.442695
      %v6240 = vpow.pop %v6239
      %v6241 = vmul.f32 %v5864, 1.442695
      %v6242 = vpow.pop %v6241
      %v6243 = vmul.f32 %v5865, 1.442695
      %v6244 = vpow.pop %v6243
      %v6245 = vmul.f32 %v5866, 1.442695
      %v6246 = vpow.pop %v6245
      %v6247 = vmul.f32 %v5867, 1.442695
      %v6248 = vpow.pop %v6247
      %v6249 = vmul.f32 %v5868, 1.442695
      %v6250 = vpow.pop %v6249
      %v6251 = vmul.f32 %v5869, 1.442695
      %v6252 = vpow.pop %v6251
      %v6253 = vmul.f32 %v5870, 1.442695
      %v6254 = vpow.pop %v6253
      %v6255 = vmul.f32 %v5871, 1.442695
      %v6256 = vpow.pop %v6255
      %v6257 = vmul.f32 %v5872, 1.442695
      %v6258 = vpow.pop %v6257
      %v6259 = vmul.f32 %v5873, 1.442695
      %v6260 = vpow.pop %v6259
      %v6261 = vmul.f32 %v5874, 1.442695
      %v6262 = vpow.pop %v6261
      %v6263 = vmul.f32 %v5875, 1.442695
      %v6264 = vpow.pop %v6263
      %v6265 = vmul.f32 %v5876, 1.442695
      %v6266 = vpow.pop %v6265
      %v6267 = vmul.f32 %v5877, 1.442695
      %v6268 = vpow.pop %v6267
      %v6269 = vmul.f32 %v5878, 1.442695
      %v6270 = vpow.pop %v6269
      %v6271 = vmul.f32 %v5879, 1.442695
      %v6272 = vpow.pop %v6271
      %v6273 = vmul.f32 %v5880, 1.442695
      %v6274 = vpow.pop %v6273
      %v6275 = vmul.f32 %v5881, 1.442695
      %v6276 = vpow.pop %v6275
      %v6277 = vmul.f32 %v5882, 1.442695
      %v6278 = vpow.pop %v6277
      %v6279 = vmul.f32 %v5883, 1.442695
      %v6280 = vpow.pop %v6279
      %v6281 = vmul.f32 %v5884, 1.442695
      %v6282 = vpow.pop %v6281
      %v6283 = vmul.f32 %v5885, 1.442695
      %v6284 = vpow.pop %v6283
      %v6285 = vmul.f32 %v5886, 1.442695
      %v6286 = vpow.pop %v6285
      %v6287 = vmul.f32 %v5887, 1.442695
      %v6288 = vpow.pop %v6287
      %v6289 = vmul.f32 %v5888, 1.442695
      %v6290 = vpow.pop %v6289
      %v6291 = vmul.f32 %v5889, 1.442695
      %v6292 = vpow.pop %v6291
      %v6293 = vmul.f32 %v5890, 1.442695
      %v6294 = vpow.pop %v6293
      %v6295 = vmul.f32 %v5891, 1.442695
      %v6296 = vpow.pop %v6295
      %v6297 = vmul.f32 %v5892, 1.442695
      %v6298 = vpow.pop %v6297
      %v6299 = vmul.f32 %v5893, 1.442695
      %v6300 = vpow.pop %v6299
      %v6301 = vmul.f32 %v5894, 1.442695
      %v6302 = vpow.pop %v6301
      %v6303 = vmul.f32 %v5895, 1.442695
      %v6304 = vpow.pop %v6303
      %v6305 = vmul.f32 %v5896, 1.442695
      %v6306 = vpow.pop %v6305
      %v6307 = vmul.f32 %v5897, 1.442695
      %v6308 = vpow.pop %v6307
      %v6309 = vmul.f32 %v5898, 1.442695
      %v6310 = vpow.pop %v6309
      %v6311 = vmul.f32 %v5899, 1.442695
      %v6312 = vpow.pop %v6311
      %v6313 = vmul.f32 %v5900, 1.442695
      %v6314 = vpow.pop %v6313
      %v6315 = vmul.f32 %v5901, 1.442695
      %v6316 = vpow.pop %v6315
      %v6317 = vmul.f32 %v5902, 1.442695
      %v6318 = vpow.pop %v6317
      %v6319 = vmul.f32 %v5903, 1.442695
      %v6320 = vpow.pop %v6319
      %v6321 = vmul.f32 %v5904, 1.442695
      %v6322 = vpow.pop %v6321
      %v6323 = vmul.f32 %v5905, 1.442695
      %v6324 = vpow.pop %v6323
      %v6325 = vmul.f32 %v5906, 1.442695
      %v6326 = vpow.pop %v6325
      %v6327 = vmul.f32 %v5907, 1.442695
      %v6328 = vpow.pop %v6327
      %v6329 = vmul.f32 %v5908, 1.442695
      %v6330 = vpow.pop %v6329
      %v6331 = vmul.f32 %v5909, 1.442695
      %v6332 = vpow.pop %v6331
      %v6333 = vmul.f32 %v5910, 1.442695
      %v6334 = vpow.pop %v6333
      %v6335 = vmul.f32 %v5911, 1.442695
      %v6336 = vpow.pop %v6335
      %v6337 = vmul.f32 %v5912, 1.442695
      %v6338 = vpow.pop %v6337
      %v6339 = vmul.f32 %v5913, 1.442695
      %v6340 = vpow.pop %v6339
      %v6341 = vmul.f32 %v5914, 1.442695
      %v6342 = vpow.pop %v6341
      %v6343 = vmul.f32 %v5915, 1.442695
      %v6344 = vpow.pop %v6343
      %v6345 = vmul.f32 %v5916, 1.442695
      %v6346 = vpow.pop %v6345
      %v6347 = vmul.f32 %v5917, 1.442695
      %v6348 = vpow.pop %v6347
      %v6349 = vmul.f32 %v5918, 1.442695
      %v6350 = vpow.pop %v6349
      %v6351 = vmul.f32 %v5919, 1.442695
      %v6352 = vpow.pop %v6351
      %v6353 = vmul.f32 %v5920, 1.442695
      %v6354 = vpow.pop %v6353
      %v6355 = vmul.f32 %v5921, 1.442695
      %v6356 = vpow.pop %v6355
      %v6357 = vmul.f32 %v5922, 1.442695
      %v6358 = vpow.pop %v6357
      %v6359 = vmul.f32 %v5923, 1.442695
      %v6360 = vpow.pop %v6359
      %v6361 = vmul.f32 %v5924, 1.442695
      %v6362 = vpow.pop %v6361
      %v6363 = vmul.f32 %v5925, 1.442695
      %v6364 = vpow.pop %v6363
      %v6365 = vmul.f32 %v5926, 1.442695
      %v6366 = vpow.pop %v6365
      %v6367 = vmul.f32 %v5927, 1.442695
      %v6368 = vpow.pop %v6367
      %v6369 = vmul.f32 %v5928, 1.442695
      %v6370 = vpow.pop %v6369
      %v6371 = vmul.f32 %v5929, 1.442695
      %v6372 = vpow.pop %v6371
      %v6373 = vmul.f32 %v5930, 1.442695
      %v6374 = vpow.pop %v6373
      %v6375 = vmul.f32 %v5931, 1.442695
      %v6376 = vpow.pop %v6375
      %v6377 = vmul.f32 %v5932, 1.442695
      %v6378 = vpow.pop %v6377
      %v6379 = vmul.f32 %v5933, 1.442695
      %v6380 = vpow.pop %v6379
      %v6381 = vmul.f32 %v5934, 1.442695
      %v6382 = vpow.pop %v6381
      %v6383 = vmul.f32 %v5935, 1.442695
      %v6384 = vpow.pop %v6383
      %v6385 = vmul.f32 %v5936, 1.442695
      %v6386 = vpow.pop %v6385
      %v6387 = vmul.f32 %v5937, 1.442695
      %v6388 = vpow.pop %v6387
      %v6389 = vmul.f32 %v5938, 1.442695
      %v6390 = vpow.pop %v6389
      %v6391 = vmul.f32 %v5939, 1.442695
      %v6392 = vpow.pop %v6391
      %v6393 = vmul.f32 %v5940, 1.442695
      %v6394 = vpow.pop %v6393
      %v6395 = vmul.f32 %v5941, 1.442695
      %v6396 = vpow.pop %v6395
      %v6397 = vmul.f32 %v5942, 1.442695
      %v6398 = vpow.pop %v6397
      %v6399 = vmul.f32 %v5943, 1.442695
      %v6400 = vpow.pop %v6399
      %v6401 = vmul.f32 %v5944, 1.442695
      %v6402 = vpow.pop %v6401
      %v6403 = vmul.f32 %v5945, 1.442695
      %v6404 = vpow.pop %v6403
      %v6405 = vmul.f32 %v5946, 1.442695
      %v6406 = vpow.pop %v6405
      %v6407 = vmul.f32 %v5947, 1.442695
      %v6408 = vpow.pop %v6407
      %v6409 = vmul.f32 %v5948, 1.442695
      %v6410 = vpow.pop %v6409
      %v6411 = vmul.f32 %v5949, 1.442695
      %v6412 = vpow.pop %v6411
      %v6413 = vmul.f32 %v5950, 1.442695
      %v6414 = vpow.pop %v6413
      %v6415 = vmul.f32 %v5951, 1.442695
      %v6416 = vpow.pop %v6415
      %v6417 = vmul.f32 %v5952, 1.442695
      %v6418 = vpow.pop %v6417
      %v6419 = vmul.f32 %v5953, 1.442695
      %v6420 = vpow.pop %v6419
      %v6421 = vmul.f32 %v5954, 1.442695
      %v6422 = vpow.pop %v6421
      %v6423 = vmul.f32 %v5955, 1.442695
      %v6424 = vpow.pop %v6423
      %v6425 = vmul.f32 %v5956, 1.442695
      %v6426 = vpow.pop %v6425
      %v6427 = vmul.f32 %v5957, 1.442695
      %v6428 = vpow.pop %v6427
      %v6429 = vmul.f32 %v5958, 1.442695
      %v6430 = vpow.pop %v6429
      %v6431 = vmul.f32 %v5959, 1.442695
      %v6432 = vpow.pop %v6431
      %v6433 = vmul.f32 %v5960, 1.442695
      %v6434 = vpow.pop %v6433
      %v6435 = vmul.f32 %v5961, 1.442695
      %v6436 = vpow.pop %v6435
      %v6437 = vmul.f32 %v5962, 1.442695
      %v6438 = vpow.pop %v6437
      %v6439 = vmul.f32 %v5963, 1.442695
      %v6440 = vpow.pop %v6439
      %v6441 = vmul.f32 %v5964, 1.442695
      %v6442 = vpow.pop %v6441
      %v6443 = vmul.f32 %v5965, 1.442695
      %v6444 = vpow.pop %v6443
      %v6445 = vmul.f32 %v5966, 1.442695
      %v6446 = vpow.pop %v6445
      %v6447 = vmul.f32 %v5967, 1.442695
      %v6448 = vpow.pop %v6447
      %v6449 = vmul.f32 %v5968, 1.442695
      %v6450 = vpow.pop %v6449
      %v6451 = vmul.f32 %v5969, 1.442695
      %v6452 = vpow.pop %v6451
      %v6453 = vmul.f32 %v5970, 1.442695
      %v6454 = vpow.pop %v6453
      %v6455 = vmul.f32 %v5971, 1.442695
      %v6456 = vpow.pop %v6455
      %v6457 = vmul.f32 %v5972, 1.442695
      %v6458 = vpow.pop %v6457
      %v6459 = vmul.f32 %v5973, 1.442695
      %v6460 = vpow.pop %v6459
      %v6461 = vmul.f32 %v5974, 1.442695
      %v6462 = vpow.pop %v6461
      %v6463 = vmul.f32 %v5975, 1.442695
      %v6464 = vpow.pop %v6463
      %v6465 = vmul.f32 %v5976, 1.442695
      %v6466 = vpow.pop %v6465
      %v6467 = vmul.f32 %v5977, 1.442695
      %v6468 = vpow.pop %v6467
      %v6469 = vmul.f32 %v5978, 1.442695
      %v6470 = vpow.pop %v6469
      %v6471 = vmul.f32 %v5979, 1.442695
      %v6472 = vpow.pop %v6471
      %v6473 = vmul.f32 %v5980, 1.442695
      %v6474 = vpow.pop %v6473
      %v6475 = vmul.f32 %v5981, 1.442695
      %v6476 = vpow.pop %v6475
      %v6477 = vmul.f32 %v5982, 1.442695
      %v6478 = vpow.pop %v6477
      %v6479 = vmul.f32 %v5983, 1.442695
      %v6480 = vpow.pop %v6479
      %v6481 = vmul.f32 %v5984, 1.442695
      %v6482 = vpow.pop %v6481
      %v6483 = vmul.f32 %v5985, 1.442695
      %v6484 = vpow.pop %v6483
      %v6485 = vmul.f32 %v5986, 1.442695
      %v6486 = vpow.pop %v6485
      %v6487 = vmul.f32 %v5987, 1.442695
      %v6488 = vpow.pop %v6487
      %v6489 = vmul.f32 %v5988, 1.442695
      %v6490 = vpow.pop %v6489
      %v6491 = vmul.f32 %v5989, 1.442695
      %v6492 = vpow.pop %v6491
      %v6493 = vmul.f32 %v5990, 1.442695
      %v6494 = vpow.pop %v6493
      %v6495 = vmul.f32 %v5991, 1.442695
      %v6496 = vpow.pop %v6495
      %v6497 = vmul.f32 %v5992, 1.442695
      %v6498 = vpow.pop %v6497
      %v6499 = vmul.f32 %v5993, 1.442695
      %v6500 = vpow.pop %v6499
      %v6501 = vmul.f32 %v5994, 1.442695
      %v6502 = vpow.pop %v6501
      %v6503 = vmul.f32 %v5995, 1.442695
      %v6504 = vpow.pop %v6503
      %v6505 = vmul.f32 %v5996, 1.442695
      %v6506 = vpow.pop %v6505
      %v6507 = vmul.f32 %v5997, 1.442695
      %v6508 = vpow.pop %v6507
      %v6509 = vmul.f32 %v5998, 1.442695
      %v6510 = vpow.pop %v6509
      %v6511 = vadd.f32 %v6000, 1.0
      %v6512 = vadd.f32 %v6002, 1.0
      %v6513 = vadd.f32 %v6004, 1.0
      %v6514 = vadd.f32 %v6006, 1.0
      %v6515 = vadd.f32 %v6008, 1.0
      %v6516 = vadd.f32 %v6010, 1.0
      %v6517 = vadd.f32 %v6012, 1.0
      %v6518 = vadd.f32 %v6014, 1.0
      %v6519 = vadd.f32 %v6016, 1.0
      %v6520 = vadd.f32 %v6018, 1.0
      %v6521 = vadd.f32 %v6020, 1.0
      %v6522 = vadd.f32 %v6022, 1.0
      %v6523 = vadd.f32 %v6024, 1.0
      %v6524 = vadd.f32 %v6026, 1.0
      %v6525 = vadd.f32 %v6028, 1.0
      %v6526 = vadd.f32 %v6030, 1.0
      %v6527 = vadd.f32 %v6032, 1.0
      %v6528 = vadd.f32 %v6034, 1.0
      %v6529 = vadd.f32 %v6036, 1.0
      %v6530 = vadd.f32 %v6038, 1.0
      %v6531 = vadd.f32 %v6040, 1.0
      %v6532 = vadd.f32 %v6042, 1.0
      %v6533 = vadd.f32 %v6044, 1.0
      %v6534 = vadd.f32 %v6046, 1.0
      %v6535 = vadd.f32 %v6048, 1.0
      %v6536 = vadd.f32 %v6050, 1.0
      %v6537 = vadd.f32 %v6052, 1.0
      %v6538 = vadd.f32 %v6054, 1.0
      %v6539 = vadd.f32 %v6056, 1.0
      %v6540 = vadd.f32 %v6058, 1.0
      %v6541 = vadd.f32 %v6060, 1.0
      %v6542 = vadd.f32 %v6062, 1.0
      %v6543 = vadd.f32 %v6064, 1.0
      %v6544 = vadd.f32 %v6066, 1.0
      %v6545 = vadd.f32 %v6068, 1.0
      %v6546 = vadd.f32 %v6070, 1.0
      %v6547 = vadd.f32 %v6072, 1.0
      %v6548 = vadd.f32 %v6074, 1.0
      %v6549 = vadd.f32 %v6076, 1.0
      %v6550 = vadd.f32 %v6078, 1.0
      %v6551 = vadd.f32 %v6080, 1.0
      %v6552 = vadd.f32 %v6082, 1.0
      %v6553 = vadd.f32 %v6084, 1.0
      %v6554 = vadd.f32 %v6086, 1.0
      %v6555 = vadd.f32 %v6088, 1.0
      %v6556 = vadd.f32 %v6090, 1.0
      %v6557 = vadd.f32 %v6092, 1.0
      %v6558 = vadd.f32 %v6094, 1.0
      %v6559 = vadd.f32 %v6096, 1.0
      %v6560 = vadd.f32 %v6098, 1.0
      %v6561 = vadd.f32 %v6100, 1.0
      %v6562 = vadd.f32 %v6102, 1.0
      %v6563 = vadd.f32 %v6104, 1.0
      %v6564 = vadd.f32 %v6106, 1.0
      %v6565 = vadd.f32 %v6108, 1.0
      %v6566 = vadd.f32 %v6110, 1.0
      %v6567 = vadd.f32 %v6112, 1.0
      %v6568 = vadd.f32 %v6114, 1.0
      %v6569 = vadd.f32 %v6116, 1.0
      %v6570 = vadd.f32 %v6118, 1.0
      %v6571 = vadd.f32 %v6120, 1.0
      %v6572 = vadd.f32 %v6122, 1.0
      %v6573 = vadd.f32 %v6124, 1.0
      %v6574 = vadd.f32 %v6126, 1.0
      %v6575 = vadd.f32 %v6128, 1.0
      %v6576 = vadd.f32 %v6130, 1.0
      %v6577 = vadd.f32 %v6132, 1.0
      %v6578 = vadd.f32 %v6134, 1.0
      %v6579 = vadd.f32 %v6136, 1.0
      %v6580 = vadd.f32 %v6138, 1.0
      %v6581 = vadd.f32 %v6140, 1.0
      %v6582 = vadd.f32 %v6142, 1.0
      %v6583 = vadd.f32 %v6144, 1.0
      %v6584 = vadd.f32 %v6146, 1.0
      %v6585 = vadd.f32 %v6148, 1.0
      %v6586 = vadd.f32 %v6150, 1.0
      %v6587 = vadd.f32 %v6152, 1.0
      %v6588 = vadd.f32 %v6154, 1.0
      %v6589 = vadd.f32 %v6156, 1.0
      %v6590 = vadd.f32 %v6158, 1.0
      %v6591 = vadd.f32 %v6160, 1.0
      %v6592 = vadd.f32 %v6162, 1.0
      %v6593 = vadd.f32 %v6164, 1.0
      %v6594 = vadd.f32 %v6166, 1.0
      %v6595 = vadd.f32 %v6168, 1.0
      %v6596 = vadd.f32 %v6170, 1.0
      %v6597 = vadd.f32 %v6172, 1.0
      %v6598 = vadd.f32 %v6174, 1.0
      %v6599 = vadd.f32 %v6176, 1.0
      %v6600 = vadd.f32 %v6178, 1.0
      %v6601 = vadd.f32 %v6180, 1.0
      %v6602 = vadd.f32 %v6182, 1.0
      %v6603 = vadd.f32 %v6184, 1.0
      %v6604 = vadd.f32 %v6186, 1.0
      %v6605 = vadd.f32 %v6188, 1.0
      %v6606 = vadd.f32 %v6190, 1.0
      %v6607 = vadd.f32 %v6192, 1.0
      %v6608 = vadd.f32 %v6194, 1.0
      %v6609 = vadd.f32 %v6196, 1.0
      %v6610 = vadd.f32 %v6198, 1.0
      %v6611 = vadd.f32 %v6200, 1.0
      %v6612 = vadd.f32 %v6202, 1.0
      %v6613 = vadd.f32 %v6204, 1.0
      %v6614 = vadd.f32 %v6206, 1.0
      %v6615 = vadd.f32 %v6208, 1.0
      %v6616 = vadd.f32 %v6210, 1.0
      %v6617 = vadd.f32 %v6212, 1.0
      %v6618 = vadd.f32 %v6214, 1.0
      %v6619 = vadd.f32 %v6216, 1.0
      %v6620 = vadd.f32 %v6218, 1.0
      %v6621 = vadd.f32 %v6220, 1.0
      %v6622 = vadd.f32 %v6222, 1.0
      %v6623 = vadd.f32 %v6224, 1.0
      %v6624 = vadd.f32 %v6226, 1.0
      %v6625 = vadd.f32 %v6228, 1.0
      %v6626 = vadd.f32 %v6230, 1.0
      %v6627 = vadd.f32 %v6232, 1.0
      %v6628 = vadd.f32 %v6234, 1.0
      %v6629 = vadd.f32 %v6236, 1.0
      %v6630 = vadd.f32 %v6238, 1.0
      %v6631 = vadd.f32 %v6240, 1.0
      %v6632 = vadd.f32 %v6242, 1.0
      %v6633 = vadd.f32 %v6244, 1.0
      %v6634 = vadd.f32 %v6246, 1.0
      %v6635 = vadd.f32 %v6248, 1.0
      %v6636 = vadd.f32 %v6250, 1.0
      %v6637 = vadd.f32 %v6252, 1.0
      %v6638 = vadd.f32 %v6254, 1.0
      %v6639 = vadd.f32 %v6256, 1.0
      %v6640 = vadd.f32 %v6258, 1.0
      %v6641 = vadd.f32 %v6260, 1.0
      %v6642 = vadd.f32 %v6262, 1.0
      %v6643 = vadd.f32 %v6264, 1.0
      %v6644 = vadd.f32 %v6266, 1.0
      %v6645 = vadd.f32 %v6268, 1.0
      %v6646 = vadd.f32 %v6270, 1.0
      %v6647 = vadd.f32 %v6272, 1.0
      %v6648 = vadd.f32 %v6274, 1.0
      %v6649 = vadd.f32 %v6276, 1.0
      %v6650 = vadd.f32 %v6278, 1.0
      %v6651 = vadd.f32 %v6280, 1.0
      %v6652 = vadd.f32 %v6282, 1.0
      %v6653 = vadd.f32 %v6284, 1.0
      %v6654 = vadd.f32 %v6286, 1.0
      %v6655 = vadd.f32 %v6288, 1.0
      %v6656 = vadd.f32 %v6290, 1.0
      %v6657 = vadd.f32 %v6292, 1.0
      %v6658 = vadd.f32 %v6294, 1.0
      %v6659 = vadd.f32 %v6296, 1.0
      %v6660 = vadd.f32 %v6298, 1.0
      %v6661 = vadd.f32 %v6300, 1.0
      %v6662 = vadd.f32 %v6302, 1.0
      %v6663 = vadd.f32 %v6304, 1.0
      %v6664 = vadd.f32 %v6306, 1.0
      %v6665 = vadd.f32 %v6308, 1.0
      %v6666 = vadd.f32 %v6310, 1.0
      %v6667 = vadd.f32 %v6312, 1.0
      %v6668 = vadd.f32 %v6314, 1.0
      %v6669 = vadd.f32 %v6316, 1.0
      %v6670 = vadd.f32 %v6318, 1.0
      %v6671 = vadd.f32 %v6320, 1.0
      %v6672 = vadd.f32 %v6322, 1.0
      %v6673 = vadd.f32 %v6324, 1.0
      %v6674 = vadd.f32 %v6326, 1.0
      %v6675 = vadd.f32 %v6328, 1.0
      %v6676 = vadd.f32 %v6330, 1.0
      %v6677 = vadd.f32 %v6332, 1.0
      %v6678 = vadd.f32 %v6334, 1.0
      %v6679 = vadd.f32 %v6336, 1.0
      %v6680 = vadd.f32 %v6338, 1.0
      %v6681 = vadd.f32 %v6340, 1.0
      %v6682 = vadd.f32 %v6342, 1.0
      %v6683 = vadd.f32 %v6344, 1.0
      %v6684 = vadd.f32 %v6346, 1.0
      %v6685 = vadd.f32 %v6348, 1.0
      %v6686 = vadd.f32 %v6350, 1.0
      %v6687 = vadd.f32 %v6352, 1.0
      %v6688 = vadd.f32 %v6354, 1.0
      %v6689 = vadd.f32 %v6356, 1.0
      %v6690 = vadd.f32 %v6358, 1.0
      %v6691 = vadd.f32 %v6360, 1.0
      %v6692 = vadd.f32 %v6362, 1.0
      %v6693 = vadd.f32 %v6364, 1.0
      %v6694 = vadd.f32 %v6366, 1.0
      %v6695 = vadd.f32 %v6368, 1.0
      %v6696 = vadd.f32 %v6370, 1.0
      %v6697 = vadd.f32 %v6372, 1.0
      %v6698 = vadd.f32 %v6374, 1.0
      %v6699 = vadd.f32 %v6376, 1.0
      %v6700 = vadd.f32 %v6378, 1.0
      %v6701 = vadd.f32 %v6380, 1.0
      %v6702 = vadd.f32 %v6382, 1.0
      %v6703 = vadd.f32 %v6384, 1.0
      %v6704 = vadd.f32 %v6386, 1.0
      %v6705 = vadd.f32 %v6388, 1.0
      %v6706 = vadd.f32 %v6390, 1.0
      %v6707 = vadd.f32 %v6392, 1.0
      %v6708 = vadd.f32 %v6394, 1.0
      %v6709 = vadd.f32 %v6396, 1.0
      %v6710 = vadd.f32 %v6398, 1.0
      %v6711 = vadd.f32 %v6400, 1.0
      %v6712 = vadd.f32 %v6402, 1.0
      %v6713 = vadd.f32 %v6404, 1.0
      %v6714 = vadd.f32 %v6406, 1.0
      %v6715 = vadd.f32 %v6408, 1.0
      %v6716 = vadd.f32 %v6410, 1.0
      %v6717 = vadd.f32 %v6412, 1.0
      %v6718 = vadd.f32 %v6414, 1.0
      %v6719 = vadd.f32 %v6416, 1.0
      %v6720 = vadd.f32 %v6418, 1.0
      %v6721 = vadd.f32 %v6420, 1.0
      %v6722 = vadd.f32 %v6422, 1.0
      %v6723 = vadd.f32 %v6424, 1.0
      %v6724 = vadd.f32 %v6426, 1.0
      %v6725 = vadd.f32 %v6428, 1.0
      %v6726 = vadd.f32 %v6430, 1.0
      %v6727 = vadd.f32 %v6432, 1.0
      %v6728 = vadd.f32 %v6434, 1.0
      %v6729 = vadd.f32 %v6436, 1.0
      %v6730 = vadd.f32 %v6438, 1.0
      %v6731 = vadd.f32 %v6440, 1.0
      %v6732 = vadd.f32 %v6442, 1.0
      %v6733 = vadd.f32 %v6444, 1.0
      %v6734 = vadd.f32 %v6446, 1.0
      %v6735 = vadd.f32 %v6448, 1.0
      %v6736 = vadd.f32 %v6450, 1.0
      %v6737 = vadd.f32 %v6452, 1.0
      %v6738 = vadd.f32 %v6454, 1.0
      %v6739 = vadd.f32 %v6456, 1.0
      %v6740 = vadd.f32 %v6458, 1.0
      %v6741 = vadd.f32 %v6460, 1.0
      %v6742 = vadd.f32 %v6462, 1.0
      %v6743 = vadd.f32 %v6464, 1.0
      %v6744 = vadd.f32 %v6466, 1.0
      %v6745 = vadd.f32 %v6468, 1.0
      %v6746 = vadd.f32 %v6470, 1.0
      %v6747 = vadd.f32 %v6472, 1.0
      %v6748 = vadd.f32 %v6474, 1.0
      %v6749 = vadd.f32 %v6476, 1.0
      %v6750 = vadd.f32 %v6478, 1.0
      %v6751 = vadd.f32 %v6480, 1.0
      %v6752 = vadd.f32 %v6482, 1.0
      %v6753 = vadd.f32 %v6484, 1.0
      %v6754 = vadd.f32 %v6486, 1.0
      %v6755 = vadd.f32 %v6488, 1.0
      %v6756 = vadd.f32 %v6490, 1.0
      %v6757 = vadd.f32 %v6492, 1.0
      %v6758 = vadd.f32 %v6494, 1.0
      %v6759 = vadd.f32 %v6496, 1.0
      %v6760 = vadd.f32 %v6498, 1.0
      %v6761 = vadd.f32 %v6500, 1.0
      %v6762 = vadd.f32 %v6502, 1.0
      %v6763 = vadd.f32 %v6504, 1.0
      %v6764 = vadd.f32 %v6506, 1.0
      %v6765 = vadd.f32 %v6508, 1.0
      %v6766 = vadd.f32 %v6510, 1.0
      %v6767 = vrcp.pop %v6511
      %v6768 = vmul.f32 1.0, %v6767
      %v6769 = vrcp.pop %v6512
      %v6770 = vmul.f32 1.0, %v6769
      %v6771 = vrcp.pop %v6513
      %v6772 = vmul.f32 1.0, %v6771
      %v6773 = vrcp.pop %v6514
      %v6774 = vmul.f32 1.0, %v6773
      %v6775 = vrcp.pop %v6515
      %v6776 = vmul.f32 1.0, %v6775
      %v6777 = vrcp.pop %v6516
      %v6778 = vmul.f32 1.0, %v6777
      %v6779 = vrcp.pop %v6517
      %v6780 = vmul.f32 1.0, %v6779
      %v6781 = vrcp.pop %v6518
      %v6782 = vmul.f32 1.0, %v6781
      %v6783 = vrcp.pop %v6519
      %v6784 = vmul.f32 1.0, %v6783
      %v6785 = vrcp.pop %v6520
      %v6786 = vmul.f32 1.0, %v6785
      %v6787 = vrcp.pop %v6521
      %v6788 = vmul.f32 1.0, %v6787
      %v6789 = vrcp.pop %v6522
      %v6790 = vmul.f32 1.0, %v6789
      %v6791 = vrcp.pop %v6523
      %v6792 = vmul.f32 1.0, %v6791
      %v6793 = vrcp.pop %v6524
      %v6794 = vmul.f32 1.0, %v6793
      %v6795 = vrcp.pop %v6525
      %v6796 = vmul.f32 1.0, %v6795
      %v6797 = vrcp.pop %v6526
      %v6798 = vmul.f32 1.0, %v6797
      %v6799 = vrcp.pop %v6527
      %v6800 = vmul.f32 1.0, %v6799
      %v6801 = vrcp.pop %v6528
      %v6802 = vmul.f32 1.0, %v6801
      %v6803 = vrcp.pop %v6529
      %v6804 = vmul.f32 1.0, %v6803
      %v6805 = vrcp.pop %v6530
      %v6806 = vmul.f32 1.0, %v6805
      %v6807 = vrcp.pop %v6531
      %v6808 = vmul.f32 1.0, %v6807
      %v6809 = vrcp.pop %v6532
      %v6810 = vmul.f32 1.0, %v6809
      %v6811 = vrcp.pop %v6533
      %v6812 = vmul.f32 1.0, %v6811
      %v6813 = vrcp.pop %v6534
      %v6814 = vmul.f32 1.0, %v6813
      %v6815 = vrcp.pop %v6535
      %v6816 = vmul.f32 1.0, %v6815
      %v6817 = vrcp.pop %v6536
      %v6818 = vmul.f32 1.0, %v6817
      %v6819 = vrcp.pop %v6537
      %v6820 = vmul.f32 1.0, %v6819
      %v6821 = vrcp.pop %v6538
      %v6822 = vmul.f32 1.0, %v6821
      %v6823 = vrcp.pop %v6539
      %v6824 = vmul.f32 1.0, %v6823
      %v6825 = vrcp.pop %v6540
      %v6826 = vmul.f32 1.0, %v6825
      %v6827 = vrcp.pop %v6541
      %v6828 = vmul.f32 1.0, %v6827
      %v6829 = vrcp.pop %v6542
      %v6830 = vmul.f32 1.0, %v6829
      %v6831 = vrcp.pop %v6543
      %v6832 = vmul.f32 1.0, %v6831
      %v6833 = vrcp.pop %v6544
      %v6834 = vmul.f32 1.0, %v6833
      %v6835 = vrcp.pop %v6545
      %v6836 = vmul.f32 1.0, %v6835
      %v6837 = vrcp.pop %v6546
      %v6838 = vmul.f32 1.0, %v6837
      %v6839 = vrcp.pop %v6547
      %v6840 = vmul.f32 1.0, %v6839
      %v6841 = vrcp.pop %v6548
      %v6842 = vmul.f32 1.0, %v6841
      %v6843 = vrcp.pop %v6549
      %v6844 = vmul.f32 1.0, %v6843
      %v6845 = vrcp.pop %v6550
      %v6846 = vmul.f32 1.0, %v6845
      %v6847 = vrcp.pop %v6551
      %v6848 = vmul.f32 1.0, %v6847
      %v6849 = vrcp.pop %v6552
      %v6850 = vmul.f32 1.0, %v6849
      %v6851 = vrcp.pop %v6553
      %v6852 = vmul.f32 1.0, %v6851
      %v6853 = vrcp.pop %v6554
      %v6854 = vmul.f32 1.0, %v6853
      %v6855 = vrcp.pop %v6555
      %v6856 = vmul.f32 1.0, %v6855
      %v6857 = vrcp.pop %v6556
      %v6858 = vmul.f32 1.0, %v6857
      %v6859 = vrcp.pop %v6557
      %v6860 = vmul.f32 1.0, %v6859
      %v6861 = vrcp.pop %v6558
      %v6862 = vmul.f32 1.0, %v6861
      %v6863 = vrcp.pop %v6559
      %v6864 = vmul.f32 1.0, %v6863
      %v6865 = vrcp.pop %v6560
      %v6866 = vmul.f32 1.0, %v6865
      %v6867 = vrcp.pop %v6561
      %v6868 = vmul.f32 1.0, %v6867
      %v6869 = vrcp.pop %v6562
      %v6870 = vmul.f32 1.0, %v6869
      %v6871 = vrcp.pop %v6563
      %v6872 = vmul.f32 1.0, %v6871
      %v6873 = vrcp.pop %v6564
      %v6874 = vmul.f32 1.0, %v6873
      %v6875 = vrcp.pop %v6565
      %v6876 = vmul.f32 1.0, %v6875
      %v6877 = vrcp.pop %v6566
      %v6878 = vmul.f32 1.0, %v6877
      %v6879 = vrcp.pop %v6567
      %v6880 = vmul.f32 1.0, %v6879
      %v6881 = vrcp.pop %v6568
      %v6882 = vmul.f32 1.0, %v6881
      %v6883 = vrcp.pop %v6569
      %v6884 = vmul.f32 1.0, %v6883
      %v6885 = vrcp.pop %v6570
      %v6886 = vmul.f32 1.0, %v6885
      %v6887 = vrcp.pop %v6571
      %v6888 = vmul.f32 1.0, %v6887
      %v6889 = vrcp.pop %v6572
      %v6890 = vmul.f32 1.0, %v6889
      %v6891 = vrcp.pop %v6573
      %v6892 = vmul.f32 1.0, %v6891
      %v6893 = vrcp.pop %v6574
      %v6894 = vmul.f32 1.0, %v6893
      %v6895 = vrcp.pop %v6575
      %v6896 = vmul.f32 1.0, %v6895
      %v6897 = vrcp.pop %v6576
      %v6898 = vmul.f32 1.0, %v6897
      %v6899 = vrcp.pop %v6577
      %v6900 = vmul.f32 1.0, %v6899
      %v6901 = vrcp.pop %v6578
      %v6902 = vmul.f32 1.0, %v6901
      %v6903 = vrcp.pop %v6579
      %v6904 = vmul.f32 1.0, %v6903
      %v6905 = vrcp.pop %v6580
      %v6906 = vmul.f32 1.0, %v6905
      %v6907 = vrcp.pop %v6581
      %v6908 = vmul.f32 1.0, %v6907
      %v6909 = vrcp.pop %v6582
      %v6910 = vmul.f32 1.0, %v6909
      %v6911 = vrcp.pop %v6583
      %v6912 = vmul.f32 1.0, %v6911
      %v6913 = vrcp.pop %v6584
      %v6914 = vmul.f32 1.0, %v6913
      %v6915 = vrcp.pop %v6585
      %v6916 = vmul.f32 1.0, %v6915
      %v6917 = vrcp.pop %v6586
      %v6918 = vmul.f32 1.0, %v6917
      %v6919 = vrcp.pop %v6587
      %v6920 = vmul.f32 1.0, %v6919
      %v6921 = vrcp.pop %v6588
      %v6922 = vmul.f32 1.0, %v6921
      %v6923 = vrcp.pop %v6589
      %v6924 = vmul.f32 1.0, %v6923
      %v6925 = vrcp.pop %v6590
      %v6926 = vmul.f32 1.0, %v6925
      %v6927 = vrcp.pop %v6591
      %v6928 = vmul.f32 1.0, %v6927
      %v6929 = vrcp.pop %v6592
      %v6930 = vmul.f32 1.0, %v6929
      %v6931 = vrcp.pop %v6593
      %v6932 = vmul.f32 1.0, %v6931
      %v6933 = vrcp.pop %v6594
      %v6934 = vmul.f32 1.0, %v6933
      %v6935 = vrcp.pop %v6595
      %v6936 = vmul.f32 1.0, %v6935
      %v6937 = vrcp.pop %v6596
      %v6938 = vmul.f32 1.0, %v6937
      %v6939 = vrcp.pop %v6597
      %v6940 = vmul.f32 1.0, %v6939
      %v6941 = vrcp.pop %v6598
      %v6942 = vmul.f32 1.0, %v6941
      %v6943 = vrcp.pop %v6599
      %v6944 = vmul.f32 1.0, %v6943
      %v6945 = vrcp.pop %v6600
      %v6946 = vmul.f32 1.0, %v6945
      %v6947 = vrcp.pop %v6601
      %v6948 = vmul.f32 1.0, %v6947
      %v6949 = vrcp.pop %v6602
      %v6950 = vmul.f32 1.0, %v6949
      %v6951 = vrcp.pop %v6603
      %v6952 = vmul.f32 1.0, %v6951
      %v6953 = vrcp.pop %v6604
      %v6954 = vmul.f32 1.0, %v6953
      %v6955 = vrcp.pop %v6605
      %v6956 = vmul.f32 1.0, %v6955
      %v6957 = vrcp.pop %v6606
      %v6958 = vmul.f32 1.0, %v6957
      %v6959 = vrcp.pop %v6607
      %v6960 = vmul.f32 1.0, %v6959
      %v6961 = vrcp.pop %v6608
      %v6962 = vmul.f32 1.0, %v6961
      %v6963 = vrcp.pop %v6609
      %v6964 = vmul.f32 1.0, %v6963
      %v6965 = vrcp.pop %v6610
      %v6966 = vmul.f32 1.0, %v6965
      %v6967 = vrcp.pop %v6611
      %v6968 = vmul.f32 1.0, %v6967
      %v6969 = vrcp.pop %v6612
      %v6970 = vmul.f32 1.0, %v6969
      %v6971 = vrcp.pop %v6613
      %v6972 = vmul.f32 1.0, %v6971
      %v6973 = vrcp.pop %v6614
      %v6974 = vmul.f32 1.0, %v6973
      %v6975 = vrcp.pop %v6615
      %v6976 = vmul.f32 1.0, %v6975
      %v6977 = vrcp.pop %v6616
      %v6978 = vmul.f32 1.0, %v6977
      %v6979 = vrcp.pop %v6617
      %v6980 = vmul.f32 1.0, %v6979
      %v6981 = vrcp.pop %v6618
      %v6982 = vmul.f32 1.0, %v6981
      %v6983 = vrcp.pop %v6619
      %v6984 = vmul.f32 1.0, %v6983
      %v6985 = vrcp.pop %v6620
      %v6986 = vmul.f32 1.0, %v6985
      %v6987 = vrcp.pop %v6621
      %v6988 = vmul.f32 1.0, %v6987
      %v6989 = vrcp.pop %v6622
      %v6990 = vmul.f32 1.0, %v6989
      %v6991 = vrcp.pop %v6623
      %v6992 = vmul.f32 1.0, %v6991
      %v6993 = vrcp.pop %v6624
      %v6994 = vmul.f32 1.0, %v6993
      %v6995 = vrcp.pop %v6625
      %v6996 = vmul.f32 1.0, %v6995
      %v6997 = vrcp.pop %v6626
      %v6998 = vmul.f32 1.0, %v6997
      %v6999 = vrcp.pop %v6627
      %v7000 = vmul.f32 1.0, %v6999
      %v7001 = vrcp.pop %v6628
      %v7002 = vmul.f32 1.0, %v7001
      %v7003 = vrcp.pop %v6629
      %v7004 = vmul.f32 1.0, %v7003
      %v7005 = vrcp.pop %v6630
      %v7006 = vmul.f32 1.0, %v7005
      %v7007 = vrcp.pop %v6631
      %v7008 = vmul.f32 1.0, %v7007
      %v7009 = vrcp.pop %v6632
      %v7010 = vmul.f32 1.0, %v7009
      %v7011 = vrcp.pop %v6633
      %v7012 = vmul.f32 1.0, %v7011
      %v7013 = vrcp.pop %v6634
      %v7014 = vmul.f32 1.0, %v7013
      %v7015 = vrcp.pop %v6635
      %v7016 = vmul.f32 1.0, %v7015
      %v7017 = vrcp.pop %v6636
      %v7018 = vmul.f32 1.0, %v7017
      %v7019 = vrcp.pop %v6637
      %v7020 = vmul.f32 1.0, %v7019
      %v7021 = vrcp.pop %v6638
      %v7022 = vmul.f32 1.0, %v7021
      %v7023 = vrcp.pop %v6639
      %v7024 = vmul.f32 1.0, %v7023
      %v7025 = vrcp.pop %v6640
      %v7026 = vmul.f32 1.0, %v7025
      %v7027 = vrcp.pop %v6641
      %v7028 = vmul.f32 1.0, %v7027
      %v7029 = vrcp.pop %v6642
      %v7030 = vmul.f32 1.0, %v7029
      %v7031 = vrcp.pop %v6643
      %v7032 = vmul.f32 1.0, %v7031
      %v7033 = vrcp.pop %v6644
      %v7034 = vmul.f32 1.0, %v7033
      %v7035 = vrcp.pop %v6645
      %v7036 = vmul.f32 1.0, %v7035
      %v7037 = vrcp.pop %v6646
      %v7038 = vmul.f32 1.0, %v7037
      %v7039 = vrcp.pop %v6647
      %v7040 = vmul.f32 1.0, %v7039
      %v7041 = vrcp.pop %v6648
      %v7042 = vmul.f32 1.0, %v7041
      %v7043 = vrcp.pop %v6649
      %v7044 = vmul.f32 1.0, %v7043
      %v7045 = vrcp.pop %v6650
      %v7046 = vmul.f32 1.0, %v7045
      %v7047 = vrcp.pop %v6651
      %v7048 = vmul.f32 1.0, %v7047
      %v7049 = vrcp.pop %v6652
      %v7050 = vmul.f32 1.0, %v7049
      %v7051 = vrcp.pop %v6653
      %v7052 = vmul.f32 1.0, %v7051
      %v7053 = vrcp.pop %v6654
      %v7054 = vmul.f32 1.0, %v7053
      %v7055 = vrcp.pop %v6655
      %v7056 = vmul.f32 1.0, %v7055
      %v7057 = vrcp.pop %v6656
      %v7058 = vmul.f32 1.0, %v7057
      %v7059 = vrcp.pop %v6657
      %v7060 = vmul.f32 1.0, %v7059
      %v7061 = vrcp.pop %v6658
      %v7062 = vmul.f32 1.0, %v7061
      %v7063 = vrcp.pop %v6659
      %v7064 = vmul.f32 1.0, %v7063
      %v7065 = vrcp.pop %v6660
      %v7066 = vmul.f32 1.0, %v7065
      %v7067 = vrcp.pop %v6661
      %v7068 = vmul.f32 1.0, %v7067
      %v7069 = vrcp.pop %v6662
      %v7070 = vmul.f32 1.0, %v7069
      %v7071 = vrcp.pop %v6663
      %v7072 = vmul.f32 1.0, %v7071
      %v7073 = vrcp.pop %v6664
      %v7074 = vmul.f32 1.0, %v7073
      %v7075 = vrcp.pop %v6665
      %v7076 = vmul.f32 1.0, %v7075
      %v7077 = vrcp.pop %v6666
      %v7078 = vmul.f32 1.0, %v7077
      %v7079 = vrcp.pop %v6667
      %v7080 = vmul.f32 1.0, %v7079
      %v7081 = vrcp.pop %v6668
      %v7082 = vmul.f32 1.0, %v7081
      %v7083 = vrcp.pop %v6669
      %v7084 = vmul.f32 1.0, %v7083
      %v7085 = vrcp.pop %v6670
      %v7086 = vmul.f32 1.0, %v7085
      %v7087 = vrcp.pop %v6671
      %v7088 = vmul.f32 1.0, %v7087
      %v7089 = vrcp.pop %v6672
      %v7090 = vmul.f32 1.0, %v7089
      %v7091 = vrcp.pop %v6673
      %v7092 = vmul.f32 1.0, %v7091
      %v7093 = vrcp.pop %v6674
      %v7094 = vmul.f32 1.0, %v7093
      %v7095 = vrcp.pop %v6675
      %v7096 = vmul.f32 1.0, %v7095
      %v7097 = vrcp.pop %v6676
      %v7098 = vmul.f32 1.0, %v7097
      %v7099 = vrcp.pop %v6677
      %v7100 = vmul.f32 1.0, %v7099
      %v7101 = vrcp.pop %v6678
      %v7102 = vmul.f32 1.0, %v7101
      %v7103 = vrcp.pop %v6679
      %v7104 = vmul.f32 1.0, %v7103
      %v7105 = vrcp.pop %v6680
      %v7106 = vmul.f32 1.0, %v7105
      %v7107 = vrcp.pop %v6681
      %v7108 = vmul.f32 1.0, %v7107
      %v7109 = vrcp.pop %v6682
      %v7110 = vmul.f32 1.0, %v7109
      %v7111 = vrcp.pop %v6683
      %v7112 = vmul.f32 1.0, %v7111
      %v7113 = vrcp.pop %v6684
      %v7114 = vmul.f32 1.0, %v7113
      %v7115 = vrcp.pop %v6685
      %v7116 = vmul.f32 1.0, %v7115
      %v7117 = vrcp.pop %v6686
      %v7118 = vmul.f32 1.0, %v7117
      %v7119 = vrcp.pop %v6687
      %v7120 = vmul.f32 1.0, %v7119
      %v7121 = vrcp.pop %v6688
      %v7122 = vmul.f32 1.0, %v7121
      %v7123 = vrcp.pop %v6689
      %v7124 = vmul.f32 1.0, %v7123
      %v7125 = vrcp.pop %v6690
      %v7126 = vmul.f32 1.0, %v7125
      %v7127 = vrcp.pop %v6691
      %v7128 = vmul.f32 1.0, %v7127
      %v7129 = vrcp.pop %v6692
      %v7130 = vmul.f32 1.0, %v7129
      %v7131 = vrcp.pop %v6693
      %v7132 = vmul.f32 1.0, %v7131
      %v7133 = vrcp.pop %v6694
      %v7134 = vmul.f32 1.0, %v7133
      %v7135 = vrcp.pop %v6695
      %v7136 = vmul.f32 1.0, %v7135
      %v7137 = vrcp.pop %v6696
      %v7138 = vmul.f32 1.0, %v7137
      %v7139 = vrcp.pop %v6697
      %v7140 = vmul.f32 1.0, %v7139
      %v7141 = vrcp.pop %v6698
      %v7142 = vmul.f32 1.0, %v7141
      %v7143 = vrcp.pop %v6699
      %v7144 = vmul.f32 1.0, %v7143
      %v7145 = vrcp.pop %v6700
      %v7146 = vmul.f32 1.0, %v7145
      %v7147 = vrcp.pop %v6701
      %v7148 = vmul.f32 1.0, %v7147
      %v7149 = vrcp.pop %v6702
      %v7150 = vmul.f32 1.0, %v7149
      %v7151 = vrcp.pop %v6703
      %v7152 = vmul.f32 1.0, %v7151
      %v7153 = vrcp.pop %v6704
      %v7154 = vmul.f32 1.0, %v7153
      %v7155 = vrcp.pop %v6705
      %v7156 = vmul.f32 1.0, %v7155
      %v7157 = vrcp.pop %v6706
      %v7158 = vmul.f32 1.0, %v7157
      %v7159 = vrcp.pop %v6707
      %v7160 = vmul.f32 1.0, %v7159
      %v7161 = vrcp.pop %v6708
      %v7162 = vmul.f32 1.0, %v7161
      %v7163 = vrcp.pop %v6709
      %v7164 = vmul.f32 1.0, %v7163
      %v7165 = vrcp.pop %v6710
      %v7166 = vmul.f32 1.0, %v7165
      %v7167 = vrcp.pop %v6711
      %v7168 = vmul.f32 1.0, %v7167
      %v7169 = vrcp.pop %v6712
      %v7170 = vmul.f32 1.0, %v7169
      %v7171 = vrcp.pop %v6713
      %v7172 = vmul.f32 1.0, %v7171
      %v7173 = vrcp.pop %v6714
      %v7174 = vmul.f32 1.0, %v7173
      %v7175 = vrcp.pop %v6715
      %v7176 = vmul.f32 1.0, %v7175
      %v7177 = vrcp.pop %v6716
      %v7178 = vmul.f32 1.0, %v7177
      %v7179 = vrcp.pop %v6717
      %v7180 = vmul.f32 1.0, %v7179
      %v7181 = vrcp.pop %v6718
      %v7182 = vmul.f32 1.0, %v7181
      %v7183 = vrcp.pop %v6719
      %v7184 = vmul.f32 1.0, %v7183
      %v7185 = vrcp.pop %v6720
      %v7186 = vmul.f32 1.0, %v7185
      %v7187 = vrcp.pop %v6721
      %v7188 = vmul.f32 1.0, %v7187
      %v7189 = vrcp.pop %v6722
      %v7190 = vmul.f32 1.0, %v7189
      %v7191 = vrcp.pop %v6723
      %v7192 = vmul.f32 1.0, %v7191
      %v7193 = vrcp.pop %v6724
      %v7194 = vmul.f32 1.0, %v7193
      %v7195 = vrcp.pop %v6725
      %v7196 = vmul.f32 1.0, %v7195
      %v7197 = vrcp.pop %v6726
      %v7198 = vmul.f32 1.0, %v7197
      %v7199 = vrcp.pop %v6727
      %v7200 = vmul.f32 1.0, %v7199
      %v7201 = vrcp.pop %v6728
      %v7202 = vmul.f32 1.0, %v7201
      %v7203 = vrcp.pop %v6729
      %v7204 = vmul.f32 1.0, %v7203
      %v7205 = vrcp.pop %v6730
      %v7206 = vmul.f32 1.0, %v7205
      %v7207 = vrcp.pop %v6731
      %v7208 = vmul.f32 1.0, %v7207
      %v7209 = vrcp.pop %v6732
      %v7210 = vmul.f32 1.0, %v7209
      %v7211 = vrcp.pop %v6733
      %v7212 = vmul.f32 1.0, %v7211
      %v7213 = vrcp.pop %v6734
      %v7214 = vmul.f32 1.0, %v7213
      %v7215 = vrcp.pop %v6735
      %v7216 = vmul.f32 1.0, %v7215
      %v7217 = vrcp.pop %v6736
      %v7218 = vmul.f32 1.0, %v7217
      %v7219 = vrcp.pop %v6737
      %v7220 = vmul.f32 1.0, %v7219
      %v7221 = vrcp.pop %v6738
      %v7222 = vmul.f32 1.0, %v7221
      %v7223 = vrcp.pop %v6739
      %v7224 = vmul.f32 1.0, %v7223
      %v7225 = vrcp.pop %v6740
      %v7226 = vmul.f32 1.0, %v7225
      %v7227 = vrcp.pop %v6741
      %v7228 = vmul.f32 1.0, %v7227
      %v7229 = vrcp.pop %v6742
      %v7230 = vmul.f32 1.0, %v7229
      %v7231 = vrcp.pop %v6743
      %v7232 = vmul.f32 1.0, %v7231
      %v7233 = vrcp.pop %v6744
      %v7234 = vmul.f32 1.0, %v7233
      %v7235 = vrcp.pop %v6745
      %v7236 = vmul.f32 1.0, %v7235
      %v7237 = vrcp.pop %v6746
      %v7238 = vmul.f32 1.0, %v7237
      %v7239 = vrcp.pop %v6747
      %v7240 = vmul.f32 1.0, %v7239
      %v7241 = vrcp.pop %v6748
      %v7242 = vmul.f32 1.0, %v7241
      %v7243 = vrcp.pop %v6749
      %v7244 = vmul.f32 1.0, %v7243
      %v7245 = vrcp.pop %v6750
      %v7246 = vmul.f32 1.0, %v7245
      %v7247 = vrcp.pop %v6751
      %v7248 = vmul.f32 1.0, %v7247
      %v7249 = vrcp.pop %v6752
      %v7250 = vmul.f32 1.0, %v7249
      %v7251 = vrcp.pop %v6753
      %v7252 = vmul.f32 1.0, %v7251
      %v7253 = vrcp.pop %v6754
      %v7254 = vmul.f32 1.0, %v7253
      %v7255 = vrcp.pop %v6755
      %v7256 = vmul.f32 1.0, %v7255
      %v7257 = vrcp.pop %v6756
      %v7258 = vmul.f32 1.0, %v7257
      %v7259 = vrcp.pop %v6757
      %v7260 = vmul.f32 1.0, %v7259
      %v7261 = vrcp.pop %v6758
      %v7262 = vmul.f32 1.0, %v7261
      %v7263 = vrcp.pop %v6759
      %v7264 = vmul.f32 1.0, %v7263
      %v7265 = vrcp.pop %v6760
      %v7266 = vmul.f32 1.0, %v7265
      %v7267 = vrcp.pop %v6761
      %v7268 = vmul.f32 1.0, %v7267
      %v7269 = vrcp.pop %v6762
      %v7270 = vmul.f32 1.0, %v7269
      %v7271 = vrcp.pop %v6763
      %v7272 = vmul.f32 1.0, %v7271
      %v7273 = vrcp.pop %v6764
      %v7274 = vmul.f32 1.0, %v7273
      %v7275 = vrcp.pop %v6765
      %v7276 = vmul.f32 1.0, %v7275
      %v7277 = vrcp.pop %v6766
      %v7278 = vmul.f32 1.0, %v7277
      %v7279 = vunpack.c.l.bf16 %v564
      %v7280 = vunpack.c.l.bf16 %v565
      %v7281 = vunpack.c.l.bf16 %v566
      %v7282 = vunpack.c.l.bf16 %v567
      %v7283 = vunpack.c.l.bf16 %v568
      %v7284 = vunpack.c.l.bf16 %v569
      %v7285 = vunpack.c.l.bf16 %v570
      %v7286 = vunpack.c.l.bf16 %v571
      %v7287 = vunpack.c.l.bf16 %v572
      %v7288 = vunpack.c.l.bf16 %v573
      %v7289 = vunpack.c.l.bf16 %v574
      %v7290 = vunpack.c.l.bf16 %v575
      %v7291 = vunpack.c.l.bf16 %v576
      %v7292 = vunpack.c.l.bf16 %v577
      %v7293 = vunpack.c.l.bf16 %v578
      %v7294 = vunpack.c.l.bf16 %v579
      %v7295 = vunpack.c.l.bf16 %v580
      %v7296 = vunpack.c.l.bf16 %v581
      %v7297 = vunpack.c.l.bf16 %v582
      %v7298 = vunpack.c.l.bf16 %v583
      %v7299 = vunpack.c.l.bf16 %v584
      %v7300 = vunpack.c.l.bf16 %v585
      %v7301 = vunpack.c.l.bf16 %v586
      %v7302 = vunpack.c.l.bf16 %v587
      %v7303 = vunpack.c.l.bf16 %v588
      %v7304 = vunpack.c.l.bf16 %v589
      %v7305 = vunpack.c.l.bf16 %v590
      %v7306 = vunpack.c.l.bf16 %v591
      %v7307 = vunpack.c.l.bf16 %v592
      %v7308 = vunpack.c.l.bf16 %v593
      %v7309 = vunpack.c.l.bf16 %v594
      %v7310 = vunpack.c.l.bf16 %v595
      %v7311 = vunpack.c.l.bf16 %v596
      %v7312 = vunpack.c.l.bf16 %v597
      %v7313 = vunpack.c.l.bf16 %v598
      %v7314 = vunpack.c.l.bf16 %v599
      %v7315 = vunpack.c.l.bf16 %v600
      %v7316 = vunpack.c.l.bf16 %v601
      %v7317 = vunpack.c.l.bf16 %v602
      %v7318 = vunpack.c.l.bf16 %v603
      %v7319 = vunpack.c.l.bf16 %v604
      %v7320 = vunpack.c.l.bf16 %v605
      %v7321 = vunpack.c.l.bf16 %v606
      %v7322 = vunpack.c.l.bf16 %v607
      %v7323 = vunpack.c.l.bf16 %v608
      %v7324 = vunpack.c.l.bf16 %v609
      %v7325 = vunpack.c.l.bf16 %v610
      %v7326 = vunpack.c.l.bf16 %v611
      %v7327 = vunpack.c.l.bf16 %v612
      %v7328 = vunpack.c.l.bf16 %v613
      %v7329 = vunpack.c.l.bf16 %v614
      %v7330 = vunpack.c.l.bf16 %v615
      %v7331 = vunpack.c.l.bf16 %v616
      %v7332 = vunpack.c.l.bf16 %v617
      %v7333 = vunpack.c.l.bf16 %v618
      %v7334 = vunpack.c.l.bf16 %v619
      %v7335 = vunpack.c.l.bf16 %v620
      %v7336 = vunpack.c.l.bf16 %v621
      %v7337 = vunpack.c.l.bf16 %v622
      %v7338 = vunpack.c.l.bf16 %v623
      %v7339 = vunpack.c.l.bf16 %v624
      %v7340 = vunpack.c.l.bf16 %v625
      %v7341 = vunpack.c.l.bf16 %v626
      %v7342 = vunpack.c.l.bf16 %v627
      %v7343 = vunpack.c.l.bf16 %v628
      %v7344 = vunpack.c.l.bf16 %v629
      %v7345 = vunpack.c.l.bf16 %v630
      %v7346 = vunpack.c.l.bf16 %v631
      %v7347 = vunpack.c.l.bf16 %v632
      %v7348 = vunpack.c.l.bf16 %v633
      %v7349 = vunpack.c.l.bf16 %v634
      %v7350 = vunpack.c.l.bf16 %v635
      %v7351 = vunpack.c.l.bf16 %v636
      %v7352 = vunpack.c.l.bf16 %v637
      %v7353 = vunpack.c.l.bf16 %v638
      %v7354 = vunpack.c.l.bf16 %v639
      %v7355 = vunpack.c.l.bf16 %v640
      %v7356 = vunpack.c.l.bf16 %v641
      %v7357 = vunpack.c.l.bf16 %v642
      %v7358 = vunpack.c.l.bf16 %v643
      %v7359 = vunpack.c.l.bf16 %v644
      %v7360 = vunpack.c.l.bf16 %v645
      %v7361 = vunpack.c.l.bf16 %v646
      %v7362 = vunpack.c.l.bf16 %v647
      %v7363 = vunpack.c.l.bf16 %v648
      %v7364 = vunpack.c.l.bf16 %v649
      %v7365 = vunpack.c.l.bf16 %v650
      %v7366 = vunpack.c.l.bf16 %v651
      %v7367 = vunpack.c.l.bf16 %v652
      %v7368 = vunpack.c.l.bf16 %v653
      %v7369 = vunpack.c.l.bf16 %v654
      %v7370 = vunpack.c.l.bf16 %v655
      %v7371 = vunpack.c.l.bf16 %v656
      %v7372 = vunpack.c.l.bf16 %v657
      %v7373 = vunpack.c.l.bf16 %v658
      %v7374 = vunpack.c.l.bf16 %v659
      %v7375 = vunpack.c.l.bf16 %v660
      %v7376 = vunpack.c.l.bf16 %v661
      %v7377 = vunpack.c.l.bf16 %v662
      %v7378 = vunpack.c.l.bf16 %v663
      %v7379 = vunpack.c.l.bf16 %v664
      %v7380 = vunpack.c.l.bf16 %v665
      %v7381 = vunpack.c.l.bf16 %v666
      %v7382 = vunpack.c.l.bf16 %v667
      %v7383 = vunpack.c.l.bf16 %v668
      %v7384 = vunpack.c.l.bf16 %v669
      %v7385 = vunpack.c.l.bf16 %v670
      %v7386 = vunpack.c.l.bf16 %v671
      %v7387 = vunpack.c.l.bf16 %v672
      %v7388 = vunpack.c.l.bf16 %v673
      %v7389 = vunpack.c.l.bf16 %v674
      %v7390 = vunpack.c.l.bf16 %v675
      %v7391 = vunpack.c.l.bf16 %v676
      %v7392 = vunpack.c.l.bf16 %v677
      %v7393 = vunpack.c.l.bf16 %v678
      %v7394 = vunpack.c.l.bf16 %v679
      %v7395 = vunpack.c.l.bf16 %v680
      %v7396 = vunpack.c.l.bf16 %v681
      %v7397 = vunpack.c.l.bf16 %v682
      %v7398 = vunpack.c.l.bf16 %v683
      %v7399 = vunpack.c.l.bf16 %v684
      %v7400 = vunpack.c.l.bf16 %v685
      %v7401 = vunpack.c.l.bf16 %v686
      %v7402 = vunpack.c.l.bf16 %v687
      %v7403 = vunpack.c.l.bf16 %v688
      %v7404 = vunpack.c.l.bf16 %v689
      %v7405 = vunpack.c.l.bf16 %v690
      %v7406 = vunpack.c.l.bf16 %v691
      %v7407 = vunpack.c.l.bf16 %v692
      %v7408 = vunpack.c.l.bf16 %v693
      %v7409 = vunpack.c.l.bf16 %v694
      %v7410 = vunpack.c.l.bf16 %v695
      %v7411 = vunpack.c.l.bf16 %v696
      %v7412 = vunpack.c.l.bf16 %v697
      %v7413 = vunpack.c.l.bf16 %v698
      %v7414 = vunpack.c.l.bf16 %v699
      %v7415 = vunpack.c.l.bf16 %v700
      %v7416 = vunpack.c.l.bf16 %v701
      %v7417 = vunpack.c.l.bf16 %v702
      %v7418 = vunpack.c.l.bf16 %v703
      %v7419 = vunpack.c.l.bf16 %v704
      %v7420 = vunpack.c.l.bf16 %v705
      %v7421 = vunpack.c.l.bf16 %v706
      %v7422 = vunpack.c.l.bf16 %v707
      %v7423 = vunpack.c.l.bf16 %v708
      %v7424 = vunpack.c.l.bf16 %v709
      %v7425 = vunpack.c.l.bf16 %v710
      %v7426 = vunpack.c.l.bf16 %v711
      %v7427 = vunpack.c.l.bf16 %v712
      %v7428 = vunpack.c.l.bf16 %v713
      %v7429 = vunpack.c.l.bf16 %v714
      %v7430 = vunpack.c.l.bf16 %v715
      %v7431 = vunpack.c.l.bf16 %v716
      %v7432 = vunpack.c.l.bf16 %v717
      %v7433 = vunpack.c.l.bf16 %v718
      %v7434 = vunpack.c.l.bf16 %v719
      %v7435 = vunpack.c.l.bf16 %v720
      %v7436 = vunpack.c.l.bf16 %v721
      %v7437 = vunpack.c.l.bf16 %v722
      %v7438 = vunpack.c.l.bf16 %v723
      %v7439 = vunpack.c.l.bf16 %v724
      %v7440 = vunpack.c.l.bf16 %v725
      %v7441 = vunpack.c.l.bf16 %v726
      %v7442 = vunpack.c.l.bf16 %v727
      %v7443 = vunpack.c.l.bf16 %v728
      %v7444 = vunpack.c.l.bf16 %v729
      %v7445 = vunpack.c.l.bf16 %v730
      %v7446 = vunpack.c.l.bf16 %v731
      %v7447 = vunpack.c.l.bf16 %v732
      %v7448 = vunpack.c.l.bf16 %v733
      %v7449 = vunpack.c.l.bf16 %v734
      %v7450 = vunpack.c.l.bf16 %v735
      %v7451 = vunpack.c.l.bf16 %v736
      %v7452 = vunpack.c.l.bf16 %v737
      %v7453 = vunpack.c.l.bf16 %v738
      %v7454 = vunpack.c.l.bf16 %v739
      %v7455 = vunpack.c.l.bf16 %v740
      %v7456 = vunpack.c.l.bf16 %v741
      %v7457 = vunpack.c.l.bf16 %v742
      %v7458 = vunpack.c.l.bf16 %v743
      %v7459 = vunpack.c.l.bf16 %v744
      %v7460 = vunpack.c.l.bf16 %v745
      %v7461 = vunpack.c.l.bf16 %v746
      %v7462 = vunpack.c.l.bf16 %v747
      %v7463 = vunpack.c.l.bf16 %v748
      %v7464 = vunpack.c.l.bf16 %v749
      %v7465 = vunpack.c.l.bf16 %v750
      %v7466 = vunpack.c.l.bf16 %v751
      %v7467 = vunpack.c.l.bf16 %v752
      %v7468 = vunpack.c.l.bf16 %v753
      %v7469 = vunpack.c.l.bf16 %v754
      %v7470 = vunpack.c.l.bf16 %v755
      %v7471 = vunpack.c.l.bf16 %v756
      %v7472 = vunpack.c.l.bf16 %v757
      %v7473 = vunpack.c.l.bf16 %v758
      %v7474 = vunpack.c.l.bf16 %v759
      %v7475 = vunpack.c.l.bf16 %v760
      %v7476 = vunpack.c.l.bf16 %v761
      %v7477 = vunpack.c.l.bf16 %v762
      %v7478 = vunpack.c.l.bf16 %v763
      %v7479 = vunpack.c.l.bf16 %v764
      %v7480 = vunpack.c.l.bf16 %v765
      %v7481 = vunpack.c.l.bf16 %v766
      %v7482 = vunpack.c.l.bf16 %v767
      %v7483 = vunpack.c.l.bf16 %v768
      %v7484 = vunpack.c.l.bf16 %v769
      %v7485 = vunpack.c.l.bf16 %v770
      %v7486 = vunpack.c.l.bf16 %v771
      %v7487 = vunpack.c.l.bf16 %v772
      %v7488 = vunpack.c.l.bf16 %v773
      %v7489 = vunpack.c.l.bf16 %v774
      %v7490 = vunpack.c.l.bf16 %v775
      %v7491 = vunpack.c.l.bf16 %v776
      %v7492 = vunpack.c.l.bf16 %v777
      %v7493 = vunpack.c.l.bf16 %v778
      %v7494 = vunpack.c.l.bf16 %v779
      %v7495 = vunpack.c.l.bf16 %v780
      %v7496 = vunpack.c.l.bf16 %v781
      %v7497 = vunpack.c.l.bf16 %v782
      %v7498 = vunpack.c.l.bf16 %v783
      %v7499 = vunpack.c.l.bf16 %v784
      %v7500 = vunpack.c.l.bf16 %v785
      %v7501 = vunpack.c.l.bf16 %v786
      %v7502 = vunpack.c.l.bf16 %v787
      %v7503 = vunpack.c.l.bf16 %v788
      %v7504 = vunpack.c.l.bf16 %v789
      %v7505 = vunpack.c.l.bf16 %v790
      %v7506 = vunpack.c.l.bf16 %v791
      %v7507 = vunpack.c.l.bf16 %v792
      %v7508 = vunpack.c.l.bf16 %v793
      %v7509 = vunpack.c.l.bf16 %v794
      %v7510 = vunpack.c.l.bf16 %v795
      %v7511 = vunpack.c.l.bf16 %v796
      %v7512 = vunpack.c.l.bf16 %v797
      %v7513 = vunpack.c.l.bf16 %v798
      %v7514 = vunpack.c.l.bf16 %v799
      %v7515 = vunpack.c.l.bf16 %v800
      %v7516 = vunpack.c.l.bf16 %v801
      %v7517 = vunpack.c.l.bf16 %v802
      %v7518 = vunpack.c.l.bf16 %v803
      %v7519 = vunpack.c.l.bf16 %v804
      %v7520 = vunpack.c.l.bf16 %v805
      %v7521 = vunpack.c.l.bf16 %v806
      %v7522 = vunpack.c.l.bf16 %v807
      %v7523 = vunpack.c.l.bf16 %v808
      %v7524 = vunpack.c.l.bf16 %v809
      %v7525 = vunpack.c.l.bf16 %v810
      %v7526 = vunpack.c.l.bf16 %v811
      %v7527 = vunpack.c.l.bf16 %v812
      %v7528 = vunpack.c.l.bf16 %v813
      %v7529 = vunpack.c.l.bf16 %v814
      %v7530 = vunpack.c.l.bf16 %v815
      %v7531 = vunpack.c.l.bf16 %v816
      %v7532 = vunpack.c.l.bf16 %v817
      %v7533 = vunpack.c.l.bf16 %v818
      %v7534 = vunpack.c.l.bf16 %v819
      %v7535 = vsub.f32 %v6768, %v7279
      %v7536 = vsub.f32 %v6770, %v7280
      %v7537 = vsub.f32 %v6772, %v7281
      %v7538 = vsub.f32 %v6774, %v7282
      %v7539 = vsub.f32 %v6776, %v7283
      %v7540 = vsub.f32 %v6778, %v7284
      %v7541 = vsub.f32 %v6780, %v7285
      %v7542 = vsub.f32 %v6782, %v7286
      %v7543 = vsub.f32 %v6784, %v7287
      %v7544 = vsub.f32 %v6786, %v7288
      %v7545 = vsub.f32 %v6788, %v7289
      %v7546 = vsub.f32 %v6790, %v7290
      %v7547 = vsub.f32 %v6792, %v7291
      %v7548 = vsub.f32 %v6794, %v7292
      %v7549 = vsub.f32 %v6796, %v7293
      %v7550 = vsub.f32 %v6798, %v7294
      %v7551 = vsub.f32 %v6800, %v7295
      %v7552 = vsub.f32 %v6802, %v7296
      %v7553 = vsub.f32 %v6804, %v7297
      %v7554 = vsub.f32 %v6806, %v7298
      %v7555 = vsub.f32 %v6808, %v7299
      %v7556 = vsub.f32 %v6810, %v7300
      %v7557 = vsub.f32 %v6812, %v7301
      %v7558 = vsub.f32 %v6814, %v7302
      %v7559 = vsub.f32 %v6816, %v7303
      %v7560 = vsub.f32 %v6818, %v7304
      %v7561 = vsub.f32 %v6820, %v7305
      %v7562 = vsub.f32 %v6822, %v7306
      %v7563 = vsub.f32 %v6824, %v7307
      %v7564 = vsub.f32 %v6826, %v7308
      %v7565 = vsub.f32 %v6828, %v7309
      %v7566 = vsub.f32 %v6830, %v7310
      %v7567 = vsub.f32 %v6832, %v7311
      %v7568 = vsub.f32 %v6834, %v7312
      %v7569 = vsub.f32 %v6836, %v7313
      %v7570 = vsub.f32 %v6838, %v7314
      %v7571 = vsub.f32 %v6840, %v7315
      %v7572 = vsub.f32 %v6842, %v7316
      %v7573 = vsub.f32 %v6844, %v7317
      %v7574 = vsub.f32 %v6846, %v7318
      %v7575 = vsub.f32 %v6848, %v7319
      %v7576 = vsub.f32 %v6850, %v7320
      %v7577 = vsub.f32 %v6852, %v7321
      %v7578 = vsub.f32 %v6854, %v7322
      %v7579 = vsub.f32 %v6856, %v7323
      %v7580 = vsub.f32 %v6858, %v7324
      %v7581 = vsub.f32 %v6860, %v7325
      %v7582 = vsub.f32 %v6862, %v7326
      %v7583 = vsub.f32 %v6864, %v7327
      %v7584 = vsub.f32 %v6866, %v7328
      %v7585 = vsub.f32 %v6868, %v7329
      %v7586 = vsub.f32 %v6870, %v7330
      %v7587 = vsub.f32 %v6872, %v7331
      %v7588 = vsub.f32 %v6874, %v7332
      %v7589 = vsub.f32 %v6876, %v7333
      %v7590 = vsub.f32 %v6878, %v7334
      %v7591 = vsub.f32 %v6880, %v7335
      %v7592 = vsub.f32 %v6882, %v7336
      %v7593 = vsub.f32 %v6884, %v7337
      %v7594 = vsub.f32 %v6886, %v7338
      %v7595 = vsub.f32 %v6888, %v7339
      %v7596 = vsub.f32 %v6890, %v7340
      %v7597 = vsub.f32 %v6892, %v7341
      %v7598 = vsub.f32 %v6894, %v7342
      %v7599 = vsub.f32 %v6896, %v7343
      %v7600 = vsub.f32 %v6898, %v7344
      %v7601 = vsub.f32 %v6900, %v7345
      %v7602 = vsub.f32 %v6902, %v7346
      %v7603 = vsub.f32 %v6904, %v7347
      %v7604 = vsub.f32 %v6906, %v7348
      %v7605 = vsub.f32 %v6908, %v7349
      %v7606 = vsub.f32 %v6910, %v7350
      %v7607 = vsub.f32 %v6912, %v7351
      %v7608 = vsub.f32 %v6914, %v7352
      %v7609 = vsub.f32 %v6916, %v7353
      %v7610 = vsub.f32 %v6918, %v7354
      %v7611 = vsub.f32 %v6920, %v7355
      %v7612 = vsub.f32 %v6922, %v7356
      %v7613 = vsub.f32 %v6924, %v7357
      %v7614 = vsub.f32 %v6926, %v7358
      %v7615 = vsub.f32 %v6928, %v7359
      %v7616 = vsub.f32 %v6930, %v7360
      %v7617 = vsub.f32 %v6932, %v7361
      %v7618 = vsub.f32 %v6934, %v7362
      %v7619 = vsub.f32 %v6936, %v7363
      %v7620 = vsub.f32 %v6938, %v7364
      %v7621 = vsub.f32 %v6940, %v7365
      %v7622 = vsub.f32 %v6942, %v7366
      %v7623 = vsub.f32 %v6944, %v7367
      %v7624 = vsub.f32 %v6946, %v7368
      %v7625 = vsub.f32 %v6948, %v7369
      %v7626 = vsub.f32 %v6950, %v7370
      %v7627 = vsub.f32 %v6952, %v7371
      %v7628 = vsub.f32 %v6954, %v7372
      %v7629 = vsub.f32 %v6956, %v7373
      %v7630 = vsub.f32 %v6958, %v7374
      %v7631 = vsub.f32 %v6960, %v7375
      %v7632 = vsub.f32 %v6962, %v7376
      %v7633 = vsub.f32 %v6964, %v7377
      %v7634 = vsub.f32 %v6966, %v7378
      %v7635 = vsub.f32 %v6968, %v7379
      %v7636 = vsub.f32 %v6970, %v7380
      %v7637 = vsub.f32 %v6972, %v7381
      %v7638 = vsub.f32 %v6974, %v7382
      %v7639 = vsub.f32 %v6976, %v7383
      %v7640 = vsub.f32 %v6978, %v7384
      %v7641 = vsub.f32 %v6980, %v7385
      %v7642 = vsub.f32 %v6982, %v7386
      %v7643 = vsub.f32 %v6984, %v7387
      %v7644 = vsub.f32 %v6986, %v7388
      %v7645 = vsub.f32 %v6988, %v7389
      %v7646 = vsub.f32 %v6990, %v7390
      %v7647 = vsub.f32 %v6992, %v7391
      %v7648 = vsub.f32 %v6994, %v7392
      %v7649 = vsub.f32 %v6996, %v7393
      %v7650 = vsub.f32 %v6998, %v7394
      %v7651 = vsub.f32 %v7000, %v7395
      %v7652 = vsub.f32 %v7002, %v7396
      %v7653 = vsub.f32 %v7004, %v7397
      %v7654 = vsub.f32 %v7006, %v7398
      %v7655 = vsub.f32 %v7008, %v7399
      %v7656 = vsub.f32 %v7010, %v7400
      %v7657 = vsub.f32 %v7012, %v7401
      %v7658 = vsub.f32 %v7014, %v7402
      %v7659 = vsub.f32 %v7016, %v7403
      %v7660 = vsub.f32 %v7018, %v7404
      %v7661 = vsub.f32 %v7020, %v7405
      %v7662 = vsub.f32 %v7022, %v7406
      %v7663 = vsub.f32 %v7024, %v7407
      %v7664 = vsub.f32 %v7026, %v7408
      %v7665 = vsub.f32 %v7028, %v7409
      %v7666 = vsub.f32 %v7030, %v7410
      %v7667 = vsub.f32 %v7032, %v7411
      %v7668 = vsub.f32 %v7034, %v7412
      %v7669 = vsub.f32 %v7036, %v7413
      %v7670 = vsub.f32 %v7038, %v7414
      %v7671 = vsub.f32 %v7040, %v7415
      %v7672 = vsub.f32 %v7042, %v7416
      %v7673 = vsub.f32 %v7044, %v7417
      %v7674 = vsub.f32 %v7046, %v7418
      %v7675 = vsub.f32 %v7048, %v7419
      %v7676 = vsub.f32 %v7050, %v7420
      %v7677 = vsub.f32 %v7052, %v7421
      %v7678 = vsub.f32 %v7054, %v7422
      %v7679 = vsub.f32 %v7056, %v7423
      %v7680 = vsub.f32 %v7058, %v7424
      %v7681 = vsub.f32 %v7060, %v7425
      %v7682 = vsub.f32 %v7062, %v7426
      %v7683 = vsub.f32 %v7064, %v7427
      %v7684 = vsub.f32 %v7066, %v7428
      %v7685 = vsub.f32 %v7068, %v7429
      %v7686 = vsub.f32 %v7070, %v7430
      %v7687 = vsub.f32 %v7072, %v7431
      %v7688 = vsub.f32 %v7074, %v7432
      %v7689 = vsub.f32 %v7076, %v7433
      %v7690 = vsub.f32 %v7078, %v7434
      %v7691 = vsub.f32 %v7080, %v7435
      %v7692 = vsub.f32 %v7082, %v7436
      %v7693 = vsub.f32 %v7084, %v7437
      %v7694 = vsub.f32 %v7086, %v7438
      %v7695 = vsub.f32 %v7088, %v7439
      %v7696 = vsub.f32 %v7090, %v7440
      %v7697 = vsub.f32 %v7092, %v7441
      %v7698 = vsub.f32 %v7094, %v7442
      %v7699 = vsub.f32 %v7096, %v7443
      %v7700 = vsub.f32 %v7098, %v7444
      %v7701 = vsub.f32 %v7100, %v7445
      %v7702 = vsub.f32 %v7102, %v7446
      %v7703 = vsub.f32 %v7104, %v7447
      %v7704 = vsub.f32 %v7106, %v7448
      %v7705 = vsub.f32 %v7108, %v7449
      %v7706 = vsub.f32 %v7110, %v7450
      %v7707 = vsub.f32 %v7112, %v7451
      %v7708 = vsub.f32 %v7114, %v7452
      %v7709 = vsub.f32 %v7116, %v7453
      %v7710 = vsub.f32 %v7118, %v7454
      %v7711 = vsub.f32 %v7120, %v7455
      %v7712 = vsub.f32 %v7122, %v7456
      %v7713 = vsub.f32 %v7124, %v7457
      %v7714 = vsub.f32 %v7126, %v7458
      %v7715 = vsub.f32 %v7128, %v7459
      %v7716 = vsub.f32 %v7130, %v7460
      %v7717 = vsub.f32 %v7132, %v7461
      %v7718 = vsub.f32 %v7134, %v7462
      %v7719 = vsub.f32 %v7136, %v7463
      %v7720 = vsub.f32 %v7138, %v7464
      %v7721 = vsub.f32 %v7140, %v7465
      %v7722 = vsub.f32 %v7142, %v7466
      %v7723 = vsub.f32 %v7144, %v7467
      %v7724 = vsub.f32 %v7146, %v7468
      %v7725 = vsub.f32 %v7148, %v7469
      %v7726 = vsub.f32 %v7150, %v7470
      %v7727 = vsub.f32 %v7152, %v7471
      %v7728 = vsub.f32 %v7154, %v7472
      %v7729 = vsub.f32 %v7156, %v7473
      %v7730 = vsub.f32 %v7158, %v7474
      %v7731 = vsub.f32 %v7160, %v7475
      %v7732 = vsub.f32 %v7162, %v7476
      %v7733 = vsub.f32 %v7164, %v7477
      %v7734 = vsub.f32 %v7166, %v7478
      %v7735 = vsub.f32 %v7168, %v7479
      %v7736 = vsub.f32 %v7170, %v7480
      %v7737 = vsub.f32 %v7172, %v7481
      %v7738 = vsub.f32 %v7174, %v7482
      %v7739 = vsub.f32 %v7176, %v7483
      %v7740 = vsub.f32 %v7178, %v7484
      %v7741 = vsub.f32 %v7180, %v7485
      %v7742 = vsub.f32 %v7182, %v7486
      %v7743 = vsub.f32 %v7184, %v7487
      %v7744 = vsub.f32 %v7186, %v7488
      %v7745 = vsub.f32 %v7188, %v7489
      %v7746 = vsub.f32 %v7190, %v7490
      %v7747 = vsub.f32 %v7192, %v7491
      %v7748 = vsub.f32 %v7194, %v7492
      %v7749 = vsub.f32 %v7196, %v7493
      %v7750 = vsub.f32 %v7198, %v7494
      %v7751 = vsub.f32 %v7200, %v7495
      %v7752 = vsub.f32 %v7202, %v7496
      %v7753 = vsub.f32 %v7204, %v7497
      %v7754 = vsub.f32 %v7206, %v7498
      %v7755 = vsub.f32 %v7208, %v7499
      %v7756 = vsub.f32 %v7210, %v7500
      %v7757 = vsub.f32 %v7212, %v7501
      %v7758 = vsub.f32 %v7214, %v7502
      %v7759 = vsub.f32 %v7216, %v7503
      %v7760 = vsub.f32 %v7218, %v7504
      %v7761 = vsub.f32 %v7220, %v7505
      %v7762 = vsub.f32 %v7222, %v7506
      %v7763 = vsub.f32 %v7224, %v7507
      %v7764 = vsub.f32 %v7226, %v7508
      %v7765 = vsub.f32 %v7228, %v7509
      %v7766 = vsub.f32 %v7230, %v7510
      %v7767 = vsub.f32 %v7232, %v7511
      %v7768 = vsub.f32 %v7234, %v7512
      %v7769 = vsub.f32 %v7236, %v7513
      %v7770 = vsub.f32 %v7238, %v7514
      %v7771 = vsub.f32 %v7240, %v7515
      %v7772 = vsub.f32 %v7242, %v7516
      %v7773 = vsub.f32 %v7244, %v7517
      %v7774 = vsub.f32 %v7246, %v7518
      %v7775 = vsub.f32 %v7248, %v7519
      %v7776 = vsub.f32 %v7250, %v7520
      %v7777 = vsub.f32 %v7252, %v7521
      %v7778 = vsub.f32 %v7254, %v7522
      %v7779 = vsub.f32 %v7256, %v7523
      %v7780 = vsub.f32 %v7258, %v7524
      %v7781 = vsub.f32 %v7260, %v7525
      %v7782 = vsub.f32 %v7262, %v7526
      %v7783 = vsub.f32 %v7264, %v7527
      %v7784 = vsub.f32 %v7266, %v7528
      %v7785 = vsub.f32 %v7268, %v7529
      %v7786 = vsub.f32 %v7270, %v7530
      %v7787 = vsub.f32 %v7272, %v7531
      %v7788 = vsub.f32 %v7274, %v7532
      %v7789 = vsub.f32 %v7276, %v7533
      %v7790 = vsub.f32 %v7278, %v7534
      %v7791 = vsel %vm5742, %v7535, 0.0
      %v7792 = vsel %vm5742, %v7536, 0.0
      %v7793 = vsel %vm5742, %v7537, 0.0
      %v7794 = vsel %vm5742, %v7538, 0.0
      %v7795 = vsel %vm5742, %v7539, 0.0
      %v7796 = vsel %vm5742, %v7540, 0.0
      %v7797 = vsel %vm5742, %v7541, 0.0
      %v7798 = vsel %vm5742, %v7542, 0.0
      %v7799 = vsel %vm5742, %v7543, 0.0
      %v7800 = vsel %vm5742, %v7544, 0.0
      %v7801 = vsel %vm5742, %v7545, 0.0
      %v7802 = vsel %vm5742, %v7546, 0.0
      %v7803 = vsel %vm5742, %v7547, 0.0
      %v7804 = vsel %vm5742, %v7548, 0.0
      %v7805 = vsel %vm5742, %v7549, 0.0
      %v7806 = vsel %vm5742, %v7550, 0.0
      %v7807 = vsel %vm5742, %v7551, 0.0
      %v7808 = vsel %vm5742, %v7552, 0.0
      %v7809 = vsel %vm5742, %v7553, 0.0
      %v7810 = vsel %vm5742, %v7554, 0.0
      %v7811 = vsel %vm5742, %v7555, 0.0
      %v7812 = vsel %vm5742, %v7556, 0.0
      %v7813 = vsel %vm5742, %v7557, 0.0
      %v7814 = vsel %vm5742, %v7558, 0.0
      %v7815 = vsel %vm5742, %v7559, 0.0
      %v7816 = vsel %vm5742, %v7560, 0.0
      %v7817 = vsel %vm5742, %v7561, 0.0
      %v7818 = vsel %vm5742, %v7562, 0.0
      %v7819 = vsel %vm5742, %v7563, 0.0
      %v7820 = vsel %vm5742, %v7564, 0.0
      %v7821 = vsel %vm5742, %v7565, 0.0
      %v7822 = vsel %vm5742, %v7566, 0.0
      %v7823 = vsel %vm5742, %v7567, 0.0
      %v7824 = vsel %vm5742, %v7568, 0.0
      %v7825 = vsel %vm5742, %v7569, 0.0
      %v7826 = vsel %vm5742, %v7570, 0.0
      %v7827 = vsel %vm5742, %v7571, 0.0
      %v7828 = vsel %vm5742, %v7572, 0.0
      %v7829 = vsel %vm5742, %v7573, 0.0
      %v7830 = vsel %vm5742, %v7574, 0.0
      %v7831 = vsel %vm5742, %v7575, 0.0
      %v7832 = vsel %vm5742, %v7576, 0.0
      %v7833 = vsel %vm5742, %v7577, 0.0
      %v7834 = vsel %vm5742, %v7578, 0.0
      %v7835 = vsel %vm5742, %v7579, 0.0
      %v7836 = vsel %vm5742, %v7580, 0.0
      %v7837 = vsel %vm5742, %v7581, 0.0
      %v7838 = vsel %vm5742, %v7582, 0.0
      %v7839 = vsel %vm5742, %v7583, 0.0
      %v7840 = vsel %vm5742, %v7584, 0.0
      %v7841 = vsel %vm5742, %v7585, 0.0
      %v7842 = vsel %vm5742, %v7586, 0.0
      %v7843 = vsel %vm5742, %v7587, 0.0
      %v7844 = vsel %vm5742, %v7588, 0.0
      %v7845 = vsel %vm5742, %v7589, 0.0
      %v7846 = vsel %vm5742, %v7590, 0.0
      %v7847 = vsel %vm5742, %v7591, 0.0
      %v7848 = vsel %vm5742, %v7592, 0.0
      %v7849 = vsel %vm5742, %v7593, 0.0
      %v7850 = vsel %vm5742, %v7594, 0.0
      %v7851 = vsel %vm5742, %v7595, 0.0
      %v7852 = vsel %vm5742, %v7596, 0.0
      %v7853 = vsel %vm5742, %v7597, 0.0
      %v7854 = vsel %vm5742, %v7598, 0.0
      %v7855 = vsel %vm5742, %v7599, 0.0
      %v7856 = vsel %vm5742, %v7600, 0.0
      %v7857 = vsel %vm5742, %v7601, 0.0
      %v7858 = vsel %vm5742, %v7602, 0.0
      %v7859 = vsel %vm5742, %v7603, 0.0
      %v7860 = vsel %vm5742, %v7604, 0.0
      %v7861 = vsel %vm5742, %v7605, 0.0
      %v7862 = vsel %vm5742, %v7606, 0.0
      %v7863 = vsel %vm5742, %v7607, 0.0
      %v7864 = vsel %vm5742, %v7608, 0.0
      %v7865 = vsel %vm5742, %v7609, 0.0
      %v7866 = vsel %vm5742, %v7610, 0.0
      %v7867 = vsel %vm5742, %v7611, 0.0
      %v7868 = vsel %vm5742, %v7612, 0.0
      %v7869 = vsel %vm5742, %v7613, 0.0
      %v7870 = vsel %vm5742, %v7614, 0.0
      %v7871 = vsel %vm5742, %v7615, 0.0
      %v7872 = vsel %vm5742, %v7616, 0.0
      %v7873 = vsel %vm5742, %v7617, 0.0
      %v7874 = vsel %vm5742, %v7618, 0.0
      %v7875 = vsel %vm5742, %v7619, 0.0
      %v7876 = vsel %vm5742, %v7620, 0.0
      %v7877 = vsel %vm5742, %v7621, 0.0
      %v7878 = vsel %vm5742, %v7622, 0.0
      %v7879 = vsel %vm5742, %v7623, 0.0
      %v7880 = vsel %vm5742, %v7624, 0.0
      %v7881 = vsel %vm5742, %v7625, 0.0
      %v7882 = vsel %vm5742, %v7626, 0.0
      %v7883 = vsel %vm5742, %v7627, 0.0
      %v7884 = vsel %vm5742, %v7628, 0.0
      %v7885 = vsel %vm5742, %v7629, 0.0
      %v7886 = vsel %vm5742, %v7630, 0.0
      %v7887 = vsel %vm5742, %v7631, 0.0
      %v7888 = vsel %vm5742, %v7632, 0.0
      %v7889 = vsel %vm5742, %v7633, 0.0
      %v7890 = vsel %vm5742, %v7634, 0.0
      %v7891 = vsel %vm5742, %v7635, 0.0
      %v7892 = vsel %vm5742, %v7636, 0.0
      %v7893 = vsel %vm5742, %v7637, 0.0
      %v7894 = vsel %vm5742, %v7638, 0.0
      %v7895 = vsel %vm5742, %v7639, 0.0
      %v7896 = vsel %vm5742, %v7640, 0.0
      %v7897 = vsel %vm5742, %v7641, 0.0
      %v7898 = vsel %vm5742, %v7642, 0.0
      %v7899 = vsel %vm5742, %v7643, 0.0
      %v7900 = vsel %vm5742, %v7644, 0.0
      %v7901 = vsel %vm5742, %v7645, 0.0
      %v7902 = vsel %vm5742, %v7646, 0.0
      %v7903 = vsel %vm5742, %v7647, 0.0
      %v7904 = vsel %vm5742, %v7648, 0.0
      %v7905 = vsel %vm5742, %v7649, 0.0
      %v7906 = vsel %vm5742, %v7650, 0.0
      %v7907 = vsel %vm5742, %v7651, 0.0
      %v7908 = vsel %vm5742, %v7652, 0.0
      %v7909 = vsel %vm5742, %v7653, 0.0
      %v7910 = vsel %vm5742, %v7654, 0.0
      %v7911 = vsel %vm5742, %v7655, 0.0
      %v7912 = vsel %vm5742, %v7656, 0.0
      %v7913 = vsel %vm5742, %v7657, 0.0
      %v7914 = vsel %vm5742, %v7658, 0.0
      %v7915 = vsel %vm5742, %v7659, 0.0
      %v7916 = vsel %vm5742, %v7660, 0.0
      %v7917 = vsel %vm5742, %v7661, 0.0
      %v7918 = vsel %vm5742, %v7662, 0.0
      %v7919 = vsel %vm5742, %v7663, 0.0
      %v7920 = vsel %vm5742, %v7664, 0.0
      %v7921 = vsel %vm5742, %v7665, 0.0
      %v7922 = vsel %vm5742, %v7666, 0.0
      %v7923 = vsel %vm5742, %v7667, 0.0
      %v7924 = vsel %vm5742, %v7668, 0.0
      %v7925 = vsel %vm5742, %v7669, 0.0
      %v7926 = vsel %vm5742, %v7670, 0.0
      %v7927 = vsel %vm5742, %v7671, 0.0
      %v7928 = vsel %vm5742, %v7672, 0.0
      %v7929 = vsel %vm5742, %v7673, 0.0
      %v7930 = vsel %vm5742, %v7674, 0.0
      %v7931 = vsel %vm5742, %v7675, 0.0
      %v7932 = vsel %vm5742, %v7676, 0.0
      %v7933 = vsel %vm5742, %v7677, 0.0
      %v7934 = vsel %vm5742, %v7678, 0.0
      %v7935 = vsel %vm5742, %v7679, 0.0
      %v7936 = vsel %vm5742, %v7680, 0.0
      %v7937 = vsel %vm5742, %v7681, 0.0
      %v7938 = vsel %vm5742, %v7682, 0.0
      %v7939 = vsel %vm5742, %v7683, 0.0
      %v7940 = vsel %vm5742, %v7684, 0.0
      %v7941 = vsel %vm5742, %v7685, 0.0
      %v7942 = vsel %vm5742, %v7686, 0.0
      %v7943 = vsel %vm5742, %v7687, 0.0
      %v7944 = vsel %vm5742, %v7688, 0.0
      %v7945 = vsel %vm5742, %v7689, 0.0
      %v7946 = vsel %vm5742, %v7690, 0.0
      %v7947 = vsel %vm5742, %v7691, 0.0
      %v7948 = vsel %vm5742, %v7692, 0.0
      %v7949 = vsel %vm5742, %v7693, 0.0
      %v7950 = vsel %vm5742, %v7694, 0.0
      %v7951 = vsel %vm5742, %v7695, 0.0
      %v7952 = vsel %vm5742, %v7696, 0.0
      %v7953 = vsel %vm5742, %v7697, 0.0
      %v7954 = vsel %vm5742, %v7698, 0.0
      %v7955 = vsel %vm5742, %v7699, 0.0
      %v7956 = vsel %vm5742, %v7700, 0.0
      %v7957 = vsel %vm5742, %v7701, 0.0
      %v7958 = vsel %vm5742, %v7702, 0.0
      %v7959 = vsel %vm5742, %v7703, 0.0
      %v7960 = vsel %vm5742, %v7704, 0.0
      %v7961 = vsel %vm5742, %v7705, 0.0
      %v7962 = vsel %vm5742, %v7706, 0.0
      %v7963 = vsel %vm5742, %v7707, 0.0
      %v7964 = vsel %vm5742, %v7708, 0.0
      %v7965 = vsel %vm5742, %v7709, 0.0
      %v7966 = vsel %vm5742, %v7710, 0.0
      %v7967 = vsel %vm5742, %v7711, 0.0
      %v7968 = vsel %vm5742, %v7712, 0.0
      %v7969 = vsel %vm5742, %v7713, 0.0
      %v7970 = vsel %vm5742, %v7714, 0.0
      %v7971 = vsel %vm5742, %v7715, 0.0
      %v7972 = vsel %vm5742, %v7716, 0.0
      %v7973 = vsel %vm5742, %v7717, 0.0
      %v7974 = vsel %vm5742, %v7718, 0.0
      %v7975 = vsel %vm5742, %v7719, 0.0
      %v7976 = vsel %vm5742, %v7720, 0.0
      %v7977 = vsel %vm5742, %v7721, 0.0
      %v7978 = vsel %vm5742, %v7722, 0.0
      %v7979 = vsel %vm5742, %v7723, 0.0
      %v7980 = vsel %vm5742, %v7724, 0.0
      %v7981 = vsel %vm5742, %v7725, 0.0
      %v7982 = vsel %vm5742, %v7726, 0.0
      %v7983 = vsel %vm5742, %v7727, 0.0
      %v7984 = vsel %vm5742, %v7728, 0.0
      %v7985 = vsel %vm5742, %v7729, 0.0
      %v7986 = vsel %vm5742, %v7730, 0.0
      %v7987 = vsel %vm5742, %v7731, 0.0
      %v7988 = vsel %vm5742, %v7732, 0.0
      %v7989 = vsel %vm5742, %v7733, 0.0
      %v7990 = vsel %vm5742, %v7734, 0.0
      %v7991 = vsel %vm5742, %v7735, 0.0
      %v7992 = vsel %vm5742, %v7736, 0.0
      %v7993 = vsel %vm5742, %v7737, 0.0
      %v7994 = vsel %vm5742, %v7738, 0.0
      %v7995 = vsel %vm5742, %v7739, 0.0
      %v7996 = vsel %vm5742, %v7740, 0.0
      %v7997 = vsel %vm5742, %v7741, 0.0
      %v7998 = vsel %vm5742, %v7742, 0.0
      %v7999 = vsel %vm5742, %v7743, 0.0
      %v8000 = vsel %vm5742, %v7744, 0.0
      %v8001 = vsel %vm5742, %v7745, 0.0
      %v8002 = vsel %vm5742, %v7746, 0.0
      %v8003 = vsel %vm5742, %v7747, 0.0
      %v8004 = vsel %vm5742, %v7748, 0.0
      %v8005 = vsel %vm5742, %v7749, 0.0
      %v8006 = vsel %vm5742, %v7750, 0.0
      %v8007 = vsel %vm5742, %v7751, 0.0
      %v8008 = vsel %vm5742, %v7752, 0.0
      %v8009 = vsel %vm5742, %v7753, 0.0
      %v8010 = vsel %vm5742, %v7754, 0.0
      %v8011 = vsel %vm5742, %v7755, 0.0
      %v8012 = vsel %vm5742, %v7756, 0.0
      %v8013 = vsel %vm5742, %v7757, 0.0
      %v8014 = vsel %vm5742, %v7758, 0.0
      %v8015 = vsel %vm5742, %v7759, 0.0
      %v8016 = vsel %vm5742, %v7760, 0.0
      %v8017 = vsel %vm5742, %v7761, 0.0
      %v8018 = vsel %vm5742, %v7762, 0.0
      %v8019 = vsel %vm5742, %v7763, 0.0
      %v8020 = vsel %vm5742, %v7764, 0.0
      %v8021 = vsel %vm5742, %v7765, 0.0
      %v8022 = vsel %vm5742, %v7766, 0.0
      %v8023 = vsel %vm5742, %v7767, 0.0
      %v8024 = vsel %vm5742, %v7768, 0.0
      %v8025 = vsel %vm5742, %v7769, 0.0
      %v8026 = vsel %vm5742, %v7770, 0.0
      %v8027 = vsel %vm5742, %v7771, 0.0
      %v8028 = vsel %vm5742, %v7772, 0.0
      %v8029 = vsel %vm5742, %v7773, 0.0
      %v8030 = vsel %vm5742, %v7774, 0.0
      %v8031 = vsel %vm5742, %v7775, 0.0
      %v8032 = vsel %vm5742, %v7776, 0.0
      %v8033 = vsel %vm5742, %v7777, 0.0
      %v8034 = vsel %vm5742, %v7778, 0.0
      %v8035 = vsel %vm5742, %v7779, 0.0
      %v8036 = vsel %vm5742, %v7780, 0.0
      %v8037 = vsel %vm5742, %v7781, 0.0
      %v8038 = vsel %vm5742, %v7782, 0.0
      %v8039 = vsel %vm5742, %v7783, 0.0
      %v8040 = vsel %vm5742, %v7784, 0.0
      %v8041 = vsel %vm5742, %v7785, 0.0
      %v8042 = vsel %vm5742, %v7786, 0.0
      %v8043 = vsel %vm5742, %v7787, 0.0
      %v8044 = vsel %vm5742, %v7788, 0.0
      %v8045 = vsel %vm5742, %v7789, 0.0
      %v8046 = vsel %vm5742, %v7790, 0.0
      %v8047 = vld [vmem:[#allocation2] sm:$0xff]
      %v8048 = vld [vmem:[#allocation2 + $0x8] sm:$0xff]
      %v8049 = vld [vmem:[#allocation2 + $0x10] sm:$0xff]
      %v8050 = vld [vmem:[#allocation2 + $0x18] sm:$0xff]
      %v8051 = vld [vmem:[#allocation2 + $0x20] sm:$0xff]
      %v8052 = vld [vmem:[#allocation2 + $0x28] sm:$0xff]
      %v8053 = vld [vmem:[#allocation2 + $0x30] sm:$0xff]
      %v8054 = vld [vmem:[#allocation2 + $0x38] sm:$0xff]
      %v8055 = vld [vmem:[#allocation2 + $0x40] sm:$0xff]
      %v8056 = vld [vmem:[#allocation2 + $0x48] sm:$0xff]
      %v8057 = vld [vmem:[#allocation2 + $0x50] sm:$0xff]
      %v8058 = vld [vmem:[#allocation2 + $0x58] sm:$0xff]
      %v8059 = vld [vmem:[#allocation2 + $0x60] sm:$0xff]
      %v8060 = vld [vmem:[#allocation2 + $0x68] sm:$0xff]
      %v8061 = vld [vmem:[#allocation2 + $0x70] sm:$0xff]
      %v8062 = vld [vmem:[#allocation2 + $0x78] sm:$0xff]
      %v8063 = vld [vmem:[#allocation2 + $0x80] sm:$0xff]
      %v8064 = vld [vmem:[#allocation2 + $0x88] sm:$0xff]
      %v8065 = vld [vmem:[#allocation2 + $0x90] sm:$0xff]
      %v8066 = vld [vmem:[#allocation2 + $0x98] sm:$0xff]
      %v8067 = vld [vmem:[#allocation2 + $0xa0] sm:$0xff]
      %v8068 = vld [vmem:[#allocation2 + $0xa8] sm:$0xff]
      %v8069 = vld [vmem:[#allocation2 + $0xb0] sm:$0xff]
      %v8070 = vld [vmem:[#allocation2 + $0xb8] sm:$0xff]
      %v8071 = vld [vmem:[#allocation2 + $0xc0] sm:$0xff]
      %v8072 = vld [vmem:[#allocation2 + $0xc8] sm:$0xff]
      %v8073 = vld [vmem:[#allocation2 + $0xd0] sm:$0xff]
      %v8074 = vld [vmem:[#allocation2 + $0xd8] sm:$0xff]
      %v8075 = vld [vmem:[#allocation2 + $0xe0] sm:$0xff]
      %v8076 = vld [vmem:[#allocation2 + $0xe8] sm:$0xff]
      %v8077 = vld [vmem:[#allocation2 + $0xf0] sm:$0xff]
      %v8078 = vld [vmem:[#allocation2 + $0xf8] sm:$0xff]
      %v8079 = vld [vmem:[#allocation2 + $0x100] sm:$0xff]
      %v8080 = vld [vmem:[#allocation2 + $0x108] sm:$0xff]
      %v8081 = vld [vmem:[#allocation2 + $0x110] sm:$0xff]
      %v8082 = vld [vmem:[#allocation2 + $0x118] sm:$0xff]
      %v8083 = vld [vmem:[#allocation2 + $0x120] sm:$0xff]
      %v8084 = vld [vmem:[#allocation2 + $0x128] sm:$0xff]
      %v8085 = vld [vmem:[#allocation2 + $0x130] sm:$0xff]
      %v8086 = vld [vmem:[#allocation2 + $0x138] sm:$0xff]
      %v8087 = vld [vmem:[#allocation2 + $0x140] sm:$0xff]
      %v8088 = vld [vmem:[#allocation2 + $0x148] sm:$0xff]
      %v8089 = vld [vmem:[#allocation2 + $0x150] sm:$0xff]
      %v8090 = vld [vmem:[#allocation2 + $0x158] sm:$0xff]
      %v8091 = vld [vmem:[#allocation2 + $0x160] sm:$0xff]
      %v8092 = vld [vmem:[#allocation2 + $0x168] sm:$0xff]
      %v8093 = vld [vmem:[#allocation2 + $0x170] sm:$0xff]
      %v8094 = vld [vmem:[#allocation2 + $0x178] sm:$0xff]
      %v8095 = vld [vmem:[#allocation2 + $0x180] sm:$0xff]
      %v8096 = vld [vmem:[#allocation2 + $0x188] sm:$0xff]
      %v8097 = vld [vmem:[#allocation2 + $0x190] sm:$0xff]
      %v8098 = vld [vmem:[#allocation2 + $0x198] sm:$0xff]
      %v8099 = vld [vmem:[#allocation2 + $0x1a0] sm:$0xff]
      %v8100 = vld [vmem:[#allocation2 + $0x1a8] sm:$0xff]
      %v8101 = vld [vmem:[#allocation2 + $0x1b0] sm:$0xff]
      %v8102 = vld [vmem:[#allocation2 + $0x1b8] sm:$0xff]
      %v8103 = vld [vmem:[#allocation2 + $0x1c0] sm:$0xff]
      %v8104 = vld [vmem:[#allocation2 + $0x1c8] sm:$0xff]
      %v8105 = vld [vmem:[#allocation2 + $0x1d0] sm:$0xff]
      %v8106 = vld [vmem:[#allocation2 + $0x1d8] sm:$0xff]
      %v8107 = vld [vmem:[#allocation2 + $0x1e0] sm:$0xff]
      %v8108 = vld [vmem:[#allocation2 + $0x1e8] sm:$0xff]
      %v8109 = vld [vmem:[#allocation2 + $0x1f0] sm:$0xff]
      %v8110 = vld [vmem:[#allocation2 + $0x1f8] sm:$0xff]
      %v8111 = vld [vmem:[#allocation2 + $0x200] sm:$0xff]
      %v8112 = vld [vmem:[#allocation2 + $0x208] sm:$0xff]
      %v8113 = vld [vmem:[#allocation2 + $0x210] sm:$0xff]
      %v8114 = vld [vmem:[#allocation2 + $0x218] sm:$0xff]
      %v8115 = vld [vmem:[#allocation2 + $0x220] sm:$0xff]
      %v8116 = vld [vmem:[#allocation2 + $0x228] sm:$0xff]
      %v8117 = vld [vmem:[#allocation2 + $0x230] sm:$0xff]
      %v8118 = vld [vmem:[#allocation2 + $0x238] sm:$0xff]
      %v8119 = vld [vmem:[#allocation2 + $0x240] sm:$0xff]
      %v8120 = vld [vmem:[#allocation2 + $0x248] sm:$0xff]
      %v8121 = vld [vmem:[#allocation2 + $0x250] sm:$0xff]
      %v8122 = vld [vmem:[#allocation2 + $0x258] sm:$0xff]
      %v8123 = vld [vmem:[#allocation2 + $0x260] sm:$0xff]
      %v8124 = vld [vmem:[#allocation2 + $0x268] sm:$0xff]
      %v8125 = vld [vmem:[#allocation2 + $0x270] sm:$0xff]
      %v8126 = vld [vmem:[#allocation2 + $0x278] sm:$0xff]
      %v8127 = vld [vmem:[#allocation2 + $0x280] sm:$0xff]
      %v8128 = vld [vmem:[#allocation2 + $0x288] sm:$0xff]
      %v8129 = vld [vmem:[#allocation2 + $0x290] sm:$0xff]
      %v8130 = vld [vmem:[#allocation2 + $0x298] sm:$0xff]
      %v8131 = vld [vmem:[#allocation2 + $0x2a0] sm:$0xff]
      %v8132 = vld [vmem:[#allocation2 + $0x2a8] sm:$0xff]
      %v8133 = vld [vmem:[#allocation2 + $0x2b0] sm:$0xff]
      %v8134 = vld [vmem:[#allocation2 + $0x2b8] sm:$0xff]
      %v8135 = vld [vmem:[#allocation2 + $0x2c0] sm:$0xff]
      %v8136 = vld [vmem:[#allocation2 + $0x2c8] sm:$0xff]
      %v8137 = vld [vmem:[#allocation2 + $0x2d0] sm:$0xff]
      %v8138 = vld [vmem:[#allocation2 + $0x2d8] sm:$0xff]
      %v8139 = vld [vmem:[#allocation2 + $0x2e0] sm:$0xff]
      %v8140 = vld [vmem:[#allocation2 + $0x2e8] sm:$0xff]
      %v8141 = vld [vmem:[#allocation2 + $0x2f0] sm:$0xff]
      %v8142 = vld [vmem:[#allocation2 + $0x2f8] sm:$0xff]
      %v8143 = vld [vmem:[#allocation2 + $0x300] sm:$0xff]
      %v8144 = vld [vmem:[#allocation2 + $0x308] sm:$0xff]
      %v8145 = vld [vmem:[#allocation2 + $0x310] sm:$0xff]
      %v8146 = vld [vmem:[#allocation2 + $0x318] sm:$0xff]
      %v8147 = vld [vmem:[#allocation2 + $0x320] sm:$0xff]
      %v8148 = vld [vmem:[#allocation2 + $0x328] sm:$0xff]
      %v8149 = vld [vmem:[#allocation2 + $0x330] sm:$0xff]
      %v8150 = vld [vmem:[#allocation2 + $0x338] sm:$0xff]
      %v8151 = vld [vmem:[#allocation2 + $0x340] sm:$0xff]
      %v8152 = vld [vmem:[#allocation2 + $0x348] sm:$0xff]
      %v8153 = vld [vmem:[#allocation2 + $0x350] sm:$0xff]
      %v8154 = vld [vmem:[#allocation2 + $0x358] sm:$0xff]
      %v8155 = vld [vmem:[#allocation2 + $0x360] sm:$0xff]
      %v8156 = vld [vmem:[#allocation2 + $0x368] sm:$0xff]
      %v8157 = vld [vmem:[#allocation2 + $0x370] sm:$0xff]
      %v8158 = vld [vmem:[#allocation2 + $0x378] sm:$0xff]
      %v8159 = vld [vmem:[#allocation2 + $0x380] sm:$0xff]
      %v8160 = vld [vmem:[#allocation2 + $0x388] sm:$0xff]
      %v8161 = vld [vmem:[#allocation2 + $0x390] sm:$0xff]
      %v8162 = vld [vmem:[#allocation2 + $0x398] sm:$0xff]
      %v8163 = vld [vmem:[#allocation2 + $0x3a0] sm:$0xff]
      %v8164 = vld [vmem:[#allocation2 + $0x3a8] sm:$0xff]
      %v8165 = vld [vmem:[#allocation2 + $0x3b0] sm:$0xff]
      %v8166 = vld [vmem:[#allocation2 + $0x3b8] sm:$0xff]
      %v8167 = vld [vmem:[#allocation2 + $0x3c0] sm:$0xff]
      %v8168 = vld [vmem:[#allocation2 + $0x3c8] sm:$0xff]
      %v8169 = vld [vmem:[#allocation2 + $0x3d0] sm:$0xff]
      %v8170 = vld [vmem:[#allocation2 + $0x3d8] sm:$0xff]
      %v8171 = vld [vmem:[#allocation2 + $0x3e0] sm:$0xff]
      %v8172 = vld [vmem:[#allocation2 + $0x3e8] sm:$0xff]
      %v8173 = vld [vmem:[#allocation2 + $0x3f0] sm:$0xff]
      %v8174 = vld [vmem:[#allocation2 + $0x3f8] sm:$0xff]
      %v8175 = vld [vmem:[#allocation2 + $0x400] sm:$0xff]
      %v8176 = vld [vmem:[#allocation2 + $0x408] sm:$0xff]
      %v8177 = vld [vmem:[#allocation2 + $0x410] sm:$0xff]
      %v8178 = vld [vmem:[#allocation2 + $0x418] sm:$0xff]
      %v8179 = vld [vmem:[#allocation2 + $0x420] sm:$0xff]
      %v8180 = vld [vmem:[#allocation2 + $0x428] sm:$0xff]
      %v8181 = vld [vmem:[#allocation2 + $0x430] sm:$0xff]
      %v8182 = vld [vmem:[#allocation2 + $0x438] sm:$0xff]
      %v8183 = vld [vmem:[#allocation2 + $0x440] sm:$0xff]
      %v8184 = vld [vmem:[#allocation2 + $0x448] sm:$0xff]
      %v8185 = vld [vmem:[#allocation2 + $0x450] sm:$0xff]
      %v8186 = vld [vmem:[#allocation2 + $0x458] sm:$0xff]
      %v8187 = vld [vmem:[#allocation2 + $0x460] sm:$0xff]
      %v8188 = vld [vmem:[#allocation2 + $0x468] sm:$0xff]
      %v8189 = vld [vmem:[#allocation2 + $0x470] sm:$0xff]
      %v8190 = vld [vmem:[#allocation2 + $0x478] sm:$0xff]
      %v8191 = vld [vmem:[#allocation2 + $0x480] sm:$0xff]
      %v8192 = vld [vmem:[#allocation2 + $0x488] sm:$0xff]
      %v8193 = vld [vmem:[#allocation2 + $0x490] sm:$0xff]
      %v8194 = vld [vmem:[#allocation2 + $0x498] sm:$0xff]
      %v8195 = vld [vmem:[#allocation2 + $0x4a0] sm:$0xff]
      %v8196 = vld [vmem:[#allocation2 + $0x4a8] sm:$0xff]
      %v8197 = vld [vmem:[#allocation2 + $0x4b0] sm:$0xff]
      %v8198 = vld [vmem:[#allocation2 + $0x4b8] sm:$0xff]
      %v8199 = vld [vmem:[#allocation2 + $0x4c0] sm:$0xff]
      %v8200 = vld [vmem:[#allocation2 + $0x4c8] sm:$0xff]
      %v8201 = vld [vmem:[#allocation2 + $0x4d0] sm:$0xff]
      %v8202 = vld [vmem:[#allocation2 + $0x4d8] sm:$0xff]
      %v8203 = vld [vmem:[#allocation2 + $0x4e0] sm:$0xff]
      %v8204 = vld [vmem:[#allocation2 + $0x4e8] sm:$0xff]
      %v8205 = vld [vmem:[#allocation2 + $0x4f0] sm:$0xff]
      %v8206 = vld [vmem:[#allocation2 + $0x4f8] sm:$0xff]
      %v8207 = vld [vmem:[#allocation2 + $0x500] sm:$0xff]
      %v8208 = vld [vmem:[#allocation2 + $0x508] sm:$0xff]
      %v8209 = vld [vmem:[#allocation2 + $0x510] sm:$0xff]
      %v8210 = vld [vmem:[#allocation2 + $0x518] sm:$0xff]
      %v8211 = vld [vmem:[#allocation2 + $0x520] sm:$0xff]
      %v8212 = vld [vmem:[#allocation2 + $0x528] sm:$0xff]
      %v8213 = vld [vmem:[#allocation2 + $0x530] sm:$0xff]
      %v8214 = vld [vmem:[#allocation2 + $0x538] sm:$0xff]
      %v8215 = vld [vmem:[#allocation2 + $0x540] sm:$0xff]
      %v8216 = vld [vmem:[#allocation2 + $0x548] sm:$0xff]
      %v8217 = vld [vmem:[#allocation2 + $0x550] sm:$0xff]
      %v8218 = vld [vmem:[#allocation2 + $0x558] sm:$0xff]
      %v8219 = vld [vmem:[#allocation2 + $0x560] sm:$0xff]
      %v8220 = vld [vmem:[#allocation2 + $0x568] sm:$0xff]
      %v8221 = vld [vmem:[#allocation2 + $0x570] sm:$0xff]
      %v8222 = vld [vmem:[#allocation2 + $0x578] sm:$0xff]
      %v8223 = vld [vmem:[#allocation2 + $0x580] sm:$0xff]
      %v8224 = vld [vmem:[#allocation2 + $0x588] sm:$0xff]
      %v8225 = vld [vmem:[#allocation2 + $0x590] sm:$0xff]
      %v8226 = vld [vmem:[#allocation2 + $0x598] sm:$0xff]
      %v8227 = vld [vmem:[#allocation2 + $0x5a0] sm:$0xff]
      %v8228 = vld [vmem:[#allocation2 + $0x5a8] sm:$0xff]
      %v8229 = vld [vmem:[#allocation2 + $0x5b0] sm:$0xff]
      %v8230 = vld [vmem:[#allocation2 + $0x5b8] sm:$0xff]
      %v8231 = vld [vmem:[#allocation2 + $0x5c0] sm:$0xff]
      %v8232 = vld [vmem:[#allocation2 + $0x5c8] sm:$0xff]
      %v8233 = vld [vmem:[#allocation2 + $0x5d0] sm:$0xff]
      %v8234 = vld [vmem:[#allocation2 + $0x5d8] sm:$0xff]
      %v8235 = vld [vmem:[#allocation2 + $0x5e0] sm:$0xff]
      %v8236 = vld [vmem:[#allocation2 + $0x5e8] sm:$0xff]
      %v8237 = vld [vmem:[#allocation2 + $0x5f0] sm:$0xff]
      %v8238 = vld [vmem:[#allocation2 + $0x5f8] sm:$0xff]
      %v8239 = vld [vmem:[#allocation2 + $0x600] sm:$0xff]
      %v8240 = vld [vmem:[#allocation2 + $0x608] sm:$0xff]
      %v8241 = vld [vmem:[#allocation2 + $0x610] sm:$0xff]
      %v8242 = vld [vmem:[#allocation2 + $0x618] sm:$0xff]
      %v8243 = vld [vmem:[#allocation2 + $0x620] sm:$0xff]
      %v8244 = vld [vmem:[#allocation2 + $0x628] sm:$0xff]
      %v8245 = vld [vmem:[#allocation2 + $0x630] sm:$0xff]
      %v8246 = vld [vmem:[#allocation2 + $0x638] sm:$0xff]
      %v8247 = vld [vmem:[#allocation2 + $0x640] sm:$0xff]
      %v8248 = vld [vmem:[#allocation2 + $0x648] sm:$0xff]
      %v8249 = vld [vmem:[#allocation2 + $0x650] sm:$0xff]
      %v8250 = vld [vmem:[#allocation2 + $0x658] sm:$0xff]
      %v8251 = vld [vmem:[#allocation2 + $0x660] sm:$0xff]
      %v8252 = vld [vmem:[#allocation2 + $0x668] sm:$0xff]
      %v8253 = vld [vmem:[#allocation2 + $0x670] sm:$0xff]
      %v8254 = vld [vmem:[#allocation2 + $0x678] sm:$0xff]
      %v8255 = vld [vmem:[#allocation2 + $0x680] sm:$0xff]
      %v8256 = vld [vmem:[#allocation2 + $0x688] sm:$0xff]
      %v8257 = vld [vmem:[#allocation2 + $0x690] sm:$0xff]
      %v8258 = vld [vmem:[#allocation2 + $0x698] sm:$0xff]
      %v8259 = vld [vmem:[#allocation2 + $0x6a0] sm:$0xff]
      %v8260 = vld [vmem:[#allocation2 + $0x6a8] sm:$0xff]
      %v8261 = vld [vmem:[#allocation2 + $0x6b0] sm:$0xff]
      %v8262 = vld [vmem:[#allocation2 + $0x6b8] sm:$0xff]
      %v8263 = vld [vmem:[#allocation2 + $0x6c0] sm:$0xff]
      %v8264 = vld [vmem:[#allocation2 + $0x6c8] sm:$0xff]
      %v8265 = vld [vmem:[#allocation2 + $0x6d0] sm:$0xff]
      %v8266 = vld [vmem:[#allocation2 + $0x6d8] sm:$0xff]
      %v8267 = vld [vmem:[#allocation2 + $0x6e0] sm:$0xff]
      %v8268 = vld [vmem:[#allocation2 + $0x6e8] sm:$0xff]
      %v8269 = vld [vmem:[#allocation2 + $0x6f0] sm:$0xff]
      %v8270 = vld [vmem:[#allocation2 + $0x6f8] sm:$0xff]
      %v8271 = vld [vmem:[#allocation2 + $0x700] sm:$0xff]
      %v8272 = vld [vmem:[#allocation2 + $0x708] sm:$0xff]
      %v8273 = vld [vmem:[#allocation2 + $0x710] sm:$0xff]
      %v8274 = vld [vmem:[#allocation2 + $0x718] sm:$0xff]
      %v8275 = vld [vmem:[#allocation2 + $0x720] sm:$0xff]
      %v8276 = vld [vmem:[#allocation2 + $0x728] sm:$0xff]
      %v8277 = vld [vmem:[#allocation2 + $0x730] sm:$0xff]
      %v8278 = vld [vmem:[#allocation2 + $0x738] sm:$0xff]
      %v8279 = vld [vmem:[#allocation2 + $0x740] sm:$0xff]
      %v8280 = vld [vmem:[#allocation2 + $0x748] sm:$0xff]
      %v8281 = vld [vmem:[#allocation2 + $0x750] sm:$0xff]
      %v8282 = vld [vmem:[#allocation2 + $0x758] sm:$0xff]
      %v8283 = vld [vmem:[#allocation2 + $0x760] sm:$0xff]
      %v8284 = vld [vmem:[#allocation2 + $0x768] sm:$0xff]
      %v8285 = vld [vmem:[#allocation2 + $0x770] sm:$0xff]
      %v8286 = vld [vmem:[#allocation2 + $0x778] sm:$0xff]
      %v8287 = vld [vmem:[#allocation2 + $0x780] sm:$0xff]
      %v8288 = vld [vmem:[#allocation2 + $0x788] sm:$0xff]
      %v8289 = vld [vmem:[#allocation2 + $0x790] sm:$0xff]
      %v8290 = vld [vmem:[#allocation2 + $0x798] sm:$0xff]
      %v8291 = vld [vmem:[#allocation2 + $0x7a0] sm:$0xff]
      %v8292 = vld [vmem:[#allocation2 + $0x7a8] sm:$0xff]
      %v8293 = vld [vmem:[#allocation2 + $0x7b0] sm:$0xff]
      %v8294 = vld [vmem:[#allocation2 + $0x7b8] sm:$0xff]
      %v8295 = vld [vmem:[#allocation2 + $0x7c0] sm:$0xff]
      %v8296 = vld [vmem:[#allocation2 + $0x7c8] sm:$0xff]
      %v8297 = vld [vmem:[#allocation2 + $0x7d0] sm:$0xff]
      %v8298 = vld [vmem:[#allocation2 + $0x7d8] sm:$0xff]
      %v8299 = vld [vmem:[#allocation2 + $0x7e0] sm:$0xff]
      %v8300 = vld [vmem:[#allocation2 + $0x7e8] sm:$0xff]
      %v8301 = vld [vmem:[#allocation2 + $0x7f0] sm:$0xff]
      %v8302 = vld [vmem:[#allocation2 + $0x7f8] sm:$0xff]
      %v8303 = vmul.f32 %v7791, %v7791
      %v8304 = vmul.f32 %v7792, %v7792
      %v8305 = vmul.f32 %v7793, %v7793
      %v8306 = vmul.f32 %v7794, %v7794
      %v8307 = vmul.f32 %v7795, %v7795
      %v8308 = vmul.f32 %v7796, %v7796
      %v8309 = vmul.f32 %v7797, %v7797
      %v8310 = vmul.f32 %v7798, %v7798
      %v8311 = vmul.f32 %v7799, %v7799
      %v8312 = vmul.f32 %v7800, %v7800
      %v8313 = vmul.f32 %v7801, %v7801
      %v8314 = vmul.f32 %v7802, %v7802
      %v8315 = vmul.f32 %v7803, %v7803
      %v8316 = vmul.f32 %v7804, %v7804
      %v8317 = vmul.f32 %v7805, %v7805
      %v8318 = vmul.f32 %v7806, %v7806
      %v8319 = vmul.f32 %v7807, %v7807
      %v8320 = vmul.f32 %v7808, %v7808
      %v8321 = vmul.f32 %v7809, %v7809
      %v8322 = vmul.f32 %v7810, %v7810
      %v8323 = vmul.f32 %v7811, %v7811
      %v8324 = vmul.f32 %v7812, %v7812
      %v8325 = vmul.f32 %v7813, %v7813
      %v8326 = vmul.f32 %v7814, %v7814
      %v8327 = vmul.f32 %v7815, %v7815
      %v8328 = vmul.f32 %v7816, %v7816
      %v8329 = vmul.f32 %v7817, %v7817
      %v8330 = vmul.f32 %v7818, %v7818
      %v8331 = vmul.f32 %v7819, %v7819
      %v8332 = vmul.f32 %v7820, %v7820
      %v8333 = vmul.f32 %v7821, %v7821
      %v8334 = vmul.f32 %v7822, %v7822
      %v8335 = vmul.f32 %v7823, %v7823
      %v8336 = vmul.f32 %v7824, %v7824
      %v8337 = vmul.f32 %v7825, %v7825
      %v8338 = vmul.f32 %v7826, %v7826
      %v8339 = vmul.f32 %v7827, %v7827
      %v8340 = vmul.f32 %v7828, %v7828
      %v8341 = vmul.f32 %v7829, %v7829
      %v8342 = vmul.f32 %v7830, %v7830
      %v8343 = vmul.f32 %v7831, %v7831
      %v8344 = vmul.f32 %v7832, %v7832
      %v8345 = vmul.f32 %v7833, %v7833
      %v8346 = vmul.f32 %v7834, %v7834
      %v8347 = vmul.f32 %v7835, %v7835
      %v8348 = vmul.f32 %v7836, %v7836
      %v8349 = vmul.f32 %v7837, %v7837
      %v8350 = vmul.f32 %v7838, %v7838
      %v8351 = vmul.f32 %v7839, %v7839
      %v8352 = vmul.f32 %v7840, %v7840
      %v8353 = vmul.f32 %v7841, %v7841
      %v8354 = vmul.f32 %v7842, %v7842
      %v8355 = vmul.f32 %v7843, %v7843
      %v8356 = vmul.f32 %v7844, %v7844
      %v8357 = vmul.f32 %v7845, %v7845
      %v8358 = vmul.f32 %v7846, %v7846
      %v8359 = vmul.f32 %v7847, %v7847
      %v8360 = vmul.f32 %v7848, %v7848
      %v8361 = vmul.f32 %v7849, %v7849
      %v8362 = vmul.f32 %v7850, %v7850
      %v8363 = vmul.f32 %v7851, %v7851
      %v8364 = vmul.f32 %v7852, %v7852
      %v8365 = vmul.f32 %v7853, %v7853
      %v8366 = vmul.f32 %v7854, %v7854
      %v8367 = vmul.f32 %v7855, %v7855
      %v8368 = vmul.f32 %v7856, %v7856
      %v8369 = vmul.f32 %v7857, %v7857
      %v8370 = vmul.f32 %v7858, %v7858
      %v8371 = vmul.f32 %v7859, %v7859
      %v8372 = vmul.f32 %v7860, %v7860
      %v8373 = vmul.f32 %v7861, %v7861
      %v8374 = vmul.f32 %v7862, %v7862
      %v8375 = vmul.f32 %v7863, %v7863
      %v8376 = vmul.f32 %v7864, %v7864
      %v8377 = vmul.f32 %v7865, %v7865
      %v8378 = vmul.f32 %v7866, %v7866
      %v8379 = vmul.f32 %v7867, %v7867
      %v8380 = vmul.f32 %v7868, %v7868
      %v8381 = vmul.f32 %v7869, %v7869
      %v8382 = vmul.f32 %v7870, %v7870
      %v8383 = vmul.f32 %v7871, %v7871
      %v8384 = vmul.f32 %v7872, %v7872
      %v8385 = vmul.f32 %v7873, %v7873
      %v8386 = vmul.f32 %v7874, %v7874
      %v8387 = vmul.f32 %v7875, %v7875
      %v8388 = vmul.f32 %v7876, %v7876
      %v8389 = vmul.f32 %v7877, %v7877
      %v8390 = vmul.f32 %v7878, %v7878
      %v8391 = vmul.f32 %v7879, %v7879
      %v8392 = vmul.f32 %v7880, %v7880
      %v8393 = vmul.f32 %v7881, %v7881
      %v8394 = vmul.f32 %v7882, %v7882
      %v8395 = vmul.f32 %v7883, %v7883
      %v8396 = vmul.f32 %v7884, %v7884
      %v8397 = vmul.f32 %v7885, %v7885
      %v8398 = vmul.f32 %v7886, %v7886
      %v8399 = vmul.f32 %v7887, %v7887
      %v8400 = vmul.f32 %v7888, %v7888
      %v8401 = vmul.f32 %v7889, %v7889
      %v8402 = vmul.f32 %v7890, %v7890
      %v8403 = vmul.f32 %v7891, %v7891
      %v8404 = vmul.f32 %v7892, %v7892
      %v8405 = vmul.f32 %v7893, %v7893
      %v8406 = vmul.f32 %v7894, %v7894
      %v8407 = vmul.f32 %v7895, %v7895
      %v8408 = vmul.f32 %v7896, %v7896
      %v8409 = vmul.f32 %v7897, %v7897
      %v8410 = vmul.f32 %v7898, %v7898
      %v8411 = vmul.f32 %v7899, %v7899
      %v8412 = vmul.f32 %v7900, %v7900
      %v8413 = vmul.f32 %v7901, %v7901
      %v8414 = vmul.f32 %v7902, %v7902
      %v8415 = vmul.f32 %v7903, %v7903
      %v8416 = vmul.f32 %v7904, %v7904
      %v8417 = vmul.f32 %v7905, %v7905
      %v8418 = vmul.f32 %v7906, %v7906
      %v8419 = vmul.f32 %v7907, %v7907
      %v8420 = vmul.f32 %v7908, %v7908
      %v8421 = vmul.f32 %v7909, %v7909
      %v8422 = vmul.f32 %v7910, %v7910
      %v8423 = vmul.f32 %v7911, %v7911
      %v8424 = vmul.f32 %v7912, %v7912
      %v8425 = vmul.f32 %v7913, %v7913
      %v8426 = vmul.f32 %v7914, %v7914
      %v8427 = vmul.f32 %v7915, %v7915
      %v8428 = vmul.f32 %v7916, %v7916
      %v8429 = vmul.f32 %v7917, %v7917
      %v8430 = vmul.f32 %v7918, %v7918
      %v8431 = vmul.f32 %v7919, %v7919
      %v8432 = vmul.f32 %v7920, %v7920
      %v8433 = vmul.f32 %v7921, %v7921
      %v8434 = vmul.f32 %v7922, %v7922
      %v8435 = vmul.f32 %v7923, %v7923
      %v8436 = vmul.f32 %v7924, %v7924
      %v8437 = vmul.f32 %v7925, %v7925
      %v8438 = vmul.f32 %v7926, %v7926
      %v8439 = vmul.f32 %v7927, %v7927
      %v8440 = vmul.f32 %v7928, %v7928
      %v8441 = vmul.f32 %v7929, %v7929
      %v8442 = vmul.f32 %v7930, %v7930
      %v8443 = vmul.f32 %v7931, %v7931
      %v8444 = vmul.f32 %v7932, %v7932
      %v8445 = vmul.f32 %v7933, %v7933
      %v8446 = vmul.f32 %v7934, %v7934
      %v8447 = vmul.f32 %v7935, %v7935
      %v8448 = vmul.f32 %v7936, %v7936
      %v8449 = vmul.f32 %v7937, %v7937
      %v8450 = vmul.f32 %v7938, %v7938
      %v8451 = vmul.f32 %v7939, %v7939
      %v8452 = vmul.f32 %v7940, %v7940
      %v8453 = vmul.f32 %v7941, %v7941
      %v8454 = vmul.f32 %v7942, %v7942
      %v8455 = vmul.f32 %v7943, %v7943
      %v8456 = vmul.f32 %v7944, %v7944
      %v8457 = vmul.f32 %v7945, %v7945
      %v8458 = vmul.f32 %v7946, %v7946
      %v8459 = vmul.f32 %v7947, %v7947
      %v8460 = vmul.f32 %v7948, %v7948
      %v8461 = vmul.f32 %v7949, %v7949
      %v8462 = vmul.f32 %v7950, %v7950
      %v8463 = vmul.f32 %v7951, %v7951
      %v8464 = vmul.f32 %v7952, %v7952
      %v8465 = vmul.f32 %v7953, %v7953
      %v8466 = vmul.f32 %v7954, %v7954
      %v8467 = vmul.f32 %v7955, %v7955
      %v8468 = vmul.f32 %v7956, %v7956
      %v8469 = vmul.f32 %v7957, %v7957
      %v8470 = vmul.f32 %v7958, %v7958
      %v8471 = vmul.f32 %v7959, %v7959
      %v8472 = vmul.f32 %v7960, %v7960
      %v8473 = vmul.f32 %v7961, %v7961
      %v8474 = vmul.f32 %v7962, %v7962
      %v8475 = vmul.f32 %v7963, %v7963
      %v8476 = vmul.f32 %v7964, %v7964
      %v8477 = vmul.f32 %v7965, %v7965
      %v8478 = vmul.f32 %v7966, %v7966
      %v8479 = vmul.f32 %v7967, %v7967
      %v8480 = vmul.f32 %v7968, %v7968
      %v8481 = vmul.f32 %v7969, %v7969
      %v8482 = vmul.f32 %v7970, %v7970
      %v8483 = vmul.f32 %v7971, %v7971
      %v8484 = vmul.f32 %v7972, %v7972
      %v8485 = vmul.f32 %v7973, %v7973
      %v8486 = vmul.f32 %v7974, %v7974
      %v8487 = vmul.f32 %v7975, %v7975
      %v8488 = vmul.f32 %v7976, %v7976
      %v8489 = vmul.f32 %v7977, %v7977
      %v8490 = vmul.f32 %v7978, %v7978
      %v8491 = vmul.f32 %v7979, %v7979
      %v8492 = vmul.f32 %v7980, %v7980
      %v8493 = vmul.f32 %v7981, %v7981
      %v8494 = vmul.f32 %v7982, %v7982
      %v8495 = vmul.f32 %v7983, %v7983
      %v8496 = vmul.f32 %v7984, %v7984
      %v8497 = vmul.f32 %v7985, %v7985
      %v8498 = vmul.f32 %v7986, %v7986
      %v8499 = vmul.f32 %v7987, %v7987
      %v8500 = vmul.f32 %v7988, %v7988
      %v8501 = vmul.f32 %v7989, %v7989
      %v8502 = vmul.f32 %v7990, %v7990
      %v8503 = vmul.f32 %v7991, %v7991
      %v8504 = vmul.f32 %v7992, %v7992
      %v8505 = vmul.f32 %v7993, %v7993
      %v8506 = vmul.f32 %v7994, %v7994
      %v8507 = vmul.f32 %v7995, %v7995
      %v8508 = vmul.f32 %v7996, %v7996
      %v8509 = vmul.f32 %v7997, %v7997
      %v8510 = vmul.f32 %v7998, %v7998
      %v8511 = vmul.f32 %v7999, %v7999
      %v8512 = vmul.f32 %v8000, %v8000
      %v8513 = vmul.f32 %v8001, %v8001
      %v8514 = vmul.f32 %v8002, %v8002
      %v8515 = vmul.f32 %v8003, %v8003
      %v8516 = vmul.f32 %v8004, %v8004
      %v8517 = vmul.f32 %v8005, %v8005
      %v8518 = vmul.f32 %v8006, %v8006
      %v8519 = vmul.f32 %v8007, %v8007
      %v8520 = vmul.f32 %v8008, %v8008
      %v8521 = vmul.f32 %v8009, %v8009
      %v8522 = vmul.f32 %v8010, %v8010
      %v8523 = vmul.f32 %v8011, %v8011
      %v8524 = vmul.f32 %v8012, %v8012
      %v8525 = vmul.f32 %v8013, %v8013
      %v8526 = vmul.f32 %v8014, %v8014
      %v8527 = vmul.f32 %v8015, %v8015
      %v8528 = vmul.f32 %v8016, %v8016
      %v8529 = vmul.f32 %v8017, %v8017
      %v8530 = vmul.f32 %v8018, %v8018
      %v8531 = vmul.f32 %v8019, %v8019
      %v8532 = vmul.f32 %v8020, %v8020
      %v8533 = vmul.f32 %v8021, %v8021
      %v8534 = vmul.f32 %v8022, %v8022
      %v8535 = vmul.f32 %v8023, %v8023
      %v8536 = vmul.f32 %v8024, %v8024
      %v8537 = vmul.f32 %v8025, %v8025
      %v8538 = vmul.f32 %v8026, %v8026
      %v8539 = vmul.f32 %v8027, %v8027
      %v8540 = vmul.f32 %v8028, %v8028
      %v8541 = vmul.f32 %v8029, %v8029
      %v8542 = vmul.f32 %v8030, %v8030
      %v8543 = vmul.f32 %v8031, %v8031
      %v8544 = vmul.f32 %v8032, %v8032
      %v8545 = vmul.f32 %v8033, %v8033
      %v8546 = vmul.f32 %v8034, %v8034
      %v8547 = vmul.f32 %v8035, %v8035
      %v8548 = vmul.f32 %v8036, %v8036
      %v8549 = vmul.f32 %v8037, %v8037
      %v8550 = vmul.f32 %v8038, %v8038
      %v8551 = vmul.f32 %v8039, %v8039
      %v8552 = vmul.f32 %v8040, %v8040
      %v8553 = vmul.f32 %v8041, %v8041
      %v8554 = vmul.f32 %v8042, %v8042
      %v8555 = vmul.f32 %v8043, %v8043
      %v8556 = vmul.f32 %v8044, %v8044
      %v8557 = vmul.f32 %v8045, %v8045
      %v8558 = vmul.f32 %v8046, %v8046
      %v8559 = vadd.f32 %v8047, %v8303
      %v8560 = vadd.f32 %v8048, %v8304
      %v8561 = vadd.f32 %v8049, %v8305
      %v8562 = vadd.f32 %v8050, %v8306
      %v8563 = vadd.f32 %v8051, %v8307
      %v8564 = vadd.f32 %v8052, %v8308
      %v8565 = vadd.f32 %v8053, %v8309
      %v8566 = vadd.f32 %v8054, %v8310
      %v8567 = vadd.f32 %v8055, %v8311
      %v8568 = vadd.f32 %v8056, %v8312
      %v8569 = vadd.f32 %v8057, %v8313
      %v8570 = vadd.f32 %v8058, %v8314
      %v8571 = vadd.f32 %v8059, %v8315
      %v8572 = vadd.f32 %v8060, %v8316
      %v8573 = vadd.f32 %v8061, %v8317
      %v8574 = vadd.f32 %v8062, %v8318
      %v8575 = vadd.f32 %v8063, %v8319
      %v8576 = vadd.f32 %v8064, %v8320
      %v8577 = vadd.f32 %v8065, %v8321
      %v8578 = vadd.f32 %v8066, %v8322
      %v8579 = vadd.f32 %v8067, %v8323
      %v8580 = vadd.f32 %v8068, %v8324
      %v8581 = vadd.f32 %v8069, %v8325
      %v8582 = vadd.f32 %v8070, %v8326
      %v8583 = vadd.f32 %v8071, %v8327
      %v8584 = vadd.f32 %v8072, %v8328
      %v8585 = vadd.f32 %v8073, %v8329
      %v8586 = vadd.f32 %v8074, %v8330
      %v8587 = vadd.f32 %v8075, %v8331
      %v8588 = vadd.f32 %v8076, %v8332
      %v8589 = vadd.f32 %v8077, %v8333
      %v8590 = vadd.f32 %v8078, %v8334
      %v8591 = vadd.f32 %v8079, %v8335
      %v8592 = vadd.f32 %v8080, %v8336
      %v8593 = vadd.f32 %v8081, %v8337
      %v8594 = vadd.f32 %v8082, %v8338
      %v8595 = vadd.f32 %v8083, %v8339
      %v8596 = vadd.f32 %v8084, %v8340
      %v8597 = vadd.f32 %v8085, %v8341
      %v8598 = vadd.f32 %v8086, %v8342
      %v8599 = vadd.f32 %v8087, %v8343
      %v8600 = vadd.f32 %v8088, %v8344
      %v8601 = vadd.f32 %v8089, %v8345
      %v8602 = vadd.f32 %v8090, %v8346
      %v8603 = vadd.f32 %v8091, %v8347
      %v8604 = vadd.f32 %v8092, %v8348
      %v8605 = vadd.f32 %v8093, %v8349
      %v8606 = vadd.f32 %v8094, %v8350
      %v8607 = vadd.f32 %v8095, %v8351
      %v8608 = vadd.f32 %v8096, %v8352
      %v8609 = vadd.f32 %v8097, %v8353
      %v8610 = vadd.f32 %v8098, %v8354
      %v8611 = vadd.f32 %v8099, %v8355
      %v8612 = vadd.f32 %v8100, %v8356
      %v8613 = vadd.f32 %v8101, %v8357
      %v8614 = vadd.f32 %v8102, %v8358
      %v8615 = vadd.f32 %v8103, %v8359
      %v8616 = vadd.f32 %v8104, %v8360
      %v8617 = vadd.f32 %v8105, %v8361
      %v8618 = vadd.f32 %v8106, %v8362
      %v8619 = vadd.f32 %v8107, %v8363
      %v8620 = vadd.f32 %v8108, %v8364
      %v8621 = vadd.f32 %v8109, %v8365
      %v8622 = vadd.f32 %v8110, %v8366
      %v8623 = vadd.f32 %v8111, %v8367
      %v8624 = vadd.f32 %v8112, %v8368
      %v8625 = vadd.f32 %v8113, %v8369
      %v8626 = vadd.f32 %v8114, %v8370
      %v8627 = vadd.f32 %v8115, %v8371
      %v8628 = vadd.f32 %v8116, %v8372
      %v8629 = vadd.f32 %v8117, %v8373
      %v8630 = vadd.f32 %v8118, %v8374
      %v8631 = vadd.f32 %v8119, %v8375
      %v8632 = vadd.f32 %v8120, %v8376
      %v8633 = vadd.f32 %v8121, %v8377
      %v8634 = vadd.f32 %v8122, %v8378
      %v8635 = vadd.f32 %v8123, %v8379
      %v8636 = vadd.f32 %v8124, %v8380
      %v8637 = vadd.f32 %v8125, %v8381
      %v8638 = vadd.f32 %v8126, %v8382
      %v8639 = vadd.f32 %v8127, %v8383
      %v8640 = vadd.f32 %v8128, %v8384
      %v8641 = vadd.f32 %v8129, %v8385
      %v8642 = vadd.f32 %v8130, %v8386
      %v8643 = vadd.f32 %v8131, %v8387
      %v8644 = vadd.f32 %v8132, %v8388
      %v8645 = vadd.f32 %v8133, %v8389
      %v8646 = vadd.f32 %v8134, %v8390
      %v8647 = vadd.f32 %v8135, %v8391
      %v8648 = vadd.f32 %v8136, %v8392
      %v8649 = vadd.f32 %v8137, %v8393
      %v8650 = vadd.f32 %v8138, %v8394
      %v8651 = vadd.f32 %v8139, %v8395
      %v8652 = vadd.f32 %v8140, %v8396
      %v8653 = vadd.f32 %v8141, %v8397
      %v8654 = vadd.f32 %v8142, %v8398
      %v8655 = vadd.f32 %v8143, %v8399
      %v8656 = vadd.f32 %v8144, %v8400
      %v8657 = vadd.f32 %v8145, %v8401
      %v8658 = vadd.f32 %v8146, %v8402
      %v8659 = vadd.f32 %v8147, %v8403
      %v8660 = vadd.f32 %v8148, %v8404
      %v8661 = vadd.f32 %v8149, %v8405
      %v8662 = vadd.f32 %v8150, %v8406
      %v8663 = vadd.f32 %v8151, %v8407
      %v8664 = vadd.f32 %v8152, %v8408
      %v8665 = vadd.f32 %v8153, %v8409
      %v8666 = vadd.f32 %v8154, %v8410
      %v8667 = vadd.f32 %v8155, %v8411
      %v8668 = vadd.f32 %v8156, %v8412
      %v8669 = vadd.f32 %v8157, %v8413
      %v8670 = vadd.f32 %v8158, %v8414
      %v8671 = vadd.f32 %v8159, %v8415
      %v8672 = vadd.f32 %v8160, %v8416
      %v8673 = vadd.f32 %v8161, %v8417
      %v8674 = vadd.f32 %v8162, %v8418
      %v8675 = vadd.f32 %v8163, %v8419
      %v8676 = vadd.f32 %v8164, %v8420
      %v8677 = vadd.f32 %v8165, %v8421
      %v8678 = vadd.f32 %v8166, %v8422
      %v8679 = vadd.f32 %v8167, %v8423
      %v8680 = vadd.f32 %v8168, %v8424
      %v8681 = vadd.f32 %v8169, %v8425
      %v8682 = vadd.f32 %v8170, %v8426
      %v8683 = vadd.f32 %v8171, %v8427
      %v8684 = vadd.f32 %v8172, %v8428
      %v8685 = vadd.f32 %v8173, %v8429
      %v8686 = vadd.f32 %v8174, %v8430
      %v8687 = vadd.f32 %v8175, %v8431
      %v8688 = vadd.f32 %v8176, %v8432
      %v8689 = vadd.f32 %v8177, %v8433
      %v8690 = vadd.f32 %v8178, %v8434
      %v8691 = vadd.f32 %v8179, %v8435
      %v8692 = vadd.f32 %v8180, %v8436
      %v8693 = vadd.f32 %v8181, %v8437
      %v8694 = vadd.f32 %v8182, %v8438
      %v8695 = vadd.f32 %v8183, %v8439
      %v8696 = vadd.f32 %v8184, %v8440
      %v8697 = vadd.f32 %v8185, %v8441
      %v8698 = vadd.f32 %v8186, %v8442
      %v8699 = vadd.f32 %v8187, %v8443
      %v8700 = vadd.f32 %v8188, %v8444
      %v8701 = vadd.f32 %v8189, %v8445
      %v8702 = vadd.f32 %v8190, %v8446
      %v8703 = vadd.f32 %v8191, %v8447
      %v8704 = vadd.f32 %v8192, %v8448
      %v8705 = vadd.f32 %v8193, %v8449
      %v8706 = vadd.f32 %v8194, %v8450
      %v8707 = vadd.f32 %v8195, %v8451
      %v8708 = vadd.f32 %v8196, %v8452
      %v8709 = vadd.f32 %v8197, %v8453
      %v8710 = vadd.f32 %v8198, %v8454
      %v8711 = vadd.f32 %v8199, %v8455
      %v8712 = vadd.f32 %v8200, %v8456
      %v8713 = vadd.f32 %v8201, %v8457
      %v8714 = vadd.f32 %v8202, %v8458
      %v8715 = vadd.f32 %v8203, %v8459
      %v8716 = vadd.f32 %v8204, %v8460
      %v8717 = vadd.f32 %v8205, %v8461
      %v8718 = vadd.f32 %v8206, %v8462
      %v8719 = vadd.f32 %v8207, %v8463
      %v8720 = vadd.f32 %v8208, %v8464
      %v8721 = vadd.f32 %v8209, %v8465
      %v8722 = vadd.f32 %v8210, %v8466
      %v8723 = vadd.f32 %v8211, %v8467
      %v8724 = vadd.f32 %v8212, %v8468
      %v8725 = vadd.f32 %v8213, %v8469
      %v8726 = vadd.f32 %v8214, %v8470
      %v8727 = vadd.f32 %v8215, %v8471
      %v8728 = vadd.f32 %v8216, %v8472
      %v8729 = vadd.f32 %v8217, %v8473
      %v8730 = vadd.f32 %v8218, %v8474
      %v8731 = vadd.f32 %v8219, %v8475
      %v8732 = vadd.f32 %v8220, %v8476
      %v8733 = vadd.f32 %v8221, %v8477
      %v8734 = vadd.f32 %v8222, %v8478
      %v8735 = vadd.f32 %v8223, %v8479
      %v8736 = vadd.f32 %v8224, %v8480
      %v8737 = vadd.f32 %v8225, %v8481
      %v8738 = vadd.f32 %v8226, %v8482
      %v8739 = vadd.f32 %v8227, %v8483
      %v8740 = vadd.f32 %v8228, %v8484
      %v8741 = vadd.f32 %v8229, %v8485
      %v8742 = vadd.f32 %v8230, %v8486
      %v8743 = vadd.f32 %v8231, %v8487
      %v8744 = vadd.f32 %v8232, %v8488
      %v8745 = vadd.f32 %v8233, %v8489
      %v8746 = vadd.f32 %v8234, %v8490
      %v8747 = vadd.f32 %v8235, %v8491
      %v8748 = vadd.f32 %v8236, %v8492
      %v8749 = vadd.f32 %v8237, %v8493
      %v8750 = vadd.f32 %v8238, %v8494
      %v8751 = vadd.f32 %v8239, %v8495
      %v8752 = vadd.f32 %v8240, %v8496
      %v8753 = vadd.f32 %v8241, %v8497
      %v8754 = vadd.f32 %v8242, %v8498
      %v8755 = vadd.f32 %v8243, %v8499
      %v8756 = vadd.f32 %v8244, %v8500
      %v8757 = vadd.f32 %v8245, %v8501
      %v8758 = vadd.f32 %v8246, %v8502
      %v8759 = vadd.f32 %v8247, %v8503
      %v8760 = vadd.f32 %v8248, %v8504
      %v8761 = vadd.f32 %v8249, %v8505
      %v8762 = vadd.f32 %v8250, %v8506
      %v8763 = vadd.f32 %v8251, %v8507
      %v8764 = vadd.f32 %v8252, %v8508
      %v8765 = vadd.f32 %v8253, %v8509
      %v8766 = vadd.f32 %v8254, %v8510
      %v8767 = vadd.f32 %v8255, %v8511
      %v8768 = vadd.f32 %v8256, %v8512
      %v8769 = vadd.f32 %v8257, %v8513
      %v8770 = vadd.f32 %v8258, %v8514
      %v8771 = vadd.f32 %v8259, %v8515
      %v8772 = vadd.f32 %v8260, %v8516
      %v8773 = vadd.f32 %v8261, %v8517
      %v8774 = vadd.f32 %v8262, %v8518
      %v8775 = vadd.f32 %v8263, %v8519
      %v8776 = vadd.f32 %v8264, %v8520
      %v8777 = vadd.f32 %v8265, %v8521
      %v8778 = vadd.f32 %v8266, %v8522
      %v8779 = vadd.f32 %v8267, %v8523
      %v8780 = vadd.f32 %v8268, %v8524
      %v8781 = vadd.f32 %v8269, %v8525
      %v8782 = vadd.f32 %v8270, %v8526
      %v8783 = vadd.f32 %v8271, %v8527
      %v8784 = vadd.f32 %v8272, %v8528
      %v8785 = vadd.f32 %v8273, %v8529
      %v8786 = vadd.f32 %v8274, %v8530
      %v8787 = vadd.f32 %v8275, %v8531
      %v8788 = vadd.f32 %v8276, %v8532
      %v8789 = vadd.f32 %v8277, %v8533
      %v8790 = vadd.f32 %v8278, %v8534
      %v8791 = vadd.f32 %v8279, %v8535
      %v8792 = vadd.f32 %v8280, %v8536
      %v8793 = vadd.f32 %v8281, %v8537
      %v8794 = vadd.f32 %v8282, %v8538
      %v8795 = vadd.f32 %v8283, %v8539
      %v8796 = vadd.f32 %v8284, %v8540
      %v8797 = vadd.f32 %v8285, %v8541
      %v8798 = vadd.f32 %v8286, %v8542
      %v8799 = vadd.f32 %v8287, %v8543
      %v8800 = vadd.f32 %v8288, %v8544
      %v8801 = vadd.f32 %v8289, %v8545
      %v8802 = vadd.f32 %v8290, %v8546
      %v8803 = vadd.f32 %v8291, %v8547
      %v8804 = vadd.f32 %v8292, %v8548
      %v8805 = vadd.f32 %v8293, %v8549
      %v8806 = vadd.f32 %v8294, %v8550
      %v8807 = vadd.f32 %v8295, %v8551
      %v8808 = vadd.f32 %v8296, %v8552
      %v8809 = vadd.f32 %v8297, %v8553
      %v8810 = vadd.f32 %v8298, %v8554
      %v8811 = vadd.f32 %v8299, %v8555
      %v8812 = vadd.f32 %v8300, %v8556
      %v8813 = vadd.f32 %v8301, %v8557
      %v8814 = vadd.f32 %v8302, %v8558
      %8815 = vst [vmem:[#allocation2] sm:$0xff] %v8559
      %8816 = vst [vmem:[#allocation2 + $0x8] sm:$0xff] %v8560
      %8817 = vst [vmem:[#allocation2 + $0x10] sm:$0xff] %v8561
      %8818 = vst [vmem:[#allocation2 + $0x18] sm:$0xff] %v8562
      %8819 = vst [vmem:[#allocation2 + $0x20] sm:$0xff] %v8563
      %8820 = vst [vmem:[#allocation2 + $0x28] sm:$0xff] %v8564
      %8821 = vst [vmem:[#allocation2 + $0x30] sm:$0xff] %v8565
      %8822 = vst [vmem:[#allocation2 + $0x38] sm:$0xff] %v8566
      %8823 = vst [vmem:[#allocation2 + $0x40] sm:$0xff] %v8567
      %8824 = vst [vmem:[#allocation2 + $0x48] sm:$0xff] %v8568
      %8825 = vst [vmem:[#allocation2 + $0x50] sm:$0xff] %v8569
      %8826 = vst [vmem:[#allocation2 + $0x58] sm:$0xff] %v8570
      %8827 = vst [vmem:[#allocation2 + $0x60] sm:$0xff] %v8571
      %8828 = vst [vmem:[#allocation2 + $0x68] sm:$0xff] %v8572
      %8829 = vst [vmem:[#allocation2 + $0x70] sm:$0xff] %v8573
      %8830 = vst [vmem:[#allocation2 + $0x78] sm:$0xff] %v8574
      %8831 = vst [vmem:[#allocation2 + $0x80] sm:$0xff] %v8575
      %8832 = vst [vmem:[#allocation2 + $0x88] sm:$0xff] %v8576
      %8833 = vst [vmem:[#allocation2 + $0x90] sm:$0xff] %v8577
      %8834 = vst [vmem:[#allocation2 + $0x98] sm:$0xff] %v8578
      %8835 = vst [vmem:[#allocation2 + $0xa0] sm:$0xff] %v8579
      %8836 = vst [vmem:[#allocation2 + $0xa8] sm:$0xff] %v8580
      %8837 = vst [vmem:[#allocation2 + $0xb0] sm:$0xff] %v8581
      %8838 = vst [vmem:[#allocation2 + $0xb8] sm:$0xff] %v8582
      %8839 = vst [vmem:[#allocation2 + $0xc0] sm:$0xff] %v8583
      %8840 = vst [vmem:[#allocation2 + $0xc8] sm:$0xff] %v8584
      %8841 = vst [vmem:[#allocation2 + $0xd0] sm:$0xff] %v8585
      %8842 = vst [vmem:[#allocation2 + $0xd8] sm:$0xff] %v8586
      %8843 = vst [vmem:[#allocation2 + $0xe0] sm:$0xff] %v8587
      %8844 = vst [vmem:[#allocation2 + $0xe8] sm:$0xff] %v8588
      %8845 = vst [vmem:[#allocation2 + $0xf0] sm:$0xff] %v8589
      %8846 = vst [vmem:[#allocation2 + $0xf8] sm:$0xff] %v8590
      %8847 = vst [vmem:[#allocation2 + $0x100] sm:$0xff] %v8591
      %8848 = vst [vmem:[#allocation2 + $0x108] sm:$0xff] %v8592
      %8849 = vst [vmem:[#allocation2 + $0x110] sm:$0xff] %v8593
      %8850 = vst [vmem:[#allocation2 + $0x118] sm:$0xff] %v8594
      %8851 = vst [vmem:[#allocation2 + $0x120] sm:$0xff] %v8595
      %8852 = vst [vmem:[#allocation2 + $0x128] sm:$0xff] %v8596
      %8853 = vst [vmem:[#allocation2 + $0x130] sm:$0xff] %v8597
      %8854 = vst [vmem:[#allocation2 + $0x138] sm:$0xff] %v8598
      %8855 = vst [vmem:[#allocation2 + $0x140] sm:$0xff] %v8599
      %8856 = vst [vmem:[#allocation2 + $0x148] sm:$0xff] %v8600
      %8857 = vst [vmem:[#allocation2 + $0x150] sm:$0xff] %v8601
      %8858 = vst [vmem:[#allocation2 + $0x158] sm:$0xff] %v8602
      %8859 = vst [vmem:[#allocation2 + $0x160] sm:$0xff] %v8603
      %8860 = vst [vmem:[#allocation2 + $0x168] sm:$0xff] %v8604
      %8861 = vst [vmem:[#allocation2 + $0x170] sm:$0xff] %v8605
      %8862 = vst [vmem:[#allocation2 + $0x178] sm:$0xff] %v8606
      %8863 = vst [vmem:[#allocation2 + $0x180] sm:$0xff] %v8607
      %8864 = vst [vmem:[#allocation2 + $0x188] sm:$0xff] %v8608
      %8865 = vst [vmem:[#allocation2 + $0x190] sm:$0xff] %v8609
      %8866 = vst [vmem:[#allocation2 + $0x198] sm:$0xff] %v8610
      %8867 = vst [vmem:[#allocation2 + $0x1a0] sm:$0xff] %v8611
      %8868 = vst [vmem:[#allocation2 + $0x1a8] sm:$0xff] %v8612
      %8869 = vst [vmem:[#allocation2 + $0x1b0] sm:$0xff] %v8613
      %8870 = vst [vmem:[#allocation2 + $0x1b8] sm:$0xff] %v8614
      %8871 = vst [vmem:[#allocation2 + $0x1c0] sm:$0xff] %v8615
      %8872 = vst [vmem:[#allocation2 + $0x1c8] sm:$0xff] %v8616
      %8873 = vst [vmem:[#allocation2 + $0x1d0] sm:$0xff] %v8617
      %8874 = vst [vmem:[#allocation2 + $0x1d8] sm:$0xff] %v8618
      %8875 = vst [vmem:[#allocation2 + $0x1e0] sm:$0xff] %v8619
      %8876 = vst [vmem:[#allocation2 + $0x1e8] sm:$0xff] %v8620
      %8877 = vst [vmem:[#allocation2 + $0x1f0] sm:$0xff] %v8621
      %8878 = vst [vmem:[#allocation2 + $0x1f8] sm:$0xff] %v8622
      %8879 = vst [vmem:[#allocation2 + $0x200] sm:$0xff] %v8623
      %8880 = vst [vmem:[#allocation2 + $0x208] sm:$0xff] %v8624
      %8881 = vst [vmem:[#allocation2 + $0x210] sm:$0xff] %v8625
      %8882 = vst [vmem:[#allocation2 + $0x218] sm:$0xff] %v8626
      %8883 = vst [vmem:[#allocation2 + $0x220] sm:$0xff] %v8627
      %8884 = vst [vmem:[#allocation2 + $0x228] sm:$0xff] %v8628
      %8885 = vst [vmem:[#allocation2 + $0x230] sm:$0xff] %v8629
      %8886 = vst [vmem:[#allocation2 + $0x238] sm:$0xff] %v8630
      %8887 = vst [vmem:[#allocation2 + $0x240] sm:$0xff] %v8631
      %8888 = vst [vmem:[#allocation2 + $0x248] sm:$0xff] %v8632
      %8889 = vst [vmem:[#allocation2 + $0x250] sm:$0xff] %v8633
      %8890 = vst [vmem:[#allocation2 + $0x258] sm:$0xff] %v8634
      %8891 = vst [vmem:[#allocation2 + $0x260] sm:$0xff] %v8635
      %8892 = vst [vmem:[#allocation2 + $0x268] sm:$0xff] %v8636
      %8893 = vst [vmem:[#allocation2 + $0x270] sm:$0xff] %v8637
      %8894 = vst [vmem:[#allocation2 + $0x278] sm:$0xff] %v8638
      %8895 = vst [vmem:[#allocation2 + $0x280] sm:$0xff] %v8639
      %8896 = vst [vmem:[#allocation2 + $0x288] sm:$0xff] %v8640
      %8897 = vst [vmem:[#allocation2 + $0x290] sm:$0xff] %v8641
      %8898 = vst [vmem:[#allocation2 + $0x298] sm:$0xff] %v8642
      %8899 = vst [vmem:[#allocation2 + $0x2a0] sm:$0xff] %v8643
      %8900 = vst [vmem:[#allocation2 + $0x2a8] sm:$0xff] %v8644
      %8901 = vst [vmem:[#allocation2 + $0x2b0] sm:$0xff] %v8645
      %8902 = vst [vmem:[#allocation2 + $0x2b8] sm:$0xff] %v8646
      %8903 = vst [vmem:[#allocation2 + $0x2c0] sm:$0xff] %v8647
      %8904 = vst [vmem:[#allocation2 + $0x2c8] sm:$0xff] %v8648
      %8905 = vst [vmem:[#allocation2 + $0x2d0] sm:$0xff] %v8649
      %8906 = vst [vmem:[#allocation2 + $0x2d8] sm:$0xff] %v8650
      %8907 = vst [vmem:[#allocation2 + $0x2e0] sm:$0xff] %v8651
      %8908 = vst [vmem:[#allocation2 + $0x2e8] sm:$0xff] %v8652
      %8909 = vst [vmem:[#allocation2 + $0x2f0] sm:$0xff] %v8653
      %8910 = vst [vmem:[#allocation2 + $0x2f8] sm:$0xff] %v8654
      %8911 = vst [vmem:[#allocation2 + $0x300] sm:$0xff] %v8655
      %8912 = vst [vmem:[#allocation2 + $0x308] sm:$0xff] %v8656
      %8913 = vst [vmem:[#allocation2 + $0x310] sm:$0xff] %v8657
      %8914 = vst [vmem:[#allocation2 + $0x318] sm:$0xff] %v8658
      %8915 = vst [vmem:[#allocation2 + $0x320] sm:$0xff] %v8659
      %8916 = vst [vmem:[#allocation2 + $0x328] sm:$0xff] %v8660
      %8917 = vst [vmem:[#allocation2 + $0x330] sm:$0xff] %v8661
      %8918 = vst [vmem:[#allocation2 + $0x338] sm:$0xff] %v8662
      %8919 = vst [vmem:[#allocation2 + $0x340] sm:$0xff] %v8663
      %8920 = vst [vmem:[#allocation2 + $0x348] sm:$0xff] %v8664
      %8921 = vst [vmem:[#allocation2 + $0x350] sm:$0xff] %v8665
      %8922 = vst [vmem:[#allocation2 + $0x358] sm:$0xff] %v8666
      %8923 = vst [vmem:[#allocation2 + $0x360] sm:$0xff] %v8667
      %8924 = vst [vmem:[#allocation2 + $0x368] sm:$0xff] %v8668
      %8925 = vst [vmem:[#allocation2 + $0x370] sm:$0xff] %v8669
      %8926 = vst [vmem:[#allocation2 + $0x378] sm:$0xff] %v8670
      %8927 = vst [vmem:[#allocation2 + $0x380] sm:$0xff] %v8671
      %8928 = vst [vmem:[#allocation2 + $0x388] sm:$0xff] %v8672
      %8929 = vst [vmem:[#allocation2 + $0x390] sm:$0xff] %v8673
      %8930 = vst [vmem:[#allocation2 + $0x398] sm:$0xff] %v8674
      %8931 = vst [vmem:[#allocation2 + $0x3a0] sm:$0xff] %v8675
      %8932 = vst [vmem:[#allocation2 + $0x3a8] sm:$0xff] %v8676
      %8933 = vst [vmem:[#allocation2 + $0x3b0] sm:$0xff] %v8677
      %8934 = vst [vmem:[#allocation2 + $0x3b8] sm:$0xff] %v8678
      %8935 = vst [vmem:[#allocation2 + $0x3c0] sm:$0xff] %v8679
      %8936 = vst [vmem:[#allocation2 + $0x3c8] sm:$0xff] %v8680
      %8937 = vst [vmem:[#allocation2 + $0x3d0] sm:$0xff] %v8681
      %8938 = vst [vmem:[#allocation2 + $0x3d8] sm:$0xff] %v8682
      %8939 = vst [vmem:[#allocation2 + $0x3e0] sm:$0xff] %v8683
      %8940 = vst [vmem:[#allocation2 + $0x3e8] sm:$0xff] %v8684
      %8941 = vst [vmem:[#allocation2 + $0x3f0] sm:$0xff] %v8685
      %8942 = vst [vmem:[#allocation2 + $0x3f8] sm:$0xff] %v8686
      %8943 = vst [vmem:[#allocation2 + $0x400] sm:$0xff] %v8687
      %8944 = vst [vmem:[#allocation2 + $0x408] sm:$0xff] %v8688
      %8945 = vst [vmem:[#allocation2 + $0x410] sm:$0xff] %v8689
      %8946 = vst [vmem:[#allocation2 + $0x418] sm:$0xff] %v8690
      %8947 = vst [vmem:[#allocation2 + $0x420] sm:$0xff] %v8691
      %8948 = vst [vmem:[#allocation2 + $0x428] sm:$0xff] %v8692
      %8949 = vst [vmem:[#allocation2 + $0x430] sm:$0xff] %v8693
      %8950 = vst [vmem:[#allocation2 + $0x438] sm:$0xff] %v8694
      %8951 = vst [vmem:[#allocation2 + $0x440] sm:$0xff] %v8695
      %8952 = vst [vmem:[#allocation2 + $0x448] sm:$0xff] %v8696
      %8953 = vst [vmem:[#allocation2 + $0x450] sm:$0xff] %v8697
      %8954 = vst [vmem:[#allocation2 + $0x458] sm:$0xff] %v8698
      %8955 = vst [vmem:[#allocation2 + $0x460] sm:$0xff] %v8699
      %8956 = vst [vmem:[#allocation2 + $0x468] sm:$0xff] %v8700
      %8957 = vst [vmem:[#allocation2 + $0x470] sm:$0xff] %v8701
      %8958 = vst [vmem:[#allocation2 + $0x478] sm:$0xff] %v8702
      %8959 = vst [vmem:[#allocation2 + $0x480] sm:$0xff] %v8703
      %8960 = vst [vmem:[#allocation2 + $0x488] sm:$0xff] %v8704
      %8961 = vst [vmem:[#allocation2 + $0x490] sm:$0xff] %v8705
      %8962 = vst [vmem:[#allocation2 + $0x498] sm:$0xff] %v8706
      %8963 = vst [vmem:[#allocation2 + $0x4a0] sm:$0xff] %v8707
      %8964 = vst [vmem:[#allocation2 + $0x4a8] sm:$0xff] %v8708
      %8965 = vst [vmem:[#allocation2 + $0x4b0] sm:$0xff] %v8709
      %8966 = vst [vmem:[#allocation2 + $0x4b8] sm:$0xff] %v8710
      %8967 = vst [vmem:[#allocation2 + $0x4c0] sm:$0xff] %v8711
      %8968 = vst [vmem:[#allocation2 + $0x4c8] sm:$0xff] %v8712
      %8969 = vst [vmem:[#allocation2 + $0x4d0] sm:$0xff] %v8713
      %8970 = vst [vmem:[#allocation2 + $0x4d8] sm:$0xff] %v8714
      %8971 = vst [vmem:[#allocation2 + $0x4e0] sm:$0xff] %v8715
      %8972 = vst [vmem:[#allocation2 + $0x4e8] sm:$0xff] %v8716
      %8973 = vst [vmem:[#allocation2 + $0x4f0] sm:$0xff] %v8717
      %8974 = vst [vmem:[#allocation2 + $0x4f8] sm:$0xff] %v8718
      %8975 = vst [vmem:[#allocation2 + $0x500] sm:$0xff] %v8719
      %8976 = vst [vmem:[#allocation2 + $0x508] sm:$0xff] %v8720
      %8977 = vst [vmem:[#allocation2 + $0x510] sm:$0xff] %v8721
      %8978 = vst [vmem:[#allocation2 + $0x518] sm:$0xff] %v8722
      %8979 = vst [vmem:[#allocation2 + $0x520] sm:$0xff] %v8723
      %8980 = vst [vmem:[#allocation2 + $0x528] sm:$0xff] %v8724
      %8981 = vst [vmem:[#allocation2 + $0x530] sm:$0xff] %v8725
      %8982 = vst [vmem:[#allocation2 + $0x538] sm:$0xff] %v8726
      %8983 = vst [vmem:[#allocation2 + $0x540] sm:$0xff] %v8727
      %8984 = vst [vmem:[#allocation2 + $0x548] sm:$0xff] %v8728
      %8985 = vst [vmem:[#allocation2 + $0x550] sm:$0xff] %v8729
      %8986 = vst [vmem:[#allocation2 + $0x558] sm:$0xff] %v8730
      %8987 = vst [vmem:[#allocation2 + $0x560] sm:$0xff] %v8731
      %8988 = vst [vmem:[#allocation2 + $0x568] sm:$0xff] %v8732
      %8989 = vst [vmem:[#allocation2 + $0x570] sm:$0xff] %v8733
      %8990 = vst [vmem:[#allocation2 + $0x578] sm:$0xff] %v8734
      %8991 = vst [vmem:[#allocation2 + $0x580] sm:$0xff] %v8735
      %8992 = vst [vmem:[#allocation2 + $0x588] sm:$0xff] %v8736
      %8993 = vst [vmem:[#allocation2 + $0x590] sm:$0xff] %v8737
      %8994 = vst [vmem:[#allocation2 + $0x598] sm:$0xff] %v8738
      %8995 = vst [vmem:[#allocation2 + $0x5a0] sm:$0xff] %v8739
      %8996 = vst [vmem:[#allocation2 + $0x5a8] sm:$0xff] %v8740
      %8997 = vst [vmem:[#allocation2 + $0x5b0] sm:$0xff] %v8741
      %8998 = vst [vmem:[#allocation2 + $0x5b8] sm:$0xff] %v8742
      %8999 = vst [vmem:[#allocation2 + $0x5c0] sm:$0xff] %v8743
      %9000 = vst [vmem:[#allocation2 + $0x5c8] sm:$0xff] %v8744
      %9001 = vst [vmem:[#allocation2 + $0x5d0] sm:$0xff] %v8745
      %9002 = vst [vmem:[#allocation2 + $0x5d8] sm:$0xff] %v8746
      %9003 = vst [vmem:[#allocation2 + $0x5e0] sm:$0xff] %v8747
      %9004 = vst [vmem:[#allocation2 + $0x5e8] sm:$0xff] %v8748
      %9005 = vst [vmem:[#allocation2 + $0x5f0] sm:$0xff] %v8749
      %9006 = vst [vmem:[#allocation2 + $0x5f8] sm:$0xff] %v8750
      %9007 = vst [vmem:[#allocation2 + $0x600] sm:$0xff] %v8751
      %9008 = vst [vmem:[#allocation2 + $0x608] sm:$0xff] %v8752
      %9009 = vst [vmem:[#allocation2 + $0x610] sm:$0xff] %v8753
      %9010 = vst [vmem:[#allocation2 + $0x618] sm:$0xff] %v8754
      %9011 = vst [vmem:[#allocation2 + $0x620] sm:$0xff] %v8755
      %9012 = vst [vmem:[#allocation2 + $0x628] sm:$0xff] %v8756
      %9013 = vst [vmem:[#allocation2 + $0x630] sm:$0xff] %v8757
      %9014 = vst [vmem:[#allocation2 + $0x638] sm:$0xff] %v8758
      %9015 = vst [vmem:[#allocation2 + $0x640] sm:$0xff] %v8759
      %9016 = vst [vmem:[#allocation2 + $0x648] sm:$0xff] %v8760
      %9017 = vst [vmem:[#allocation2 + $0x650] sm:$0xff] %v8761
      %9018 = vst [vmem:[#allocation2 + $0x658] sm:$0xff] %v8762
      %9019 = vst [vmem:[#allocation2 + $0x660] sm:$0xff] %v8763
      %9020 = vst [vmem:[#allocation2 + $0x668] sm:$0xff] %v8764
      %9021 = vst [vmem:[#allocation2 + $0x670] sm:$0xff] %v8765
      %9022 = vst [vmem:[#allocation2 + $0x678] sm:$0xff] %v8766
      %9023 = vst [vmem:[#allocation2 + $0x680] sm:$0xff] %v8767
      %9024 = vst [vmem:[#allocation2 + $0x688] sm:$0xff] %v8768
      %9025 = vst [vmem:[#allocation2 + $0x690] sm:$0xff] %v8769
      %9026 = vst [vmem:[#allocation2 + $0x698] sm:$0xff] %v8770
      %9027 = vst [vmem:[#allocation2 + $0x6a0] sm:$0xff] %v8771
      %9028 = vst [vmem:[#allocation2 + $0x6a8] sm:$0xff] %v8772
      %9029 = vst [vmem:[#allocation2 + $0x6b0] sm:$0xff] %v8773
      %9030 = vst [vmem:[#allocation2 + $0x6b8] sm:$0xff] %v8774
      %9031 = vst [vmem:[#allocation2 + $0x6c0] sm:$0xff] %v8775
      %9032 = vst [vmem:[#allocation2 + $0x6c8] sm:$0xff] %v8776
      %9033 = vst [vmem:[#allocation2 + $0x6d0] sm:$0xff] %v8777
      %9034 = vst [vmem:[#allocation2 + $0x6d8] sm:$0xff] %v8778
      %9035 = vst [vmem:[#allocation2 + $0x6e0] sm:$0xff] %v8779
      %9036 = vst [vmem:[#allocation2 + $0x6e8] sm:$0xff] %v8780
      %9037 = vst [vmem:[#allocation2 + $0x6f0] sm:$0xff] %v8781
      %9038 = vst [vmem:[#allocation2 + $0x6f8] sm:$0xff] %v8782
      %9039 = vst [vmem:[#allocation2 + $0x700] sm:$0xff] %v8783
      %9040 = vst [vmem:[#allocation2 + $0x708] sm:$0xff] %v8784
      %9041 = vst [vmem:[#allocation2 + $0x710] sm:$0xff] %v8785
      %9042 = vst [vmem:[#allocation2 + $0x718] sm:$0xff] %v8786
      %9043 = vst [vmem:[#allocation2 + $0x720] sm:$0xff] %v8787
      %9044 = vst [vmem:[#allocation2 + $0x728] sm:$0xff] %v8788
      %9045 = vst [vmem:[#allocation2 + $0x730] sm:$0xff] %v8789
      %9046 = vst [vmem:[#allocation2 + $0x738] sm:$0xff] %v8790
      %9047 = vst [vmem:[#allocation2 + $0x740] sm:$0xff] %v8791
      %9048 = vst [vmem:[#allocation2 + $0x748] sm:$0xff] %v8792
      %9049 = vst [vmem:[#allocation2 + $0x750] sm:$0xff] %v8793
      %9050 = vst [vmem:[#allocation2 + $0x758] sm:$0xff] %v8794
      %9051 = vst [vmem:[#allocation2 + $0x760] sm:$0xff] %v8795
      %9052 = vst [vmem:[#allocation2 + $0x768] sm:$0xff] %v8796
      %9053 = vst [vmem:[#allocation2 + $0x770] sm:$0xff] %v8797
      %9054 = vst [vmem:[#allocation2 + $0x778] sm:$0xff] %v8798
      %9055 = vst [vmem:[#allocation2 + $0x780] sm:$0xff] %v8799
      %9056 = vst [vmem:[#allocation2 + $0x788] sm:$0xff] %v8800
      %9057 = vst [vmem:[#allocation2 + $0x790] sm:$0xff] %v8801
      %9058 = vst [vmem:[#allocation2 + $0x798] sm:$0xff] %v8802
      %9059 = vst [vmem:[#allocation2 + $0x7a0] sm:$0xff] %v8803
      %9060 = vst [vmem:[#allocation2 + $0x7a8] sm:$0xff] %v8804
      %9061 = vst [vmem:[#allocation2 + $0x7b0] sm:$0xff] %v8805
      %9062 = vst [vmem:[#allocation2 + $0x7b8] sm:$0xff] %v8806
      %9063 = vst [vmem:[#allocation2 + $0x7c0] sm:$0xff] %v8807
      %9064 = vst [vmem:[#allocation2 + $0x7c8] sm:$0xff] %v8808
      %9065 = vst [vmem:[#allocation2 + $0x7d0] sm:$0xff] %v8809
      %9066 = vst [vmem:[#allocation2 + $0x7d8] sm:$0xff] %v8810
      %9067 = vst [vmem:[#allocation2 + $0x7e0] sm:$0xff] %v8811
      %9068 = vst [vmem:[#allocation2 + $0x7e8] sm:$0xff] %v8812
      %9069 = vst [vmem:[#allocation2 + $0x7f0] sm:$0xff] %v8813
      %9070 = vst [vmem:[#allocation2 + $0x7f8] sm:$0xff] %v8814
      %p9071 = scmp.eq.s32.totalorder %s23, 1
      // Predicated region
      $region53: #{gnr_forward.3} parent=47 // pred_check
        %p9072 = pneg %p9071
      $region54: #{gnr_forward.3} parent=47 // pred_check_branch
        %9074 = sbr.rel (%p9072) target = $region56
      $region55: #{gnr_forward.3} parent=47 // pred_region
        %v9075 = vld [vmem:[#allocation2] sm:$0xff]
        %v9076 = vld [vmem:[#allocation2 + $0x8] sm:$0xff]
        %v9077 = vld [vmem:[#allocation2 + $0x10] sm:$0xff]
        %v9078 = vld [vmem:[#allocation2 + $0x18] sm:$0xff]
        %v9079 = vld [vmem:[#allocation2 + $0x20] sm:$0xff]
        %v9080 = vld [vmem:[#allocation2 + $0x28] sm:$0xff]
        %v9081 = vld [vmem:[#allocation2 + $0x30] sm:$0xff]
        %v9082 = vld [vmem:[#allocation2 + $0x38] sm:$0xff]
        %v9083 = vld [vmem:[#allocation2 + $0x40] sm:$0xff]
        %v9084 = vld [vmem:[#allocation2 + $0x48] sm:$0xff]
        %v9085 = vld [vmem:[#allocation2 + $0x50] sm:$0xff]
        %v9086 = vld [vmem:[#allocation2 + $0x58] sm:$0xff]
        %v9087 = vld [vmem:[#allocation2 + $0x60] sm:$0xff]
        %v9088 = vld [vmem:[#allocation2 + $0x68] sm:$0xff]
        %v9089 = vld [vmem:[#allocation2 + $0x70] sm:$0xff]
        %v9090 = vld [vmem:[#allocation2 + $0x78] sm:$0xff]
        %v9091 = vld [vmem:[#allocation2 + $0x80] sm:$0xff]
        %v9092 = vld [vmem:[#allocation2 + $0x88] sm:$0xff]
        %v9093 = vld [vmem:[#allocation2 + $0x90] sm:$0xff]
        %v9094 = vld [vmem:[#allocation2 + $0x98] sm:$0xff]
        %v9095 = vld [vmem:[#allocation2 + $0xa0] sm:$0xff]
        %v9096 = vld [vmem:[#allocation2 + $0xa8] sm:$0xff]
        %v9097 = vld [vmem:[#allocation2 + $0xb0] sm:$0xff]
        %v9098 = vld [vmem:[#allocation2 + $0xb8] sm:$0xff]
        %v9099 = vld [vmem:[#allocation2 + $0xc0] sm:$0xff]
        %v9100 = vld [vmem:[#allocation2 + $0xc8] sm:$0xff]
        %v9101 = vld [vmem:[#allocation2 + $0xd0] sm:$0xff]
        %v9102 = vld [vmem:[#allocation2 + $0xd8] sm:$0xff]
        %v9103 = vld [vmem:[#allocation2 + $0xe0] sm:$0xff]
        %v9104 = vld [vmem:[#allocation2 + $0xe8] sm:$0xff]
        %v9105 = vld [vmem:[#allocation2 + $0xf0] sm:$0xff]
        %v9106 = vld [vmem:[#allocation2 + $0xf8] sm:$0xff]
        %v9107 = vld [vmem:[#allocation2 + $0x100] sm:$0xff]
        %v9108 = vld [vmem:[#allocation2 + $0x108] sm:$0xff]
        %v9109 = vld [vmem:[#allocation2 + $0x110] sm:$0xff]
        %v9110 = vld [vmem:[#allocation2 + $0x118] sm:$0xff]
        %v9111 = vld [vmem:[#allocation2 + $0x120] sm:$0xff]
        %v9112 = vld [vmem:[#allocation2 + $0x128] sm:$0xff]
        %v9113 = vld [vmem:[#allocation2 + $0x130] sm:$0xff]
        %v9114 = vld [vmem:[#allocation2 + $0x138] sm:$0xff]
        %v9115 = vld [vmem:[#allocation2 + $0x140] sm:$0xff]
        %v9116 = vld [vmem:[#allocation2 + $0x148] sm:$0xff]
        %v9117 = vld [vmem:[#allocation2 + $0x150] sm:$0xff]
        %v9118 = vld [vmem:[#allocation2 + $0x158] sm:$0xff]
        %v9119 = vld [vmem:[#allocation2 + $0x160] sm:$0xff]
        %v9120 = vld [vmem:[#allocation2 + $0x168] sm:$0xff]
        %v9121 = vld [vmem:[#allocation2 + $0x170] sm:$0xff]
        %v9122 = vld [vmem:[#allocation2 + $0x178] sm:$0xff]
        %v9123 = vld [vmem:[#allocation2 + $0x180] sm:$0xff]
        %v9124 = vld [vmem:[#allocation2 + $0x188] sm:$0xff]
        %v9125 = vld [vmem:[#allocation2 + $0x190] sm:$0xff]
        %v9126 = vld [vmem:[#allocation2 + $0x198] sm:$0xff]
        %v9127 = vld [vmem:[#allocation2 + $0x1a0] sm:$0xff]
        %v9128 = vld [vmem:[#allocation2 + $0x1a8] sm:$0xff]
        %v9129 = vld [vmem:[#allocation2 + $0x1b0] sm:$0xff]
        %v9130 = vld [vmem:[#allocation2 + $0x1b8] sm:$0xff]
        %v9131 = vld [vmem:[#allocation2 + $0x1c0] sm:$0xff]
        %v9132 = vld [vmem:[#allocation2 + $0x1c8] sm:$0xff]
        %v9133 = vld [vmem:[#allocation2 + $0x1d0] sm:$0xff]
        %v9134 = vld [vmem:[#allocation2 + $0x1d8] sm:$0xff]
        %v9135 = vld [vmem:[#allocation2 + $0x1e0] sm:$0xff]
        %v9136 = vld [vmem:[#allocation2 + $0x1e8] sm:$0xff]
        %v9137 = vld [vmem:[#allocation2 + $0x1f0] sm:$0xff]
        %v9138 = vld [vmem:[#allocation2 + $0x1f8] sm:$0xff]
        %v9139 = vld [vmem:[#allocation2 + $0x200] sm:$0xff]
        %v9140 = vld [vmem:[#allocation2 + $0x208] sm:$0xff]
        %v9141 = vld [vmem:[#allocation2 + $0x210] sm:$0xff]
        %v9142 = vld [vmem:[#allocation2 + $0x218] sm:$0xff]
        %v9143 = vld [vmem:[#allocation2 + $0x220] sm:$0xff]
        %v9144 = vld [vmem:[#allocation2 + $0x228] sm:$0xff]
        %v9145 = vld [vmem:[#allocation2 + $0x230] sm:$0xff]
        %v9146 = vld [vmem:[#allocation2 + $0x238] sm:$0xff]
        %v9147 = vld [vmem:[#allocation2 + $0x240] sm:$0xff]
        %v9148 = vld [vmem:[#allocation2 + $0x248] sm:$0xff]
        %v9149 = vld [vmem:[#allocation2 + $0x250] sm:$0xff]
        %v9150 = vld [vmem:[#allocation2 + $0x258] sm:$0xff]
        %v9151 = vld [vmem:[#allocation2 + $0x260] sm:$0xff]
        %v9152 = vld [vmem:[#allocation2 + $0x268] sm:$0xff]
        %v9153 = vld [vmem:[#allocation2 + $0x270] sm:$0xff]
        %v9154 = vld [vmem:[#allocation2 + $0x278] sm:$0xff]
        %v9155 = vld [vmem:[#allocation2 + $0x280] sm:$0xff]
        %v9156 = vld [vmem:[#allocation2 + $0x288] sm:$0xff]
        %v9157 = vld [vmem:[#allocation2 + $0x290] sm:$0xff]
        %v9158 = vld [vmem:[#allocation2 + $0x298] sm:$0xff]
        %v9159 = vld [vmem:[#allocation2 + $0x2a0] sm:$0xff]
        %v9160 = vld [vmem:[#allocation2 + $0x2a8] sm:$0xff]
        %v9161 = vld [vmem:[#allocation2 + $0x2b0] sm:$0xff]
        %v9162 = vld [vmem:[#allocation2 + $0x2b8] sm:$0xff]
        %v9163 = vld [vmem:[#allocation2 + $0x2c0] sm:$0xff]
        %v9164 = vld [vmem:[#allocation2 + $0x2c8] sm:$0xff]
        %v9165 = vld [vmem:[#allocation2 + $0x2d0] sm:$0xff]
        %v9166 = vld [vmem:[#allocation2 + $0x2d8] sm:$0xff]
        %v9167 = vld [vmem:[#allocation2 + $0x2e0] sm:$0xff]
        %v9168 = vld [vmem:[#allocation2 + $0x2e8] sm:$0xff]
        %v9169 = vld [vmem:[#allocation2 + $0x2f0] sm:$0xff]
        %v9170 = vld [vmem:[#allocation2 + $0x2f8] sm:$0xff]
        %v9171 = vld [vmem:[#allocation2 + $0x300] sm:$0xff]
        %v9172 = vld [vmem:[#allocation2 + $0x308] sm:$0xff]
        %v9173 = vld [vmem:[#allocation2 + $0x310] sm:$0xff]
        %v9174 = vld [vmem:[#allocation2 + $0x318] sm:$0xff]
        %v9175 = vld [vmem:[#allocation2 + $0x320] sm:$0xff]
        %v9176 = vld [vmem:[#allocation2 + $0x328] sm:$0xff]
        %v9177 = vld [vmem:[#allocation2 + $0x330] sm:$0xff]
        %v9178 = vld [vmem:[#allocation2 + $0x338] sm:$0xff]
        %v9179 = vld [vmem:[#allocation2 + $0x340] sm:$0xff]
        %v9180 = vld [vmem:[#allocation2 + $0x348] sm:$0xff]
        %v9181 = vld [vmem:[#allocation2 + $0x350] sm:$0xff]
        %v9182 = vld [vmem:[#allocation2 + $0x358] sm:$0xff]
        %v9183 = vld [vmem:[#allocation2 + $0x360] sm:$0xff]
        %v9184 = vld [vmem:[#allocation2 + $0x368] sm:$0xff]
        %v9185 = vld [vmem:[#allocation2 + $0x370] sm:$0xff]
        %v9186 = vld [vmem:[#allocation2 + $0x378] sm:$0xff]
        %v9187 = vld [vmem:[#allocation2 + $0x380] sm:$0xff]
        %v9188 = vld [vmem:[#allocation2 + $0x388] sm:$0xff]
        %v9189 = vld [vmem:[#allocation2 + $0x390] sm:$0xff]
        %v9190 = vld [vmem:[#allocation2 + $0x398] sm:$0xff]
        %v9191 = vld [vmem:[#allocation2 + $0x3a0] sm:$0xff]
        %v9192 = vld [vmem:[#allocation2 + $0x3a8] sm:$0xff]
        %v9193 = vld [vmem:[#allocation2 + $0x3b0] sm:$0xff]
        %v9194 = vld [vmem:[#allocation2 + $0x3b8] sm:$0xff]
        %v9195 = vld [vmem:[#allocation2 + $0x3c0] sm:$0xff]
        %v9196 = vld [vmem:[#allocation2 + $0x3c8] sm:$0xff]
        %v9197 = vld [vmem:[#allocation2 + $0x3d0] sm:$0xff]
        %v9198 = vld [vmem:[#allocation2 + $0x3d8] sm:$0xff]
        %v9199 = vld [vmem:[#allocation2 + $0x3e0] sm:$0xff]
        %v9200 = vld [vmem:[#allocation2 + $0x3e8] sm:$0xff]
        %v9201 = vld [vmem:[#allocation2 + $0x3f0] sm:$0xff]
        %v9202 = vld [vmem:[#allocation2 + $0x3f8] sm:$0xff]
        %v9203 = vld [vmem:[#allocation2 + $0x400] sm:$0xff]
        %v9204 = vld [vmem:[#allocation2 + $0x408] sm:$0xff]
        %v9205 = vld [vmem:[#allocation2 + $0x410] sm:$0xff]
        %v9206 = vld [vmem:[#allocation2 + $0x418] sm:$0xff]
        %v9207 = vld [vmem:[#allocation2 + $0x420] sm:$0xff]
        %v9208 = vld [vmem:[#allocation2 + $0x428] sm:$0xff]
        %v9209 = vld [vmem:[#allocation2 + $0x430] sm:$0xff]
        %v9210 = vld [vmem:[#allocation2 + $0x438] sm:$0xff]
        %v9211 = vld [vmem:[#allocation2 + $0x440] sm:$0xff]
        %v9212 = vld [vmem:[#allocation2 + $0x448] sm:$0xff]
        %v9213 = vld [vmem:[#allocation2 + $0x450] sm:$0xff]
        %v9214 = vld [vmem:[#allocation2 + $0x458] sm:$0xff]
        %v9215 = vld [vmem:[#allocation2 + $0x460] sm:$0xff]
        %v9216 = vld [vmem:[#allocation2 + $0x468] sm:$0xff]
        %v9217 = vld [vmem:[#allocation2 + $0x470] sm:$0xff]
        %v9218 = vld [vmem:[#allocation2 + $0x478] sm:$0xff]
        %v9219 = vld [vmem:[#allocation2 + $0x480] sm:$0xff]
        %v9220 = vld [vmem:[#allocation2 + $0x488] sm:$0xff]
        %v9221 = vld [vmem:[#allocation2 + $0x490] sm:$0xff]
        %v9222 = vld [vmem:[#allocation2 + $0x498] sm:$0xff]
        %v9223 = vld [vmem:[#allocation2 + $0x4a0] sm:$0xff]
        %v9224 = vld [vmem:[#allocation2 + $0x4a8] sm:$0xff]
        %v9225 = vld [vmem:[#allocation2 + $0x4b0] sm:$0xff]
        %v9226 = vld [vmem:[#allocation2 + $0x4b8] sm:$0xff]
        %v9227 = vld [vmem:[#allocation2 + $0x4c0] sm:$0xff]
        %v9228 = vld [vmem:[#allocation2 + $0x4c8] sm:$0xff]
        %v9229 = vld [vmem:[#allocation2 + $0x4d0] sm:$0xff]
        %v9230 = vld [vmem:[#allocation2 + $0x4d8] sm:$0xff]
        %v9231 = vld [vmem:[#allocation2 + $0x4e0] sm:$0xff]
        %v9232 = vld [vmem:[#allocation2 + $0x4e8] sm:$0xff]
        %v9233 = vld [vmem:[#allocation2 + $0x4f0] sm:$0xff]
        %v9234 = vld [vmem:[#allocation2 + $0x4f8] sm:$0xff]
        %v9235 = vld [vmem:[#allocation2 + $0x500] sm:$0xff]
        %v9236 = vld [vmem:[#allocation2 + $0x508] sm:$0xff]
        %v9237 = vld [vmem:[#allocation2 + $0x510] sm:$0xff]
        %v9238 = vld [vmem:[#allocation2 + $0x518] sm:$0xff]
        %v9239 = vld [vmem:[#allocation2 + $0x520] sm:$0xff]
        %v9240 = vld [vmem:[#allocation2 + $0x528] sm:$0xff]
        %v9241 = vld [vmem:[#allocation2 + $0x530] sm:$0xff]
        %v9242 = vld [vmem:[#allocation2 + $0x538] sm:$0xff]
        %v9243 = vld [vmem:[#allocation2 + $0x540] sm:$0xff]
        %v9244 = vld [vmem:[#allocation2 + $0x548] sm:$0xff]
        %v9245 = vld [vmem:[#allocation2 + $0x550] sm:$0xff]
        %v9246 = vld [vmem:[#allocation2 + $0x558] sm:$0xff]
        %v9247 = vld [vmem:[#allocation2 + $0x560] sm:$0xff]
        %v9248 = vld [vmem:[#allocation2 + $0x568] sm:$0xff]
        %v9249 = vld [vmem:[#allocation2 + $0x570] sm:$0xff]
        %v9250 = vld [vmem:[#allocation2 + $0x578] sm:$0xff]
        %v9251 = vld [vmem:[#allocation2 + $0x580] sm:$0xff]
        %v9252 = vld [vmem:[#allocation2 + $0x588] sm:$0xff]
        %v9253 = vld [vmem:[#allocation2 + $0x590] sm:$0xff]
        %v9254 = vld [vmem:[#allocation2 + $0x598] sm:$0xff]
        %v9255 = vld [vmem:[#allocation2 + $0x5a0] sm:$0xff]
        %v9256 = vld [vmem:[#allocation2 + $0x5a8] sm:$0xff]
        %v9257 = vld [vmem:[#allocation2 + $0x5b0] sm:$0xff]
        %v9258 = vld [vmem:[#allocation2 + $0x5b8] sm:$0xff]
        %v9259 = vld [vmem:[#allocation2 + $0x5c0] sm:$0xff]
        %v9260 = vld [vmem:[#allocation2 + $0x5c8] sm:$0xff]
        %v9261 = vld [vmem:[#allocation2 + $0x5d0] sm:$0xff]
        %v9262 = vld [vmem:[#allocation2 + $0x5d8] sm:$0xff]
        %v9263 = vld [vmem:[#allocation2 + $0x5e0] sm:$0xff]
        %v9264 = vld [vmem:[#allocation2 + $0x5e8] sm:$0xff]
        %v9265 = vld [vmem:[#allocation2 + $0x5f0] sm:$0xff]
        %v9266 = vld [vmem:[#allocation2 + $0x5f8] sm:$0xff]
        %v9267 = vld [vmem:[#allocation2 + $0x600] sm:$0xff]
        %v9268 = vld [vmem:[#allocation2 + $0x608] sm:$0xff]
        %v9269 = vld [vmem:[#allocation2 + $0x610] sm:$0xff]
        %v9270 = vld [vmem:[#allocation2 + $0x618] sm:$0xff]
        %v9271 = vld [vmem:[#allocation2 + $0x620] sm:$0xff]
        %v9272 = vld [vmem:[#allocation2 + $0x628] sm:$0xff]
        %v9273 = vld [vmem:[#allocation2 + $0x630] sm:$0xff]
        %v9274 = vld [vmem:[#allocation2 + $0x638] sm:$0xff]
        %v9275 = vld [vmem:[#allocation2 + $0x640] sm:$0xff]
        %v9276 = vld [vmem:[#allocation2 + $0x648] sm:$0xff]
        %v9277 = vld [vmem:[#allocation2 + $0x650] sm:$0xff]
        %v9278 = vld [vmem:[#allocation2 + $0x658] sm:$0xff]
        %v9279 = vld [vmem:[#allocation2 + $0x660] sm:$0xff]
        %v9280 = vld [vmem:[#allocation2 + $0x668] sm:$0xff]
        %v9281 = vld [vmem:[#allocation2 + $0x670] sm:$0xff]
        %v9282 = vld [vmem:[#allocation2 + $0x678] sm:$0xff]
        %v9283 = vld [vmem:[#allocation2 + $0x680] sm:$0xff]
        %v9284 = vld [vmem:[#allocation2 + $0x688] sm:$0xff]
        %v9285 = vld [vmem:[#allocation2 + $0x690] sm:$0xff]
        %v9286 = vld [vmem:[#allocation2 + $0x698] sm:$0xff]
        %v9287 = vld [vmem:[#allocation2 + $0x6a0] sm:$0xff]
        %v9288 = vld [vmem:[#allocation2 + $0x6a8] sm:$0xff]
        %v9289 = vld [vmem:[#allocation2 + $0x6b0] sm:$0xff]
        %v9290 = vld [vmem:[#allocation2 + $0x6b8] sm:$0xff]
        %v9291 = vld [vmem:[#allocation2 + $0x6c0] sm:$0xff]
        %v9292 = vld [vmem:[#allocation2 + $0x6c8] sm:$0xff]
        %v9293 = vld [vmem:[#allocation2 + $0x6d0] sm:$0xff]
        %v9294 = vld [vmem:[#allocation2 + $0x6d8] sm:$0xff]
        %v9295 = vld [vmem:[#allocation2 + $0x6e0] sm:$0xff]
        %v9296 = vld [vmem:[#allocation2 + $0x6e8] sm:$0xff]
        %v9297 = vld [vmem:[#allocation2 + $0x6f0] sm:$0xff]
        %v9298 = vld [vmem:[#allocation2 + $0x6f8] sm:$0xff]
        %v9299 = vld [vmem:[#allocation2 + $0x700] sm:$0xff]
        %v9300 = vld [vmem:[#allocation2 + $0x708] sm:$0xff]
        %v9301 = vld [vmem:[#allocation2 + $0x710] sm:$0xff]
        %v9302 = vld [vmem:[#allocation2 + $0x718] sm:$0xff]
        %v9303 = vld [vmem:[#allocation2 + $0x720] sm:$0xff]
        %v9304 = vld [vmem:[#allocation2 + $0x728] sm:$0xff]
        %v9305 = vld [vmem:[#allocation2 + $0x730] sm:$0xff]
        %v9306 = vld [vmem:[#allocation2 + $0x738] sm:$0xff]
        %v9307 = vld [vmem:[#allocation2 + $0x740] sm:$0xff]
        %v9308 = vld [vmem:[#allocation2 + $0x748] sm:$0xff]
        %v9309 = vld [vmem:[#allocation2 + $0x750] sm:$0xff]
        %v9310 = vld [vmem:[#allocation2 + $0x758] sm:$0xff]
        %v9311 = vld [vmem:[#allocation2 + $0x760] sm:$0xff]
        %v9312 = vld [vmem:[#allocation2 + $0x768] sm:$0xff]
        %v9313 = vld [vmem:[#allocation2 + $0x770] sm:$0xff]
        %v9314 = vld [vmem:[#allocation2 + $0x778] sm:$0xff]
        %v9315 = vld [vmem:[#allocation2 + $0x780] sm:$0xff]
        %v9316 = vld [vmem:[#allocation2 + $0x788] sm:$0xff]
        %v9317 = vld [vmem:[#allocation2 + $0x790] sm:$0xff]
        %v9318 = vld [vmem:[#allocation2 + $0x798] sm:$0xff]
        %v9319 = vld [vmem:[#allocation2 + $0x7a0] sm:$0xff]
        %v9320 = vld [vmem:[#allocation2 + $0x7a8] sm:$0xff]
        %v9321 = vld [vmem:[#allocation2 + $0x7b0] sm:$0xff]
        %v9322 = vld [vmem:[#allocation2 + $0x7b8] sm:$0xff]
        %v9323 = vld [vmem:[#allocation2 + $0x7c0] sm:$0xff]
        %v9324 = vld [vmem:[#allocation2 + $0x7c8] sm:$0xff]
        %v9325 = vld [vmem:[#allocation2 + $0x7d0] sm:$0xff]
        %v9326 = vld [vmem:[#allocation2 + $0x7d8] sm:$0xff]
        %v9327 = vld [vmem:[#allocation2 + $0x7e0] sm:$0xff]
        %v9328 = vld [vmem:[#allocation2 + $0x7e8] sm:$0xff]
        %v9329 = vld [vmem:[#allocation2 + $0x7f0] sm:$0xff]
        %v9330 = vld [vmem:[#allocation2 + $0x7f8] sm:$0xff]
        %v9331 = vadd.f32 %v9075, %v9076
        %v9332 = vadd.f32 %v9331, %v9077
        %v9333 = vadd.f32 %v9332, %v9078
        %v9334 = vadd.f32 %v9333, %v9079
        %v9335 = vadd.f32 %v9334, %v9080
        %v9336 = vadd.f32 %v9335, %v9081
        %v9337 = vadd.f32 %v9336, %v9082
        %v9338 = vadd.f32 %v9337, %v9083
        %v9339 = vadd.f32 %v9338, %v9084
        %v9340 = vadd.f32 %v9339, %v9085
        %v9341 = vadd.f32 %v9340, %v9086
        %v9342 = vadd.f32 %v9341, %v9087
        %v9343 = vadd.f32 %v9342, %v9088
        %v9344 = vadd.f32 %v9343, %v9089
        %v9345 = vadd.f32 %v9344, %v9090
        %v9346 = vadd.f32 %v9345, %v9091
        %v9347 = vadd.f32 %v9346, %v9092
        %v9348 = vadd.f32 %v9347, %v9093
        %v9349 = vadd.f32 %v9348, %v9094
        %v9350 = vadd.f32 %v9349, %v9095
        %v9351 = vadd.f32 %v9350, %v9096
        %v9352 = vadd.f32 %v9351, %v9097
        %v9353 = vadd.f32 %v9352, %v9098
        %v9354 = vadd.f32 %v9353, %v9099
        %v9355 = vadd.f32 %v9354, %v9100
        %v9356 = vadd.f32 %v9355, %v9101
        %v9357 = vadd.f32 %v9356, %v9102
        %v9358 = vadd.f32 %v9357, %v9103
        %v9359 = vadd.f32 %v9358, %v9104
        %v9360 = vadd.f32 %v9359, %v9105
        %v9361 = vadd.f32 %v9360, %v9106
        %v9362 = vadd.f32 %v9361, %v9107
        %v9363 = vadd.f32 %v9362, %v9108
        %v9364 = vadd.f32 %v9363, %v9109
        %v9365 = vadd.f32 %v9364, %v9110
        %v9366 = vadd.f32 %v9365, %v9111
        %v9367 = vadd.f32 %v9366, %v9112
        %v9368 = vadd.f32 %v9367, %v9113
        %v9369 = vadd.f32 %v9368, %v9114
        %v9370 = vadd.f32 %v9369, %v9115
        %v9371 = vadd.f32 %v9370, %v9116
        %v9372 = vadd.f32 %v9371, %v9117
        %v9373 = vadd.f32 %v9372, %v9118
        %v9374 = vadd.f32 %v9373, %v9119
        %v9375 = vadd.f32 %v9374, %v9120
        %v9376 = vadd.f32 %v9375, %v9121
        %v9377 = vadd.f32 %v9376, %v9122
        %v9378 = vadd.f32 %v9377, %v9123
        %v9379 = vadd.f32 %v9378, %v9124
        %v9380 = vadd.f32 %v9379, %v9125
        %v9381 = vadd.f32 %v9380, %v9126
        %v9382 = vadd.f32 %v9381, %v9127
        %v9383 = vadd.f32 %v9382, %v9128
        %v9384 = vadd.f32 %v9383, %v9129
        %v9385 = vadd.f32 %v9384, %v9130
        %v9386 = vadd.f32 %v9385, %v9131
        %v9387 = vadd.f32 %v9386, %v9132
        %v9388 = vadd.f32 %v9387, %v9133
        %v9389 = vadd.f32 %v9388, %v9134
        %v9390 = vadd.f32 %v9389, %v9135
        %v9391 = vadd.f32 %v9390, %v9136
        %v9392 = vadd.f32 %v9391, %v9137
        %v9393 = vadd.f32 %v9392, %v9138
        %v9394 = vadd.f32 %v9393, %v9139
        %v9395 = vadd.f32 %v9394, %v9140
        %v9396 = vadd.f32 %v9395, %v9141
        %v9397 = vadd.f32 %v9396, %v9142
        %v9398 = vadd.f32 %v9397, %v9143
        %v9399 = vadd.f32 %v9398, %v9144
        %v9400 = vadd.f32 %v9399, %v9145
        %v9401 = vadd.f32 %v9400, %v9146
        %v9402 = vadd.f32 %v9401, %v9147
        %v9403 = vadd.f32 %v9402, %v9148
        %v9404 = vadd.f32 %v9403, %v9149
        %v9405 = vadd.f32 %v9404, %v9150
        %v9406 = vadd.f32 %v9405, %v9151
        %v9407 = vadd.f32 %v9406, %v9152
        %v9408 = vadd.f32 %v9407, %v9153
        %v9409 = vadd.f32 %v9408, %v9154
        %v9410 = vadd.f32 %v9409, %v9155
        %v9411 = vadd.f32 %v9410, %v9156
        %v9412 = vadd.f32 %v9411, %v9157
        %v9413 = vadd.f32 %v9412, %v9158
        %v9414 = vadd.f32 %v9413, %v9159
        %v9415 = vadd.f32 %v9414, %v9160
        %v9416 = vadd.f32 %v9415, %v9161
        %v9417 = vadd.f32 %v9416, %v9162
        %v9418 = vadd.f32 %v9417, %v9163
        %v9419 = vadd.f32 %v9418, %v9164
        %v9420 = vadd.f32 %v9419, %v9165
        %v9421 = vadd.f32 %v9420, %v9166
        %v9422 = vadd.f32 %v9421, %v9167
        %v9423 = vadd.f32 %v9422, %v9168
        %v9424 = vadd.f32 %v9423, %v9169
        %v9425 = vadd.f32 %v9424, %v9170
        %v9426 = vadd.f32 %v9425, %v9171
        %v9427 = vadd.f32 %v9426, %v9172
        %v9428 = vadd.f32 %v9427, %v9173
        %v9429 = vadd.f32 %v9428, %v9174
        %v9430 = vadd.f32 %v9429, %v9175
        %v9431 = vadd.f32 %v9430, %v9176
        %v9432 = vadd.f32 %v9431, %v9177
        %v9433 = vadd.f32 %v9432, %v9178
        %v9434 = vadd.f32 %v9433, %v9179
        %v9435 = vadd.f32 %v9434, %v9180
        %v9436 = vadd.f32 %v9435, %v9181
        %v9437 = vadd.f32 %v9436, %v9182
        %v9438 = vadd.f32 %v9437, %v9183
        %v9439 = vadd.f32 %v9438, %v9184
        %v9440 = vadd.f32 %v9439, %v9185
        %v9441 = vadd.f32 %v9440, %v9186
        %v9442 = vadd.f32 %v9441, %v9187
        %v9443 = vadd.f32 %v9442, %v9188
        %v9444 = vadd.f32 %v9443, %v9189
        %v9445 = vadd.f32 %v9444, %v9190
        %v9446 = vadd.f32 %v9445, %v9191
        %v9447 = vadd.f32 %v9446, %v9192
        %v9448 = vadd.f32 %v9447, %v9193
        %v9449 = vadd.f32 %v9448, %v9194
        %v9450 = vadd.f32 %v9449, %v9195
        %v9451 = vadd.f32 %v9450, %v9196
        %v9452 = vadd.f32 %v9451, %v9197
        %v9453 = vadd.f32 %v9452, %v9198
        %v9454 = vadd.f32 %v9453, %v9199
        %v9455 = vadd.f32 %v9454, %v9200
        %v9456 = vadd.f32 %v9455, %v9201
        %v9457 = vadd.f32 %v9456, %v9202
        %v9458 = vadd.f32 %v9457, %v9203
        %v9459 = vadd.f32 %v9458, %v9204
        %v9460 = vadd.f32 %v9459, %v9205
        %v9461 = vadd.f32 %v9460, %v9206
        %v9462 = vadd.f32 %v9461, %v9207
        %v9463 = vadd.f32 %v9462, %v9208
        %v9464 = vadd.f32 %v9463, %v9209
        %v9465 = vadd.f32 %v9464, %v9210
        %v9466 = vadd.f32 %v9465, %v9211
        %v9467 = vadd.f32 %v9466, %v9212
        %v9468 = vadd.f32 %v9467, %v9213
        %v9469 = vadd.f32 %v9468, %v9214
        %v9470 = vadd.f32 %v9469, %v9215
        %v9471 = vadd.f32 %v9470, %v9216
        %v9472 = vadd.f32 %v9471, %v9217
        %v9473 = vadd.f32 %v9472, %v9218
        %v9474 = vadd.f32 %v9473, %v9219
        %v9475 = vadd.f32 %v9474, %v9220
        %v9476 = vadd.f32 %v9475, %v9221
        %v9477 = vadd.f32 %v9476, %v9222
        %v9478 = vadd.f32 %v9477, %v9223
        %v9479 = vadd.f32 %v9478, %v9224
        %v9480 = vadd.f32 %v9479, %v9225
        %v9481 = vadd.f32 %v9480, %v9226
        %v9482 = vadd.f32 %v9481, %v9227
        %v9483 = vadd.f32 %v9482, %v9228
        %v9484 = vadd.f32 %v9483, %v9229
        %v9485 = vadd.f32 %v9484, %v9230
        %v9486 = vadd.f32 %v9485, %v9231
        %v9487 = vadd.f32 %v9486, %v9232
        %v9488 = vadd.f32 %v9487, %v9233
        %v9489 = vadd.f32 %v9488, %v9234
        %v9490 = vadd.f32 %v9489, %v9235
        %v9491 = vadd.f32 %v9490, %v9236
        %v9492 = vadd.f32 %v9491, %v9237
        %v9493 = vadd.f32 %v9492, %v9238
        %v9494 = vadd.f32 %v9493, %v9239
        %v9495 = vadd.f32 %v9494, %v9240
        %v9496 = vadd.f32 %v9495, %v9241
        %v9497 = vadd.f32 %v9496, %v9242
        %v9498 = vadd.f32 %v9497, %v9243
        %v9499 = vadd.f32 %v9498, %v9244
        %v9500 = vadd.f32 %v9499, %v9245
        %v9501 = vadd.f32 %v9500, %v9246
        %v9502 = vadd.f32 %v9501, %v9247
        %v9503 = vadd.f32 %v9502, %v9248
        %v9504 = vadd.f32 %v9503, %v9249
        %v9505 = vadd.f32 %v9504, %v9250
        %v9506 = vadd.f32 %v9505, %v9251
        %v9507 = vadd.f32 %v9506, %v9252
        %v9508 = vadd.f32 %v9507, %v9253
        %v9509 = vadd.f32 %v9508, %v9254
        %v9510 = vadd.f32 %v9509, %v9255
        %v9511 = vadd.f32 %v9510, %v9256
        %v9512 = vadd.f32 %v9511, %v9257
        %v9513 = vadd.f32 %v9512, %v9258
        %v9514 = vadd.f32 %v9513, %v9259
        %v9515 = vadd.f32 %v9514, %v9260
        %v9516 = vadd.f32 %v9515, %v9261
        %v9517 = vadd.f32 %v9516, %v9262
        %v9518 = vadd.f32 %v9517, %v9263
        %v9519 = vadd.f32 %v9518, %v9264
        %v9520 = vadd.f32 %v9519, %v9265
        %v9521 = vadd.f32 %v9520, %v9266
        %v9522 = vadd.f32 %v9521, %v9267
        %v9523 = vadd.f32 %v9522, %v9268
        %v9524 = vadd.f32 %v9523, %v9269
        %v9525 = vadd.f32 %v9524, %v9270
        %v9526 = vadd.f32 %v9525, %v9271
        %v9527 = vadd.f32 %v9526, %v9272
        %v9528 = vadd.f32 %v9527, %v9273
        %v9529 = vadd.f32 %v9528, %v9274
        %v9530 = vadd.f32 %v9529, %v9275
        %v9531 = vadd.f32 %v9530, %v9276
        %v9532 = vadd.f32 %v9531, %v9277
        %v9533 = vadd.f32 %v9532, %v9278
        %v9534 = vadd.f32 %v9533, %v9279
        %v9535 = vadd.f32 %v9534, %v9280
        %v9536 = vadd.f32 %v9535, %v9281
        %v9537 = vadd.f32 %v9536, %v9282
        %v9538 = vadd.f32 %v9537, %v9283
        %v9539 = vadd.f32 %v9538, %v9284
        %v9540 = vadd.f32 %v9539, %v9285
        %v9541 = vadd.f32 %v9540, %v9286
        %v9542 = vadd.f32 %v9541, %v9287
        %v9543 = vadd.f32 %v9542, %v9288
        %v9544 = vadd.f32 %v9543, %v9289
        %v9545 = vadd.f32 %v9544, %v9290
        %v9546 = vadd.f32 %v9545, %v9291
        %v9547 = vadd.f32 %v9546, %v9292
        %v9548 = vadd.f32 %v9547, %v9293
        %v9549 = vadd.f32 %v9548, %v9294
        %v9550 = vadd.f32 %v9549, %v9295
        %v9551 = vadd.f32 %v9550, %v9296
        %v9552 = vadd.f32 %v9551, %v9297
        %v9553 = vadd.f32 %v9552, %v9298
        %v9554 = vadd.f32 %v9553, %v9299
        %v9555 = vadd.f32 %v9554, %v9300
        %v9556 = vadd.f32 %v9555, %v9301
        %v9557 = vadd.f32 %v9556, %v9302
        %v9558 = vadd.f32 %v9557, %v9303
        %v9559 = vadd.f32 %v9558, %v9304
        %v9560 = vadd.f32 %v9559, %v9305
        %v9561 = vadd.f32 %v9560, %v9306
        %v9562 = vadd.f32 %v9561, %v9307
        %v9563 = vadd.f32 %v9562, %v9308
        %v9564 = vadd.f32 %v9563, %v9309
        %v9565 = vadd.f32 %v9564, %v9310
        %v9566 = vadd.f32 %v9565, %v9311
        %v9567 = vadd.f32 %v9566, %v9312
        %v9568 = vadd.f32 %v9567, %v9313
        %v9569 = vadd.f32 %v9568, %v9314
        %v9570 = vadd.f32 %v9569, %v9315
        %v9571 = vadd.f32 %v9570, %v9316
        %v9572 = vadd.f32 %v9571, %v9317
        %v9573 = vadd.f32 %v9572, %v9318
        %v9574 = vadd.f32 %v9573, %v9319
        %v9575 = vadd.f32 %v9574, %v9320
        %v9576 = vadd.f32 %v9575, %v9321
        %v9577 = vadd.f32 %v9576, %v9322
        %v9578 = vadd.f32 %v9577, %v9323
        %v9579 = vadd.f32 %v9578, %v9324
        %v9580 = vadd.f32 %v9579, %v9325
        %v9581 = vadd.f32 %v9580, %v9326
        %v9582 = vadd.f32 %v9581, %v9327
        %v9583 = vadd.f32 %v9582, %v9328
        %v9584 = vadd.f32 %v9583, %v9329
        %v9585 = vadd.f32 %v9584, %v9330
        %v9586 = vrot.slane %v9585, 4
        %v9587 = vadd.f32 %v9585, %v9586
        %v9588 = vrot.slane %v9587, 2
        %v9589 = vadd.f32 %v9587, %v9588
        %v9590 = vrot.slane %v9589, 1
        %v9591 = vadd.f32 %v9589, %v9590
        %9592 = vst [vmem:[%s302] sm:$0x1] %v9591
      $region56: #{gnr_forward.3} parent=47 // pred_fallthru
        _
      %p9593 = scmp.lt.s32.totalorder %s22, 1
      %s9594 = scalar_select %p9593, %s22, 1
      %s9595 = scalar_lea.vmem %s7, %s9594
      // Predicated region
      $region57: #{gnr_forward.3} parent=47 // pred_check
        %p9596 = pneg %p204
      $region58: #{gnr_forward.3} parent=47 // pred_check_branch
        %9598 = sbr.rel (%p9596) target = $region60
      $region59: #{gnr_forward.3} parent=47 // pred_region
        _
      $region60: #{gnr_forward.3} parent=47 // pred_fallthru
        _
    $region48: #{gnr_forward.3} parent=5 // pred_fallthru
      _
    %p9599 = scmp.le.s32.totalorder 2, %s13
    // Predicated region
    $region61: #{gnr_forward.3} parent=5 // pred_check
      %p9600 = pneg %p9599
    $region62: #{gnr_forward.3} parent=5 // pred_check_branch
      %9602 = sbr.rel (%p9600) target = $region64
    $region63: #{gnr_forward.3} parent=5 // pred_region
      %s9603 = ssub.s32 %s13, 2
      // Predicated region
      $region65: #{gnr_forward.3} parent=63 // pred_check
        %p9604 = pneg %p210
      $region66: #{gnr_forward.3} parent=63 // pred_check_branch
        %9606 = sbr.rel (%p9604) target = $region68
      $region67: #{gnr_forward.3} parent=63 // pred_region
        %p9607 = scmp.lt.s32.totalorder %s24, 1
        %s9608 = scalar_select %p9607, %s24, 1
        %s9609 = scalar_lea.vmem %s7, %s9608
      $region68: #{gnr_forward.3} parent=63 // pred_fallthru
        _
    $region64: #{gnr_forward.3} parent=5 // pred_fallthru
      _
  $region6: #{gnr_forward.3} parent=0 // loop_footer
    %s17 = sadd.s32 1, %s13
  $region7: #{gnr_forward.3} parent=0 // loop_footer_branch
    %12 = sbr.rel target = $region3
  $region8: #{gnr_forward.3} parent=0 // loop_exit
    _

</llo_original>
